<compile_context>
chip_gen: v5e
topology: v5e:2x2
jax: 0.10.0
libtpu: 0.0.40
codegen_flags: <defaults>
</compile_context>

<pallas_src>
import jax
import jax.numpy as jnp
from jax.experimental import pallas as pl
from jax.experimental.pallas import tpu as pltpu

DIM = 33
SHIFT = DIM ** 3                      # 35937 bins per channel
BINSIZE = 1.000001 / (DIM - 1)
R_SUB = 40                            # 33 red bins padded to a sublane multiple of 8
NROW = 4 * R_SUB                      # 160 rows: c*40 + r, c in {R,G,B,count}
NBG = DIM * DIM                       # 1089 combined (blue, green) bins
PC_TARGET = 1024                      # pixel-chunk size (review: 1024-2048)


def _default_bin_splits(batch):
    """Split the bin columns across v7x's two TensorCores when batch==1."""
    if batch >= 2:
        return 1
    try:
        kind = jax.devices()[0].device_kind.lower()
    except Exception:
        return 1
    return 2 if ("v7" in kind or "tpu7" in kind) else 1


def _make_kernel(P, pc, nc, ncol, use_bf16):
    needs_tail = (P % pc) != 0
    inv_bin = float(1.0 / BINSIZE)    # == 31.999968; bin coords stay < 32

    def kernel(inp_ref, mask_ref, outp_ref, out_ref):
        # inp_ref:  (1, 3, pc)  input r/g/b rows, pixels on lanes
        # mask_ref: (1, 1, pc)
        # outp_ref: (1, 3, pc)  target r/g/b rows
        # out_ref:  (1, NROW, ncol) f32 (lut | count) slab, VMEM-resident
        #           across the pixel-chunk axis (same block index for all kk)
        hh = pl.program_id(1)          # bin-column half (always 0 unless split)
        kk = pl.program_id(2)          # pixel chunk

        inp_s = inp_ref[0]             # (3, pc)
        m = mask_ref[0]                # (1, pc)
        o = outp_ref[0]                # (3, pc)

        if needs_tail:
            # Zero out the ragged tail of the last chunk (OOB lanes may hold
            # garbage incl. NaN/Inf; select -- not multiply -- keeps it clean).
            pix = kk * pc + jax.lax.broadcasted_iota(jnp.int32, (1, pc), 1)
            valid = pix < P
            inp_s = jnp.where(valid, inp_s, 0.0)
            m = jnp.where(valid, m, 0.0)
            o = jnp.where(valid, o, 0.0)

        # ---- LHS factor (NROW, pc): hat red weights * outp * mask ----------
        r = inp_s[0:1] * inv_bin                                     # (1, pc)
        rrow = jax.lax.broadcasted_iota(jnp.int32, (R_SUB, pc), 0).astype(jnp.float32)
        wr = jnp.maximum(1.0 - jnp.abs(r - rrow), 0.0)               # (R_SUB, pc)
        om = o * m                                                   # (3, pc)
        lhs = jnp.concatenate(
            [wr * om[0:1], wr * om[1:2], wr * om[2:3], wr * m], axis=0)  # (NROW, pc)

        # ---- RHS^T factor (ncol, pc): fused hat(blue)*hat(green) -----------
        g = inp_s[1:2] * inv_bin                                     # (1, pc)
        b = inp_s[2:3] * inv_bin                                     # (1, pc)
        col = (jax.lax.broadcasted_iota(jnp.int32, (ncol, 1), 0)
               + hh * ncol).astype(jnp.float32)                      # (ncol, 1)
        # Exact col // 33 without integer division: |col*(1/33) - col/33| < 1e-5
        # for col < 1280 and the true fractional part is either 0 or >= 1/33,
        # so adding 1e-3 before floor can never change a correct result and
        # always lifts exact multiples above the integer.
        bcol = jnp.floor(col * (1.0 / 33.0) + 1e-3)                  # blue bin
        gcol = col - bcol * 33.0                                     # green bin
        rhs_t = (jnp.maximum(1.0 - jnp.abs(b - bcol), 0.0)
                 * jnp.maximum(1.0 - jnp.abs(g - gcol), 0.0))        # (ncol, pc)
        # padded columns (global bin >= 1089) have bcol >= 33 while b < 32,
        # so their hat weight is exactly 0.

        if use_bf16:
            lhs = lhs.astype(jnp.bfloat16)
            rhs_t = rhs_t.astype(jnp.bfloat16)
        # scatter-add over the pixel chunk == one A.B^T MXU contraction
        contrib = jax.lax.dot_general(
            lhs, rhs_t, (((1,), (1,)), ((), ())),
            preferred_element_type=jnp.float32)                      # (NROW, ncol)

        @pl.when(kk == 0)
        def _():
            out_ref[0, :, :] = contrib

        @pl.when(kk > 0)
        def _():
            out_ref[0, :, :] = out_ref[0, :, :] + contrib

        # ---- finalize: divide lut by count once, after the last chunk ------
        @pl.when(kk == nc - 1)
        def _():
            acc = out_ref[0, :, :]
            cnt = acc[3 * R_SUB:4 * R_SUB, :]                        # (R_SUB, ncol)
            pos = cnt > 0.0
            scale = jnp.where(pos, 1.0 / jnp.where(pos, cnt, 1.0), 0.0)
            out_ref[0, 0 * R_SUB:1 * R_SUB, :] = acc[0 * R_SUB:1 * R_SUB, :] * scale
            out_ref[0, 1 * R_SUB:2 * R_SUB, :] = acc[1 * R_SUB:2 * R_SUB, :] * scale
            out_ref[0, 2 * R_SUB:3 * R_SUB, :] = acc[2 * R_SUB:3 * R_SUB, :] * scale
            # count rows are already final

    return kernel


def tridistribute_generator(mask, inp, outp, *, use_bf16=True, bin_splits=None):
    """Forward pass of TridistributeGeneraotr. Returns (lut, lut_count, output)."""
    mask = mask.astype(jnp.float32)
    inp = inp.astype(jnp.float32)
    outp = outp.astype(jnp.float32)

    B, C, H, W = inp.shape
    assert C == 3
    P = H * W

    splits = _default_bin_splits(B) if bin_splits is None else max(1, int(bin_splits))
    ncol = ((-(-NBG // splits)) + 127) // 128 * 128     # per-half, lane aligned
    total_cols = splits * ncol                          # 1152 (1 split) / 1280 (2)

    p128 = ((P + 127) // 128) * 128
    pc = min(PC_TARGET, p128)
    nc = -(-P // pc)

    # Free channel-major views -- no concat / pad / transpose copies in HBM.
    inp_f = inp.reshape(B, 3, P)
    mask_f = mask.reshape(B, 1, P)
    outp_f = outp.reshape(B, 3, P)

    kernel = _make_kernel(P, pc, nc, ncol, use_bf16)

    out = pl.pallas_call(
        kernel,
        out_shape=jax.ShapeDtypeStruct((B, NROW, total_cols), jnp.float32),
        grid_spec=pltpu.PrefetchScalarGridSpec(
            num_scalar_prefetch=0,
            grid=(B, splits, nc),
            in_specs=[pl.BlockSpec((1, 3, pc), lambda bb, hh, kk: (bb, 0, kk)),
                      pl.BlockSpec((1, 1, pc), lambda bb, hh, kk: (bb, 0, kk)),
                      pl.BlockSpec((1, 3, pc), lambda bb, hh, kk: (bb, 0, kk))],
            out_specs=pl.BlockSpec((1, NROW, ncol), lambda bb, hh, kk: (bb, 0, hh))),
        compiler_params=pltpu.CompilerParams(
            dimension_semantics=("parallel", "parallel", "arbitrary"),
            # ~20-26 MiB worst-case live set at pc=1024; 48 MiB leaves headroom
            # everywhere and stays below v7x's 64 MiB physical VMEM.
            vmem_limit_bytes=48 * 1024 * 1024),
        cost_estimate=pl.CostEstimate(
            flops=2 * B * nc * NROW * pc * total_cols,
            transcendentals=0,
            bytes_accessed=B * splits * 7 * P * 4 + B * NROW * total_cols * 4),
    )(inp_f, mask_f, outp_f)

    # rows c*40+r (r<33), cols j = blue*33+green  ->  lut[B, 3, blue, green, red]
    lut = out[:, :3 * R_SUB, :NBG].reshape(B, 3, R_SUB, NBG)[:, :, :DIM, :]
    lut = jnp.transpose(lut.reshape(B, 3, DIM, DIM, DIM), (0, 1, 3, 4, 2))
    cnt = out[:, 3 * R_SUB:3 * R_SUB + DIM, :NBG]
    cnt = jnp.transpose(cnt.reshape(B, 1, DIM, DIM, DIM), (0, 1, 3, 4, 2))
    cnt = jnp.broadcast_to(cnt, (B, 3, DIM, DIM, DIM))
    # TODO(synk): only the forward (+divide) path is implemented; the custom
    # autograd backward of the CUDA extension is out of scope here.
    return lut, cnt, outp


def _reference(mask, inp, outp):
    """Pure-JAX scatter-add reference (same bin quantisation as the kernel)."""
    B, _, H, W = inp.shape
    P = H * W
    inv_bin = 1.0 / BINSIZE
    r = inp[:, 0].reshape(B, P) * inv_bin
    g = inp[:, 1].reshape(B, P) * inv_bin
    b = inp[:, 2].reshape(B, P) * inv_bin
    m = mask[:, 0].reshape(B, P)
    o = outp.reshape(B, 3, P)
    rif, gif, bif = jnp.floor(r), jnp.floor(g), jnp.floor(b)
    rd, gd, bd = r - rif, g - gif, b - bif
    idx000 = (rif + gif * DIM + bif * (DIM * DIM)).astype(jnp.int32)

    lut = jnp.zeros((B, 3, SHIFT), jnp.float32)
    cnt = jnp.zeros((B, SHIFT), jnp.float32)
    bidx = jnp.arange(B)[:, None]
    cidx = jnp.arange(3)[None, :, None]
    for dr in (0, 1):
        wr = rd if dr else (1.0 - rd)
        for dg in (0, 1):
            wg = gd if dg else (1.0 - gd)
            for db in (0, 1):
                wb = bd if db else (1.0 - bd)
                w = wr * wg * wb * m
                idx = idx000 + dr + dg * DIM + db * (DIM * DIM)
                cnt = cnt.at[bidx, idx].add(w)
                lut = lut.at[jnp.arange(B)[:, None, None], cidx,
                             idx[:, None, :]].add(w[:, None, :] * o)
    cnt3 = cnt[:, None, :]
    lut = jnp.where(cnt3 > 0, lut / jnp.where(cnt3 > 0, cnt3, 1.0), 0.0)
    return (lut.reshape(B, 3, DIM, DIM, DIM),
            jnp.broadcast_to(cnt3, (B, 3, SHIFT)).reshape(B, 3, DIM, DIM, DIM))


if __name__ == "__main__":
    key = jax.random.PRNGKey(0)
    k1, k2, k3 = jax.random.split(key, 3)
    B, H, W = 2, 16, 16
    inp = jax.random.uniform(k1, (B, 3, H, W), jnp.float32)        # input image in [0,1]
    outp = jax.random.uniform(k2, (B, 3, H, W), jnp.float32)       # "output" image in [0,1]
    mask = (jax.random.uniform(k3, (B, 1, H, W)) > 0.5).astype(jnp.float32)

    ref_lut, ref_cnt = _reference(mask, inp, outp)

    # 1) exact path (f32 MXU operands)
    lut, lut_count, out_pt = tridistribute_generator(mask, inp, outp, use_bf16=False)
    jax.block_until_ready((lut, lut_count, out_pt))
    assert lut.shape == (B, 3, DIM, DIM, DIM)
    assert lut_count.shape == (B, 3, DIM, DIM, DIM)
    assert jnp.allclose(lut, ref_lut, atol=1e-4, rtol=1e-4)
    assert jnp.allclose(lut_count, ref_cnt, atol=1e-4, rtol=1e-4)
    assert jnp.allclose(out_pt, outp)

    # 2) default fast path (bf16 MXU operands, f32 accumulate) -- relaxed tolerance
    lut_b, cnt_b, _ = tridistribute_generator(mask, inp, outp)
    jax.block_until_ready((lut_b, cnt_b))
    assert jnp.allclose(lut_b, ref_lut, atol=3e-2, rtol=3e-2)
    assert jnp.allclose(cnt_b, ref_cnt, atol=3e-2, rtol=3e-2)

    # 3) dual-core bin-split layout (what v7x auto-selects at batch==1), forced
    lut_s, cnt_s, _ = tridistribute_generator(mask, inp, outp,
                                              use_bf16=False, bin_splits=2)
    jax.block_until_ready((lut_s, cnt_s))
    assert jnp.allclose(lut_s, ref_lut, atol=1e-4, rtol=1e-4)
    assert jnp.allclose(cnt_s, ref_cnt, atol=1e-4, rtol=1e-4)

    print("KERNEL_OK")
</pallas_src>

<mosaic_0001>
module attributes {stable_mosaic.version = 11 : i64} {
  func.func @kernel(%arg0: i32, %arg1: i32, %arg2: i32, %arg3: memref<1x3x256xf32, #tpu.memory_space<vmem>>, %arg4: memref<1x1x256xf32, #tpu.memory_space<vmem>>, %arg5: memref<1x3x256xf32, #tpu.memory_space<vmem>>, %arg6: memref<1x160x1152xf32, #tpu.memory_space<vmem>>) attributes {dimension_semantics = [#tpu.dimension_semantics<parallel>, #tpu.dimension_semantics<parallel>, #tpu.dimension_semantics<arbitrary>], iteration_bounds = array<i64: 2, 1, 1>, scalar_prefetch = 0 : i64, scratch_operands = 0 : i64, tpu.core_type = #tpu.core_type<tc>, window_params = [{transform_indices = @transform_0, window_bounds = array<i64: 1, 3, 256>}, {transform_indices = @transform_1, window_bounds = array<i64: 1, 1, 256>}, {transform_indices = @transform_2, window_bounds = array<i64: 1, 3, 256>}, {transform_indices = @transform_3, window_bounds = array<i64: 1, 160, 1152>}]} {
    %c0 = arith.constant 0 : index
    %c0_0 = arith.constant 0 : index
    %c0_1 = arith.constant 0 : index
    %0 = vector.load %arg3[%c0, %c0_0, %c0_1] : memref<1x3x256xf32, #tpu.memory_space<vmem>>, vector<1x3x256xf32>
    %1 = vector.shape_cast %0 : vector<1x3x256xf32> to vector<3x256xf32>
    %c0_2 = arith.constant 0 : index
    %c0_3 = arith.constant 0 : index
    %c0_4 = arith.constant 0 : index
    %2 = vector.load %arg4[%c0_2, %c0_3, %c0_4] : memref<1x1x256xf32, #tpu.memory_space<vmem>>, vector<1x1x256xf32>
    %3 = vector.shape_cast %2 : vector<1x1x256xf32> to vector<1x256xf32>
    %c0_5 = arith.constant 0 : index
    %c0_6 = arith.constant 0 : index
    %c0_7 = arith.constant 0 : index
    %4 = vector.load %arg5[%c0_5, %c0_6, %c0_7] : memref<1x3x256xf32, #tpu.memory_space<vmem>>, vector<1x3x256xf32>
    %5 = vector.shape_cast %4 : vector<1x3x256xf32> to vector<3x256xf32>
    %6 = vector.extract_strided_slice %1 {offsets = [0, 0], sizes = [1, 256], strides = [1, 1]} : vector<3x256xf32> to vector<1x256xf32>
    %cst = arith.constant 31.9999676 : f32
    %7 = vector.broadcast %cst : f32 to vector<1x256xf32>
    %8 = arith.mulf %6, %7 : vector<1x256xf32>
    %9 = tpu.iota {dimensions = array<i32: 0>} : vector<40x256xi32>
    %10 = arith.sitofp %9 : vector<40x256xi32> to vector<40x256xf32>
    %11 = vector.broadcast %8 : vector<1x256xf32> to vector<40x256xf32>
    %12 = arith.subf %11, %10 : vector<40x256xf32>
    %13 = math.absf %12 : vector<40x256xf32>
    %cst_8 = arith.constant 1.000000e+00 : f32
    %14 = vector.broadcast %cst_8 : f32 to vector<40x256xf32>
    %15 = arith.subf %14, %13 : vector<40x256xf32>
    %cst_9 = arith.constant 0.000000e+00 : f32
    %16 = vector.broadcast %cst_9 : f32 to vector<40x256xf32>
    %17 = arith.maximumf %15, %16 : vector<40x256xf32>
    %18 = vector.broadcast %3 : vector<1x256xf32> to vector<3x256xf32>
    %19 = arith.mulf %5, %18 : vector<3x256xf32>
    %20 = vector.extract_strided_slice %19 {offsets = [0, 0], sizes = [1, 256], strides = [1, 1]} : vector<3x256xf32> to vector<1x256xf32>
    %21 = vector.broadcast %20 : vector<1x256xf32> to vector<40x256xf32>
    %22 = arith.mulf %17, %21 : vector<40x256xf32>
    %23 = vector.extract_strided_slice %19 {offsets = [1, 0], sizes = [1, 256], strides = [1, 1]} : vector<3x256xf32> to vector<1x256xf32>
    %24 = vector.broadcast %23 : vector<1x256xf32> to vector<40x256xf32>
    %25 = arith.mulf %17, %24 : vector<40x256xf32>
    %26 = vector.extract_strided_slice %19 {offsets = [2, 0], sizes = [1, 256], strides = [1, 1]} : vector<3x256xf32> to vector<1x256xf32>
    %27 = vector.broadcast %26 : vector<1x256xf32> to vector<40x256xf32>
    %28 = arith.mulf %17, %27 : vector<40x256xf32>
    %29 = vector.broadcast %3 : vector<1x256xf32> to vector<40x256xf32>
    %30 = arith.mulf %17, %29 : vector<40x256xf32>
    %31 = tpu.concatenate %22, %25, %28, %30 in 0 : vector<40x256xf32>, vector<40x256xf32>, vector<40x256xf32>, vector<40x256xf32> -> vector<160x256xf32>
    %32 = vector.extract_strided_slice %1 {offsets = [1, 0], sizes = [1, 256], strides = [1, 1]} : vector<3x256xf32> to vector<1x256xf32>
    %cst_10 = arith.constant 31.9999676 : f32
    %33 = vector.broadcast %cst_10 : f32 to vector<1x256xf32>
    %34 = arith.mulf %32, %33 : vector<1x256xf32>
    %35 = vector.extract_strided_slice %1 {offsets = [2, 0], sizes = [1, 256], strides = [1, 1]} : vector<3x256xf32> to vector<1x256xf32>
    %cst_11 = arith.constant 31.9999676 : f32
    %36 = vector.broadcast %cst_11 : f32 to vector<1x256xf32>
    %37 = arith.mulf %35, %36 : vector<1x256xf32>
    %38 = tpu.iota {dimensions = array<i32: 0>} : vector<1152x1xi32>
    %c1152_i32 = arith.constant 1152 : i32
    %39 = arith.muli %arg1, %c1152_i32 : i32
    %40 = vector.broadcast %39 : i32 to vector<1152x1xi32>
    %41 = arith.addi %38, %40 : vector<1152x1xi32>
    %42 = arith.sitofp %41 : vector<1152x1xi32> to vector<1152x1xf32>
    %cst_12 = arith.constant 0.0303030312 : f32
    %43 = vector.broadcast %cst_12 : f32 to vector<1152x1xf32>
    %44 = arith.mulf %42, %43 : vector<1152x1xf32>
    %cst_13 = arith.constant 1.000000e-03 : f32
    %45 = vector.broadcast %cst_13 : f32 to vector<1152x1xf32>
    %46 = arith.addf %44, %45 : vector<1152x1xf32>
    %47 = math.floor %46 : vector<1152x1xf32>
    %cst_14 = arith.constant 3.300000e+01 : f32
    %48 = vector.broadcast %cst_14 : f32 to vector<1152x1xf32>
    %49 = arith.mulf %47, %48 : vector<1152x1xf32>
    %50 = arith.subf %42, %49 : vector<1152x1xf32>
    %51 = vector.broadcast %37 : vector<1x256xf32> to vector<1152x256xf32>
    %52 = vector.broadcast %47 : vector<1152x1xf32> to vector<1152x256xf32>
    %53 = arith.subf %51, %52 : vector<1152x256xf32>
    %54 = math.absf %53 : vector<1152x256xf32>
    %cst_15 = arith.constant 1.000000e+00 : f32
    %55 = vector.broadcast %cst_15 : f32 to vector<1152x256xf32>
    %56 = arith.subf %55, %54 : vector<1152x256xf32>
    %cst_16 = arith.constant 0.000000e+00 : f32
    %57 = vector.broadcast %cst_16 : f32 to vector<1152x256xf32>
    %58 = arith.maximumf %56, %57 : vector<1152x256xf32>
    %59 = vector.broadcast %34 : vector<1x256xf32> to vector<1152x256xf32>
    %60 = vector.broadcast %50 : vector<1152x1xf32> to vector<1152x256xf32>
    %61 = arith.subf %59, %60 : vector<1152x256xf32>
    %62 = math.absf %61 : vector<1152x256xf32>
    %cst_17 = arith.constant 1.000000e+00 : f32
    %63 = vector.broadcast %cst_17 : f32 to vector<1152x256xf32>
    %64 = arith.subf %63, %62 : vector<1152x256xf32>
    %cst_18 = arith.constant 0.000000e+00 : f32
    %65 = vector.broadcast %cst_18 : f32 to vector<1152x256xf32>
    %66 = arith.maximumf %64, %65 : vector<1152x256xf32>
    %67 = arith.mulf %58, %66 : vector<1152x256xf32>
    %cst_19 = arith.constant dense<0.000000e+00> : vector<160x1152xf32>
    %68 = tpu.matmul %31, %67, %cst_19 {dimension_numbers = #tpu.dot_dimension_numbers<[1], [1], [0], [0], [0, 0, 1, 0], [], []>} : vector<160x256xf32>, vector<1152x256xf32>, vector<160x1152xf32> -> vector<160x1152xf32>
    %c0_i32 = arith.constant 0 : i32
    %69 = arith.cmpi eq, %arg2, %c0_i32 : i32
    %70 = arith.extui %69 : i1 to i32
    %c0_i32_20 = arith.constant 0 : i32
    %71 = arith.cmpi ne, %70, %c0_i32_20 : i32
    scf.if %71 {
      %c0_25 = arith.constant 0 : index
      %c0_26 = arith.constant 0 : index
      %c0_27 = arith.constant 0 : index
      %78 = vector.load %arg6[%c0_25, %c0_26, %c0_27] : memref<1x160x1152xf32, #tpu.memory_space<vmem>>, vector<1x160x1152xf32>
      %79 = vector.shape_cast %78 : vector<1x160x1152xf32> to vector<160x1152xf32>
      %80 = vector.shape_cast %68 : vector<160x1152xf32> to vector<1x160x1152xf32>
      tpu.vector_store %arg6[%c0_25, %c0_26, %c0_27], %80 {strides = array<i32>} : memref<1x160x1152xf32, #tpu.memory_space<vmem>>, vector<1x160x1152xf32>,
    } else {
    }
    %c0_i32_21 = arith.constant 0 : i32
    %72 = arith.cmpi sgt, %arg2, %c0_i32_21 : i32
    %73 = arith.extui %72 : i1 to i32
    %c0_i32_22 = arith.constant 0 : i32
    %74 = arith.cmpi ne, %73, %c0_i32_22 : i32
    scf.if %74 {
      %c0_25 = arith.constant 0 : index
      %c0_26 = arith.constant 0 : index
      %c0_27 = arith.constant 0 : index
      %78 = vector.load %arg6[%c0_25, %c0_26, %c0_27] : memref<1x160x1152xf32, #tpu.memory_space<vmem>>, vector<1x160x1152xf32>
      %79 = vector.shape_cast %78 : vector<1x160x1152xf32> to vector<160x1152xf32>
      %80 = arith.addf %79, %68 : vector<160x1152xf32>
      %c0_28 = arith.constant 0 : index
      %c0_29 = arith.constant 0 : index
      %c0_30 = arith.constant 0 : index
      %81 = vector.load %arg6[%c0_28, %c0_29, %c0_30] : memref<1x160x1152xf32, #tpu.memory_space<vmem>>, vector<1x160x1152xf32>
      %82 = vector.shape_cast %81 : vector<1x160x1152xf32> to vector<160x1152xf32>
      %83 = vector.shape_cast %80 : vector<160x1152xf32> to vector<1x160x1152xf32>
      tpu.vector_store %arg6[%c0_28, %c0_29, %c0_30], %83 {strides = array<i32>} : memref<1x160x1152xf32, #tpu.memory_space<vmem>>, vector<1x160x1152xf32>,
    } else {
    }
    %c0_i32_23 = arith.constant 0 : i32
    %75 = arith.cmpi eq, %arg2, %c0_i32_23 : i32
    %76 = arith.extui %75 : i1 to i32
    %c0_i32_24 = arith.constant 0 : i32
    %77 = arith.cmpi ne, %76, %c0_i32_24 : i32
    scf.if %77 {
      %c0_25 = arith.constant 0 : index
      %c0_26 = arith.constant 0 : index
      %c0_27 = arith.constant 0 : index
      %78 = vector.load %arg6[%c0_25, %c0_26, %c0_27] : memref<1x160x1152xf32, #tpu.memory_space<vmem>>, vector<1x160x1152xf32>
      %79 = vector.shape_cast %78 : vector<1x160x1152xf32> to vector<160x1152xf32>
      %80 = vector.extract_strided_slice %79 {offsets = [120, 0], sizes = [40, 1152], strides = [1, 1]} : vector<160x1152xf32> to vector<40x1152xf32>
      %cst_28 = arith.constant 0.000000e+00 : f32
      %81 = vector.broadcast %cst_28 : f32 to vector<40x1152xf32>
      %82 = arith.cmpf ogt, %80, %81 : vector<40x1152xf32>
      %cst_29 = arith.constant 1.000000e+00 : f32
      %83 = vector.broadcast %cst_29 : f32 to vector<40x1152xf32>
      %84 = arith.select %82, %80, %83 : vector<40x1152xi1>, vector<40x1152xf32>
      %cst_30 = arith.constant 1.000000e+00 : f32
      %85 = vector.broadcast %cst_30 : f32 to vector<40x1152xf32>
      %86 = arith.divf %85, %84 : vector<40x1152xf32>
      %cst_31 = arith.constant 0.000000e+00 : f32
      %87 = vector.broadcast %cst_31 : f32 to vector<40x1152xf32>
      %88 = arith.select %82, %86, %87 : vector<40x1152xi1>, vector<40x1152xf32>
      %89 = vector.extract_strided_slice %79 {offsets = [0, 0], sizes = [40, 1152], strides = [1, 1]} : vector<160x1152xf32> to vector<40x1152xf32>
      %90 = arith.mulf %89, %88 : vector<40x1152xf32>
      %c0_32 = arith.constant 0 : index
      %c0_33 = arith.constant 0 : index
      %c0_34 = arith.constant 0 : index
      %91 = vector.load %arg6[%c0_32, %c0_33, %c0_34] : memref<1x160x1152xf32, #tpu.memory_space<vmem>>, vector<1x40x1152xf32>
      %92 = vector.shape_cast %91 : vector<1x40x1152xf32> to vector<40x1152xf32>
      %93 = vector.shape_cast %90 : vector<40x1152xf32> to vector<1x40x1152xf32>
      tpu.vector_store %arg6[%c0_32, %c0_33, %c0_34], %93 {strides = array<i32>} : memref<1x160x1152xf32, #tpu.memory_space<vmem>>, vector<1x40x1152xf32>,
      %94 = vector.extract_strided_slice %79 {offsets = [40, 0], sizes = [40, 1152], strides = [1, 1]} : vector<160x1152xf32> to vector<40x1152xf32>
      %95 = arith.mulf %94, %88 : vector<40x1152xf32>
      %c0_35 = arith.constant 0 : index
      %c40 = arith.constant 40 : index
      %c0_36 = arith.constant 0 : index
      %96 = vector.load %arg6[%c0_35, %c40, %c0_36] : memref<1x160x1152xf32, #tpu.memory_space<vmem>>, vector<1x40x1152xf32>
      %97 = vector.shape_cast %96 : vector<1x40x1152xf32> to vector<40x1152xf32>
      %98 = vector.shape_cast %95 : vector<40x1152xf32> to vector<1x40x1152xf32>
      tpu.vector_store %arg6[%c0_35, %c40, %c0_36], %98 {strides = array<i32>} : memref<1x160x1152xf32, #tpu.memory_space<vmem>>, vector<1x40x1152xf32>,
      %99 = vector.extract_strided_slice %79 {offsets = [80, 0], sizes = [40, 1152], strides = [1, 1]} : vector<160x1152xf32> to vector<40x1152xf32>
      %100 = arith.mulf %99, %88 : vector<40x1152xf32>
      %c0_37 = arith.constant 0 : index
      %c80 = arith.constant 80 : index
      %c0_38 = arith.constant 0 : index
      %101 = vector.load %arg6[%c0_37, %c80, %c0_38] : memref<1x160x1152xf32, #tpu.memory_space<vmem>>, vector<1x40x1152xf32>
      %102 = vector.shape_cast %101 : vector<1x40x1152xf32> to vector<40x1152xf32>
      %103 = vector.shape_cast %100 : vector<40x1152xf32> to vector<1x40x1152xf32>
      tpu.vector_store %arg6[%c0_37, %c80, %c0_38], %103 {strides = array<i32>} : memref<1x160x1152xf32, #tpu.memory_space<vmem>>, vector<1x40x1152xf32>,
    } else {
    }
    return
  }
  func.func @transform_0(%arg0: i32, %arg1: i32, %arg2: i32) -> (i32, i32, i32) {
    %c0_i32 = arith.constant 0 : i32
    %c0_i32_0 = arith.constant 0 : i32
    return %arg0, %c0_i32, %arg2 : i32, i32, i32
  }
  func.func @transform_1(%arg0: i32, %arg1: i32, %arg2: i32) -> (i32, i32, i32) {
    %c0_i32 = arith.constant 0 : i32
    %c0_i32_0 = arith.constant 0 : i32
    return %arg0, %c0_i32, %arg2 : i32, i32, i32
  }
  func.func @transform_2(%arg0: i32, %arg1: i32, %arg2: i32) -> (i32, i32, i32) {
    %c0_i32 = arith.constant 0 : i32
    %c0_i32_0 = arith.constant 0 : i32
    return %arg0, %c0_i32, %arg2 : i32, i32, i32
  }
  func.func @transform_3(%arg0: i32, %arg1: i32, %arg2: i32) -> (i32, i32, i32) {
    %c0_i32 = arith.constant 0 : i32
    %c0_i32_0 = arith.constant 0 : i32
    return %arg0, %c0_i32, %arg1 : i32, i32, i32
  }
}

</mosaic_0001>

<llo_original>
// kernel: tpu_custom_call.1
$region0: #{tpu_custom_call.1}
  #allocation0 [shape = 'u32[]', space=smem, size = 0x4, offset = 0x4, fixed_abs, tag = 'smem constant byte address 0x4 - core index']
  #allocation1 [shape = 'u32[72,128]{1,0:T(1,128)}', space=vmem, size = 0x9000, scoped, tag = 'internal scratch']
  %s0 = inlined_call_operand.vmem [shape: f32[2,3,256], index: 0, kind: input, shape index: {}]
  %s1 = inlined_call_operand.hbm [shape: f32[2,1,256], index: 1, kind: input, shape index: {}]
  %s2 = inlined_call_operand.vmem [shape: f32[2,3,256], index: 2, kind: input, shape index: {}]
  %s3 = inlined_call_operand.hbm [shape: f32[2,160,1152], index: 3, kind: output, shape index: {}]
  %s4 = sld [smem:[#allocation0]]
  $region61: #{tpu_custom_call.1} parent=0
    _
  %s6 = ssub.s32 1, %s4
  %s7 = scalar_select 0, %s6, %s4
  $region1: #{tpu_custom_call.1} parent=0
    #allocation2 [shape = 'u8[2048]{0}', space=vmem, size = 0x800, scoped, tag = 'input window, operand 1']
    #allocation3 [shape = 's32[2]{0}', space=sflag, size = 0x8, scoped, tag = 'scoped memory for tpu_custom_call.1']
    #allocation4 [shape = 's32[2]{0}', space=sflag, size = 0x8, scoped, tag = 'scoped memory for tpu_custom_call.1']
    #allocation5 [shape = 'u8[1474560]{0}', space=vmem, size = 0x168000, scoped, tag = 'output window, operand 0']
    %8 = vsyncpa [#allocation3], 0
    %s9 = scalar_lea.sflag [#allocation3], 1
    %10 = vsyncpa %s9, 0
    %11 = vsyncpa [#allocation4], 0
    %s12 = scalar_lea.sflag [#allocation4], 1
    %13 = vsyncpa %s12, 0
    loop: start=0, step=1, limit=4
    $region2: #{tpu_custom_call.1} parent=1 // loop_pre_header
      _
    $region3: #{tpu_custom_call.1} parent=1 // loop_header
      %s15 = sphi 0, %s19
      %p16 = scmp.ge.s32.totalorder %s15, 4
      %s22 = sphi 0, %s41
      %s23 = sphi 0, %s37
      %s24 = sphi 0, %s33
      %s25 = sphi 0, %s22
      %s26 = sphi 0, %s23
      %s27 = sphi 0, %s24
      %s28 = sphi 0, %s25
      %s29 = sphi 0, %s26
      %s30 = sphi 0, %s27
      %s46 = sphi 0, %s48
      %s49 = sphi 0, %s46
      %s50 = sphi 0, %s49
      %s66 = sphi 0, %s50
      %s74 = sphi 0, %s76
      %s77 = sphi 0, %s74
      %s78 = sphi 0, %s77
      %s94 = sphi 0, %s78
      %s102 = sphi 0, %s104
      %s105 = sphi 0, %s102
      %s106 = sphi 0, %s105
      %s122 = sphi 0, %s106
      %s130 = sphi 0, %s132
      %s133 = sphi 0, %s130
      %s134 = sphi 0, %s133
      %s150 = sphi 0, %s134
    $region4: #{tpu_custom_call.1} parent=1 // loop_header_branch
      %18 = sbr.rel (%p16) target = $region8
    $region5: #{tpu_custom_call.1} parent=1 // loop_body
      %s20 = ssub.s32 %s15, 1
      %s21 = ssub.s32 %s15, 2
      %s31 = sadd.s32 1, %s24
      %p32 = scmp.ge.s32.totalorder %s31, 1
      %s33 = scalar_select %p32, 0, %s31
      %s34 = sadd.s32 1, %s23
      %s35 = scalar_select %p32, %s34, %s23
      %p36 = scmp.ge.s32.totalorder %s35, 1
      %s37 = scalar_select %p36, 0, %s35
      %s38 = sadd.s32 1, %s22
      %s39 = scalar_select %p36, %s38, %s22
      %p40 = scmp.ge.s32.totalorder %s39, 2
      %s41 = scalar_select %p40, 0, %s39
      %s42 = ssub.s32 %s22, %s41
      %s43 = ssub.s32 %s24, %s33
      %s44 = sor.u32 %s42, %s43
      %p45 = scmp.eq.s32.totalorder %s44, 0
      %s47 = sadd.s32 %s46, 1
      %s48 = scalar_select %p45, %s46, %s47
      %p51 = pneg %p45
      %p52 = scmp.eq.s32.totalorder %s15, 1
      %p53 = por %p51, %p52
      %p54 = scmp.ne.s32.totalorder %s46, %s49
      %p55 = scmp.eq.s32.totalorder %s15, 0
      %p56 = por %p54, %p55
      %p57 = scmp.ne.s32.totalorder %s46, %s49
      %p58 = scmp.eq.s32.totalorder %s20, 1
      %p59 = por %p57, %p58
      %p60 = scmp.ne.s32.totalorder %s49, %s50
      %p61 = scmp.eq.s32.totalorder %s20, 0
      %p62 = por %p60, %p61
      %p63 = scmp.ne.s32.totalorder %s49, %s50
      %p64 = scmp.eq.s32.totalorder %s21, 1
      %p65 = por %p63, %p64
      %p67 = scmp.ne.s32.totalorder %s50, %s66
      %p68 = scmp.eq.s32.totalorder %s21, 0
      %p69 = por %p67, %p68
      %s70 = ssub.s32 %s22, %s41
      %s71 = ssub.s32 %s24, %s33
      %s72 = sor.u32 %s70, %s71
      %p73 = scmp.eq.s32.totalorder %s72, 0
      %s75 = sadd.s32 %s74, 1
      %s76 = scalar_select %p73, %s74, %s75
      %p79 = pneg %p73
      %p80 = scmp.eq.s32.totalorder %s15, 1
      %p81 = por %p79, %p80
      %p82 = scmp.ne.s32.totalorder %s74, %s77
      %p83 = scmp.eq.s32.totalorder %s15, 0
      %p84 = por %p82, %p83
      %p85 = scmp.ne.s32.totalorder %s74, %s77
      %p86 = scmp.eq.s32.totalorder %s20, 1
      %p87 = por %p85, %p86
      %p88 = scmp.ne.s32.totalorder %s77, %s78
      %p89 = scmp.eq.s32.totalorder %s20, 0
      %p90 = por %p88, %p89
      %p91 = scmp.ne.s32.totalorder %s77, %s78
      %p92 = scmp.eq.s32.totalorder %s21, 1
      %p93 = por %p91, %p92
      %p95 = scmp.ne.s32.totalorder %s78, %s94
      %p96 = scmp.eq.s32.totalorder %s21, 0
      %p97 = por %p95, %p96
      %s98 = ssub.s32 %s22, %s41
      %s99 = ssub.s32 %s24, %s33
      %s100 = sor.u32 %s98, %s99
      %p101 = scmp.eq.s32.totalorder %s100, 0
      %s103 = sadd.s32 %s102, 1
      %s104 = scalar_select %p101, %s102, %s103
      %p107 = pneg %p101
      %p108 = scmp.eq.s32.totalorder %s15, 1
      %p109 = por %p107, %p108
      %p110 = scmp.ne.s32.totalorder %s102, %s105
      %p111 = scmp.eq.s32.totalorder %s15, 0
      %p112 = por %p110, %p111
      %p113 = scmp.ne.s32.totalorder %s102, %s105
      %p114 = scmp.eq.s32.totalorder %s20, 1
      %p115 = por %p113, %p114
      %p116 = scmp.ne.s32.totalorder %s105, %s106
      %p117 = scmp.eq.s32.totalorder %s20, 0
      %p118 = por %p116, %p117
      %p119 = scmp.ne.s32.totalorder %s105, %s106
      %p120 = scmp.eq.s32.totalorder %s21, 1
      %p121 = por %p119, %p120
      %p123 = scmp.ne.s32.totalorder %s106, %s122
      %p124 = scmp.eq.s32.totalorder %s21, 0
      %p125 = por %p123, %p124
      %s126 = ssub.s32 %s22, %s41
      %s127 = ssub.s32 %s23, %s37
      %s128 = sor.u32 %s126, %s127
      %p129 = scmp.eq.s32.totalorder %s128, 0
      %s131 = sadd.s32 %s130, 1
      %s132 = scalar_select %p129, %s130, %s131
      %p135 = pneg %p129
      %p136 = scmp.eq.s32.totalorder %s15, 1
      %p137 = por %p135, %p136
      %p138 = scmp.ne.s32.totalorder %s130, %s133
      %p139 = scmp.eq.s32.totalorder %s15, 0
      %p140 = por %p138, %p139
      %p141 = scmp.ne.s32.totalorder %s130, %s133
      %p142 = scmp.eq.s32.totalorder %s20, 1
      %p143 = por %p141, %p142
      %p144 = scmp.ne.s32.totalorder %s133, %s134
      %p145 = scmp.eq.s32.totalorder %s20, 0
      %p146 = por %p144, %p145
      %p147 = scmp.ne.s32.totalorder %s133, %s134
      %p148 = scmp.eq.s32.totalorder %s21, 1
      %p149 = por %p147, %p148
      %p151 = scmp.ne.s32.totalorder %s134, %s150
      %p152 = scmp.eq.s32.totalorder %s21, 0
      %p153 = por %p151, %p152
      %p154 = scmp.le.s32.totalorder 1, %s15
      %p155 = scmp.lt.s32.totalorder %s15, 3
      %p156 = pnand %p154, %p155
      %p157 = pneg %p156
      // Predicated region
      $region9: #{tpu_custom_call.1} parent=5 // pred_check
        _
      $region10: #{tpu_custom_call.1} parent=5 // pred_check_branch
        %159 = sbr.rel (%p156) target = $region12
      $region11: #{tpu_custom_call.1} parent=5 // pred_region
        %s160 = ssub.s32 %s15, 1
      $region12: #{tpu_custom_call.1} parent=5 // pred_fallthru
        _
      %p161 = scmp.lt.s32.totalorder %s15, 2
      // Predicated region
      $region13: #{tpu_custom_call.1} parent=5 // pred_check
        %p162 = pneg %p161
      $region14: #{tpu_custom_call.1} parent=5 // pred_check_branch
        %164 = sbr.rel (%p162) target = $region16
      $region15: #{tpu_custom_call.1} parent=5 // pred_region
        // Predicated region
        $region17: #{tpu_custom_call.1} parent=15 // pred_check
          %p165 = pneg %p56
        $region18: #{tpu_custom_call.1} parent=15 // pred_check_branch
          %167 = sbr.rel (%p165) target = $region20
        $region19: #{tpu_custom_call.1} parent=15 // pred_region
          %s168 = smul.u32 2, %s24
          %p169 = scmp.lt.s32.totalorder %s22, 1
          %s170 = scalar_select %p169, %s22, 1
          %p171 = scmp.lt.s32.totalorder %s168, 1
          %s172 = scalar_select %p171, %s168, 1
          %s173 = smul.addr %s170, 2
          %s174 = sadd.s32 %s172, %s173
          %s175 = smul.addr %s174, 4
          %s176 = scalar_lea.vmem %s0, %s175
          %s177 = smul.u32 2, %s24
        $region20: #{tpu_custom_call.1} parent=15 // pred_fallthru
          _
        // Predicated region
        $region21: #{tpu_custom_call.1} parent=15 // pred_check
          %p178 = pneg %p84
        $region22: #{tpu_custom_call.1} parent=15 // pred_check_branch
          %180 = sbr.rel (%p178) target = $region24
        $region23: #{tpu_custom_call.1} parent=15 // pred_region
          %s181 = sand.u32 %s74, 1
          %s182 = scalar_lea.sflag [#allocation3], %s181
          %s183 = sand.u32 %s74, 1
          %s184 = smul.addr %s183, 2
          %s185 = scalar_lea.vmem [#allocation2], %s184
          %s186 = smul.u32 2, %s24
          %188 = vsyncadd %s182, 0
          %s189 = smul.addr %s22, 2
          %s190 = sadd.s32 %s186, %s189
          %s191 = scalar_lea.hbm %s1, %s190
          %s193 = sshll.u32 %s191, 4
          %s194 = int_to_ptr.hbm [resolvable:$true] %s193
          %s195 = sshll.u32 %s185, 4
          %s196 = int_to_ptr.vmem [resolvable:$true] %s195
          %198 = dma.hbm_to_vmem [thread:$0]  %s194, 32, %s196, %s182
        $region24: #{tpu_custom_call.1} parent=15 // pred_fallthru
          _
        // Predicated region
        $region25: #{tpu_custom_call.1} parent=15 // pred_check
          %p199 = pneg %p112
        $region26: #{tpu_custom_call.1} parent=15 // pred_check_branch
          %201 = sbr.rel (%p199) target = $region28
        $region27: #{tpu_custom_call.1} parent=15 // pred_region
          %s202 = smul.u32 2, %s24
          %p203 = scmp.lt.s32.totalorder %s22, 1
          %s204 = scalar_select %p203, %s22, 1
          %p205 = scmp.lt.s32.totalorder %s202, 1
          %s206 = scalar_select %p205, %s202, 1
          %s207 = smul.addr %s204, 2
          %s208 = sadd.s32 %s206, %s207
          %s209 = smul.addr %s208, 4
          %s210 = scalar_lea.vmem %s2, %s209
          %s211 = smul.u32 2, %s24
        $region28: #{tpu_custom_call.1} parent=15 // pred_fallthru
          _
      $region16: #{tpu_custom_call.1} parent=5 // pred_fallthru
        _
      %p212 = scmp.le.s32.totalorder 1, %s15
      %p213 = scmp.lt.s32.totalorder %s15, 3
      %p214 = pnand %p212, %p213
      %p215 = pneg %p214
      // Predicated region
      $region29: #{tpu_custom_call.1} parent=5 // pred_check
        _
      $region30: #{tpu_custom_call.1} parent=5 // pred_check_branch
        %217 = sbr.rel (%p214) target = $region32
      $region31: #{tpu_custom_call.1} parent=5 // pred_region
        %s218 = ssub.s32 %s15, 1
        %s219 = sand.u32 %s77, 1
        %s220 = scalar_lea.sflag [#allocation3], %s219
        %s221 = sand.u32 %s77, 1
        %s222 = smul.addr %s221, 2
        %s223 = scalar_lea.vmem [#allocation2], %s222
        // Predicated region
        $region33: #{tpu_custom_call.1} parent=31 // pred_check
          %p224 = pneg %p90
        $region34: #{tpu_custom_call.1} parent=31 // pred_check_branch
          %226 = sbr.rel (%p224) target = $region36
        $region35: #{tpu_custom_call.1} parent=31 // pred_region
          %228 = dma.done %s220, 32
        $region36: #{tpu_custom_call.1} parent=31 // pred_fallthru
          _
        %s229 = smul.u32 2, %s27
        %p230 = scmp.lt.s32.totalorder %s25, 1
        %s231 = scalar_select %p230, %s25, 1
        %p232 = scmp.lt.s32.totalorder %s229, 1
        %s233 = scalar_select %p232, %s229, 1
        %s234 = smul.addr %s231, 2
        %s235 = sadd.s32 %s233, %s234
        %s236 = smul.addr %s235, 4
        %s237 = scalar_lea.vmem %s0, %s236
        %p238 = pneg %p62
        %p239 = pneg %p59
        %s240 = sand.u32 %s77, 1
        %s241 = scalar_lea.sflag [#allocation3], %s240
        %s242 = sand.u32 %s77, 1
        %s243 = smul.addr %s242, 2
        %s244 = scalar_lea.vmem [#allocation2], %s243
        %p245 = pneg %p90
        %p246 = pneg %p87
        %s247 = smul.u32 2, %s27
        %p248 = scmp.lt.s32.totalorder %s25, 1
        %s249 = scalar_select %p248, %s25, 1
        %p250 = scmp.lt.s32.totalorder %s247, 1
        %s251 = scalar_select %p250, %s247, 1
        %s252 = smul.addr %s249, 2
        %s253 = sadd.s32 %s251, %s252
        %s254 = smul.addr %s253, 4
        %s255 = scalar_lea.vmem %s2, %s254
        %p256 = pneg %p118
        %p257 = pneg %p115
        %p258 = pneg %p146
        %p259 = pneg %p143
        %s260 = sand.u32 %s133, 1
        %s261 = scalar_lea.sflag [#allocation4], %s260
        %s262 = sand.u32 %s133, 1
        %s263 = smul.addr %s262, 1440
        %s264 = scalar_lea.vmem [#allocation5], %s263
        %s265 = smul.u32 2, %s27
        %p266 = scmp.lt.s32.totalorder %s25, 1
        %s267 = scalar_select %p266, %s25, 1
        %p268 = scmp.lt.s32.totalorder %s265, 1
        %s269 = scalar_select %p268, %s265, 1
        %s270 = smul.addr %s267, 2
        %s271 = sadd.s32 %s269, %s270
        %s272 = smul.addr %s271, 4
        %s273 = scalar_lea.vmem %s0, %s272
        %s274 = smul.u32 2, %s27
        %s275 = smul.u32 2, %s27
        %s276 = smul.u32 2, %s27
        %p277 = scmp.lt.s32.totalorder %s25, 1
        %s278 = scalar_select %p277, %s25, 1
        %p279 = scmp.lt.s32.totalorder %s276, 1
        %s280 = scalar_select %p279, %s276, 1
        %s281 = smul.addr %s278, 2
        %s282 = sadd.s32 %s280, %s281
        %s283 = smul.addr %s282, 4
        %s284 = scalar_lea.vmem %s2, %s283
        %s285 = smul.u32 2, %s27
        %s286 = smul.u32 9, %s26
        %v287 = vld [vmem:[%s273] sm:$0x77]
        %v288 = vld [vmem:[%s223] sm:$0x3]
        %v289 = vld [vmem:[%s284] sm:$0x77]
        %v290 = vmul.f32 %v287, 31.999968
        %v291 = vlaneseq
        %v292 = vshrl.u32 %v291, 7
        %v293 = vadd.s32 %v292, 8
        %v294 = vadd.s32 %v292, 16
        %v295 = vadd.s32 %v292, 24
        %v296 = vadd.s32 %v292, 32
        %v297 = vcvt.s32.f32 %v292
        %v298 = vcvt.s32.f32 %v293
        %v299 = vcvt.s32.f32 %v294
        %v300 = vcvt.s32.f32 %v295
        %v301 = vcvt.s32.f32 %v296
        %v303 = vperm.slane %v290, 0
        %v304 = vperm.slane %v290, 4
        %v307 = vperm.slane %v303, 0
        %v308 = vperm.slane %v304, 0
        %v309 = vsub.f32 %v307, %v297
        %v310 = vsub.f32 %v308, %v297
        %v311 = vsub.f32 %v307, %v298
        %v312 = vsub.f32 %v308, %v298
        %v313 = vsub.f32 %v307, %v299
        %v314 = vsub.f32 %v308, %v299
        %v315 = vsub.f32 %v307, %v300
        %v316 = vsub.f32 %v308, %v300
        %v317 = vsub.f32 %v307, %v301
        %v318 = vsub.f32 %v308, %v301
        %v319 = vand.u32 2147483647, %v309
        %v320 = vand.u32 2147483647, %v310
        %v321 = vand.u32 2147483647, %v311
        %v322 = vand.u32 2147483647, %v312
        %v323 = vand.u32 2147483647, %v313
        %v324 = vand.u32 2147483647, %v314
        %v325 = vand.u32 2147483647, %v315
        %v326 = vand.u32 2147483647, %v316
        %v327 = vand.u32 2147483647, %v317
        %v328 = vand.u32 2147483647, %v318
        %v329 = vsub.f32 1.0, %v319
        %v330 = vsub.f32 1.0, %v320
        %v331 = vsub.f32 1.0, %v321
        %v332 = vsub.f32 1.0, %v322
        %v333 = vsub.f32 1.0, %v323
        %v334 = vsub.f32 1.0, %v324
        %v335 = vsub.f32 1.0, %v325
        %v336 = vsub.f32 1.0, %v326
        %v337 = vsub.f32 1.0, %v327
        %v338 = vsub.f32 1.0, %v328
        %v339 = vmax.f32 %v329, 0.0
        %v340 = vmax.f32 %v330, 0.0
        %v341 = vmax.f32 %v331, 0.0
        %v342 = vmax.f32 %v332, 0.0
        %v343 = vmax.f32 %v333, 0.0
        %v344 = vmax.f32 %v334, 0.0
        %v345 = vmax.f32 %v335, 0.0
        %v346 = vmax.f32 %v336, 0.0
        %v347 = vmax.f32 %v337, 0.0
        %v348 = vmax.f32 %v338, 0.0
        %v350 = vperm.slane %v288, 0
        %v351 = vperm.slane %v288, 1
        %v352 = vrot.slane %v351, 4
        %vm353 = vcmask 1043456
        %v354 = vsel %vm353, %v350, %v352
        %v356 = vmul.f32 %v289, %v354
        %v358 = vperm.slane %v356, 0
        %v359 = vperm.slane %v356, 4
        %v362 = vperm.slane %v358, 0
        %v363 = vperm.slane %v359, 0
        %v364 = vmul.f32 %v339, %v362
        %v365 = vmul.f32 %v340, %v363
        %v366 = vmul.f32 %v341, %v362
        %v367 = vmul.f32 %v342, %v363
        %v368 = vmul.f32 %v343, %v362
        %v369 = vmul.f32 %v344, %v363
        %v370 = vmul.f32 %v345, %v362
        %v371 = vmul.f32 %v346, %v363
        %v372 = vmul.f32 %v347, %v362
        %v373 = vmul.f32 %v348, %v363
        %v374 = vperm.slane %v356, 1
        %v375 = vperm.slane %v356, 5
        %v378 = vperm.slane %v374, 1
        %v379 = vperm.slane %v375, 1
        %v380 = vmul.f32 %v339, %v378
        %v381 = vmul.f32 %v340, %v379
        %v382 = vmul.f32 %v341, %v378
        %v383 = vmul.f32 %v342, %v379
        %v384 = vmul.f32 %v343, %v378
        %v385 = vmul.f32 %v344, %v379
        %v386 = vmul.f32 %v345, %v378
        %v387 = vmul.f32 %v346, %v379
        %v388 = vmul.f32 %v347, %v378
        %v389 = vmul.f32 %v348, %v379
        %v390 = vperm.slane %v356, 2
        %v391 = vperm.slane %v356, 6
        %v394 = vperm.slane %v390, 2
        %v395 = vperm.slane %v391, 2
        %v396 = vmul.f32 %v339, %v394
        %v397 = vmul.f32 %v340, %v395
        %v398 = vmul.f32 %v341, %v394
        %v399 = vmul.f32 %v342, %v395
        %v400 = vmul.f32 %v343, %v394
        %v401 = vmul.f32 %v344, %v395
        %v402 = vmul.f32 %v345, %v394
        %v403 = vmul.f32 %v346, %v395
        %v404 = vmul.f32 %v347, %v394
        %v405 = vmul.f32 %v348, %v395
        %v408 = vmul.f32 %v339, %v350
        %v409 = vmul.f32 %v340, %v351
        %v410 = vmul.f32 %v341, %v350
        %v411 = vmul.f32 %v342, %v351
        %v412 = vmul.f32 %v343, %v350
        %v413 = vmul.f32 %v344, %v351
        %v414 = vmul.f32 %v345, %v350
        %v415 = vmul.f32 %v346, %v351
        %v416 = vmul.f32 %v347, %v350
        %v417 = vmul.f32 %v348, %v351
        %v418 = vadd.s32 %v292, 40
        %v419 = vadd.s32 %v292, 48
        %v420 = vadd.s32 %v292, 56
        %v421 = vadd.s32 %v292, 64
        %v422 = vadd.s32 %v292, 72
        %v423 = vadd.s32 %v292, 80
        %v424 = vadd.s32 %v292, 88
        %v425 = vadd.s32 %v292, 96
        %v426 = vadd.s32 %v292, 104
        %v427 = vadd.s32 %v292, 112
        %v428 = vadd.s32 %v292, 120
        %v429 = vadd.s32 %v292, 128
        %v430 = vadd.s32 %v292, 136
        %v431 = vadd.s32 %v292, 144
        %v432 = vadd.s32 %v292, 152
        %v433 = vadd.s32 %v292, 160
        %v434 = vadd.s32 %v292, 168
        %v435 = vadd.s32 %v292, 176
        %v436 = vadd.s32 %v292, 184
        %v437 = vadd.s32 %v292, 192
        %v438 = vadd.s32 %v292, 200
        %v439 = vadd.s32 %v292, 208
        %v440 = vadd.s32 %v292, 216
        %v441 = vadd.s32 %v292, 224
        %v442 = vadd.s32 %v292, 232
        %v443 = vadd.s32 %v292, 240
        %v444 = vadd.s32 %v292, 248
        %v445 = vadd.s32 %v292, 256
        %v446 = vadd.s32 %v292, 264
        %v447 = vadd.s32 %v292, 272
        %v448 = vadd.s32 %v292, 280
        %v449 = vadd.s32 %v292, 288
        %v450 = vadd.s32 %v292, 296
        %v451 = vadd.s32 %v292, 304
        %v452 = vadd.s32 %v292, 312
        %v453 = vadd.s32 %v292, 320
        %v454 = vadd.s32 %v292, 328
        %v455 = vadd.s32 %v292, 336
        %v456 = vadd.s32 %v292, 344
        %v457 = vadd.s32 %v292, 352
        %v458 = vadd.s32 %v292, 360
        %v459 = vadd.s32 %v292, 368
        %v460 = vadd.s32 %v292, 376
        %v461 = vadd.s32 %v292, 384
        %v462 = vadd.s32 %v292, 392
        %v463 = vadd.s32 %v292, 400
        %v464 = vadd.s32 %v292, 408
        %v465 = vadd.s32 %v292, 416
        %v466 = vadd.s32 %v292, 424
        %v467 = vadd.s32 %v292, 432
        %v468 = vadd.s32 %v292, 440
        %v469 = vadd.s32 %v292, 448
        %v470 = vadd.s32 %v292, 456
        %v471 = vadd.s32 %v292, 464
        %v472 = vadd.s32 %v292, 472
        %v473 = vadd.s32 %v292, 480
        %v474 = vadd.s32 %v292, 488
        %v475 = vadd.s32 %v292, 496
        %v476 = vadd.s32 %v292, 504
        %v477 = vadd.s32 %v292, 512
        %v478 = vadd.s32 %v292, 520
        %v479 = vadd.s32 %v292, 528
        %v480 = vadd.s32 %v292, 536
        %v481 = vadd.s32 %v292, 544
        %v482 = vadd.s32 %v292, 552
        %v483 = vadd.s32 %v292, 560
        %v484 = vadd.s32 %v292, 568
        %v485 = vadd.s32 %v292, 576
        %v486 = vadd.s32 %v292, 584
        %v487 = vadd.s32 %v292, 592
        %v488 = vadd.s32 %v292, 600
        %v489 = vadd.s32 %v292, 608
        %v490 = vadd.s32 %v292, 616
        %v491 = vadd.s32 %v292, 624
        %v492 = vadd.s32 %v292, 632
        %v493 = vadd.s32 %v292, 640
        %v494 = vadd.s32 %v292, 648
        %v495 = vadd.s32 %v292, 656
        %v496 = vadd.s32 %v292, 664
        %v497 = vadd.s32 %v292, 672
        %v498 = vadd.s32 %v292, 680
        %v499 = vadd.s32 %v292, 688
        %v500 = vadd.s32 %v292, 696
        %v501 = vadd.s32 %v292, 704
        %v502 = vadd.s32 %v292, 712
        %v503 = vadd.s32 %v292, 720
        %v504 = vadd.s32 %v292, 728
        %v505 = vadd.s32 %v292, 736
        %v506 = vadd.s32 %v292, 744
        %v507 = vadd.s32 %v292, 752
        %v508 = vadd.s32 %v292, 760
        %v509 = vadd.s32 %v292, 768
        %v510 = vadd.s32 %v292, 776
        %v511 = vadd.s32 %v292, 784
        %v512 = vadd.s32 %v292, 792
        %v513 = vadd.s32 %v292, 800
        %v514 = vadd.s32 %v292, 808
        %v515 = vadd.s32 %v292, 816
        %v516 = vadd.s32 %v292, 824
        %v517 = vadd.s32 %v292, 832
        %v518 = vadd.s32 %v292, 840
        %v519 = vadd.s32 %v292, 848
        %v520 = vadd.s32 %v292, 856
        %v521 = vadd.s32 %v292, 864
        %v522 = vadd.s32 %v292, 872
        %v523 = vadd.s32 %v292, 880
        %v524 = vadd.s32 %v292, 888
        %v525 = vadd.s32 %v292, 896
        %v526 = vadd.s32 %v292, 904
        %v527 = vadd.s32 %v292, 912
        %v528 = vadd.s32 %v292, 920
        %v529 = vadd.s32 %v292, 928
        %v530 = vadd.s32 %v292, 936
        %v531 = vadd.s32 %v292, 944
        %v532 = vadd.s32 %v292, 952
        %v533 = vadd.s32 %v292, 960
        %v534 = vadd.s32 %v292, 968
        %v535 = vadd.s32 %v292, 976
        %v536 = vadd.s32 %v292, 984
        %v537 = vadd.s32 %v292, 992
        %v538 = vadd.s32 %v292, 1000
        %v539 = vadd.s32 %v292, 1008
        %v540 = vadd.s32 %v292, 1016
        %v541 = vadd.s32 %v292, 1024
        %v542 = vadd.s32 %v292, 1032
        %v543 = vadd.s32 %v292, 1040
        %v544 = vadd.s32 %v292, 1048
        %v545 = vadd.s32 %v292, 1056
        %v546 = vadd.s32 %v292, 1064
        %v547 = vadd.s32 %v292, 1072
        %v548 = vadd.s32 %v292, 1080
        %v549 = vadd.s32 %v292, 1088
        %v550 = vadd.s32 %v292, 1096
        %v551 = vadd.s32 %v292, 1104
        %v552 = vadd.s32 %v292, 1112
        %v553 = vadd.s32 %v292, 1120
        %v554 = vadd.s32 %v292, 1128
        %v555 = vadd.s32 %v292, 1136
        %v556 = vadd.s32 %v292, 1144
        %s557 = smul.u32 %s26, 1152
        %v558 = vstv %s557
        %v559 = vadd.s32 %v292, %v558
        %v560 = vadd.s32 %v293, %v558
        %v561 = vadd.s32 %v294, %v558
        %v562 = vadd.s32 %v295, %v558
        %v563 = vadd.s32 %v296, %v558
        %v564 = vadd.s32 %v418, %v558
        %v565 = vadd.s32 %v419, %v558
        %v566 = vadd.s32 %v420, %v558
        %v567 = vadd.s32 %v421, %v558
        %v568 = vadd.s32 %v422, %v558
        %v569 = vadd.s32 %v423, %v558
        %v570 = vadd.s32 %v424, %v558
        %v571 = vadd.s32 %v425, %v558
        %v572 = vadd.s32 %v426, %v558
        %v573 = vadd.s32 %v427, %v558
        %v574 = vadd.s32 %v428, %v558
        %v575 = vadd.s32 %v429, %v558
        %v576 = vadd.s32 %v430, %v558
        %v577 = vadd.s32 %v431, %v558
        %v578 = vadd.s32 %v432, %v558
        %v579 = vadd.s32 %v433, %v558
        %v580 = vadd.s32 %v434, %v558
        %v581 = vadd.s32 %v435, %v558
        %v582 = vadd.s32 %v436, %v558
        %v583 = vadd.s32 %v437, %v558
        %v584 = vadd.s32 %v438, %v558
        %v585 = vadd.s32 %v439, %v558
        %v586 = vadd.s32 %v440, %v558
        %v587 = vadd.s32 %v441, %v558
        %v588 = vadd.s32 %v442, %v558
        %v589 = vadd.s32 %v443, %v558
        %v590 = vadd.s32 %v444, %v558
        %v591 = vadd.s32 %v445, %v558
        %v592 = vadd.s32 %v446, %v558
        %v593 = vadd.s32 %v447, %v558
        %v594 = vadd.s32 %v448, %v558
        %v595 = vadd.s32 %v449, %v558
        %v596 = vadd.s32 %v450, %v558
        %v597 = vadd.s32 %v451, %v558
        %v598 = vadd.s32 %v452, %v558
        %v599 = vadd.s32 %v453, %v558
        %v600 = vadd.s32 %v454, %v558
        %v601 = vadd.s32 %v455, %v558
        %v602 = vadd.s32 %v456, %v558
        %v603 = vadd.s32 %v457, %v558
        %v604 = vadd.s32 %v458, %v558
        %v605 = vadd.s32 %v459, %v558
        %v606 = vadd.s32 %v460, %v558
        %v607 = vadd.s32 %v461, %v558
        %v608 = vadd.s32 %v462, %v558
        %v609 = vadd.s32 %v463, %v558
        %v610 = vadd.s32 %v464, %v558
        %v611 = vadd.s32 %v465, %v558
        %v612 = vadd.s32 %v466, %v558
        %v613 = vadd.s32 %v467, %v558
        %v614 = vadd.s32 %v468, %v558
        %v615 = vadd.s32 %v469, %v558
        %v616 = vadd.s32 %v470, %v558
        %v617 = vadd.s32 %v471, %v558
        %v618 = vadd.s32 %v472, %v558
        %v619 = vadd.s32 %v473, %v558
        %v620 = vadd.s32 %v474, %v558
        %v621 = vadd.s32 %v475, %v558
        %v622 = vadd.s32 %v476, %v558
        %v623 = vadd.s32 %v477, %v558
        %v624 = vadd.s32 %v478, %v558
        %v625 = vadd.s32 %v479, %v558
        %v626 = vadd.s32 %v480, %v558
        %v627 = vadd.s32 %v481, %v558
        %v628 = vadd.s32 %v482, %v558
        %v629 = vadd.s32 %v483, %v558
        %v630 = vadd.s32 %v484, %v558
        %v631 = vadd.s32 %v485, %v558
        %v632 = vadd.s32 %v486, %v558
        %v633 = vadd.s32 %v487, %v558
        %v634 = vadd.s32 %v488, %v558
        %v635 = vadd.s32 %v489, %v558
        %v636 = vadd.s32 %v490, %v558
        %v637 = vadd.s32 %v491, %v558
        %v638 = vadd.s32 %v492, %v558
        %v639 = vadd.s32 %v493, %v558
        %v640 = vadd.s32 %v494, %v558
        %v641 = vadd.s32 %v495, %v558
        %v642 = vadd.s32 %v496, %v558
        %v643 = vadd.s32 %v497, %v558
        %v644 = vadd.s32 %v498, %v558
        %v645 = vadd.s32 %v499, %v558
        %v646 = vadd.s32 %v500, %v558
        %v647 = vadd.s32 %v501, %v558
        %v648 = vadd.s32 %v502, %v558
        %v649 = vadd.s32 %v503, %v558
        %v650 = vadd.s32 %v504, %v558
        %v651 = vadd.s32 %v505, %v558
        %v652 = vadd.s32 %v506, %v558
        %v653 = vadd.s32 %v507, %v558
        %v654 = vadd.s32 %v508, %v558
        %v655 = vadd.s32 %v509, %v558
        %v656 = vadd.s32 %v510, %v558
        %v657 = vadd.s32 %v511, %v558
        %v658 = vadd.s32 %v512, %v558
        %v659 = vadd.s32 %v513, %v558
        %v660 = vadd.s32 %v514, %v558
        %v661 = vadd.s32 %v515, %v558
        %v662 = vadd.s32 %v516, %v558
        %v663 = vadd.s32 %v517, %v558
        %v664 = vadd.s32 %v518, %v558
        %v665 = vadd.s32 %v519, %v558
        %v666 = vadd.s32 %v520, %v558
        %v667 = vadd.s32 %v521, %v558
        %v668 = vadd.s32 %v522, %v558
        %v669 = vadd.s32 %v523, %v558
        %v670 = vadd.s32 %v524, %v558
        %v671 = vadd.s32 %v525, %v558
        %v672 = vadd.s32 %v526, %v558
        %v673 = vadd.s32 %v527, %v558
        %v674 = vadd.s32 %v528, %v558
        %v675 = vadd.s32 %v529, %v558
        %v676 = vadd.s32 %v530, %v558
        %v677 = vadd.s32 %v531, %v558
        %v678 = vadd.s32 %v532, %v558
        %v679 = vadd.s32 %v533, %v558
        %v680 = vadd.s32 %v534, %v558
        %v681 = vadd.s32 %v535, %v558
        %v682 = vadd.s32 %v536, %v558
        %v683 = vadd.s32 %v537, %v558
        %v684 = vadd.s32 %v538, %v558
        %v685 = vadd.s32 %v539, %v558
        %v686 = vadd.s32 %v540, %v558
        %v687 = vadd.s32 %v541, %v558
        %v688 = vadd.s32 %v542, %v558
        %v689 = vadd.s32 %v543, %v558
        %v690 = vadd.s32 %v544, %v558
        %v691 = vadd.s32 %v545, %v558
        %v692 = vadd.s32 %v546, %v558
        %v693 = vadd.s32 %v547, %v558
        %v694 = vadd.s32 %v548, %v558
        %v695 = vadd.s32 %v549, %v558
        %v696 = vadd.s32 %v550, %v558
        %v697 = vadd.s32 %v551, %v558
        %v698 = vadd.s32 %v552, %v558
        %v699 = vadd.s32 %v553, %v558
        %v700 = vadd.s32 %v554, %v558
        %v701 = vadd.s32 %v555, %v558
        %v702 = vadd.s32 %v556, %v558
        %v703 = vcvt.s32.f32 %v559
        %v704 = vcvt.s32.f32 %v560
        %v705 = vcvt.s32.f32 %v561
        %v706 = vcvt.s32.f32 %v562
        %v707 = vcvt.s32.f32 %v563
        %v708 = vcvt.s32.f32 %v564
        %v709 = vcvt.s32.f32 %v565
        %v710 = vcvt.s32.f32 %v566
        %v711 = vcvt.s32.f32 %v567
        %v712 = vcvt.s32.f32 %v568
        %v713 = vcvt.s32.f32 %v569
        %v714 = vcvt.s32.f32 %v570
        %v715 = vcvt.s32.f32 %v571
        %v716 = vcvt.s32.f32 %v572
        %v717 = vcvt.s32.f32 %v573
        %v718 = vcvt.s32.f32 %v574
        %v719 = vcvt.s32.f32 %v575
        %v720 = vcvt.s32.f32 %v576
        %v721 = vcvt.s32.f32 %v577
        %v722 = vcvt.s32.f32 %v578
        %v723 = vcvt.s32.f32 %v579
        %v724 = vcvt.s32.f32 %v580
        %v725 = vcvt.s32.f32 %v581
        %v726 = vcvt.s32.f32 %v582
        %v727 = vcvt.s32.f32 %v583
        %v728 = vcvt.s32.f32 %v584
        %v729 = vcvt.s32.f32 %v585
        %v730 = vcvt.s32.f32 %v586
        %v731 = vcvt.s32.f32 %v587
        %v732 = vcvt.s32.f32 %v588
        %v733 = vcvt.s32.f32 %v589
        %v734 = vcvt.s32.f32 %v590
        %v735 = vcvt.s32.f32 %v591
        %v736 = vcvt.s32.f32 %v592
        %v737 = vcvt.s32.f32 %v593
        %v738 = vcvt.s32.f32 %v594
        %v739 = vcvt.s32.f32 %v595
        %v740 = vcvt.s32.f32 %v596
        %v741 = vcvt.s32.f32 %v597
        %v742 = vcvt.s32.f32 %v598
        %v743 = vcvt.s32.f32 %v599
        %v744 = vcvt.s32.f32 %v600
        %v745 = vcvt.s32.f32 %v601
        %v746 = vcvt.s32.f32 %v602
        %v747 = vcvt.s32.f32 %v603
        %v748 = vcvt.s32.f32 %v604
        %v749 = vcvt.s32.f32 %v605
        %v750 = vcvt.s32.f32 %v606
        %v751 = vcvt.s32.f32 %v607
        %v752 = vcvt.s32.f32 %v608
        %v753 = vcvt.s32.f32 %v609
        %v754 = vcvt.s32.f32 %v610
        %v755 = vcvt.s32.f32 %v611
        %v756 = vcvt.s32.f32 %v612
        %v757 = vcvt.s32.f32 %v613
        %v758 = vcvt.s32.f32 %v614
        %v759 = vcvt.s32.f32 %v615
        %v760 = vcvt.s32.f32 %v616
        %v761 = vcvt.s32.f32 %v617
        %v762 = vcvt.s32.f32 %v618
        %v763 = vcvt.s32.f32 %v619
        %v764 = vcvt.s32.f32 %v620
        %v765 = vcvt.s32.f32 %v621
        %v766 = vcvt.s32.f32 %v622
        %v767 = vcvt.s32.f32 %v623
        %v768 = vcvt.s32.f32 %v624
        %v769 = vcvt.s32.f32 %v625
        %v770 = vcvt.s32.f32 %v626
        %v771 = vcvt.s32.f32 %v627
        %v772 = vcvt.s32.f32 %v628
        %v773 = vcvt.s32.f32 %v629
        %v774 = vcvt.s32.f32 %v630
        %v775 = vcvt.s32.f32 %v631
        %v776 = vcvt.s32.f32 %v632
        %v777 = vcvt.s32.f32 %v633
        %v778 = vcvt.s32.f32 %v634
        %v779 = vcvt.s32.f32 %v635
        %v780 = vcvt.s32.f32 %v636
        %v781 = vcvt.s32.f32 %v637
        %v782 = vcvt.s32.f32 %v638
        %v783 = vcvt.s32.f32 %v639
        %v784 = vcvt.s32.f32 %v640
        %v785 = vcvt.s32.f32 %v641
        %v786 = vcvt.s32.f32 %v642
        %v787 = vcvt.s32.f32 %v643
        %v788 = vcvt.s32.f32 %v644
        %v789 = vcvt.s32.f32 %v645
        %v790 = vcvt.s32.f32 %v646
        %v791 = vcvt.s32.f32 %v647
        %v792 = vcvt.s32.f32 %v648
        %v793 = vcvt.s32.f32 %v649
        %v794 = vcvt.s32.f32 %v650
        %v795 = vcvt.s32.f32 %v651
        %v796 = vcvt.s32.f32 %v652
        %v797 = vcvt.s32.f32 %v653
        %v798 = vcvt.s32.f32 %v654
        %v799 = vcvt.s32.f32 %v655
        %v800 = vcvt.s32.f32 %v656
        %v801 = vcvt.s32.f32 %v657
        %v802 = vcvt.s32.f32 %v658
        %v803 = vcvt.s32.f32 %v659
        %v804 = vcvt.s32.f32 %v660
        %v805 = vcvt.s32.f32 %v661
        %v806 = vcvt.s32.f32 %v662
        %v807 = vcvt.s32.f32 %v663
        %v808 = vcvt.s32.f32 %v664
        %v809 = vcvt.s32.f32 %v665
        %v810 = vcvt.s32.f32 %v666
        %v811 = vcvt.s32.f32 %v667
        %v812 = vcvt.s32.f32 %v668
        %v813 = vcvt.s32.f32 %v669
        %v814 = vcvt.s32.f32 %v670
        %v815 = vcvt.s32.f32 %v671
        %v816 = vcvt.s32.f32 %v672
        %v817 = vcvt.s32.f32 %v673
        %v818 = vcvt.s32.f32 %v674
        %v819 = vcvt.s32.f32 %v675
        %v820 = vcvt.s32.f32 %v676
        %v821 = vcvt.s32.f32 %v677
        %v822 = vcvt.s32.f32 %v678
        %v823 = vcvt.s32.f32 %v679
        %v824 = vcvt.s32.f32 %v680
        %v825 = vcvt.s32.f32 %v681
        %v826 = vcvt.s32.f32 %v682
        %v827 = vcvt.s32.f32 %v683
        %v828 = vcvt.s32.f32 %v684
        %v829 = vcvt.s32.f32 %v685
        %v830 = vcvt.s32.f32 %v686
        %v831 = vcvt.s32.f32 %v687
        %v832 = vcvt.s32.f32 %v688
        %v833 = vcvt.s32.f32 %v689
        %v834 = vcvt.s32.f32 %v690
        %v835 = vcvt.s32.f32 %v691
        %v836 = vcvt.s32.f32 %v692
        %v837 = vcvt.s32.f32 %v693
        %v838 = vcvt.s32.f32 %v694
        %v839 = vcvt.s32.f32 %v695
        %v840 = vcvt.s32.f32 %v696
        %v841 = vcvt.s32.f32 %v697
        %v842 = vcvt.s32.f32 %v698
        %v843 = vcvt.s32.f32 %v699
        %v844 = vcvt.s32.f32 %v700
        %v845 = vcvt.s32.f32 %v701
        %v846 = vcvt.s32.f32 %v702
        %v847 = vmul.f32 %v703, 0.030303031
        %v848 = vmul.f32 %v704, 0.030303031
        %v849 = vmul.f32 %v705, 0.030303031
        %v850 = vmul.f32 %v706, 0.030303031
        %v851 = vmul.f32 %v707, 0.030303031
        %v852 = vmul.f32 %v708, 0.030303031
        %v853 = vmul.f32 %v709, 0.030303031
        %v854 = vmul.f32 %v710, 0.030303031
        %v855 = vmul.f32 %v711, 0.030303031
        %v856 = vmul.f32 %v712, 0.030303031
        %v857 = vmul.f32 %v713, 0.030303031
        %v858 = vmul.f32 %v714, 0.030303031
        %v859 = vmul.f32 %v715, 0.030303031
        %v860 = vmul.f32 %v716, 0.030303031
        %v861 = vmul.f32 %v717, 0.030303031
        %v862 = vmul.f32 %v718, 0.030303031
        %v863 = vmul.f32 %v719, 0.030303031
        %v864 = vmul.f32 %v720, 0.030303031
        %v865 = vmul.f32 %v721, 0.030303031
        %v866 = vmul.f32 %v722, 0.030303031
        %v867 = vmul.f32 %v723, 0.030303031
        %v868 = vmul.f32 %v724, 0.030303031
        %v869 = vmul.f32 %v725, 0.030303031
        %v870 = vmul.f32 %v726, 0.030303031
        %v871 = vmul.f32 %v727, 0.030303031
        %v872 = vmul.f32 %v728, 0.030303031
        %v873 = vmul.f32 %v729, 0.030303031
        %v874 = vmul.f32 %v730, 0.030303031
        %v875 = vmul.f32 %v731, 0.030303031
        %v876 = vmul.f32 %v732, 0.030303031
        %v877 = vmul.f32 %v733, 0.030303031
        %v878 = vmul.f32 %v734, 0.030303031
        %v879 = vmul.f32 %v735, 0.030303031
        %v880 = vmul.f32 %v736, 0.030303031
        %v881 = vmul.f32 %v737, 0.030303031
        %v882 = vmul.f32 %v738, 0.030303031
        %v883 = vmul.f32 %v739, 0.030303031
        %v884 = vmul.f32 %v740, 0.030303031
        %v885 = vmul.f32 %v741, 0.030303031
        %v886 = vmul.f32 %v742, 0.030303031
        %v887 = vmul.f32 %v743, 0.030303031
        %v888 = vmul.f32 %v744, 0.030303031
        %v889 = vmul.f32 %v745, 0.030303031
        %v890 = vmul.f32 %v746, 0.030303031
        %v891 = vmul.f32 %v747, 0.030303031
        %v892 = vmul.f32 %v748, 0.030303031
        %v893 = vmul.f32 %v749, 0.030303031
        %v894 = vmul.f32 %v750, 0.030303031
        %v895 = vmul.f32 %v751, 0.030303031
        %v896 = vmul.f32 %v752, 0.030303031
        %v897 = vmul.f32 %v753, 0.030303031
        %v898 = vmul.f32 %v754, 0.030303031
        %v899 = vmul.f32 %v755, 0.030303031
        %v900 = vmul.f32 %v756, 0.030303031
        %v901 = vmul.f32 %v757, 0.030303031
        %v902 = vmul.f32 %v758, 0.030303031
        %v903 = vmul.f32 %v759, 0.030303031
        %v904 = vmul.f32 %v760, 0.030303031
        %v905 = vmul.f32 %v761, 0.030303031
        %v906 = vmul.f32 %v762, 0.030303031
        %v907 = vmul.f32 %v763, 0.030303031
        %v908 = vmul.f32 %v764, 0.030303031
        %v909 = vmul.f32 %v765, 0.030303031
        %v910 = vmul.f32 %v766, 0.030303031
        %v911 = vmul.f32 %v767, 0.030303031
        %v912 = vmul.f32 %v768, 0.030303031
        %v913 = vmul.f32 %v769, 0.030303031
        %v914 = vmul.f32 %v770, 0.030303031
        %v915 = vmul.f32 %v771, 0.030303031
        %v916 = vmul.f32 %v772, 0.030303031
        %v917 = vmul.f32 %v773, 0.030303031
        %v918 = vmul.f32 %v774, 0.030303031
        %v919 = vmul.f32 %v775, 0.030303031
        %v920 = vmul.f32 %v776, 0.030303031
        %v921 = vmul.f32 %v777, 0.030303031
        %v922 = vmul.f32 %v778, 0.030303031
        %v923 = vmul.f32 %v779, 0.030303031
        %v924 = vmul.f32 %v780, 0.030303031
        %v925 = vmul.f32 %v781, 0.030303031
        %v926 = vmul.f32 %v782, 0.030303031
        %v927 = vmul.f32 %v783, 0.030303031
        %v928 = vmul.f32 %v784, 0.030303031
        %v929 = vmul.f32 %v785, 0.030303031
        %v930 = vmul.f32 %v786, 0.030303031
        %v931 = vmul.f32 %v787, 0.030303031
        %v932 = vmul.f32 %v788, 0.030303031
        %v933 = vmul.f32 %v789, 0.030303031
        %v934 = vmul.f32 %v790, 0.030303031
        %v935 = vmul.f32 %v791, 0.030303031
        %v936 = vmul.f32 %v792, 0.030303031
        %v937 = vmul.f32 %v793, 0.030303031
        %v938 = vmul.f32 %v794, 0.030303031
        %v939 = vmul.f32 %v795, 0.030303031
        %v940 = vmul.f32 %v796, 0.030303031
        %v941 = vmul.f32 %v797, 0.030303031
        %v942 = vmul.f32 %v798, 0.030303031
        %v943 = vmul.f32 %v799, 0.030303031
        %v944 = vmul.f32 %v800, 0.030303031
        %v945 = vmul.f32 %v801, 0.030303031
        %v946 = vmul.f32 %v802, 0.030303031
        %v947 = vmul.f32 %v803, 0.030303031
        %v948 = vmul.f32 %v804, 0.030303031
        %v949 = vmul.f32 %v805, 0.030303031
        %v950 = vmul.f32 %v806, 0.030303031
        %v951 = vmul.f32 %v807, 0.030303031
        %v952 = vmul.f32 %v808, 0.030303031
        %v953 = vmul.f32 %v809, 0.030303031
        %v954 = vmul.f32 %v810, 0.030303031
        %v955 = vmul.f32 %v811, 0.030303031
        %v956 = vmul.f32 %v812, 0.030303031
        %v957 = vmul.f32 %v813, 0.030303031
        %v958 = vmul.f32 %v814, 0.030303031
        %v959 = vmul.f32 %v815, 0.030303031
        %v960 = vmul.f32 %v816, 0.030303031
        %v961 = vmul.f32 %v817, 0.030303031
        %v962 = vmul.f32 %v818, 0.030303031
        %v963 = vmul.f32 %v819, 0.030303031
        %v964 = vmul.f32 %v820, 0.030303031
        %v965 = vmul.f32 %v821, 0.030303031
        %v966 = vmul.f32 %v822, 0.030303031
        %v967 = vmul.f32 %v823, 0.030303031
        %v968 = vmul.f32 %v824, 0.030303031
        %v969 = vmul.f32 %v825, 0.030303031
        %v970 = vmul.f32 %v826, 0.030303031
        %v971 = vmul.f32 %v827, 0.030303031
        %v972 = vmul.f32 %v828, 0.030303031
        %v973 = vmul.f32 %v829, 0.030303031
        %v974 = vmul.f32 %v830, 0.030303031
        %v975 = vmul.f32 %v831, 0.030303031
        %v976 = vmul.f32 %v832, 0.030303031
        %v977 = vmul.f32 %v833, 0.030303031
        %v978 = vmul.f32 %v834, 0.030303031
        %v979 = vmul.f32 %v835, 0.030303031
        %v980 = vmul.f32 %v836, 0.030303031
        %v981 = vmul.f32 %v837, 0.030303031
        %v982 = vmul.f32 %v838, 0.030303031
        %v983 = vmul.f32 %v839, 0.030303031
        %v984 = vmul.f32 %v840, 0.030303031
        %v985 = vmul.f32 %v841, 0.030303031
        %v986 = vmul.f32 %v842, 0.030303031
        %v987 = vmul.f32 %v843, 0.030303031
        %v988 = vmul.f32 %v844, 0.030303031
        %v989 = vmul.f32 %v845, 0.030303031
        %v990 = vmul.f32 %v846, 0.030303031
        %v991 = vadd.f32 %v847, 0.001
        %v992 = vadd.f32 %v848, 0.001
        %v993 = vadd.f32 %v849, 0.001
        %v994 = vadd.f32 %v850, 0.001
        %v995 = vadd.f32 %v851, 0.001
        %v996 = vadd.f32 %v852, 0.001
        %v997 = vadd.f32 %v853, 0.001
        %v998 = vadd.f32 %v854, 0.001
        %v999 = vadd.f32 %v855, 0.001
        %v1000 = vadd.f32 %v856, 0.001
        %v1001 = vadd.f32 %v857, 0.001
        %v1002 = vadd.f32 %v858, 0.001
        %v1003 = vadd.f32 %v859, 0.001
        %v1004 = vadd.f32 %v860, 0.001
        %v1005 = vadd.f32 %v861, 0.001
        %v1006 = vadd.f32 %v862, 0.001
        %v1007 = vadd.f32 %v863, 0.001
        %v1008 = vadd.f32 %v864, 0.001
        %v1009 = vadd.f32 %v865, 0.001
        %v1010 = vadd.f32 %v866, 0.001
        %v1011 = vadd.f32 %v867, 0.001
        %v1012 = vadd.f32 %v868, 0.001
        %v1013 = vadd.f32 %v869, 0.001
        %v1014 = vadd.f32 %v870, 0.001
        %v1015 = vadd.f32 %v871, 0.001
        %v1016 = vadd.f32 %v872, 0.001
        %v1017 = vadd.f32 %v873, 0.001
        %v1018 = vadd.f32 %v874, 0.001
        %v1019 = vadd.f32 %v875, 0.001
        %v1020 = vadd.f32 %v876, 0.001
        %v1021 = vadd.f32 %v877, 0.001
        %v1022 = vadd.f32 %v878, 0.001
        %v1023 = vadd.f32 %v879, 0.001
        %v1024 = vadd.f32 %v880, 0.001
        %v1025 = vadd.f32 %v881, 0.001
        %v1026 = vadd.f32 %v882, 0.001
        %v1027 = vadd.f32 %v883, 0.001
        %v1028 = vadd.f32 %v884, 0.001
        %v1029 = vadd.f32 %v885, 0.001
        %v1030 = vadd.f32 %v886, 0.001
        %v1031 = vadd.f32 %v887, 0.001
        %v1032 = vadd.f32 %v888, 0.001
        %v1033 = vadd.f32 %v889, 0.001
        %v1034 = vadd.f32 %v890, 0.001
        %v1035 = vadd.f32 %v891, 0.001
        %v1036 = vadd.f32 %v892, 0.001
        %v1037 = vadd.f32 %v893, 0.001
        %v1038 = vadd.f32 %v894, 0.001
        %v1039 = vadd.f32 %v895, 0.001
        %v1040 = vadd.f32 %v896, 0.001
        %v1041 = vadd.f32 %v897, 0.001
        %v1042 = vadd.f32 %v898, 0.001
        %v1043 = vadd.f32 %v899, 0.001
        %v1044 = vadd.f32 %v900, 0.001
        %v1045 = vadd.f32 %v901, 0.001
        %v1046 = vadd.f32 %v902, 0.001
        %v1047 = vadd.f32 %v903, 0.001
        %v1048 = vadd.f32 %v904, 0.001
        %v1049 = vadd.f32 %v905, 0.001
        %v1050 = vadd.f32 %v906, 0.001
        %v1051 = vadd.f32 %v907, 0.001
        %v1052 = vadd.f32 %v908, 0.001
        %v1053 = vadd.f32 %v909, 0.001
        %v1054 = vadd.f32 %v910, 0.001
        %v1055 = vadd.f32 %v911, 0.001
        %v1056 = vadd.f32 %v912, 0.001
        %v1057 = vadd.f32 %v913, 0.001
        %v1058 = vadd.f32 %v914, 0.001
        %v1059 = vadd.f32 %v915, 0.001
        %v1060 = vadd.f32 %v916, 0.001
        %v1061 = vadd.f32 %v917, 0.001
        %v1062 = vadd.f32 %v918, 0.001
        %v1063 = vadd.f32 %v919, 0.001
        %v1064 = vadd.f32 %v920, 0.001
        %v1065 = vadd.f32 %v921, 0.001
        %v1066 = vadd.f32 %v922, 0.001
        %v1067 = vadd.f32 %v923, 0.001
        %v1068 = vadd.f32 %v924, 0.001
        %v1069 = vadd.f32 %v925, 0.001
        %v1070 = vadd.f32 %v926, 0.001
        %v1071 = vadd.f32 %v927, 0.001
        %v1072 = vadd.f32 %v928, 0.001
        %v1073 = vadd.f32 %v929, 0.001
        %v1074 = vadd.f32 %v930, 0.001
        %v1075 = vadd.f32 %v931, 0.001
        %v1076 = vadd.f32 %v932, 0.001
        %v1077 = vadd.f32 %v933, 0.001
        %v1078 = vadd.f32 %v934, 0.001
        %v1079 = vadd.f32 %v935, 0.001
        %v1080 = vadd.f32 %v936, 0.001
        %v1081 = vadd.f32 %v937, 0.001
        %v1082 = vadd.f32 %v938, 0.001
        %v1083 = vadd.f32 %v939, 0.001
        %v1084 = vadd.f32 %v940, 0.001
        %v1085 = vadd.f32 %v941, 0.001
        %v1086 = vadd.f32 %v942, 0.001
        %v1087 = vadd.f32 %v943, 0.001
        %v1088 = vadd.f32 %v944, 0.001
        %v1089 = vadd.f32 %v945, 0.001
        %v1090 = vadd.f32 %v946, 0.001
        %v1091 = vadd.f32 %v947, 0.001
        %v1092 = vadd.f32 %v948, 0.001
        %v1093 = vadd.f32 %v949, 0.001
        %v1094 = vadd.f32 %v950, 0.001
        %v1095 = vadd.f32 %v951, 0.001
        %v1096 = vadd.f32 %v952, 0.001
        %v1097 = vadd.f32 %v953, 0.001
        %v1098 = vadd.f32 %v954, 0.001
        %v1099 = vadd.f32 %v955, 0.001
        %v1100 = vadd.f32 %v956, 0.001
        %v1101 = vadd.f32 %v957, 0.001
        %v1102 = vadd.f32 %v958, 0.001
        %v1103 = vadd.f32 %v959, 0.001
        %v1104 = vadd.f32 %v960, 0.001
        %v1105 = vadd.f32 %v961, 0.001
        %v1106 = vadd.f32 %v962, 0.001
        %v1107 = vadd.f32 %v963, 0.001
        %v1108 = vadd.f32 %v964, 0.001
        %v1109 = vadd.f32 %v965, 0.001
        %v1110 = vadd.f32 %v966, 0.001
        %v1111 = vadd.f32 %v967, 0.001
        %v1112 = vadd.f32 %v968, 0.001
        %v1113 = vadd.f32 %v969, 0.001
        %v1114 = vadd.f32 %v970, 0.001
        %v1115 = vadd.f32 %v971, 0.001
        %v1116 = vadd.f32 %v972, 0.001
        %v1117 = vadd.f32 %v973, 0.001
        %v1118 = vadd.f32 %v974, 0.001
        %v1119 = vadd.f32 %v975, 0.001
        %v1120 = vadd.f32 %v976, 0.001
        %v1121 = vadd.f32 %v977, 0.001
        %v1122 = vadd.f32 %v978, 0.001
        %v1123 = vadd.f32 %v979, 0.001
        %v1124 = vadd.f32 %v980, 0.001
        %v1125 = vadd.f32 %v981, 0.001
        %v1126 = vadd.f32 %v982, 0.001
        %v1127 = vadd.f32 %v983, 0.001
        %v1128 = vadd.f32 %v984, 0.001
        %v1129 = vadd.f32 %v985, 0.001
        %v1130 = vadd.f32 %v986, 0.001
        %v1131 = vadd.f32 %v987, 0.001
        %v1132 = vadd.f32 %v988, 0.001
        %v1133 = vadd.f32 %v989, 0.001
        %v1134 = vadd.f32 %v990, 0.001
        %v1135 = vfloor.f32 %v991
        %v1136 = vfloor.f32 %v992
        %v1137 = vfloor.f32 %v993
        %v1138 = vfloor.f32 %v994
        %v1139 = vfloor.f32 %v995
        %v1140 = vfloor.f32 %v996
        %v1141 = vfloor.f32 %v997
        %v1142 = vfloor.f32 %v998
        %v1143 = vfloor.f32 %v999
        %v1144 = vfloor.f32 %v1000
        %v1145 = vfloor.f32 %v1001
        %v1146 = vfloor.f32 %v1002
        %v1147 = vfloor.f32 %v1003
        %v1148 = vfloor.f32 %v1004
        %v1149 = vfloor.f32 %v1005
        %v1150 = vfloor.f32 %v1006
        %v1151 = vfloor.f32 %v1007
        %v1152 = vfloor.f32 %v1008
        %v1153 = vfloor.f32 %v1009
        %v1154 = vfloor.f32 %v1010
        %v1155 = vfloor.f32 %v1011
        %v1156 = vfloor.f32 %v1012
        %v1157 = vfloor.f32 %v1013
        %v1158 = vfloor.f32 %v1014
        %v1159 = vfloor.f32 %v1015
        %v1160 = vfloor.f32 %v1016
        %v1161 = vfloor.f32 %v1017
        %v1162 = vfloor.f32 %v1018
        %v1163 = vfloor.f32 %v1019
        %v1164 = vfloor.f32 %v1020
        %v1165 = vfloor.f32 %v1021
        %v1166 = vfloor.f32 %v1022
        %v1167 = vfloor.f32 %v1023
        %v1168 = vfloor.f32 %v1024
        %v1169 = vfloor.f32 %v1025
        %v1170 = vfloor.f32 %v1026
        %v1171 = vfloor.f32 %v1027
        %v1172 = vfloor.f32 %v1028
        %v1173 = vfloor.f32 %v1029
        %v1174 = vfloor.f32 %v1030
        %v1175 = vfloor.f32 %v1031
        %v1176 = vfloor.f32 %v1032
        %v1177 = vfloor.f32 %v1033
        %v1178 = vfloor.f32 %v1034
        %v1179 = vfloor.f32 %v1035
        %v1180 = vfloor.f32 %v1036
        %v1181 = vfloor.f32 %v1037
        %v1182 = vfloor.f32 %v1038
        %v1183 = vfloor.f32 %v1039
        %v1184 = vfloor.f32 %v1040
        %v1185 = vfloor.f32 %v1041
        %v1186 = vfloor.f32 %v1042
        %v1187 = vfloor.f32 %v1043
        %v1188 = vfloor.f32 %v1044
        %v1189 = vfloor.f32 %v1045
        %v1190 = vfloor.f32 %v1046
        %v1191 = vfloor.f32 %v1047
        %v1192 = vfloor.f32 %v1048
        %v1193 = vfloor.f32 %v1049
        %v1194 = vfloor.f32 %v1050
        %v1195 = vfloor.f32 %v1051
        %v1196 = vfloor.f32 %v1052
        %v1197 = vfloor.f32 %v1053
        %v1198 = vfloor.f32 %v1054
        %v1199 = vfloor.f32 %v1055
        %v1200 = vfloor.f32 %v1056
        %v1201 = vfloor.f32 %v1057
        %v1202 = vfloor.f32 %v1058
        %v1203 = vfloor.f32 %v1059
        %v1204 = vfloor.f32 %v1060
        %v1205 = vfloor.f32 %v1061
        %v1206 = vfloor.f32 %v1062
        %v1207 = vfloor.f32 %v1063
        %v1208 = vfloor.f32 %v1064
        %v1209 = vfloor.f32 %v1065
        %v1210 = vfloor.f32 %v1066
        %v1211 = vfloor.f32 %v1067
        %v1212 = vfloor.f32 %v1068
        %v1213 = vfloor.f32 %v1069
        %v1214 = vfloor.f32 %v1070
        %v1215 = vfloor.f32 %v1071
        %v1216 = vfloor.f32 %v1072
        %v1217 = vfloor.f32 %v1073
        %v1218 = vfloor.f32 %v1074
        %v1219 = vfloor.f32 %v1075
        %v1220 = vfloor.f32 %v1076
        %v1221 = vfloor.f32 %v1077
        %v1222 = vfloor.f32 %v1078
        %v1223 = vfloor.f32 %v1079
        %v1224 = vfloor.f32 %v1080
        %v1225 = vfloor.f32 %v1081
        %v1226 = vfloor.f32 %v1082
        %v1227 = vfloor.f32 %v1083
        %v1228 = vfloor.f32 %v1084
        %v1229 = vfloor.f32 %v1085
        %v1230 = vfloor.f32 %v1086
        %v1231 = vfloor.f32 %v1087
        %v1232 = vfloor.f32 %v1088
        %v1233 = vfloor.f32 %v1089
        %v1234 = vfloor.f32 %v1090
        %v1235 = vfloor.f32 %v1091
        %v1236 = vfloor.f32 %v1092
        %v1237 = vfloor.f32 %v1093
        %v1238 = vfloor.f32 %v1094
        %v1239 = vfloor.f32 %v1095
        %v1240 = vfloor.f32 %v1096
        %v1241 = vfloor.f32 %v1097
        %v1242 = vfloor.f32 %v1098
        %v1243 = vfloor.f32 %v1099
        %v1244 = vfloor.f32 %v1100
        %v1245 = vfloor.f32 %v1101
        %v1246 = vfloor.f32 %v1102
        %v1247 = vfloor.f32 %v1103
        %v1248 = vfloor.f32 %v1104
        %v1249 = vfloor.f32 %v1105
        %v1250 = vfloor.f32 %v1106
        %v1251 = vfloor.f32 %v1107
        %v1252 = vfloor.f32 %v1108
        %v1253 = vfloor.f32 %v1109
        %v1254 = vfloor.f32 %v1110
        %v1255 = vfloor.f32 %v1111
        %v1256 = vfloor.f32 %v1112
        %v1257 = vfloor.f32 %v1113
        %v1258 = vfloor.f32 %v1114
        %v1259 = vfloor.f32 %v1115
        %v1260 = vfloor.f32 %v1116
        %v1261 = vfloor.f32 %v1117
        %v1262 = vfloor.f32 %v1118
        %v1263 = vfloor.f32 %v1119
        %v1264 = vfloor.f32 %v1120
        %v1265 = vfloor.f32 %v1121
        %v1266 = vfloor.f32 %v1122
        %v1267 = vfloor.f32 %v1123
        %v1268 = vfloor.f32 %v1124
        %v1269 = vfloor.f32 %v1125
        %v1270 = vfloor.f32 %v1126
        %v1271 = vfloor.f32 %v1127
        %v1272 = vfloor.f32 %v1128
        %v1273 = vfloor.f32 %v1129
        %v1274 = vfloor.f32 %v1130
        %v1275 = vfloor.f32 %v1131
        %v1276 = vfloor.f32 %v1132
        %v1277 = vfloor.f32 %v1133
        %v1278 = vfloor.f32 %v1134
        %v1279 = vmul.f32 %v1135, 33.0
        %v1280 = vmul.f32 %v1136, 33.0
        %v1281 = vmul.f32 %v1137, 33.0
        %v1282 = vmul.f32 %v1138, 33.0
        %v1283 = vmul.f32 %v1139, 33.0
        %v1284 = vmul.f32 %v1140, 33.0
        %v1285 = vmul.f32 %v1141, 33.0
        %v1286 = vmul.f32 %v1142, 33.0
        %v1287 = vmul.f32 %v1143, 33.0
        %v1288 = vmul.f32 %v1144, 33.0
        %v1289 = vmul.f32 %v1145, 33.0
        %v1290 = vmul.f32 %v1146, 33.0
        %v1291 = vmul.f32 %v1147, 33.0
        %v1292 = vmul.f32 %v1148, 33.0
        %v1293 = vmul.f32 %v1149, 33.0
        %v1294 = vmul.f32 %v1150, 33.0
        %v1295 = vmul.f32 %v1151, 33.0
        %v1296 = vmul.f32 %v1152, 33.0
        %v1297 = vmul.f32 %v1153, 33.0
        %v1298 = vmul.f32 %v1154, 33.0
        %v1299 = vmul.f32 %v1155, 33.0
        %v1300 = vmul.f32 %v1156, 33.0
        %v1301 = vmul.f32 %v1157, 33.0
        %v1302 = vmul.f32 %v1158, 33.0
        %v1303 = vmul.f32 %v1159, 33.0
        %v1304 = vmul.f32 %v1160, 33.0
        %v1305 = vmul.f32 %v1161, 33.0
        %v1306 = vmul.f32 %v1162, 33.0
        %v1307 = vmul.f32 %v1163, 33.0
        %v1308 = vmul.f32 %v1164, 33.0
        %v1309 = vmul.f32 %v1165, 33.0
        %v1310 = vmul.f32 %v1166, 33.0
        %v1311 = vmul.f32 %v1167, 33.0
        %v1312 = vmul.f32 %v1168, 33.0
        %v1313 = vmul.f32 %v1169, 33.0
        %v1314 = vmul.f32 %v1170, 33.0
        %v1315 = vmul.f32 %v1171, 33.0
        %v1316 = vmul.f32 %v1172, 33.0
        %v1317 = vmul.f32 %v1173, 33.0
        %v1318 = vmul.f32 %v1174, 33.0
        %v1319 = vmul.f32 %v1175, 33.0
        %v1320 = vmul.f32 %v1176, 33.0
        %v1321 = vmul.f32 %v1177, 33.0
        %v1322 = vmul.f32 %v1178, 33.0
        %v1323 = vmul.f32 %v1179, 33.0
        %v1324 = vmul.f32 %v1180, 33.0
        %v1325 = vmul.f32 %v1181, 33.0
        %v1326 = vmul.f32 %v1182, 33.0
        %v1327 = vmul.f32 %v1183, 33.0
        %v1328 = vmul.f32 %v1184, 33.0
        %v1329 = vmul.f32 %v1185, 33.0
        %v1330 = vmul.f32 %v1186, 33.0
        %v1331 = vmul.f32 %v1187, 33.0
        %v1332 = vmul.f32 %v1188, 33.0
        %v1333 = vmul.f32 %v1189, 33.0
        %v1334 = vmul.f32 %v1190, 33.0
        %v1335 = vmul.f32 %v1191, 33.0
        %v1336 = vmul.f32 %v1192, 33.0
        %v1337 = vmul.f32 %v1193, 33.0
        %v1338 = vmul.f32 %v1194, 33.0
        %v1339 = vmul.f32 %v1195, 33.0
        %v1340 = vmul.f32 %v1196, 33.0
        %v1341 = vmul.f32 %v1197, 33.0
        %v1342 = vmul.f32 %v1198, 33.0
        %v1343 = vmul.f32 %v1199, 33.0
        %v1344 = vmul.f32 %v1200, 33.0
        %v1345 = vmul.f32 %v1201, 33.0
        %v1346 = vmul.f32 %v1202, 33.0
        %v1347 = vmul.f32 %v1203, 33.0
        %v1348 = vmul.f32 %v1204, 33.0
        %v1349 = vmul.f32 %v1205, 33.0
        %v1350 = vmul.f32 %v1206, 33.0
        %v1351 = vmul.f32 %v1207, 33.0
        %v1352 = vmul.f32 %v1208, 33.0
        %v1353 = vmul.f32 %v1209, 33.0
        %v1354 = vmul.f32 %v1210, 33.0
        %v1355 = vmul.f32 %v1211, 33.0
        %v1356 = vmul.f32 %v1212, 33.0
        %v1357 = vmul.f32 %v1213, 33.0
        %v1358 = vmul.f32 %v1214, 33.0
        %v1359 = vmul.f32 %v1215, 33.0
        %v1360 = vmul.f32 %v1216, 33.0
        %v1361 = vmul.f32 %v1217, 33.0
        %v1362 = vmul.f32 %v1218, 33.0
        %v1363 = vmul.f32 %v1219, 33.0
        %v1364 = vmul.f32 %v1220, 33.0
        %v1365 = vmul.f32 %v1221, 33.0
        %v1366 = vmul.f32 %v1222, 33.0
        %v1367 = vmul.f32 %v1223, 33.0
        %v1368 = vmul.f32 %v1224, 33.0
        %v1369 = vmul.f32 %v1225, 33.0
        %v1370 = vmul.f32 %v1226, 33.0
        %v1371 = vmul.f32 %v1227, 33.0
        %v1372 = vmul.f32 %v1228, 33.0
        %v1373 = vmul.f32 %v1229, 33.0
        %v1374 = vmul.f32 %v1230, 33.0
        %v1375 = vmul.f32 %v1231, 33.0
        %v1376 = vmul.f32 %v1232, 33.0
        %v1377 = vmul.f32 %v1233, 33.0
        %v1378 = vmul.f32 %v1234, 33.0
        %v1379 = vmul.f32 %v1235, 33.0
        %v1380 = vmul.f32 %v1236, 33.0
        %v1381 = vmul.f32 %v1237, 33.0
        %v1382 = vmul.f32 %v1238, 33.0
        %v1383 = vmul.f32 %v1239, 33.0
        %v1384 = vmul.f32 %v1240, 33.0
        %v1385 = vmul.f32 %v1241, 33.0
        %v1386 = vmul.f32 %v1242, 33.0
        %v1387 = vmul.f32 %v1243, 33.0
        %v1388 = vmul.f32 %v1244, 33.0
        %v1389 = vmul.f32 %v1245, 33.0
        %v1390 = vmul.f32 %v1246, 33.0
        %v1391 = vmul.f32 %v1247, 33.0
        %v1392 = vmul.f32 %v1248, 33.0
        %v1393 = vmul.f32 %v1249, 33.0
        %v1394 = vmul.f32 %v1250, 33.0
        %v1395 = vmul.f32 %v1251, 33.0
        %v1396 = vmul.f32 %v1252, 33.0
        %v1397 = vmul.f32 %v1253, 33.0
        %v1398 = vmul.f32 %v1254, 33.0
        %v1399 = vmul.f32 %v1255, 33.0
        %v1400 = vmul.f32 %v1256, 33.0
        %v1401 = vmul.f32 %v1257, 33.0
        %v1402 = vmul.f32 %v1258, 33.0
        %v1403 = vmul.f32 %v1259, 33.0
        %v1404 = vmul.f32 %v1260, 33.0
        %v1405 = vmul.f32 %v1261, 33.0
        %v1406 = vmul.f32 %v1262, 33.0
        %v1407 = vmul.f32 %v1263, 33.0
        %v1408 = vmul.f32 %v1264, 33.0
        %v1409 = vmul.f32 %v1265, 33.0
        %v1410 = vmul.f32 %v1266, 33.0
        %v1411 = vmul.f32 %v1267, 33.0
        %v1412 = vmul.f32 %v1268, 33.0
        %v1413 = vmul.f32 %v1269, 33.0
        %v1414 = vmul.f32 %v1270, 33.0
        %v1415 = vmul.f32 %v1271, 33.0
        %v1416 = vmul.f32 %v1272, 33.0
        %v1417 = vmul.f32 %v1273, 33.0
        %v1418 = vmul.f32 %v1274, 33.0
        %v1419 = vmul.f32 %v1275, 33.0
        %v1420 = vmul.f32 %v1276, 33.0
        %v1421 = vmul.f32 %v1277, 33.0
        %v1422 = vmul.f32 %v1278, 33.0
        %v1423 = vsub.f32 %v703, %v1279
        %v1424 = vsub.f32 %v704, %v1280
        %v1425 = vsub.f32 %v705, %v1281
        %v1426 = vsub.f32 %v706, %v1282
        %v1427 = vsub.f32 %v707, %v1283
        %v1428 = vsub.f32 %v708, %v1284
        %v1429 = vsub.f32 %v709, %v1285
        %v1430 = vsub.f32 %v710, %v1286
        %v1431 = vsub.f32 %v711, %v1287
        %v1432 = vsub.f32 %v712, %v1288
        %v1433 = vsub.f32 %v713, %v1289
        %v1434 = vsub.f32 %v714, %v1290
        %v1435 = vsub.f32 %v715, %v1291
        %v1436 = vsub.f32 %v716, %v1292
        %v1437 = vsub.f32 %v717, %v1293
        %v1438 = vsub.f32 %v718, %v1294
        %v1439 = vsub.f32 %v719, %v1295
        %v1440 = vsub.f32 %v720, %v1296
        %v1441 = vsub.f32 %v721, %v1297
        %v1442 = vsub.f32 %v722, %v1298
        %v1443 = vsub.f32 %v723, %v1299
        %v1444 = vsub.f32 %v724, %v1300
        %v1445 = vsub.f32 %v725, %v1301
        %v1446 = vsub.f32 %v726, %v1302
        %v1447 = vsub.f32 %v727, %v1303
        %v1448 = vsub.f32 %v728, %v1304
        %v1449 = vsub.f32 %v729, %v1305
        %v1450 = vsub.f32 %v730, %v1306
        %v1451 = vsub.f32 %v731, %v1307
        %v1452 = vsub.f32 %v732, %v1308
        %v1453 = vsub.f32 %v733, %v1309
        %v1454 = vsub.f32 %v734, %v1310
        %v1455 = vsub.f32 %v735, %v1311
        %v1456 = vsub.f32 %v736, %v1312
        %v1457 = vsub.f32 %v737, %v1313
        %v1458 = vsub.f32 %v738, %v1314
        %v1459 = vsub.f32 %v739, %v1315
        %v1460 = vsub.f32 %v740, %v1316
        %v1461 = vsub.f32 %v741, %v1317
        %v1462 = vsub.f32 %v742, %v1318
        %v1463 = vsub.f32 %v743, %v1319
        %v1464 = vsub.f32 %v744, %v1320
        %v1465 = vsub.f32 %v745, %v1321
        %v1466 = vsub.f32 %v746, %v1322
        %v1467 = vsub.f32 %v747, %v1323
        %v1468 = vsub.f32 %v748, %v1324
        %v1469 = vsub.f32 %v749, %v1325
        %v1470 = vsub.f32 %v750, %v1326
        %v1471 = vsub.f32 %v751, %v1327
        %v1472 = vsub.f32 %v752, %v1328
        %v1473 = vsub.f32 %v753, %v1329
        %v1474 = vsub.f32 %v754, %v1330
        %v1475 = vsub.f32 %v755, %v1331
        %v1476 = vsub.f32 %v756, %v1332
        %v1477 = vsub.f32 %v757, %v1333
        %v1478 = vsub.f32 %v758, %v1334
        %v1479 = vsub.f32 %v759, %v1335
        %v1480 = vsub.f32 %v760, %v1336
        %v1481 = vsub.f32 %v761, %v1337
        %v1482 = vsub.f32 %v762, %v1338
        %v1483 = vsub.f32 %v763, %v1339
        %v1484 = vsub.f32 %v764, %v1340
        %v1485 = vsub.f32 %v765, %v1341
        %v1486 = vsub.f32 %v766, %v1342
        %v1487 = vsub.f32 %v767, %v1343
        %v1488 = vsub.f32 %v768, %v1344
        %v1489 = vsub.f32 %v769, %v1345
        %v1490 = vsub.f32 %v770, %v1346
        %v1491 = vsub.f32 %v771, %v1347
        %v1492 = vsub.f32 %v772, %v1348
        %v1493 = vsub.f32 %v773, %v1349
        %v1494 = vsub.f32 %v774, %v1350
        %v1495 = vsub.f32 %v775, %v1351
        %v1496 = vsub.f32 %v776, %v1352
        %v1497 = vsub.f32 %v777, %v1353
        %v1498 = vsub.f32 %v778, %v1354
        %v1499 = vsub.f32 %v779, %v1355
        %v1500 = vsub.f32 %v780, %v1356
        %v1501 = vsub.f32 %v781, %v1357
        %v1502 = vsub.f32 %v782, %v1358
        %v1503 = vsub.f32 %v783, %v1359
        %v1504 = vsub.f32 %v784, %v1360
        %v1505 = vsub.f32 %v785, %v1361
        %v1506 = vsub.f32 %v786, %v1362
        %v1507 = vsub.f32 %v787, %v1363
        %v1508 = vsub.f32 %v788, %v1364
        %v1509 = vsub.f32 %v789, %v1365
        %v1510 = vsub.f32 %v790, %v1366
        %v1511 = vsub.f32 %v791, %v1367
        %v1512 = vsub.f32 %v792, %v1368
        %v1513 = vsub.f32 %v793, %v1369
        %v1514 = vsub.f32 %v794, %v1370
        %v1515 = vsub.f32 %v795, %v1371
        %v1516 = vsub.f32 %v796, %v1372
        %v1517 = vsub.f32 %v797, %v1373
        %v1518 = vsub.f32 %v798, %v1374
        %v1519 = vsub.f32 %v799, %v1375
        %v1520 = vsub.f32 %v800, %v1376
        %v1521 = vsub.f32 %v801, %v1377
        %v1522 = vsub.f32 %v802, %v1378
        %v1523 = vsub.f32 %v803, %v1379
        %v1524 = vsub.f32 %v804, %v1380
        %v1525 = vsub.f32 %v805, %v1381
        %v1526 = vsub.f32 %v806, %v1382
        %v1527 = vsub.f32 %v807, %v1383
        %v1528 = vsub.f32 %v808, %v1384
        %v1529 = vsub.f32 %v809, %v1385
        %v1530 = vsub.f32 %v810, %v1386
        %v1531 = vsub.f32 %v811, %v1387
        %v1532 = vsub.f32 %v812, %v1388
        %v1533 = vsub.f32 %v813, %v1389
        %v1534 = vsub.f32 %v814, %v1390
        %v1535 = vsub.f32 %v815, %v1391
        %v1536 = vsub.f32 %v816, %v1392
        %v1537 = vsub.f32 %v817, %v1393
        %v1538 = vsub.f32 %v818, %v1394
        %v1539 = vsub.f32 %v819, %v1395
        %v1540 = vsub.f32 %v820, %v1396
        %v1541 = vsub.f32 %v821, %v1397
        %v1542 = vsub.f32 %v822, %v1398
        %v1543 = vsub.f32 %v823, %v1399
        %v1544 = vsub.f32 %v824, %v1400
        %v1545 = vsub.f32 %v825, %v1401
        %v1546 = vsub.f32 %v826, %v1402
        %v1547 = vsub.f32 %v827, %v1403
        %v1548 = vsub.f32 %v828, %v1404
        %v1549 = vsub.f32 %v829, %v1405
        %v1550 = vsub.f32 %v830, %v1406
        %v1551 = vsub.f32 %v831, %v1407
        %v1552 = vsub.f32 %v832, %v1408
        %v1553 = vsub.f32 %v833, %v1409
        %v1554 = vsub.f32 %v834, %v1410
        %v1555 = vsub.f32 %v835, %v1411
        %v1556 = vsub.f32 %v836, %v1412
        %v1557 = vsub.f32 %v837, %v1413
        %v1558 = vsub.f32 %v838, %v1414
        %v1559 = vsub.f32 %v839, %v1415
        %v1560 = vsub.f32 %v840, %v1416
        %v1561 = vsub.f32 %v841, %v1417
        %v1562 = vsub.f32 %v842, %v1418
        %v1563 = vsub.f32 %v843, %v1419
        %v1564 = vsub.f32 %v844, %v1420
        %v1565 = vsub.f32 %v845, %v1421
        %v1566 = vsub.f32 %v846, %v1422
        %v1567 = vperm.slane %v290, 2
        %v1568 = vperm.slane %v290, 6
        %v1571 = vperm.slane %v1567, 2
        %v1572 = vperm.slane %v1568, 2
        %v1573 = vsub.f32 %v1571, %v1135
        %v1574 = vsub.f32 %v1572, %v1135
        %v1575 = vsub.f32 %v1571, %v1136
        %v1576 = vsub.f32 %v1572, %v1136
        %v1577 = vsub.f32 %v1571, %v1137
        %v1578 = vsub.f32 %v1572, %v1137
        %v1579 = vsub.f32 %v1571, %v1138
        %v1580 = vsub.f32 %v1572, %v1138
        %v1581 = vsub.f32 %v1571, %v1139
        %v1582 = vsub.f32 %v1572, %v1139
        %v1583 = vsub.f32 %v1571, %v1140
        %v1584 = vsub.f32 %v1572, %v1140
        %v1585 = vsub.f32 %v1571, %v1141
        %v1586 = vsub.f32 %v1572, %v1141
        %v1587 = vsub.f32 %v1571, %v1142
        %v1588 = vsub.f32 %v1572, %v1142
        %v1589 = vsub.f32 %v1571, %v1143
        %v1590 = vsub.f32 %v1572, %v1143
        %v1591 = vsub.f32 %v1571, %v1144
        %v1592 = vsub.f32 %v1572, %v1144
        %v1593 = vsub.f32 %v1571, %v1145
        %v1594 = vsub.f32 %v1572, %v1145
        %v1595 = vsub.f32 %v1571, %v1146
        %v1596 = vsub.f32 %v1572, %v1146
        %v1597 = vsub.f32 %v1571, %v1147
        %v1598 = vsub.f32 %v1572, %v1147
        %v1599 = vsub.f32 %v1571, %v1148
        %v1600 = vsub.f32 %v1572, %v1148
        %v1601 = vsub.f32 %v1571, %v1149
        %v1602 = vsub.f32 %v1572, %v1149
        %v1603 = vsub.f32 %v1571, %v1150
        %v1604 = vsub.f32 %v1572, %v1150
        %v1605 = vsub.f32 %v1571, %v1151
        %v1606 = vsub.f32 %v1572, %v1151
        %v1607 = vsub.f32 %v1571, %v1152
        %v1608 = vsub.f32 %v1572, %v1152
        %v1609 = vsub.f32 %v1571, %v1153
        %v1610 = vsub.f32 %v1572, %v1153
        %v1611 = vsub.f32 %v1571, %v1154
        %v1612 = vsub.f32 %v1572, %v1154
        %v1613 = vsub.f32 %v1571, %v1155
        %v1614 = vsub.f32 %v1572, %v1155
        %v1615 = vsub.f32 %v1571, %v1156
        %v1616 = vsub.f32 %v1572, %v1156
        %v1617 = vsub.f32 %v1571, %v1157
        %v1618 = vsub.f32 %v1572, %v1157
        %v1619 = vsub.f32 %v1571, %v1158
        %v1620 = vsub.f32 %v1572, %v1158
        %v1621 = vsub.f32 %v1571, %v1159
        %v1622 = vsub.f32 %v1572, %v1159
        %v1623 = vsub.f32 %v1571, %v1160
        %v1624 = vsub.f32 %v1572, %v1160
        %v1625 = vsub.f32 %v1571, %v1161
        %v1626 = vsub.f32 %v1572, %v1161
        %v1627 = vsub.f32 %v1571, %v1162
        %v1628 = vsub.f32 %v1572, %v1162
        %v1629 = vsub.f32 %v1571, %v1163
        %v1630 = vsub.f32 %v1572, %v1163
        %v1631 = vsub.f32 %v1571, %v1164
        %v1632 = vsub.f32 %v1572, %v1164
        %v1633 = vsub.f32 %v1571, %v1165
        %v1634 = vsub.f32 %v1572, %v1165
        %v1635 = vsub.f32 %v1571, %v1166
        %v1636 = vsub.f32 %v1572, %v1166
        %v1637 = vsub.f32 %v1571, %v1167
        %v1638 = vsub.f32 %v1572, %v1167
        %v1639 = vsub.f32 %v1571, %v1168
        %v1640 = vsub.f32 %v1572, %v1168
        %v1641 = vsub.f32 %v1571, %v1169
        %v1642 = vsub.f32 %v1572, %v1169
        %v1643 = vsub.f32 %v1571, %v1170
        %v1644 = vsub.f32 %v1572, %v1170
        %v1645 = vsub.f32 %v1571, %v1171
        %v1646 = vsub.f32 %v1572, %v1171
        %v1647 = vsub.f32 %v1571, %v1172
        %v1648 = vsub.f32 %v1572, %v1172
        %v1649 = vsub.f32 %v1571, %v1173
        %v1650 = vsub.f32 %v1572, %v1173
        %v1651 = vsub.f32 %v1571, %v1174
        %v1652 = vsub.f32 %v1572, %v1174
        %v1653 = vsub.f32 %v1571, %v1175
        %v1654 = vsub.f32 %v1572, %v1175
        %v1655 = vsub.f32 %v1571, %v1176
        %v1656 = vsub.f32 %v1572, %v1176
        %v1657 = vsub.f32 %v1571, %v1177
        %v1658 = vsub.f32 %v1572, %v1177
        %v1659 = vsub.f32 %v1571, %v1178
        %v1660 = vsub.f32 %v1572, %v1178
        %v1661 = vsub.f32 %v1571, %v1179
        %v1662 = vsub.f32 %v1572, %v1179
        %v1663 = vsub.f32 %v1571, %v1180
        %v1664 = vsub.f32 %v1572, %v1180
        %v1665 = vsub.f32 %v1571, %v1181
        %v1666 = vsub.f32 %v1572, %v1181
        %v1667 = vsub.f32 %v1571, %v1182
        %v1668 = vsub.f32 %v1572, %v1182
        %v1669 = vsub.f32 %v1571, %v1183
        %v1670 = vsub.f32 %v1572, %v1183
        %v1671 = vsub.f32 %v1571, %v1184
        %v1672 = vsub.f32 %v1572, %v1184
        %v1673 = vsub.f32 %v1571, %v1185
        %v1674 = vsub.f32 %v1572, %v1185
        %v1675 = vsub.f32 %v1571, %v1186
        %v1676 = vsub.f32 %v1572, %v1186
        %v1677 = vsub.f32 %v1571, %v1187
        %v1678 = vsub.f32 %v1572, %v1187
        %v1679 = vsub.f32 %v1571, %v1188
        %v1680 = vsub.f32 %v1572, %v1188
        %v1681 = vsub.f32 %v1571, %v1189
        %v1682 = vsub.f32 %v1572, %v1189
        %v1683 = vsub.f32 %v1571, %v1190
        %v1684 = vsub.f32 %v1572, %v1190
        %v1685 = vsub.f32 %v1571, %v1191
        %v1686 = vsub.f32 %v1572, %v1191
        %v1687 = vsub.f32 %v1571, %v1192
        %v1688 = vsub.f32 %v1572, %v1192
        %v1689 = vsub.f32 %v1571, %v1193
        %v1690 = vsub.f32 %v1572, %v1193
        %v1691 = vsub.f32 %v1571, %v1194
        %v1692 = vsub.f32 %v1572, %v1194
        %v1693 = vsub.f32 %v1571, %v1195
        %v1694 = vsub.f32 %v1572, %v1195
        %v1695 = vsub.f32 %v1571, %v1196
        %v1696 = vsub.f32 %v1572, %v1196
        %v1697 = vsub.f32 %v1571, %v1197
        %v1698 = vsub.f32 %v1572, %v1197
        %v1699 = vsub.f32 %v1571, %v1198
        %v1700 = vsub.f32 %v1572, %v1198
        %v1701 = vsub.f32 %v1571, %v1199
        %v1702 = vsub.f32 %v1572, %v1199
        %v1703 = vsub.f32 %v1571, %v1200
        %v1704 = vsub.f32 %v1572, %v1200
        %v1705 = vsub.f32 %v1571, %v1201
        %v1706 = vsub.f32 %v1572, %v1201
        %v1707 = vsub.f32 %v1571, %v1202
        %v1708 = vsub.f32 %v1572, %v1202
        %v1709 = vsub.f32 %v1571, %v1203
        %v1710 = vsub.f32 %v1572, %v1203
        %v1711 = vsub.f32 %v1571, %v1204
        %v1712 = vsub.f32 %v1572, %v1204
        %v1713 = vsub.f32 %v1571, %v1205
        %v1714 = vsub.f32 %v1572, %v1205
        %v1715 = vsub.f32 %v1571, %v1206
        %v1716 = vsub.f32 %v1572, %v1206
        %v1717 = vsub.f32 %v1571, %v1207
        %v1718 = vsub.f32 %v1572, %v1207
        %v1719 = vsub.f32 %v1571, %v1208
        %v1720 = vsub.f32 %v1572, %v1208
        %v1721 = vsub.f32 %v1571, %v1209
        %v1722 = vsub.f32 %v1572, %v1209
        %v1723 = vsub.f32 %v1571, %v1210
        %v1724 = vsub.f32 %v1572, %v1210
        %v1725 = vsub.f32 %v1571, %v1211
        %v1726 = vsub.f32 %v1572, %v1211
        %v1727 = vsub.f32 %v1571, %v1212
        %v1728 = vsub.f32 %v1572, %v1212
        %v1729 = vsub.f32 %v1571, %v1213
        %v1730 = vsub.f32 %v1572, %v1213
        %v1731 = vsub.f32 %v1571, %v1214
        %v1732 = vsub.f32 %v1572, %v1214
        %v1733 = vsub.f32 %v1571, %v1215
        %v1734 = vsub.f32 %v1572, %v1215
        %v1735 = vsub.f32 %v1571, %v1216
        %v1736 = vsub.f32 %v1572, %v1216
        %v1737 = vsub.f32 %v1571, %v1217
        %v1738 = vsub.f32 %v1572, %v1217
        %v1739 = vsub.f32 %v1571, %v1218
        %v1740 = vsub.f32 %v1572, %v1218
        %v1741 = vsub.f32 %v1571, %v1219
        %v1742 = vsub.f32 %v1572, %v1219
        %v1743 = vsub.f32 %v1571, %v1220
        %v1744 = vsub.f32 %v1572, %v1220
        %v1745 = vsub.f32 %v1571, %v1221
        %v1746 = vsub.f32 %v1572, %v1221
        %v1747 = vsub.f32 %v1571, %v1222
        %v1748 = vsub.f32 %v1572, %v1222
        %v1749 = vsub.f32 %v1571, %v1223
        %v1750 = vsub.f32 %v1572, %v1223
        %v1751 = vsub.f32 %v1571, %v1224
        %v1752 = vsub.f32 %v1572, %v1224
        %v1753 = vsub.f32 %v1571, %v1225
        %v1754 = vsub.f32 %v1572, %v1225
        %v1755 = vsub.f32 %v1571, %v1226
        %v1756 = vsub.f32 %v1572, %v1226
        %v1757 = vsub.f32 %v1571, %v1227
        %v1758 = vsub.f32 %v1572, %v1227
        %v1759 = vsub.f32 %v1571, %v1228
        %v1760 = vsub.f32 %v1572, %v1228
        %v1761 = vsub.f32 %v1571, %v1229
        %v1762 = vsub.f32 %v1572, %v1229
        %v1763 = vsub.f32 %v1571, %v1230
        %v1764 = vsub.f32 %v1572, %v1230
        %v1765 = vsub.f32 %v1571, %v1231
        %v1766 = vsub.f32 %v1572, %v1231
        %v1767 = vsub.f32 %v1571, %v1232
        %v1768 = vsub.f32 %v1572, %v1232
        %v1769 = vsub.f32 %v1571, %v1233
        %v1770 = vsub.f32 %v1572, %v1233
        %v1771 = vsub.f32 %v1571, %v1234
        %v1772 = vsub.f32 %v1572, %v1234
        %v1773 = vsub.f32 %v1571, %v1235
        %v1774 = vsub.f32 %v1572, %v1235
        %v1775 = vsub.f32 %v1571, %v1236
        %v1776 = vsub.f32 %v1572, %v1236
        %v1777 = vsub.f32 %v1571, %v1237
        %v1778 = vsub.f32 %v1572, %v1237
        %v1779 = vsub.f32 %v1571, %v1238
        %v1780 = vsub.f32 %v1572, %v1238
        %v1781 = vsub.f32 %v1571, %v1239
        %v1782 = vsub.f32 %v1572, %v1239
        %v1783 = vsub.f32 %v1571, %v1240
        %v1784 = vsub.f32 %v1572, %v1240
        %v1785 = vsub.f32 %v1571, %v1241
        %v1786 = vsub.f32 %v1572, %v1241
        %v1787 = vsub.f32 %v1571, %v1242
        %v1788 = vsub.f32 %v1572, %v1242
        %v1789 = vsub.f32 %v1571, %v1243
        %v1790 = vsub.f32 %v1572, %v1243
        %v1791 = vsub.f32 %v1571, %v1244
        %v1792 = vsub.f32 %v1572, %v1244
        %v1793 = vsub.f32 %v1571, %v1245
        %v1794 = vsub.f32 %v1572, %v1245
        %v1795 = vsub.f32 %v1571, %v1246
        %v1796 = vsub.f32 %v1572, %v1246
        %v1797 = vsub.f32 %v1571, %v1247
        %v1798 = vsub.f32 %v1572, %v1247
        %v1799 = vsub.f32 %v1571, %v1248
        %v1800 = vsub.f32 %v1572, %v1248
        %v1801 = vsub.f32 %v1571, %v1249
        %v1802 = vsub.f32 %v1572, %v1249
        %v1803 = vsub.f32 %v1571, %v1250
        %v1804 = vsub.f32 %v1572, %v1250
        %v1805 = vsub.f32 %v1571, %v1251
        %v1806 = vsub.f32 %v1572, %v1251
        %v1807 = vsub.f32 %v1571, %v1252
        %v1808 = vsub.f32 %v1572, %v1252
        %v1809 = vsub.f32 %v1571, %v1253
        %v1810 = vsub.f32 %v1572, %v1253
        %v1811 = vsub.f32 %v1571, %v1254
        %v1812 = vsub.f32 %v1572, %v1254
        %v1813 = vsub.f32 %v1571, %v1255
        %v1814 = vsub.f32 %v1572, %v1255
        %v1815 = vsub.f32 %v1571, %v1256
        %v1816 = vsub.f32 %v1572, %v1256
        %v1817 = vsub.f32 %v1571, %v1257
        %v1818 = vsub.f32 %v1572, %v1257
        %v1819 = vsub.f32 %v1571, %v1258
        %v1820 = vsub.f32 %v1572, %v1258
        %v1821 = vsub.f32 %v1571, %v1259
        %v1822 = vsub.f32 %v1572, %v1259
        %v1823 = vsub.f32 %v1571, %v1260
        %v1824 = vsub.f32 %v1572, %v1260
        %v1825 = vsub.f32 %v1571, %v1261
        %v1826 = vsub.f32 %v1572, %v1261
        %v1827 = vsub.f32 %v1571, %v1262
        %v1828 = vsub.f32 %v1572, %v1262
        %v1829 = vsub.f32 %v1571, %v1263
        %v1830 = vsub.f32 %v1572, %v1263
        %v1831 = vsub.f32 %v1571, %v1264
        %v1832 = vsub.f32 %v1572, %v1264
        %v1833 = vsub.f32 %v1571, %v1265
        %v1834 = vsub.f32 %v1572, %v1265
        %v1835 = vsub.f32 %v1571, %v1266
        %v1836 = vsub.f32 %v1572, %v1266
        %v1837 = vsub.f32 %v1571, %v1267
        %v1838 = vsub.f32 %v1572, %v1267
        %v1839 = vsub.f32 %v1571, %v1268
        %v1840 = vsub.f32 %v1572, %v1268
        %v1841 = vsub.f32 %v1571, %v1269
        %v1842 = vsub.f32 %v1572, %v1269
        %v1843 = vsub.f32 %v1571, %v1270
        %v1844 = vsub.f32 %v1572, %v1270
        %v1845 = vsub.f32 %v1571, %v1271
        %v1846 = vsub.f32 %v1572, %v1271
        %v1847 = vsub.f32 %v1571, %v1272
        %v1848 = vsub.f32 %v1572, %v1272
        %v1849 = vsub.f32 %v1571, %v1273
        %v1850 = vsub.f32 %v1572, %v1273
        %v1851 = vsub.f32 %v1571, %v1274
        %v1852 = vsub.f32 %v1572, %v1274
        %v1853 = vsub.f32 %v1571, %v1275
        %v1854 = vsub.f32 %v1572, %v1275
        %v1855 = vsub.f32 %v1571, %v1276
        %v1856 = vsub.f32 %v1572, %v1276
        %v1857 = vsub.f32 %v1571, %v1277
        %v1858 = vsub.f32 %v1572, %v1277
        %v1859 = vsub.f32 %v1571, %v1278
        %v1860 = vsub.f32 %v1572, %v1278
        %v1861 = vand.u32 2147483647, %v1573
        %v1862 = vand.u32 2147483647, %v1574
        %v1863 = vand.u32 2147483647, %v1575
        %v1864 = vand.u32 2147483647, %v1576
        %v1865 = vand.u32 2147483647, %v1577
        %v1866 = vand.u32 2147483647, %v1578
        %v1867 = vand.u32 2147483647, %v1579
        %v1868 = vand.u32 2147483647, %v1580
        %v1869 = vand.u32 2147483647, %v1581
        %v1870 = vand.u32 2147483647, %v1582
        %v1871 = vand.u32 2147483647, %v1583
        %v1872 = vand.u32 2147483647, %v1584
        %v1873 = vand.u32 2147483647, %v1585
        %v1874 = vand.u32 2147483647, %v1586
        %v1875 = vand.u32 2147483647, %v1587
        %v1876 = vand.u32 2147483647, %v1588
        %v1877 = vand.u32 2147483647, %v1589
        %v1878 = vand.u32 2147483647, %v1590
        %v1879 = vand.u32 2147483647, %v1591
        %v1880 = vand.u32 2147483647, %v1592
        %v1881 = vand.u32 2147483647, %v1593
        %v1882 = vand.u32 2147483647, %v1594
        %v1883 = vand.u32 2147483647, %v1595
        %v1884 = vand.u32 2147483647, %v1596
        %v1885 = vand.u32 2147483647, %v1597
        %v1886 = vand.u32 2147483647, %v1598
        %v1887 = vand.u32 2147483647, %v1599
        %v1888 = vand.u32 2147483647, %v1600
        %v1889 = vand.u32 2147483647, %v1601
        %v1890 = vand.u32 2147483647, %v1602
        %v1891 = vand.u32 2147483647, %v1603
        %v1892 = vand.u32 2147483647, %v1604
        %v1893 = vand.u32 2147483647, %v1605
        %v1894 = vand.u32 2147483647, %v1606
        %v1895 = vand.u32 2147483647, %v1607
        %v1896 = vand.u32 2147483647, %v1608
        %v1897 = vand.u32 2147483647, %v1609
        %v1898 = vand.u32 2147483647, %v1610
        %v1899 = vand.u32 2147483647, %v1611
        %v1900 = vand.u32 2147483647, %v1612
        %v1901 = vand.u32 2147483647, %v1613
        %v1902 = vand.u32 2147483647, %v1614
        %v1903 = vand.u32 2147483647, %v1615
        %v1904 = vand.u32 2147483647, %v1616
        %v1905 = vand.u32 2147483647, %v1617
        %v1906 = vand.u32 2147483647, %v1618
        %v1907 = vand.u32 2147483647, %v1619
        %v1908 = vand.u32 2147483647, %v1620
        %v1909 = vand.u32 2147483647, %v1621
        %v1910 = vand.u32 2147483647, %v1622
        %v1911 = vand.u32 2147483647, %v1623
        %v1912 = vand.u32 2147483647, %v1624
        %v1913 = vand.u32 2147483647, %v1625
        %v1914 = vand.u32 2147483647, %v1626
        %v1915 = vand.u32 2147483647, %v1627
        %v1916 = vand.u32 2147483647, %v1628
        %v1917 = vand.u32 2147483647, %v1629
        %v1918 = vand.u32 2147483647, %v1630
        %v1919 = vand.u32 2147483647, %v1631
        %v1920 = vand.u32 2147483647, %v1632
        %v1921 = vand.u32 2147483647, %v1633
        %v1922 = vand.u32 2147483647, %v1634
        %v1923 = vand.u32 2147483647, %v1635
        %v1924 = vand.u32 2147483647, %v1636
        %v1925 = vand.u32 2147483647, %v1637
        %v1926 = vand.u32 2147483647, %v1638
        %v1927 = vand.u32 2147483647, %v1639
        %v1928 = vand.u32 2147483647, %v1640
        %v1929 = vand.u32 2147483647, %v1641
        %v1930 = vand.u32 2147483647, %v1642
        %v1931 = vand.u32 2147483647, %v1643
        %v1932 = vand.u32 2147483647, %v1644
        %v1933 = vand.u32 2147483647, %v1645
        %v1934 = vand.u32 2147483647, %v1646
        %v1935 = vand.u32 2147483647, %v1647
        %v1936 = vand.u32 2147483647, %v1648
        %v1937 = vand.u32 2147483647, %v1649
        %v1938 = vand.u32 2147483647, %v1650
        %v1939 = vand.u32 2147483647, %v1651
        %v1940 = vand.u32 2147483647, %v1652
        %v1941 = vand.u32 2147483647, %v1653
        %v1942 = vand.u32 2147483647, %v1654
        %v1943 = vand.u32 2147483647, %v1655
        %v1944 = vand.u32 2147483647, %v1656
        %v1945 = vand.u32 2147483647, %v1657
        %v1946 = vand.u32 2147483647, %v1658
        %v1947 = vand.u32 2147483647, %v1659
        %v1948 = vand.u32 2147483647, %v1660
        %v1949 = vand.u32 2147483647, %v1661
        %v1950 = vand.u32 2147483647, %v1662
        %v1951 = vand.u32 2147483647, %v1663
        %v1952 = vand.u32 2147483647, %v1664
        %v1953 = vand.u32 2147483647, %v1665
        %v1954 = vand.u32 2147483647, %v1666
        %v1955 = vand.u32 2147483647, %v1667
        %v1956 = vand.u32 2147483647, %v1668
        %v1957 = vand.u32 2147483647, %v1669
        %v1958 = vand.u32 2147483647, %v1670
        %v1959 = vand.u32 2147483647, %v1671
        %v1960 = vand.u32 2147483647, %v1672
        %v1961 = vand.u32 2147483647, %v1673
        %v1962 = vand.u32 2147483647, %v1674
        %v1963 = vand.u32 2147483647, %v1675
        %v1964 = vand.u32 2147483647, %v1676
        %v1965 = vand.u32 2147483647, %v1677
        %v1966 = vand.u32 2147483647, %v1678
        %v1967 = vand.u32 2147483647, %v1679
        %v1968 = vand.u32 2147483647, %v1680
        %v1969 = vand.u32 2147483647, %v1681
        %v1970 = vand.u32 2147483647, %v1682
        %v1971 = vand.u32 2147483647, %v1683
        %v1972 = vand.u32 2147483647, %v1684
        %v1973 = vand.u32 2147483647, %v1685
        %v1974 = vand.u32 2147483647, %v1686
        %v1975 = vand.u32 2147483647, %v1687
        %v1976 = vand.u32 2147483647, %v1688
        %v1977 = vand.u32 2147483647, %v1689
        %v1978 = vand.u32 2147483647, %v1690
        %v1979 = vand.u32 2147483647, %v1691
        %v1980 = vand.u32 2147483647, %v1692
        %v1981 = vand.u32 2147483647, %v1693
        %v1982 = vand.u32 2147483647, %v1694
        %v1983 = vand.u32 2147483647, %v1695
        %v1984 = vand.u32 2147483647, %v1696
        %v1985 = vand.u32 2147483647, %v1697
        %v1986 = vand.u32 2147483647, %v1698
        %v1987 = vand.u32 2147483647, %v1699
        %v1988 = vand.u32 2147483647, %v1700
        %v1989 = vand.u32 2147483647, %v1701
        %v1990 = vand.u32 2147483647, %v1702
        %v1991 = vand.u32 2147483647, %v1703
        %v1992 = vand.u32 2147483647, %v1704
        %v1993 = vand.u32 2147483647, %v1705
        %v1994 = vand.u32 2147483647, %v1706
        %v1995 = vand.u32 2147483647, %v1707
        %v1996 = vand.u32 2147483647, %v1708
        %v1997 = vand.u32 2147483647, %v1709
        %v1998 = vand.u32 2147483647, %v1710
        %v1999 = vand.u32 2147483647, %v1711
        %v2000 = vand.u32 2147483647, %v1712
        %v2001 = vand.u32 2147483647, %v1713
        %v2002 = vand.u32 2147483647, %v1714
        %v2003 = vand.u32 2147483647, %v1715
        %v2004 = vand.u32 2147483647, %v1716
        %v2005 = vand.u32 2147483647, %v1717
        %v2006 = vand.u32 2147483647, %v1718
        %v2007 = vand.u32 2147483647, %v1719
        %v2008 = vand.u32 2147483647, %v1720
        %v2009 = vand.u32 2147483647, %v1721
        %v2010 = vand.u32 2147483647, %v1722
        %v2011 = vand.u32 2147483647, %v1723
        %v2012 = vand.u32 2147483647, %v1724
        %v2013 = vand.u32 2147483647, %v1725
        %v2014 = vand.u32 2147483647, %v1726
        %v2015 = vand.u32 2147483647, %v1727
        %v2016 = vand.u32 2147483647, %v1728
        %v2017 = vand.u32 2147483647, %v1729
        %v2018 = vand.u32 2147483647, %v1730
        %v2019 = vand.u32 2147483647, %v1731
        %v2020 = vand.u32 2147483647, %v1732
        %v2021 = vand.u32 2147483647, %v1733
        %v2022 = vand.u32 2147483647, %v1734
        %v2023 = vand.u32 2147483647, %v1735
        %v2024 = vand.u32 2147483647, %v1736
        %v2025 = vand.u32 2147483647, %v1737
        %v2026 = vand.u32 2147483647, %v1738
        %v2027 = vand.u32 2147483647, %v1739
        %v2028 = vand.u32 2147483647, %v1740
        %v2029 = vand.u32 2147483647, %v1741
        %v2030 = vand.u32 2147483647, %v1742
        %v2031 = vand.u32 2147483647, %v1743
        %v2032 = vand.u32 2147483647, %v1744
        %v2033 = vand.u32 2147483647, %v1745
        %v2034 = vand.u32 2147483647, %v1746
        %v2035 = vand.u32 2147483647, %v1747
        %v2036 = vand.u32 2147483647, %v1748
        %v2037 = vand.u32 2147483647, %v1749
        %v2038 = vand.u32 2147483647, %v1750
        %v2039 = vand.u32 2147483647, %v1751
        %v2040 = vand.u32 2147483647, %v1752
        %v2041 = vand.u32 2147483647, %v1753
        %v2042 = vand.u32 2147483647, %v1754
        %v2043 = vand.u32 2147483647, %v1755
        %v2044 = vand.u32 2147483647, %v1756
        %v2045 = vand.u32 2147483647, %v1757
        %v2046 = vand.u32 2147483647, %v1758
        %v2047 = vand.u32 2147483647, %v1759
        %v2048 = vand.u32 2147483647, %v1760
        %v2049 = vand.u32 2147483647, %v1761
        %v2050 = vand.u32 2147483647, %v1762
        %v2051 = vand.u32 2147483647, %v1763
        %v2052 = vand.u32 2147483647, %v1764
        %v2053 = vand.u32 2147483647, %v1765
        %v2054 = vand.u32 2147483647, %v1766
        %v2055 = vand.u32 2147483647, %v1767
        %v2056 = vand.u32 2147483647, %v1768
        %v2057 = vand.u32 2147483647, %v1769
        %v2058 = vand.u32 2147483647, %v1770
        %v2059 = vand.u32 2147483647, %v1771
        %v2060 = vand.u32 2147483647, %v1772
        %v2061 = vand.u32 2147483647, %v1773
        %v2062 = vand.u32 2147483647, %v1774
        %v2063 = vand.u32 2147483647, %v1775
        %v2064 = vand.u32 2147483647, %v1776
        %v2065 = vand.u32 2147483647, %v1777
        %v2066 = vand.u32 2147483647, %v1778
        %v2067 = vand.u32 2147483647, %v1779
        %v2068 = vand.u32 2147483647, %v1780
        %v2069 = vand.u32 2147483647, %v1781
        %v2070 = vand.u32 2147483647, %v1782
        %v2071 = vand.u32 2147483647, %v1783
        %v2072 = vand.u32 2147483647, %v1784
        %v2073 = vand.u32 2147483647, %v1785
        %v2074 = vand.u32 2147483647, %v1786
        %v2075 = vand.u32 2147483647, %v1787
        %v2076 = vand.u32 2147483647, %v1788
        %v2077 = vand.u32 2147483647, %v1789
        %v2078 = vand.u32 2147483647, %v1790
        %v2079 = vand.u32 2147483647, %v1791
        %v2080 = vand.u32 2147483647, %v1792
        %v2081 = vand.u32 2147483647, %v1793
        %v2082 = vand.u32 2147483647, %v1794
        %v2083 = vand.u32 2147483647, %v1795
        %v2084 = vand.u32 2147483647, %v1796
        %v2085 = vand.u32 2147483647, %v1797
        %v2086 = vand.u32 2147483647, %v1798
        %v2087 = vand.u32 2147483647, %v1799
        %v2088 = vand.u32 2147483647, %v1800
        %v2089 = vand.u32 2147483647, %v1801
        %v2090 = vand.u32 2147483647, %v1802
        %v2091 = vand.u32 2147483647, %v1803
        %v2092 = vand.u32 2147483647, %v1804
        %v2093 = vand.u32 2147483647, %v1805
        %v2094 = vand.u32 2147483647, %v1806
        %v2095 = vand.u32 2147483647, %v1807
        %v2096 = vand.u32 2147483647, %v1808
        %v2097 = vand.u32 2147483647, %v1809
        %v2098 = vand.u32 2147483647, %v1810
        %v2099 = vand.u32 2147483647, %v1811
        %v2100 = vand.u32 2147483647, %v1812
        %v2101 = vand.u32 2147483647, %v1813
        %v2102 = vand.u32 2147483647, %v1814
        %v2103 = vand.u32 2147483647, %v1815
        %v2104 = vand.u32 2147483647, %v1816
        %v2105 = vand.u32 2147483647, %v1817
        %v2106 = vand.u32 2147483647, %v1818
        %v2107 = vand.u32 2147483647, %v1819
        %v2108 = vand.u32 2147483647, %v1820
        %v2109 = vand.u32 2147483647, %v1821
        %v2110 = vand.u32 2147483647, %v1822
        %v2111 = vand.u32 2147483647, %v1823
        %v2112 = vand.u32 2147483647, %v1824
        %v2113 = vand.u32 2147483647, %v1825
        %v2114 = vand.u32 2147483647, %v1826
        %v2115 = vand.u32 2147483647, %v1827
        %v2116 = vand.u32 2147483647, %v1828
        %v2117 = vand.u32 2147483647, %v1829
        %v2118 = vand.u32 2147483647, %v1830
        %v2119 = vand.u32 2147483647, %v1831
        %v2120 = vand.u32 2147483647, %v1832
        %v2121 = vand.u32 2147483647, %v1833
        %v2122 = vand.u32 2147483647, %v1834
        %v2123 = vand.u32 2147483647, %v1835
        %v2124 = vand.u32 2147483647, %v1836
        %v2125 = vand.u32 2147483647, %v1837
        %v2126 = vand.u32 2147483647, %v1838
        %v2127 = vand.u32 2147483647, %v1839
        %v2128 = vand.u32 2147483647, %v1840
        %v2129 = vand.u32 2147483647, %v1841
        %v2130 = vand.u32 2147483647, %v1842
        %v2131 = vand.u32 2147483647, %v1843
        %v2132 = vand.u32 2147483647, %v1844
        %v2133 = vand.u32 2147483647, %v1845
        %v2134 = vand.u32 2147483647, %v1846
        %v2135 = vand.u32 2147483647, %v1847
        %v2136 = vand.u32 2147483647, %v1848
        %v2137 = vand.u32 2147483647, %v1849
        %v2138 = vand.u32 2147483647, %v1850
        %v2139 = vand.u32 2147483647, %v1851
        %v2140 = vand.u32 2147483647, %v1852
        %v2141 = vand.u32 2147483647, %v1853
        %v2142 = vand.u32 2147483647, %v1854
        %v2143 = vand.u32 2147483647, %v1855
        %v2144 = vand.u32 2147483647, %v1856
        %v2145 = vand.u32 2147483647, %v1857
        %v2146 = vand.u32 2147483647, %v1858
        %v2147 = vand.u32 2147483647, %v1859
        %v2148 = vand.u32 2147483647, %v1860
        %v2149 = vsub.f32 1.0, %v1861
        %v2150 = vsub.f32 1.0, %v1862
        %v2151 = vsub.f32 1.0, %v1863
        %v2152 = vsub.f32 1.0, %v1864
        %v2153 = vsub.f32 1.0, %v1865
        %v2154 = vsub.f32 1.0, %v1866
        %v2155 = vsub.f32 1.0, %v1867
        %v2156 = vsub.f32 1.0, %v1868
        %v2157 = vsub.f32 1.0, %v1869
        %v2158 = vsub.f32 1.0, %v1870
        %v2159 = vsub.f32 1.0, %v1871
        %v2160 = vsub.f32 1.0, %v1872
        %v2161 = vsub.f32 1.0, %v1873
        %v2162 = vsub.f32 1.0, %v1874
        %v2163 = vsub.f32 1.0, %v1875
        %v2164 = vsub.f32 1.0, %v1876
        %v2165 = vsub.f32 1.0, %v1877
        %v2166 = vsub.f32 1.0, %v1878
        %v2167 = vsub.f32 1.0, %v1879
        %v2168 = vsub.f32 1.0, %v1880
        %v2169 = vsub.f32 1.0, %v1881
        %v2170 = vsub.f32 1.0, %v1882
        %v2171 = vsub.f32 1.0, %v1883
        %v2172 = vsub.f32 1.0, %v1884
        %v2173 = vsub.f32 1.0, %v1885
        %v2174 = vsub.f32 1.0, %v1886
        %v2175 = vsub.f32 1.0, %v1887
        %v2176 = vsub.f32 1.0, %v1888
        %v2177 = vsub.f32 1.0, %v1889
        %v2178 = vsub.f32 1.0, %v1890
        %v2179 = vsub.f32 1.0, %v1891
        %v2180 = vsub.f32 1.0, %v1892
        %v2181 = vsub.f32 1.0, %v1893
        %v2182 = vsub.f32 1.0, %v1894
        %v2183 = vsub.f32 1.0, %v1895
        %v2184 = vsub.f32 1.0, %v1896
        %v2185 = vsub.f32 1.0, %v1897
        %v2186 = vsub.f32 1.0, %v1898
        %v2187 = vsub.f32 1.0, %v1899
        %v2188 = vsub.f32 1.0, %v1900
        %v2189 = vsub.f32 1.0, %v1901
        %v2190 = vsub.f32 1.0, %v1902
        %v2191 = vsub.f32 1.0, %v1903
        %v2192 = vsub.f32 1.0, %v1904
        %v2193 = vsub.f32 1.0, %v1905
        %v2194 = vsub.f32 1.0, %v1906
        %v2195 = vsub.f32 1.0, %v1907
        %v2196 = vsub.f32 1.0, %v1908
        %v2197 = vsub.f32 1.0, %v1909
        %v2198 = vsub.f32 1.0, %v1910
        %v2199 = vsub.f32 1.0, %v1911
        %v2200 = vsub.f32 1.0, %v1912
        %v2201 = vsub.f32 1.0, %v1913
        %v2202 = vsub.f32 1.0, %v1914
        %v2203 = vsub.f32 1.0, %v1915
        %v2204 = vsub.f32 1.0, %v1916
        %v2205 = vsub.f32 1.0, %v1917
        %v2206 = vsub.f32 1.0, %v1918
        %v2207 = vsub.f32 1.0, %v1919
        %v2208 = vsub.f32 1.0, %v1920
        %v2209 = vsub.f32 1.0, %v1921
        %v2210 = vsub.f32 1.0, %v1922
        %v2211 = vsub.f32 1.0, %v1923
        %v2212 = vsub.f32 1.0, %v1924
        %v2213 = vsub.f32 1.0, %v1925
        %v2214 = vsub.f32 1.0, %v1926
        %v2215 = vsub.f32 1.0, %v1927
        %v2216 = vsub.f32 1.0, %v1928
        %v2217 = vsub.f32 1.0, %v1929
        %v2218 = vsub.f32 1.0, %v1930
        %v2219 = vsub.f32 1.0, %v1931
        %v2220 = vsub.f32 1.0, %v1932
        %v2221 = vsub.f32 1.0, %v1933
        %v2222 = vsub.f32 1.0, %v1934
        %v2223 = vsub.f32 1.0, %v1935
        %v2224 = vsub.f32 1.0, %v1936
        %v2225 = vsub.f32 1.0, %v1937
        %v2226 = vsub.f32 1.0, %v1938
        %v2227 = vsub.f32 1.0, %v1939
        %v2228 = vsub.f32 1.0, %v1940
        %v2229 = vsub.f32 1.0, %v1941
        %v2230 = vsub.f32 1.0, %v1942
        %v2231 = vsub.f32 1.0, %v1943
        %v2232 = vsub.f32 1.0, %v1944
        %v2233 = vsub.f32 1.0, %v1945
        %v2234 = vsub.f32 1.0, %v1946
        %v2235 = vsub.f32 1.0, %v1947
        %v2236 = vsub.f32 1.0, %v1948
        %v2237 = vsub.f32 1.0, %v1949
        %v2238 = vsub.f32 1.0, %v1950
        %v2239 = vsub.f32 1.0, %v1951
        %v2240 = vsub.f32 1.0, %v1952
        %v2241 = vsub.f32 1.0, %v1953
        %v2242 = vsub.f32 1.0, %v1954
        %v2243 = vsub.f32 1.0, %v1955
        %v2244 = vsub.f32 1.0, %v1956
        %v2245 = vsub.f32 1.0, %v1957
        %v2246 = vsub.f32 1.0, %v1958
        %v2247 = vsub.f32 1.0, %v1959
        %v2248 = vsub.f32 1.0, %v1960
        %v2249 = vsub.f32 1.0, %v1961
        %v2250 = vsub.f32 1.0, %v1962
        %v2251 = vsub.f32 1.0, %v1963
        %v2252 = vsub.f32 1.0, %v1964
        %v2253 = vsub.f32 1.0, %v1965
        %v2254 = vsub.f32 1.0, %v1966
        %v2255 = vsub.f32 1.0, %v1967
        %v2256 = vsub.f32 1.0, %v1968
        %v2257 = vsub.f32 1.0, %v1969
        %v2258 = vsub.f32 1.0, %v1970
        %v2259 = vsub.f32 1.0, %v1971
        %v2260 = vsub.f32 1.0, %v1972
        %v2261 = vsub.f32 1.0, %v1973
        %v2262 = vsub.f32 1.0, %v1974
        %v2263 = vsub.f32 1.0, %v1975
        %v2264 = vsub.f32 1.0, %v1976
        %v2265 = vsub.f32 1.0, %v1977
        %v2266 = vsub.f32 1.0, %v1978
        %v2267 = vsub.f32 1.0, %v1979
        %v2268 = vsub.f32 1.0, %v1980
        %v2269 = vsub.f32 1.0, %v1981
        %v2270 = vsub.f32 1.0, %v1982
        %v2271 = vsub.f32 1.0, %v1983
        %v2272 = vsub.f32 1.0, %v1984
        %v2273 = vsub.f32 1.0, %v1985
        %v2274 = vsub.f32 1.0, %v1986
        %v2275 = vsub.f32 1.0, %v1987
        %v2276 = vsub.f32 1.0, %v1988
        %v2277 = vsub.f32 1.0, %v1989
        %v2278 = vsub.f32 1.0, %v1990
        %v2279 = vsub.f32 1.0, %v1991
        %v2280 = vsub.f32 1.0, %v1992
        %v2281 = vsub.f32 1.0, %v1993
        %v2282 = vsub.f32 1.0, %v1994
        %v2283 = vsub.f32 1.0, %v1995
        %v2284 = vsub.f32 1.0, %v1996
        %v2285 = vsub.f32 1.0, %v1997
        %v2286 = vsub.f32 1.0, %v1998
        %v2287 = vsub.f32 1.0, %v1999
        %v2288 = vsub.f32 1.0, %v2000
        %v2289 = vsub.f32 1.0, %v2001
        %v2290 = vsub.f32 1.0, %v2002
        %v2291 = vsub.f32 1.0, %v2003
        %v2292 = vsub.f32 1.0, %v2004
        %v2293 = vsub.f32 1.0, %v2005
        %v2294 = vsub.f32 1.0, %v2006
        %v2295 = vsub.f32 1.0, %v2007
        %v2296 = vsub.f32 1.0, %v2008
        %v2297 = vsub.f32 1.0, %v2009
        %v2298 = vsub.f32 1.0, %v2010
        %v2299 = vsub.f32 1.0, %v2011
        %v2300 = vsub.f32 1.0, %v2012
        %v2301 = vsub.f32 1.0, %v2013
        %v2302 = vsub.f32 1.0, %v2014
        %v2303 = vsub.f32 1.0, %v2015
        %v2304 = vsub.f32 1.0, %v2016
        %v2305 = vsub.f32 1.0, %v2017
        %v2306 = vsub.f32 1.0, %v2018
        %v2307 = vsub.f32 1.0, %v2019
        %v2308 = vsub.f32 1.0, %v2020
        %v2309 = vsub.f32 1.0, %v2021
        %v2310 = vsub.f32 1.0, %v2022
        %v2311 = vsub.f32 1.0, %v2023
        %v2312 = vsub.f32 1.0, %v2024
        %v2313 = vsub.f32 1.0, %v2025
        %v2314 = vsub.f32 1.0, %v2026
        %v2315 = vsub.f32 1.0, %v2027
        %v2316 = vsub.f32 1.0, %v2028
        %v2317 = vsub.f32 1.0, %v2029
        %v2318 = vsub.f32 1.0, %v2030
        %v2319 = vsub.f32 1.0, %v2031
        %v2320 = vsub.f32 1.0, %v2032
        %v2321 = vsub.f32 1.0, %v2033
        %v2322 = vsub.f32 1.0, %v2034
        %v2323 = vsub.f32 1.0, %v2035
        %v2324 = vsub.f32 1.0, %v2036
        %v2325 = vsub.f32 1.0, %v2037
        %v2326 = vsub.f32 1.0, %v2038
        %v2327 = vsub.f32 1.0, %v2039
        %v2328 = vsub.f32 1.0, %v2040
        %v2329 = vsub.f32 1.0, %v2041
        %v2330 = vsub.f32 1.0, %v2042
        %v2331 = vsub.f32 1.0, %v2043
        %v2332 = vsub.f32 1.0, %v2044
        %v2333 = vsub.f32 1.0, %v2045
        %v2334 = vsub.f32 1.0, %v2046
        %v2335 = vsub.f32 1.0, %v2047
        %v2336 = vsub.f32 1.0, %v2048
        %v2337 = vsub.f32 1.0, %v2049
        %v2338 = vsub.f32 1.0, %v2050
        %v2339 = vsub.f32 1.0, %v2051
        %v2340 = vsub.f32 1.0, %v2052
        %v2341 = vsub.f32 1.0, %v2053
        %v2342 = vsub.f32 1.0, %v2054
        %v2343 = vsub.f32 1.0, %v2055
        %v2344 = vsub.f32 1.0, %v2056
        %v2345 = vsub.f32 1.0, %v2057
        %v2346 = vsub.f32 1.0, %v2058
        %v2347 = vsub.f32 1.0, %v2059
        %v2348 = vsub.f32 1.0, %v2060
        %v2349 = vsub.f32 1.0, %v2061
        %v2350 = vsub.f32 1.0, %v2062
        %v2351 = vsub.f32 1.0, %v2063
        %v2352 = vsub.f32 1.0, %v2064
        %v2353 = vsub.f32 1.0, %v2065
        %v2354 = vsub.f32 1.0, %v2066
        %v2355 = vsub.f32 1.0, %v2067
        %v2356 = vsub.f32 1.0, %v2068
        %v2357 = vsub.f32 1.0, %v2069
        %v2358 = vsub.f32 1.0, %v2070
        %v2359 = vsub.f32 1.0, %v2071
        %v2360 = vsub.f32 1.0, %v2072
        %v2361 = vsub.f32 1.0, %v2073
        %v2362 = vsub.f32 1.0, %v2074
        %v2363 = vsub.f32 1.0, %v2075
        %v2364 = vsub.f32 1.0, %v2076
        %v2365 = vsub.f32 1.0, %v2077
        %v2366 = vsub.f32 1.0, %v2078
        %v2367 = vsub.f32 1.0, %v2079
        %v2368 = vsub.f32 1.0, %v2080
        %v2369 = vsub.f32 1.0, %v2081
        %v2370 = vsub.f32 1.0, %v2082
        %v2371 = vsub.f32 1.0, %v2083
        %v2372 = vsub.f32 1.0, %v2084
        %v2373 = vsub.f32 1.0, %v2085
        %v2374 = vsub.f32 1.0, %v2086
        %v2375 = vsub.f32 1.0, %v2087
        %v2376 = vsub.f32 1.0, %v2088
        %v2377 = vsub.f32 1.0, %v2089
        %v2378 = vsub.f32 1.0, %v2090
        %v2379 = vsub.f32 1.0, %v2091
        %v2380 = vsub.f32 1.0, %v2092
        %v2381 = vsub.f32 1.0, %v2093
        %v2382 = vsub.f32 1.0, %v2094
        %v2383 = vsub.f32 1.0, %v2095
        %v2384 = vsub.f32 1.0, %v2096
        %v2385 = vsub.f32 1.0, %v2097
        %v2386 = vsub.f32 1.0, %v2098
        %v2387 = vsub.f32 1.0, %v2099
        %v2388 = vsub.f32 1.0, %v2100
        %v2389 = vsub.f32 1.0, %v2101
        %v2390 = vsub.f32 1.0, %v2102
        %v2391 = vsub.f32 1.0, %v2103
        %v2392 = vsub.f32 1.0, %v2104
        %v2393 = vsub.f32 1.0, %v2105
        %v2394 = vsub.f32 1.0, %v2106
        %v2395 = vsub.f32 1.0, %v2107
        %v2396 = vsub.f32 1.0, %v2108
        %v2397 = vsub.f32 1.0, %v2109
        %v2398 = vsub.f32 1.0, %v2110
        %v2399 = vsub.f32 1.0, %v2111
        %v2400 = vsub.f32 1.0, %v2112
        %v2401 = vsub.f32 1.0, %v2113
        %v2402 = vsub.f32 1.0, %v2114
        %v2403 = vsub.f32 1.0, %v2115
        %v2404 = vsub.f32 1.0, %v2116
        %v2405 = vsub.f32 1.0, %v2117
        %v2406 = vsub.f32 1.0, %v2118
        %v2407 = vsub.f32 1.0, %v2119
        %v2408 = vsub.f32 1.0, %v2120
        %v2409 = vsub.f32 1.0, %v2121
        %v2410 = vsub.f32 1.0, %v2122
        %v2411 = vsub.f32 1.0, %v2123
        %v2412 = vsub.f32 1.0, %v2124
        %v2413 = vsub.f32 1.0, %v2125
        %v2414 = vsub.f32 1.0, %v2126
        %v2415 = vsub.f32 1.0, %v2127
        %v2416 = vsub.f32 1.0, %v2128
        %v2417 = vsub.f32 1.0, %v2129
        %v2418 = vsub.f32 1.0, %v2130
        %v2419 = vsub.f32 1.0, %v2131
        %v2420 = vsub.f32 1.0, %v2132
        %v2421 = vsub.f32 1.0, %v2133
        %v2422 = vsub.f32 1.0, %v2134
        %v2423 = vsub.f32 1.0, %v2135
        %v2424 = vsub.f32 1.0, %v2136
        %v2425 = vsub.f32 1.0, %v2137
        %v2426 = vsub.f32 1.0, %v2138
        %v2427 = vsub.f32 1.0, %v2139
        %v2428 = vsub.f32 1.0, %v2140
        %v2429 = vsub.f32 1.0, %v2141
        %v2430 = vsub.f32 1.0, %v2142
        %v2431 = vsub.f32 1.0, %v2143
        %v2432 = vsub.f32 1.0, %v2144
        %v2433 = vsub.f32 1.0, %v2145
        %v2434 = vsub.f32 1.0, %v2146
        %v2435 = vsub.f32 1.0, %v2147
        %v2436 = vsub.f32 1.0, %v2148
        %v2437 = vmax.f32 %v2149, 0.0
        %v2438 = vmax.f32 %v2150, 0.0
        %v2439 = vmax.f32 %v2151, 0.0
        %v2440 = vmax.f32 %v2152, 0.0
        %v2441 = vmax.f32 %v2153, 0.0
        %v2442 = vmax.f32 %v2154, 0.0
        %v2443 = vmax.f32 %v2155, 0.0
        %v2444 = vmax.f32 %v2156, 0.0
        %v2445 = vmax.f32 %v2157, 0.0
        %v2446 = vmax.f32 %v2158, 0.0
        %v2447 = vmax.f32 %v2159, 0.0
        %v2448 = vmax.f32 %v2160, 0.0
        %v2449 = vmax.f32 %v2161, 0.0
        %v2450 = vmax.f32 %v2162, 0.0
        %v2451 = vmax.f32 %v2163, 0.0
        %v2452 = vmax.f32 %v2164, 0.0
        %v2453 = vmax.f32 %v2165, 0.0
        %v2454 = vmax.f32 %v2166, 0.0
        %v2455 = vmax.f32 %v2167, 0.0
        %v2456 = vmax.f32 %v2168, 0.0
        %v2457 = vmax.f32 %v2169, 0.0
        %v2458 = vmax.f32 %v2170, 0.0
        %v2459 = vmax.f32 %v2171, 0.0
        %v2460 = vmax.f32 %v2172, 0.0
        %v2461 = vmax.f32 %v2173, 0.0
        %v2462 = vmax.f32 %v2174, 0.0
        %v2463 = vmax.f32 %v2175, 0.0
        %v2464 = vmax.f32 %v2176, 0.0
        %v2465 = vmax.f32 %v2177, 0.0
        %v2466 = vmax.f32 %v2178, 0.0
        %v2467 = vmax.f32 %v2179, 0.0
        %v2468 = vmax.f32 %v2180, 0.0
        %v2469 = vmax.f32 %v2181, 0.0
        %v2470 = vmax.f32 %v2182, 0.0
        %v2471 = vmax.f32 %v2183, 0.0
        %v2472 = vmax.f32 %v2184, 0.0
        %v2473 = vmax.f32 %v2185, 0.0
        %v2474 = vmax.f32 %v2186, 0.0
        %v2475 = vmax.f32 %v2187, 0.0
        %v2476 = vmax.f32 %v2188, 0.0
        %v2477 = vmax.f32 %v2189, 0.0
        %v2478 = vmax.f32 %v2190, 0.0
        %v2479 = vmax.f32 %v2191, 0.0
        %v2480 = vmax.f32 %v2192, 0.0
        %v2481 = vmax.f32 %v2193, 0.0
        %v2482 = vmax.f32 %v2194, 0.0
        %v2483 = vmax.f32 %v2195, 0.0
        %v2484 = vmax.f32 %v2196, 0.0
        %v2485 = vmax.f32 %v2197, 0.0
        %v2486 = vmax.f32 %v2198, 0.0
        %v2487 = vmax.f32 %v2199, 0.0
        %v2488 = vmax.f32 %v2200, 0.0
        %v2489 = vmax.f32 %v2201, 0.0
        %v2490 = vmax.f32 %v2202, 0.0
        %v2491 = vmax.f32 %v2203, 0.0
        %v2492 = vmax.f32 %v2204, 0.0
        %v2493 = vmax.f32 %v2205, 0.0
        %v2494 = vmax.f32 %v2206, 0.0
        %v2495 = vmax.f32 %v2207, 0.0
        %v2496 = vmax.f32 %v2208, 0.0
        %v2497 = vmax.f32 %v2209, 0.0
        %v2498 = vmax.f32 %v2210, 0.0
        %v2499 = vmax.f32 %v2211, 0.0
        %v2500 = vmax.f32 %v2212, 0.0
        %v2501 = vmax.f32 %v2213, 0.0
        %v2502 = vmax.f32 %v2214, 0.0
        %v2503 = vmax.f32 %v2215, 0.0
        %v2504 = vmax.f32 %v2216, 0.0
        %v2505 = vmax.f32 %v2217, 0.0
        %v2506 = vmax.f32 %v2218, 0.0
        %v2507 = vmax.f32 %v2219, 0.0
        %v2508 = vmax.f32 %v2220, 0.0
        %v2509 = vmax.f32 %v2221, 0.0
        %v2510 = vmax.f32 %v2222, 0.0
        %v2511 = vmax.f32 %v2223, 0.0
        %v2512 = vmax.f32 %v2224, 0.0
        %v2513 = vmax.f32 %v2225, 0.0
        %v2514 = vmax.f32 %v2226, 0.0
        %v2515 = vmax.f32 %v2227, 0.0
        %v2516 = vmax.f32 %v2228, 0.0
        %v2517 = vmax.f32 %v2229, 0.0
        %v2518 = vmax.f32 %v2230, 0.0
        %v2519 = vmax.f32 %v2231, 0.0
        %v2520 = vmax.f32 %v2232, 0.0
        %v2521 = vmax.f32 %v2233, 0.0
        %v2522 = vmax.f32 %v2234, 0.0
        %v2523 = vmax.f32 %v2235, 0.0
        %v2524 = vmax.f32 %v2236, 0.0
        %v2525 = vmax.f32 %v2237, 0.0
        %v2526 = vmax.f32 %v2238, 0.0
        %v2527 = vmax.f32 %v2239, 0.0
        %v2528 = vmax.f32 %v2240, 0.0
        %v2529 = vmax.f32 %v2241, 0.0
        %v2530 = vmax.f32 %v2242, 0.0
        %v2531 = vmax.f32 %v2243, 0.0
        %v2532 = vmax.f32 %v2244, 0.0
        %v2533 = vmax.f32 %v2245, 0.0
        %v2534 = vmax.f32 %v2246, 0.0
        %v2535 = vmax.f32 %v2247, 0.0
        %v2536 = vmax.f32 %v2248, 0.0
        %v2537 = vmax.f32 %v2249, 0.0
        %v2538 = vmax.f32 %v2250, 0.0
        %v2539 = vmax.f32 %v2251, 0.0
        %v2540 = vmax.f32 %v2252, 0.0
        %v2541 = vmax.f32 %v2253, 0.0
        %v2542 = vmax.f32 %v2254, 0.0
        %v2543 = vmax.f32 %v2255, 0.0
        %v2544 = vmax.f32 %v2256, 0.0
        %v2545 = vmax.f32 %v2257, 0.0
        %v2546 = vmax.f32 %v2258, 0.0
        %v2547 = vmax.f32 %v2259, 0.0
        %v2548 = vmax.f32 %v2260, 0.0
        %v2549 = vmax.f32 %v2261, 0.0
        %v2550 = vmax.f32 %v2262, 0.0
        %v2551 = vmax.f32 %v2263, 0.0
        %v2552 = vmax.f32 %v2264, 0.0
        %v2553 = vmax.f32 %v2265, 0.0
        %v2554 = vmax.f32 %v2266, 0.0
        %v2555 = vmax.f32 %v2267, 0.0
        %v2556 = vmax.f32 %v2268, 0.0
        %v2557 = vmax.f32 %v2269, 0.0
        %v2558 = vmax.f32 %v2270, 0.0
        %v2559 = vmax.f32 %v2271, 0.0
        %v2560 = vmax.f32 %v2272, 0.0
        %v2561 = vmax.f32 %v2273, 0.0
        %v2562 = vmax.f32 %v2274, 0.0
        %v2563 = vmax.f32 %v2275, 0.0
        %v2564 = vmax.f32 %v2276, 0.0
        %v2565 = vmax.f32 %v2277, 0.0
        %v2566 = vmax.f32 %v2278, 0.0
        %v2567 = vmax.f32 %v2279, 0.0
        %v2568 = vmax.f32 %v2280, 0.0
        %v2569 = vmax.f32 %v2281, 0.0
        %v2570 = vmax.f32 %v2282, 0.0
        %v2571 = vmax.f32 %v2283, 0.0
        %v2572 = vmax.f32 %v2284, 0.0
        %v2573 = vmax.f32 %v2285, 0.0
        %v2574 = vmax.f32 %v2286, 0.0
        %v2575 = vmax.f32 %v2287, 0.0
        %v2576 = vmax.f32 %v2288, 0.0
        %v2577 = vmax.f32 %v2289, 0.0
        %v2578 = vmax.f32 %v2290, 0.0
        %v2579 = vmax.f32 %v2291, 0.0
        %v2580 = vmax.f32 %v2292, 0.0
        %v2581 = vmax.f32 %v2293, 0.0
        %v2582 = vmax.f32 %v2294, 0.0
        %v2583 = vmax.f32 %v2295, 0.0
        %v2584 = vmax.f32 %v2296, 0.0
        %v2585 = vmax.f32 %v2297, 0.0
        %v2586 = vmax.f32 %v2298, 0.0
        %v2587 = vmax.f32 %v2299, 0.0
        %v2588 = vmax.f32 %v2300, 0.0
        %v2589 = vmax.f32 %v2301, 0.0
        %v2590 = vmax.f32 %v2302, 0.0
        %v2591 = vmax.f32 %v2303, 0.0
        %v2592 = vmax.f32 %v2304, 0.0
        %v2593 = vmax.f32 %v2305, 0.0
        %v2594 = vmax.f32 %v2306, 0.0
        %v2595 = vmax.f32 %v2307, 0.0
        %v2596 = vmax.f32 %v2308, 0.0
        %v2597 = vmax.f32 %v2309, 0.0
        %v2598 = vmax.f32 %v2310, 0.0
        %v2599 = vmax.f32 %v2311, 0.0
        %v2600 = vmax.f32 %v2312, 0.0
        %v2601 = vmax.f32 %v2313, 0.0
        %v2602 = vmax.f32 %v2314, 0.0
        %v2603 = vmax.f32 %v2315, 0.0
        %v2604 = vmax.f32 %v2316, 0.0
        %v2605 = vmax.f32 %v2317, 0.0
        %v2606 = vmax.f32 %v2318, 0.0
        %v2607 = vmax.f32 %v2319, 0.0
        %v2608 = vmax.f32 %v2320, 0.0
        %v2609 = vmax.f32 %v2321, 0.0
        %v2610 = vmax.f32 %v2322, 0.0
        %v2611 = vmax.f32 %v2323, 0.0
        %v2612 = vmax.f32 %v2324, 0.0
        %v2613 = vmax.f32 %v2325, 0.0
        %v2614 = vmax.f32 %v2326, 0.0
        %v2615 = vmax.f32 %v2327, 0.0
        %v2616 = vmax.f32 %v2328, 0.0
        %v2617 = vmax.f32 %v2329, 0.0
        %v2618 = vmax.f32 %v2330, 0.0
        %v2619 = vmax.f32 %v2331, 0.0
        %v2620 = vmax.f32 %v2332, 0.0
        %v2621 = vmax.f32 %v2333, 0.0
        %v2622 = vmax.f32 %v2334, 0.0
        %v2623 = vmax.f32 %v2335, 0.0
        %v2624 = vmax.f32 %v2336, 0.0
        %v2625 = vmax.f32 %v2337, 0.0
        %v2626 = vmax.f32 %v2338, 0.0
        %v2627 = vmax.f32 %v2339, 0.0
        %v2628 = vmax.f32 %v2340, 0.0
        %v2629 = vmax.f32 %v2341, 0.0
        %v2630 = vmax.f32 %v2342, 0.0
        %v2631 = vmax.f32 %v2343, 0.0
        %v2632 = vmax.f32 %v2344, 0.0
        %v2633 = vmax.f32 %v2345, 0.0
        %v2634 = vmax.f32 %v2346, 0.0
        %v2635 = vmax.f32 %v2347, 0.0
        %v2636 = vmax.f32 %v2348, 0.0
        %v2637 = vmax.f32 %v2349, 0.0
        %v2638 = vmax.f32 %v2350, 0.0
        %v2639 = vmax.f32 %v2351, 0.0
        %v2640 = vmax.f32 %v2352, 0.0
        %v2641 = vmax.f32 %v2353, 0.0
        %v2642 = vmax.f32 %v2354, 0.0
        %v2643 = vmax.f32 %v2355, 0.0
        %v2644 = vmax.f32 %v2356, 0.0
        %v2645 = vmax.f32 %v2357, 0.0
        %v2646 = vmax.f32 %v2358, 0.0
        %v2647 = vmax.f32 %v2359, 0.0
        %v2648 = vmax.f32 %v2360, 0.0
        %v2649 = vmax.f32 %v2361, 0.0
        %v2650 = vmax.f32 %v2362, 0.0
        %v2651 = vmax.f32 %v2363, 0.0
        %v2652 = vmax.f32 %v2364, 0.0
        %v2653 = vmax.f32 %v2365, 0.0
        %v2654 = vmax.f32 %v2366, 0.0
        %v2655 = vmax.f32 %v2367, 0.0
        %v2656 = vmax.f32 %v2368, 0.0
        %v2657 = vmax.f32 %v2369, 0.0
        %v2658 = vmax.f32 %v2370, 0.0
        %v2659 = vmax.f32 %v2371, 0.0
        %v2660 = vmax.f32 %v2372, 0.0
        %v2661 = vmax.f32 %v2373, 0.0
        %v2662 = vmax.f32 %v2374, 0.0
        %v2663 = vmax.f32 %v2375, 0.0
        %v2664 = vmax.f32 %v2376, 0.0
        %v2665 = vmax.f32 %v2377, 0.0
        %v2666 = vmax.f32 %v2378, 0.0
        %v2667 = vmax.f32 %v2379, 0.0
        %v2668 = vmax.f32 %v2380, 0.0
        %v2669 = vmax.f32 %v2381, 0.0
        %v2670 = vmax.f32 %v2382, 0.0
        %v2671 = vmax.f32 %v2383, 0.0
        %v2672 = vmax.f32 %v2384, 0.0
        %v2673 = vmax.f32 %v2385, 0.0
        %v2674 = vmax.f32 %v2386, 0.0
        %v2675 = vmax.f32 %v2387, 0.0
        %v2676 = vmax.f32 %v2388, 0.0
        %v2677 = vmax.f32 %v2389, 0.0
        %v2678 = vmax.f32 %v2390, 0.0
        %v2679 = vmax.f32 %v2391, 0.0
        %v2680 = vmax.f32 %v2392, 0.0
        %v2681 = vmax.f32 %v2393, 0.0
        %v2682 = vmax.f32 %v2394, 0.0
        %v2683 = vmax.f32 %v2395, 0.0
        %v2684 = vmax.f32 %v2396, 0.0
        %v2685 = vmax.f32 %v2397, 0.0
        %v2686 = vmax.f32 %v2398, 0.0
        %v2687 = vmax.f32 %v2399, 0.0
        %v2688 = vmax.f32 %v2400, 0.0
        %v2689 = vmax.f32 %v2401, 0.0
        %v2690 = vmax.f32 %v2402, 0.0
        %v2691 = vmax.f32 %v2403, 0.0
        %v2692 = vmax.f32 %v2404, 0.0
        %v2693 = vmax.f32 %v2405, 0.0
        %v2694 = vmax.f32 %v2406, 0.0
        %v2695 = vmax.f32 %v2407, 0.0
        %v2696 = vmax.f32 %v2408, 0.0
        %v2697 = vmax.f32 %v2409, 0.0
        %v2698 = vmax.f32 %v2410, 0.0
        %v2699 = vmax.f32 %v2411, 0.0
        %v2700 = vmax.f32 %v2412, 0.0
        %v2701 = vmax.f32 %v2413, 0.0
        %v2702 = vmax.f32 %v2414, 0.0
        %v2703 = vmax.f32 %v2415, 0.0
        %v2704 = vmax.f32 %v2416, 0.0
        %v2705 = vmax.f32 %v2417, 0.0
        %v2706 = vmax.f32 %v2418, 0.0
        %v2707 = vmax.f32 %v2419, 0.0
        %v2708 = vmax.f32 %v2420, 0.0
        %v2709 = vmax.f32 %v2421, 0.0
        %v2710 = vmax.f32 %v2422, 0.0
        %v2711 = vmax.f32 %v2423, 0.0
        %v2712 = vmax.f32 %v2424, 0.0
        %v2713 = vmax.f32 %v2425, 0.0
        %v2714 = vmax.f32 %v2426, 0.0
        %v2715 = vmax.f32 %v2427, 0.0
        %v2716 = vmax.f32 %v2428, 0.0
        %v2717 = vmax.f32 %v2429, 0.0
        %v2718 = vmax.f32 %v2430, 0.0
        %v2719 = vmax.f32 %v2431, 0.0
        %v2720 = vmax.f32 %v2432, 0.0
        %v2721 = vmax.f32 %v2433, 0.0
        %v2722 = vmax.f32 %v2434, 0.0
        %v2723 = vmax.f32 %v2435, 0.0
        %v2724 = vmax.f32 %v2436, 0.0
        %v2725 = vperm.slane %v290, 1
        %v2726 = vperm.slane %v290, 5
        %v2729 = vperm.slane %v2725, 1
        %v2730 = vperm.slane %v2726, 1
        %v2731 = vsub.f32 %v2729, %v1423
        %v2732 = vsub.f32 %v2730, %v1423
        %v2733 = vsub.f32 %v2729, %v1424
        %v2734 = vsub.f32 %v2730, %v1424
        %v2735 = vsub.f32 %v2729, %v1425
        %v2736 = vsub.f32 %v2730, %v1425
        %v2737 = vsub.f32 %v2729, %v1426
        %v2738 = vsub.f32 %v2730, %v1426
        %v2739 = vsub.f32 %v2729, %v1427
        %v2740 = vsub.f32 %v2730, %v1427
        %v2741 = vsub.f32 %v2729, %v1428
        %v2742 = vsub.f32 %v2730, %v1428
        %v2743 = vsub.f32 %v2729, %v1429
        %v2744 = vsub.f32 %v2730, %v1429
        %v2745 = vsub.f32 %v2729, %v1430
        %v2746 = vsub.f32 %v2730, %v1430
        %v2747 = vsub.f32 %v2729, %v1431
        %v2748 = vsub.f32 %v2730, %v1431
        %v2749 = vsub.f32 %v2729, %v1432
        %v2750 = vsub.f32 %v2730, %v1432
        %v2751 = vsub.f32 %v2729, %v1433
        %v2752 = vsub.f32 %v2730, %v1433
        %v2753 = vsub.f32 %v2729, %v1434
        %v2754 = vsub.f32 %v2730, %v1434
        %v2755 = vsub.f32 %v2729, %v1435
        %v2756 = vsub.f32 %v2730, %v1435
        %v2757 = vsub.f32 %v2729, %v1436
        %v2758 = vsub.f32 %v2730, %v1436
        %v2759 = vsub.f32 %v2729, %v1437
        %v2760 = vsub.f32 %v2730, %v1437
        %v2761 = vsub.f32 %v2729, %v1438
        %v2762 = vsub.f32 %v2730, %v1438
        %v2763 = vsub.f32 %v2729, %v1439
        %v2764 = vsub.f32 %v2730, %v1439
        %v2765 = vsub.f32 %v2729, %v1440
        %v2766 = vsub.f32 %v2730, %v1440
        %v2767 = vsub.f32 %v2729, %v1441
        %v2768 = vsub.f32 %v2730, %v1441
        %v2769 = vsub.f32 %v2729, %v1442
        %v2770 = vsub.f32 %v2730, %v1442
        %v2771 = vsub.f32 %v2729, %v1443
        %v2772 = vsub.f32 %v2730, %v1443
        %v2773 = vsub.f32 %v2729, %v1444
        %v2774 = vsub.f32 %v2730, %v1444
        %v2775 = vsub.f32 %v2729, %v1445
        %v2776 = vsub.f32 %v2730, %v1445
        %v2777 = vsub.f32 %v2729, %v1446
        %v2778 = vsub.f32 %v2730, %v1446
        %v2779 = vsub.f32 %v2729, %v1447
        %v2780 = vsub.f32 %v2730, %v1447
        %v2781 = vsub.f32 %v2729, %v1448
        %v2782 = vsub.f32 %v2730, %v1448
        %v2783 = vsub.f32 %v2729, %v1449
        %v2784 = vsub.f32 %v2730, %v1449
        %v2785 = vsub.f32 %v2729, %v1450
        %v2786 = vsub.f32 %v2730, %v1450
        %v2787 = vsub.f32 %v2729, %v1451
        %v2788 = vsub.f32 %v2730, %v1451
        %v2789 = vsub.f32 %v2729, %v1452
        %v2790 = vsub.f32 %v2730, %v1452
        %v2791 = vsub.f32 %v2729, %v1453
        %v2792 = vsub.f32 %v2730, %v1453
        %v2793 = vsub.f32 %v2729, %v1454
        %v2794 = vsub.f32 %v2730, %v1454
        %v2795 = vsub.f32 %v2729, %v1455
        %v2796 = vsub.f32 %v2730, %v1455
        %v2797 = vsub.f32 %v2729, %v1456
        %v2798 = vsub.f32 %v2730, %v1456
        %v2799 = vsub.f32 %v2729, %v1457
        %v2800 = vsub.f32 %v2730, %v1457
        %v2801 = vsub.f32 %v2729, %v1458
        %v2802 = vsub.f32 %v2730, %v1458
        %v2803 = vsub.f32 %v2729, %v1459
        %v2804 = vsub.f32 %v2730, %v1459
        %v2805 = vsub.f32 %v2729, %v1460
        %v2806 = vsub.f32 %v2730, %v1460
        %v2807 = vsub.f32 %v2729, %v1461
        %v2808 = vsub.f32 %v2730, %v1461
        %v2809 = vsub.f32 %v2729, %v1462
        %v2810 = vsub.f32 %v2730, %v1462
        %v2811 = vsub.f32 %v2729, %v1463
        %v2812 = vsub.f32 %v2730, %v1463
        %v2813 = vsub.f32 %v2729, %v1464
        %v2814 = vsub.f32 %v2730, %v1464
        %v2815 = vsub.f32 %v2729, %v1465
        %v2816 = vsub.f32 %v2730, %v1465
        %v2817 = vsub.f32 %v2729, %v1466
        %v2818 = vsub.f32 %v2730, %v1466
        %v2819 = vsub.f32 %v2729, %v1467
        %v2820 = vsub.f32 %v2730, %v1467
        %v2821 = vsub.f32 %v2729, %v1468
        %v2822 = vsub.f32 %v2730, %v1468
        %v2823 = vsub.f32 %v2729, %v1469
        %v2824 = vsub.f32 %v2730, %v1469
        %v2825 = vsub.f32 %v2729, %v1470
        %v2826 = vsub.f32 %v2730, %v1470
        %v2827 = vsub.f32 %v2729, %v1471
        %v2828 = vsub.f32 %v2730, %v1471
        %v2829 = vsub.f32 %v2729, %v1472
        %v2830 = vsub.f32 %v2730, %v1472
        %v2831 = vsub.f32 %v2729, %v1473
        %v2832 = vsub.f32 %v2730, %v1473
        %v2833 = vsub.f32 %v2729, %v1474
        %v2834 = vsub.f32 %v2730, %v1474
        %v2835 = vsub.f32 %v2729, %v1475
        %v2836 = vsub.f32 %v2730, %v1475
        %v2837 = vsub.f32 %v2729, %v1476
        %v2838 = vsub.f32 %v2730, %v1476
        %v2839 = vsub.f32 %v2729, %v1477
        %v2840 = vsub.f32 %v2730, %v1477
        %v2841 = vsub.f32 %v2729, %v1478
        %v2842 = vsub.f32 %v2730, %v1478
        %v2843 = vsub.f32 %v2729, %v1479
        %v2844 = vsub.f32 %v2730, %v1479
        %v2845 = vsub.f32 %v2729, %v1480
        %v2846 = vsub.f32 %v2730, %v1480
        %v2847 = vsub.f32 %v2729, %v1481
        %v2848 = vsub.f32 %v2730, %v1481
        %v2849 = vsub.f32 %v2729, %v1482
        %v2850 = vsub.f32 %v2730, %v1482
        %v2851 = vsub.f32 %v2729, %v1483
        %v2852 = vsub.f32 %v2730, %v1483
        %v2853 = vsub.f32 %v2729, %v1484
        %v2854 = vsub.f32 %v2730, %v1484
        %v2855 = vsub.f32 %v2729, %v1485
        %v2856 = vsub.f32 %v2730, %v1485
        %v2857 = vsub.f32 %v2729, %v1486
        %v2858 = vsub.f32 %v2730, %v1486
        %v2859 = vsub.f32 %v2729, %v1487
        %v2860 = vsub.f32 %v2730, %v1487
        %v2861 = vsub.f32 %v2729, %v1488
        %v2862 = vsub.f32 %v2730, %v1488
        %v2863 = vsub.f32 %v2729, %v1489
        %v2864 = vsub.f32 %v2730, %v1489
        %v2865 = vsub.f32 %v2729, %v1490
        %v2866 = vsub.f32 %v2730, %v1490
        %v2867 = vsub.f32 %v2729, %v1491
        %v2868 = vsub.f32 %v2730, %v1491
        %v2869 = vsub.f32 %v2729, %v1492
        %v2870 = vsub.f32 %v2730, %v1492
        %v2871 = vsub.f32 %v2729, %v1493
        %v2872 = vsub.f32 %v2730, %v1493
        %v2873 = vsub.f32 %v2729, %v1494
        %v2874 = vsub.f32 %v2730, %v1494
        %v2875 = vsub.f32 %v2729, %v1495
        %v2876 = vsub.f32 %v2730, %v1495
        %v2877 = vsub.f32 %v2729, %v1496
        %v2878 = vsub.f32 %v2730, %v1496
        %v2879 = vsub.f32 %v2729, %v1497
        %v2880 = vsub.f32 %v2730, %v1497
        %v2881 = vsub.f32 %v2729, %v1498
        %v2882 = vsub.f32 %v2730, %v1498
        %v2883 = vsub.f32 %v2729, %v1499
        %v2884 = vsub.f32 %v2730, %v1499
        %v2885 = vsub.f32 %v2729, %v1500
        %v2886 = vsub.f32 %v2730, %v1500
        %v2887 = vsub.f32 %v2729, %v1501
        %v2888 = vsub.f32 %v2730, %v1501
        %v2889 = vsub.f32 %v2729, %v1502
        %v2890 = vsub.f32 %v2730, %v1502
        %v2891 = vsub.f32 %v2729, %v1503
        %v2892 = vsub.f32 %v2730, %v1503
        %v2893 = vsub.f32 %v2729, %v1504
        %v2894 = vsub.f32 %v2730, %v1504
        %v2895 = vsub.f32 %v2729, %v1505
        %v2896 = vsub.f32 %v2730, %v1505
        %v2897 = vsub.f32 %v2729, %v1506
        %v2898 = vsub.f32 %v2730, %v1506
        %v2899 = vsub.f32 %v2729, %v1507
        %v2900 = vsub.f32 %v2730, %v1507
        %v2901 = vsub.f32 %v2729, %v1508
        %v2902 = vsub.f32 %v2730, %v1508
        %v2903 = vsub.f32 %v2729, %v1509
        %v2904 = vsub.f32 %v2730, %v1509
        %v2905 = vsub.f32 %v2729, %v1510
        %v2906 = vsub.f32 %v2730, %v1510
        %v2907 = vsub.f32 %v2729, %v1511
        %v2908 = vsub.f32 %v2730, %v1511
        %v2909 = vsub.f32 %v2729, %v1512
        %v2910 = vsub.f32 %v2730, %v1512
        %v2911 = vsub.f32 %v2729, %v1513
        %v2912 = vsub.f32 %v2730, %v1513
        %v2913 = vsub.f32 %v2729, %v1514
        %v2914 = vsub.f32 %v2730, %v1514
        %v2915 = vsub.f32 %v2729, %v1515
        %v2916 = vsub.f32 %v2730, %v1515
        %v2917 = vsub.f32 %v2729, %v1516
        %v2918 = vsub.f32 %v2730, %v1516
        %v2919 = vsub.f32 %v2729, %v1517
        %v2920 = vsub.f32 %v2730, %v1517
        %v2921 = vsub.f32 %v2729, %v1518
        %v2922 = vsub.f32 %v2730, %v1518
        %v2923 = vsub.f32 %v2729, %v1519
        %v2924 = vsub.f32 %v2730, %v1519
        %v2925 = vsub.f32 %v2729, %v1520
        %v2926 = vsub.f32 %v2730, %v1520
        %v2927 = vsub.f32 %v2729, %v1521
        %v2928 = vsub.f32 %v2730, %v1521
        %v2929 = vsub.f32 %v2729, %v1522
        %v2930 = vsub.f32 %v2730, %v1522
        %v2931 = vsub.f32 %v2729, %v1523
        %v2932 = vsub.f32 %v2730, %v1523
        %v2933 = vsub.f32 %v2729, %v1524
        %v2934 = vsub.f32 %v2730, %v1524
        %v2935 = vsub.f32 %v2729, %v1525
        %v2936 = vsub.f32 %v2730, %v1525
        %v2937 = vsub.f32 %v2729, %v1526
        %v2938 = vsub.f32 %v2730, %v1526
        %v2939 = vsub.f32 %v2729, %v1527
        %v2940 = vsub.f32 %v2730, %v1527
        %v2941 = vsub.f32 %v2729, %v1528
        %v2942 = vsub.f32 %v2730, %v1528
        %v2943 = vsub.f32 %v2729, %v1529
        %v2944 = vsub.f32 %v2730, %v1529
        %v2945 = vsub.f32 %v2729, %v1530
        %v2946 = vsub.f32 %v2730, %v1530
        %v2947 = vsub.f32 %v2729, %v1531
        %v2948 = vsub.f32 %v2730, %v1531
        %v2949 = vsub.f32 %v2729, %v1532
        %v2950 = vsub.f32 %v2730, %v1532
        %v2951 = vsub.f32 %v2729, %v1533
        %v2952 = vsub.f32 %v2730, %v1533
        %v2953 = vsub.f32 %v2729, %v1534
        %v2954 = vsub.f32 %v2730, %v1534
        %v2955 = vsub.f32 %v2729, %v1535
        %v2956 = vsub.f32 %v2730, %v1535
        %v2957 = vsub.f32 %v2729, %v1536
        %v2958 = vsub.f32 %v2730, %v1536
        %v2959 = vsub.f32 %v2729, %v1537
        %v2960 = vsub.f32 %v2730, %v1537
        %v2961 = vsub.f32 %v2729, %v1538
        %v2962 = vsub.f32 %v2730, %v1538
        %v2963 = vsub.f32 %v2729, %v1539
        %v2964 = vsub.f32 %v2730, %v1539
        %v2965 = vsub.f32 %v2729, %v1540
        %v2966 = vsub.f32 %v2730, %v1540
        %v2967 = vsub.f32 %v2729, %v1541
        %v2968 = vsub.f32 %v2730, %v1541
        %v2969 = vsub.f32 %v2729, %v1542
        %v2970 = vsub.f32 %v2730, %v1542
        %v2971 = vsub.f32 %v2729, %v1543
        %v2972 = vsub.f32 %v2730, %v1543
        %v2973 = vsub.f32 %v2729, %v1544
        %v2974 = vsub.f32 %v2730, %v1544
        %v2975 = vsub.f32 %v2729, %v1545
        %v2976 = vsub.f32 %v2730, %v1545
        %v2977 = vsub.f32 %v2729, %v1546
        %v2978 = vsub.f32 %v2730, %v1546
        %v2979 = vsub.f32 %v2729, %v1547
        %v2980 = vsub.f32 %v2730, %v1547
        %v2981 = vsub.f32 %v2729, %v1548
        %v2982 = vsub.f32 %v2730, %v1548
        %v2983 = vsub.f32 %v2729, %v1549
        %v2984 = vsub.f32 %v2730, %v1549
        %v2985 = vsub.f32 %v2729, %v1550
        %v2986 = vsub.f32 %v2730, %v1550
        %v2987 = vsub.f32 %v2729, %v1551
        %v2988 = vsub.f32 %v2730, %v1551
        %v2989 = vsub.f32 %v2729, %v1552
        %v2990 = vsub.f32 %v2730, %v1552
        %v2991 = vsub.f32 %v2729, %v1553
        %v2992 = vsub.f32 %v2730, %v1553
        %v2993 = vsub.f32 %v2729, %v1554
        %v2994 = vsub.f32 %v2730, %v1554
        %v2995 = vsub.f32 %v2729, %v1555
        %v2996 = vsub.f32 %v2730, %v1555
        %v2997 = vsub.f32 %v2729, %v1556
        %v2998 = vsub.f32 %v2730, %v1556
        %v2999 = vsub.f32 %v2729, %v1557
        %v3000 = vsub.f32 %v2730, %v1557
        %v3001 = vsub.f32 %v2729, %v1558
        %v3002 = vsub.f32 %v2730, %v1558
        %v3003 = vsub.f32 %v2729, %v1559
        %v3004 = vsub.f32 %v2730, %v1559
        %v3005 = vsub.f32 %v2729, %v1560
        %v3006 = vsub.f32 %v2730, %v1560
        %v3007 = vsub.f32 %v2729, %v1561
        %v3008 = vsub.f32 %v2730, %v1561
        %v3009 = vsub.f32 %v2729, %v1562
        %v3010 = vsub.f32 %v2730, %v1562
        %v3011 = vsub.f32 %v2729, %v1563
        %v3012 = vsub.f32 %v2730, %v1563
        %v3013 = vsub.f32 %v2729, %v1564
        %v3014 = vsub.f32 %v2730, %v1564
        %v3015 = vsub.f32 %v2729, %v1565
        %v3016 = vsub.f32 %v2730, %v1565
        %v3017 = vsub.f32 %v2729, %v1566
        %v3018 = vsub.f32 %v2730, %v1566
        %v3019 = vand.u32 2147483647, %v2731
        %v3020 = vand.u32 2147483647, %v2732
        %v3021 = vand.u32 2147483647, %v2733
        %v3022 = vand.u32 2147483647, %v2734
        %v3023 = vand.u32 2147483647, %v2735
        %v3024 = vand.u32 2147483647, %v2736
        %v3025 = vand.u32 2147483647, %v2737
        %v3026 = vand.u32 2147483647, %v2738
        %v3027 = vand.u32 2147483647, %v2739
        %v3028 = vand.u32 2147483647, %v2740
        %v3029 = vand.u32 2147483647, %v2741
        %v3030 = vand.u32 2147483647, %v2742
        %v3031 = vand.u32 2147483647, %v2743
        %v3032 = vand.u32 2147483647, %v2744
        %v3033 = vand.u32 2147483647, %v2745
        %v3034 = vand.u32 2147483647, %v2746
        %v3035 = vand.u32 2147483647, %v2747
        %v3036 = vand.u32 2147483647, %v2748
        %v3037 = vand.u32 2147483647, %v2749
        %v3038 = vand.u32 2147483647, %v2750
        %v3039 = vand.u32 2147483647, %v2751
        %v3040 = vand.u32 2147483647, %v2752
        %v3041 = vand.u32 2147483647, %v2753
        %v3042 = vand.u32 2147483647, %v2754
        %v3043 = vand.u32 2147483647, %v2755
        %v3044 = vand.u32 2147483647, %v2756
        %v3045 = vand.u32 2147483647, %v2757
        %v3046 = vand.u32 2147483647, %v2758
        %v3047 = vand.u32 2147483647, %v2759
        %v3048 = vand.u32 2147483647, %v2760
        %v3049 = vand.u32 2147483647, %v2761
        %v3050 = vand.u32 2147483647, %v2762
        %v3051 = vand.u32 2147483647, %v2763
        %v3052 = vand.u32 2147483647, %v2764
        %v3053 = vand.u32 2147483647, %v2765
        %v3054 = vand.u32 2147483647, %v2766
        %v3055 = vand.u32 2147483647, %v2767
        %v3056 = vand.u32 2147483647, %v2768
        %v3057 = vand.u32 2147483647, %v2769
        %v3058 = vand.u32 2147483647, %v2770
        %v3059 = vand.u32 2147483647, %v2771
        %v3060 = vand.u32 2147483647, %v2772
        %v3061 = vand.u32 2147483647, %v2773
        %v3062 = vand.u32 2147483647, %v2774
        %v3063 = vand.u32 2147483647, %v2775
        %v3064 = vand.u32 2147483647, %v2776
        %v3065 = vand.u32 2147483647, %v2777
        %v3066 = vand.u32 2147483647, %v2778
        %v3067 = vand.u32 2147483647, %v2779
        %v3068 = vand.u32 2147483647, %v2780
        %v3069 = vand.u32 2147483647, %v2781
        %v3070 = vand.u32 2147483647, %v2782
        %v3071 = vand.u32 2147483647, %v2783
        %v3072 = vand.u32 2147483647, %v2784
        %v3073 = vand.u32 2147483647, %v2785
        %v3074 = vand.u32 2147483647, %v2786
        %v3075 = vand.u32 2147483647, %v2787
        %v3076 = vand.u32 2147483647, %v2788
        %v3077 = vand.u32 2147483647, %v2789
        %v3078 = vand.u32 2147483647, %v2790
        %v3079 = vand.u32 2147483647, %v2791
        %v3080 = vand.u32 2147483647, %v2792
        %v3081 = vand.u32 2147483647, %v2793
        %v3082 = vand.u32 2147483647, %v2794
        %v3083 = vand.u32 2147483647, %v2795
        %v3084 = vand.u32 2147483647, %v2796
        %v3085 = vand.u32 2147483647, %v2797
        %v3086 = vand.u32 2147483647, %v2798
        %v3087 = vand.u32 2147483647, %v2799
        %v3088 = vand.u32 2147483647, %v2800
        %v3089 = vand.u32 2147483647, %v2801
        %v3090 = vand.u32 2147483647, %v2802
        %v3091 = vand.u32 2147483647, %v2803
        %v3092 = vand.u32 2147483647, %v2804
        %v3093 = vand.u32 2147483647, %v2805
        %v3094 = vand.u32 2147483647, %v2806
        %v3095 = vand.u32 2147483647, %v2807
        %v3096 = vand.u32 2147483647, %v2808
        %v3097 = vand.u32 2147483647, %v2809
        %v3098 = vand.u32 2147483647, %v2810
        %v3099 = vand.u32 2147483647, %v2811
        %v3100 = vand.u32 2147483647, %v2812
        %v3101 = vand.u32 2147483647, %v2813
        %v3102 = vand.u32 2147483647, %v2814
        %v3103 = vand.u32 2147483647, %v2815
        %v3104 = vand.u32 2147483647, %v2816
        %v3105 = vand.u32 2147483647, %v2817
        %v3106 = vand.u32 2147483647, %v2818
        %v3107 = vand.u32 2147483647, %v2819
        %v3108 = vand.u32 2147483647, %v2820
        %v3109 = vand.u32 2147483647, %v2821
        %v3110 = vand.u32 2147483647, %v2822
        %v3111 = vand.u32 2147483647, %v2823
        %v3112 = vand.u32 2147483647, %v2824
        %v3113 = vand.u32 2147483647, %v2825
        %v3114 = vand.u32 2147483647, %v2826
        %v3115 = vand.u32 2147483647, %v2827
        %v3116 = vand.u32 2147483647, %v2828
        %v3117 = vand.u32 2147483647, %v2829
        %v3118 = vand.u32 2147483647, %v2830
        %v3119 = vand.u32 2147483647, %v2831
        %v3120 = vand.u32 2147483647, %v2832
        %v3121 = vand.u32 2147483647, %v2833
        %v3122 = vand.u32 2147483647, %v2834
        %v3123 = vand.u32 2147483647, %v2835
        %v3124 = vand.u32 2147483647, %v2836
        %v3125 = vand.u32 2147483647, %v2837
        %v3126 = vand.u32 2147483647, %v2838
        %v3127 = vand.u32 2147483647, %v2839
        %v3128 = vand.u32 2147483647, %v2840
        %v3129 = vand.u32 2147483647, %v2841
        %v3130 = vand.u32 2147483647, %v2842
        %v3131 = vand.u32 2147483647, %v2843
        %v3132 = vand.u32 2147483647, %v2844
        %v3133 = vand.u32 2147483647, %v2845
        %v3134 = vand.u32 2147483647, %v2846
        %v3135 = vand.u32 2147483647, %v2847
        %v3136 = vand.u32 2147483647, %v2848
        %v3137 = vand.u32 2147483647, %v2849
        %v3138 = vand.u32 2147483647, %v2850
        %v3139 = vand.u32 2147483647, %v2851
        %v3140 = vand.u32 2147483647, %v2852
        %v3141 = vand.u32 2147483647, %v2853
        %v3142 = vand.u32 2147483647, %v2854
        %v3143 = vand.u32 2147483647, %v2855
        %v3144 = vand.u32 2147483647, %v2856
        %v3145 = vand.u32 2147483647, %v2857
        %v3146 = vand.u32 2147483647, %v2858
        %v3147 = vand.u32 2147483647, %v2859
        %v3148 = vand.u32 2147483647, %v2860
        %v3149 = vand.u32 2147483647, %v2861
        %v3150 = vand.u32 2147483647, %v2862
        %v3151 = vand.u32 2147483647, %v2863
        %v3152 = vand.u32 2147483647, %v2864
        %v3153 = vand.u32 2147483647, %v2865
        %v3154 = vand.u32 2147483647, %v2866
        %v3155 = vand.u32 2147483647, %v2867
        %v3156 = vand.u32 2147483647, %v2868
        %v3157 = vand.u32 2147483647, %v2869
        %v3158 = vand.u32 2147483647, %v2870
        %v3159 = vand.u32 2147483647, %v2871
        %v3160 = vand.u32 2147483647, %v2872
        %v3161 = vand.u32 2147483647, %v2873
        %v3162 = vand.u32 2147483647, %v2874
        %v3163 = vand.u32 2147483647, %v2875
        %v3164 = vand.u32 2147483647, %v2876
        %v3165 = vand.u32 2147483647, %v2877
        %v3166 = vand.u32 2147483647, %v2878
        %v3167 = vand.u32 2147483647, %v2879
        %v3168 = vand.u32 2147483647, %v2880
        %v3169 = vand.u32 2147483647, %v2881
        %v3170 = vand.u32 2147483647, %v2882
        %v3171 = vand.u32 2147483647, %v2883
        %v3172 = vand.u32 2147483647, %v2884
        %v3173 = vand.u32 2147483647, %v2885
        %v3174 = vand.u32 2147483647, %v2886
        %v3175 = vand.u32 2147483647, %v2887
        %v3176 = vand.u32 2147483647, %v2888
        %v3177 = vand.u32 2147483647, %v2889
        %v3178 = vand.u32 2147483647, %v2890
        %v3179 = vand.u32 2147483647, %v2891
        %v3180 = vand.u32 2147483647, %v2892
        %v3181 = vand.u32 2147483647, %v2893
        %v3182 = vand.u32 2147483647, %v2894
        %v3183 = vand.u32 2147483647, %v2895
        %v3184 = vand.u32 2147483647, %v2896
        %v3185 = vand.u32 2147483647, %v2897
        %v3186 = vand.u32 2147483647, %v2898
        %v3187 = vand.u32 2147483647, %v2899
        %v3188 = vand.u32 2147483647, %v2900
        %v3189 = vand.u32 2147483647, %v2901
        %v3190 = vand.u32 2147483647, %v2902
        %v3191 = vand.u32 2147483647, %v2903
        %v3192 = vand.u32 2147483647, %v2904
        %v3193 = vand.u32 2147483647, %v2905
        %v3194 = vand.u32 2147483647, %v2906
        %v3195 = vand.u32 2147483647, %v2907
        %v3196 = vand.u32 2147483647, %v2908
        %v3197 = vand.u32 2147483647, %v2909
        %v3198 = vand.u32 2147483647, %v2910
        %v3199 = vand.u32 2147483647, %v2911
        %v3200 = vand.u32 2147483647, %v2912
        %v3201 = vand.u32 2147483647, %v2913
        %v3202 = vand.u32 2147483647, %v2914
        %v3203 = vand.u32 2147483647, %v2915
        %v3204 = vand.u32 2147483647, %v2916
        %v3205 = vand.u32 2147483647, %v2917
        %v3206 = vand.u32 2147483647, %v2918
        %v3207 = vand.u32 2147483647, %v2919
        %v3208 = vand.u32 2147483647, %v2920
        %v3209 = vand.u32 2147483647, %v2921
        %v3210 = vand.u32 2147483647, %v2922
        %v3211 = vand.u32 2147483647, %v2923
        %v3212 = vand.u32 2147483647, %v2924
        %v3213 = vand.u32 2147483647, %v2925
        %v3214 = vand.u32 2147483647, %v2926
        %v3215 = vand.u32 2147483647, %v2927
        %v3216 = vand.u32 2147483647, %v2928
        %v3217 = vand.u32 2147483647, %v2929
        %v3218 = vand.u32 2147483647, %v2930
        %v3219 = vand.u32 2147483647, %v2931
        %v3220 = vand.u32 2147483647, %v2932
        %v3221 = vand.u32 2147483647, %v2933
        %v3222 = vand.u32 2147483647, %v2934
        %v3223 = vand.u32 2147483647, %v2935
        %v3224 = vand.u32 2147483647, %v2936
        %v3225 = vand.u32 2147483647, %v2937
        %v3226 = vand.u32 2147483647, %v2938
        %v3227 = vand.u32 2147483647, %v2939
        %v3228 = vand.u32 2147483647, %v2940
        %v3229 = vand.u32 2147483647, %v2941
        %v3230 = vand.u32 2147483647, %v2942
        %v3231 = vand.u32 2147483647, %v2943
        %v3232 = vand.u32 2147483647, %v2944
        %v3233 = vand.u32 2147483647, %v2945
        %v3234 = vand.u32 2147483647, %v2946
        %v3235 = vand.u32 2147483647, %v2947
        %v3236 = vand.u32 2147483647, %v2948
        %v3237 = vand.u32 2147483647, %v2949
        %v3238 = vand.u32 2147483647, %v2950
        %v3239 = vand.u32 2147483647, %v2951
        %v3240 = vand.u32 2147483647, %v2952
        %v3241 = vand.u32 2147483647, %v2953
        %v3242 = vand.u32 2147483647, %v2954
        %v3243 = vand.u32 2147483647, %v2955
        %v3244 = vand.u32 2147483647, %v2956
        %v3245 = vand.u32 2147483647, %v2957
        %v3246 = vand.u32 2147483647, %v2958
        %v3247 = vand.u32 2147483647, %v2959
        %v3248 = vand.u32 2147483647, %v2960
        %v3249 = vand.u32 2147483647, %v2961
        %v3250 = vand.u32 2147483647, %v2962
        %v3251 = vand.u32 2147483647, %v2963
        %v3252 = vand.u32 2147483647, %v2964
        %v3253 = vand.u32 2147483647, %v2965
        %v3254 = vand.u32 2147483647, %v2966
        %v3255 = vand.u32 2147483647, %v2967
        %v3256 = vand.u32 2147483647, %v2968
        %v3257 = vand.u32 2147483647, %v2969
        %v3258 = vand.u32 2147483647, %v2970
        %v3259 = vand.u32 2147483647, %v2971
        %v3260 = vand.u32 2147483647, %v2972
        %v3261 = vand.u32 2147483647, %v2973
        %v3262 = vand.u32 2147483647, %v2974
        %v3263 = vand.u32 2147483647, %v2975
        %v3264 = vand.u32 2147483647, %v2976
        %v3265 = vand.u32 2147483647, %v2977
        %v3266 = vand.u32 2147483647, %v2978
        %v3267 = vand.u32 2147483647, %v2979
        %v3268 = vand.u32 2147483647, %v2980
        %v3269 = vand.u32 2147483647, %v2981
        %v3270 = vand.u32 2147483647, %v2982
        %v3271 = vand.u32 2147483647, %v2983
        %v3272 = vand.u32 2147483647, %v2984
        %v3273 = vand.u32 2147483647, %v2985
        %v3274 = vand.u32 2147483647, %v2986
        %v3275 = vand.u32 2147483647, %v2987
        %v3276 = vand.u32 2147483647, %v2988
        %v3277 = vand.u32 2147483647, %v2989
        %v3278 = vand.u32 2147483647, %v2990
        %v3279 = vand.u32 2147483647, %v2991
        %v3280 = vand.u32 2147483647, %v2992
        %v3281 = vand.u32 2147483647, %v2993
        %v3282 = vand.u32 2147483647, %v2994
        %v3283 = vand.u32 2147483647, %v2995
        %v3284 = vand.u32 2147483647, %v2996
        %v3285 = vand.u32 2147483647, %v2997
        %v3286 = vand.u32 2147483647, %v2998
        %v3287 = vand.u32 2147483647, %v2999
        %v3288 = vand.u32 2147483647, %v3000
        %v3289 = vand.u32 2147483647, %v3001
        %v3290 = vand.u32 2147483647, %v3002
        %v3291 = vand.u32 2147483647, %v3003
        %v3292 = vand.u32 2147483647, %v3004
        %v3293 = vand.u32 2147483647, %v3005
        %v3294 = vand.u32 2147483647, %v3006
        %v3295 = vand.u32 2147483647, %v3007
        %v3296 = vand.u32 2147483647, %v3008
        %v3297 = vand.u32 2147483647, %v3009
        %v3298 = vand.u32 2147483647, %v3010
        %v3299 = vand.u32 2147483647, %v3011
        %v3300 = vand.u32 2147483647, %v3012
        %v3301 = vand.u32 2147483647, %v3013
        %v3302 = vand.u32 2147483647, %v3014
        %v3303 = vand.u32 2147483647, %v3015
        %v3304 = vand.u32 2147483647, %v3016
        %v3305 = vand.u32 2147483647, %v3017
        %v3306 = vand.u32 2147483647, %v3018
        %v3307 = vsub.f32 1.0, %v3019
        %v3308 = vsub.f32 1.0, %v3020
        %v3309 = vsub.f32 1.0, %v3021
        %v3310 = vsub.f32 1.0, %v3022
        %v3311 = vsub.f32 1.0, %v3023
        %v3312 = vsub.f32 1.0, %v3024
        %v3313 = vsub.f32 1.0, %v3025
        %v3314 = vsub.f32 1.0, %v3026
        %v3315 = vsub.f32 1.0, %v3027
        %v3316 = vsub.f32 1.0, %v3028
        %v3317 = vsub.f32 1.0, %v3029
        %v3318 = vsub.f32 1.0, %v3030
        %v3319 = vsub.f32 1.0, %v3031
        %v3320 = vsub.f32 1.0, %v3032
        %v3321 = vsub.f32 1.0, %v3033
        %v3322 = vsub.f32 1.0, %v3034
        %v3323 = vsub.f32 1.0, %v3035
        %v3324 = vsub.f32 1.0, %v3036
        %v3325 = vsub.f32 1.0, %v3037
        %v3326 = vsub.f32 1.0, %v3038
        %v3327 = vsub.f32 1.0, %v3039
        %v3328 = vsub.f32 1.0, %v3040
        %v3329 = vsub.f32 1.0, %v3041
        %v3330 = vsub.f32 1.0, %v3042
        %v3331 = vsub.f32 1.0, %v3043
        %v3332 = vsub.f32 1.0, %v3044
        %v3333 = vsub.f32 1.0, %v3045
        %v3334 = vsub.f32 1.0, %v3046
        %v3335 = vsub.f32 1.0, %v3047
        %v3336 = vsub.f32 1.0, %v3048
        %v3337 = vsub.f32 1.0, %v3049
        %v3338 = vsub.f32 1.0, %v3050
        %v3339 = vsub.f32 1.0, %v3051
        %v3340 = vsub.f32 1.0, %v3052
        %v3341 = vsub.f32 1.0, %v3053
        %v3342 = vsub.f32 1.0, %v3054
        %v3343 = vsub.f32 1.0, %v3055
        %v3344 = vsub.f32 1.0, %v3056
        %v3345 = vsub.f32 1.0, %v3057
        %v3346 = vsub.f32 1.0, %v3058
        %v3347 = vsub.f32 1.0, %v3059
        %v3348 = vsub.f32 1.0, %v3060
        %v3349 = vsub.f32 1.0, %v3061
        %v3350 = vsub.f32 1.0, %v3062
        %v3351 = vsub.f32 1.0, %v3063
        %v3352 = vsub.f32 1.0, %v3064
        %v3353 = vsub.f32 1.0, %v3065
        %v3354 = vsub.f32 1.0, %v3066
        %v3355 = vsub.f32 1.0, %v3067
        %v3356 = vsub.f32 1.0, %v3068
        %v3357 = vsub.f32 1.0, %v3069
        %v3358 = vsub.f32 1.0, %v3070
        %v3359 = vsub.f32 1.0, %v3071
        %v3360 = vsub.f32 1.0, %v3072
        %v3361 = vsub.f32 1.0, %v3073
        %v3362 = vsub.f32 1.0, %v3074
        %v3363 = vsub.f32 1.0, %v3075
        %v3364 = vsub.f32 1.0, %v3076
        %v3365 = vsub.f32 1.0, %v3077
        %v3366 = vsub.f32 1.0, %v3078
        %v3367 = vsub.f32 1.0, %v3079
        %v3368 = vsub.f32 1.0, %v3080
        %v3369 = vsub.f32 1.0, %v3081
        %v3370 = vsub.f32 1.0, %v3082
        %v3371 = vsub.f32 1.0, %v3083
        %v3372 = vsub.f32 1.0, %v3084
        %v3373 = vsub.f32 1.0, %v3085
        %v3374 = vsub.f32 1.0, %v3086
        %v3375 = vsub.f32 1.0, %v3087
        %v3376 = vsub.f32 1.0, %v3088
        %v3377 = vsub.f32 1.0, %v3089
        %v3378 = vsub.f32 1.0, %v3090
        %v3379 = vsub.f32 1.0, %v3091
        %v3380 = vsub.f32 1.0, %v3092
        %v3381 = vsub.f32 1.0, %v3093
        %v3382 = vsub.f32 1.0, %v3094
        %v3383 = vsub.f32 1.0, %v3095
        %v3384 = vsub.f32 1.0, %v3096
        %v3385 = vsub.f32 1.0, %v3097
        %v3386 = vsub.f32 1.0, %v3098
        %v3387 = vsub.f32 1.0, %v3099
        %v3388 = vsub.f32 1.0, %v3100
        %v3389 = vsub.f32 1.0, %v3101
        %v3390 = vsub.f32 1.0, %v3102
        %v3391 = vsub.f32 1.0, %v3103
        %v3392 = vsub.f32 1.0, %v3104
        %v3393 = vsub.f32 1.0, %v3105
        %v3394 = vsub.f32 1.0, %v3106
        %v3395 = vsub.f32 1.0, %v3107
        %v3396 = vsub.f32 1.0, %v3108
        %v3397 = vsub.f32 1.0, %v3109
        %v3398 = vsub.f32 1.0, %v3110
        %v3399 = vsub.f32 1.0, %v3111
        %v3400 = vsub.f32 1.0, %v3112
        %v3401 = vsub.f32 1.0, %v3113
        %v3402 = vsub.f32 1.0, %v3114
        %v3403 = vsub.f32 1.0, %v3115
        %v3404 = vsub.f32 1.0, %v3116
        %v3405 = vsub.f32 1.0, %v3117
        %v3406 = vsub.f32 1.0, %v3118
        %v3407 = vsub.f32 1.0, %v3119
        %v3408 = vsub.f32 1.0, %v3120
        %v3409 = vsub.f32 1.0, %v3121
        %v3410 = vsub.f32 1.0, %v3122
        %v3411 = vsub.f32 1.0, %v3123
        %v3412 = vsub.f32 1.0, %v3124
        %v3413 = vsub.f32 1.0, %v3125
        %v3414 = vsub.f32 1.0, %v3126
        %v3415 = vsub.f32 1.0, %v3127
        %v3416 = vsub.f32 1.0, %v3128
        %v3417 = vsub.f32 1.0, %v3129
        %v3418 = vsub.f32 1.0, %v3130
        %v3419 = vsub.f32 1.0, %v3131
        %v3420 = vsub.f32 1.0, %v3132
        %v3421 = vsub.f32 1.0, %v3133
        %v3422 = vsub.f32 1.0, %v3134
        %v3423 = vsub.f32 1.0, %v3135
        %v3424 = vsub.f32 1.0, %v3136
        %v3425 = vsub.f32 1.0, %v3137
        %v3426 = vsub.f32 1.0, %v3138
        %v3427 = vsub.f32 1.0, %v3139
        %v3428 = vsub.f32 1.0, %v3140
        %v3429 = vsub.f32 1.0, %v3141
        %v3430 = vsub.f32 1.0, %v3142
        %v3431 = vsub.f32 1.0, %v3143
        %v3432 = vsub.f32 1.0, %v3144
        %v3433 = vsub.f32 1.0, %v3145
        %v3434 = vsub.f32 1.0, %v3146
        %v3435 = vsub.f32 1.0, %v3147
        %v3436 = vsub.f32 1.0, %v3148
        %v3437 = vsub.f32 1.0, %v3149
        %v3438 = vsub.f32 1.0, %v3150
        %v3439 = vsub.f32 1.0, %v3151
        %v3440 = vsub.f32 1.0, %v3152
        %v3441 = vsub.f32 1.0, %v3153
        %v3442 = vsub.f32 1.0, %v3154
        %v3443 = vsub.f32 1.0, %v3155
        %v3444 = vsub.f32 1.0, %v3156
        %v3445 = vsub.f32 1.0, %v3157
        %v3446 = vsub.f32 1.0, %v3158
        %v3447 = vsub.f32 1.0, %v3159
        %v3448 = vsub.f32 1.0, %v3160
        %v3449 = vsub.f32 1.0, %v3161
        %v3450 = vsub.f32 1.0, %v3162
        %v3451 = vsub.f32 1.0, %v3163
        %v3452 = vsub.f32 1.0, %v3164
        %v3453 = vsub.f32 1.0, %v3165
        %v3454 = vsub.f32 1.0, %v3166
        %v3455 = vsub.f32 1.0, %v3167
        %v3456 = vsub.f32 1.0, %v3168
        %v3457 = vsub.f32 1.0, %v3169
        %v3458 = vsub.f32 1.0, %v3170
        %v3459 = vsub.f32 1.0, %v3171
        %v3460 = vsub.f32 1.0, %v3172
        %v3461 = vsub.f32 1.0, %v3173
        %v3462 = vsub.f32 1.0, %v3174
        %v3463 = vsub.f32 1.0, %v3175
        %v3464 = vsub.f32 1.0, %v3176
        %v3465 = vsub.f32 1.0, %v3177
        %v3466 = vsub.f32 1.0, %v3178
        %v3467 = vsub.f32 1.0, %v3179
        %v3468 = vsub.f32 1.0, %v3180
        %v3469 = vsub.f32 1.0, %v3181
        %v3470 = vsub.f32 1.0, %v3182
        %v3471 = vsub.f32 1.0, %v3183
        %v3472 = vsub.f32 1.0, %v3184
        %v3473 = vsub.f32 1.0, %v3185
        %v3474 = vsub.f32 1.0, %v3186
        %v3475 = vsub.f32 1.0, %v3187
        %v3476 = vsub.f32 1.0, %v3188
        %v3477 = vsub.f32 1.0, %v3189
        %v3478 = vsub.f32 1.0, %v3190
        %v3479 = vsub.f32 1.0, %v3191
        %v3480 = vsub.f32 1.0, %v3192
        %v3481 = vsub.f32 1.0, %v3193
        %v3482 = vsub.f32 1.0, %v3194
        %v3483 = vsub.f32 1.0, %v3195
        %v3484 = vsub.f32 1.0, %v3196
        %v3485 = vsub.f32 1.0, %v3197
        %v3486 = vsub.f32 1.0, %v3198
        %v3487 = vsub.f32 1.0, %v3199
        %v3488 = vsub.f32 1.0, %v3200
        %v3489 = vsub.f32 1.0, %v3201
        %v3490 = vsub.f32 1.0, %v3202
        %v3491 = vsub.f32 1.0, %v3203
        %v3492 = vsub.f32 1.0, %v3204
        %v3493 = vsub.f32 1.0, %v3205
        %v3494 = vsub.f32 1.0, %v3206
        %v3495 = vsub.f32 1.0, %v3207
        %v3496 = vsub.f32 1.0, %v3208
        %v3497 = vsub.f32 1.0, %v3209
        %v3498 = vsub.f32 1.0, %v3210
        %v3499 = vsub.f32 1.0, %v3211
        %v3500 = vsub.f32 1.0, %v3212
        %v3501 = vsub.f32 1.0, %v3213
        %v3502 = vsub.f32 1.0, %v3214
        %v3503 = vsub.f32 1.0, %v3215
        %v3504 = vsub.f32 1.0, %v3216
        %v3505 = vsub.f32 1.0, %v3217
        %v3506 = vsub.f32 1.0, %v3218
        %v3507 = vsub.f32 1.0, %v3219
        %v3508 = vsub.f32 1.0, %v3220
        %v3509 = vsub.f32 1.0, %v3221
        %v3510 = vsub.f32 1.0, %v3222
        %v3511 = vsub.f32 1.0, %v3223
        %v3512 = vsub.f32 1.0, %v3224
        %v3513 = vsub.f32 1.0, %v3225
        %v3514 = vsub.f32 1.0, %v3226
        %v3515 = vsub.f32 1.0, %v3227
        %v3516 = vsub.f32 1.0, %v3228
        %v3517 = vsub.f32 1.0, %v3229
        %v3518 = vsub.f32 1.0, %v3230
        %v3519 = vsub.f32 1.0, %v3231
        %v3520 = vsub.f32 1.0, %v3232
        %v3521 = vsub.f32 1.0, %v3233
        %v3522 = vsub.f32 1.0, %v3234
        %v3523 = vsub.f32 1.0, %v3235
        %v3524 = vsub.f32 1.0, %v3236
        %v3525 = vsub.f32 1.0, %v3237
        %v3526 = vsub.f32 1.0, %v3238
        %v3527 = vsub.f32 1.0, %v3239
        %v3528 = vsub.f32 1.0, %v3240
        %v3529 = vsub.f32 1.0, %v3241
        %v3530 = vsub.f32 1.0, %v3242
        %v3531 = vsub.f32 1.0, %v3243
        %v3532 = vsub.f32 1.0, %v3244
        %v3533 = vsub.f32 1.0, %v3245
        %v3534 = vsub.f32 1.0, %v3246
        %v3535 = vsub.f32 1.0, %v3247
        %v3536 = vsub.f32 1.0, %v3248
        %v3537 = vsub.f32 1.0, %v3249
        %v3538 = vsub.f32 1.0, %v3250
        %v3539 = vsub.f32 1.0, %v3251
        %v3540 = vsub.f32 1.0, %v3252
        %v3541 = vsub.f32 1.0, %v3253
        %v3542 = vsub.f32 1.0, %v3254
        %v3543 = vsub.f32 1.0, %v3255
        %v3544 = vsub.f32 1.0, %v3256
        %v3545 = vsub.f32 1.0, %v3257
        %v3546 = vsub.f32 1.0, %v3258
        %v3547 = vsub.f32 1.0, %v3259
        %v3548 = vsub.f32 1.0, %v3260
        %v3549 = vsub.f32 1.0, %v3261
        %v3550 = vsub.f32 1.0, %v3262
        %v3551 = vsub.f32 1.0, %v3263
        %v3552 = vsub.f32 1.0, %v3264
        %v3553 = vsub.f32 1.0, %v3265
        %v3554 = vsub.f32 1.0, %v3266
        %v3555 = vsub.f32 1.0, %v3267
        %v3556 = vsub.f32 1.0, %v3268
        %v3557 = vsub.f32 1.0, %v3269
        %v3558 = vsub.f32 1.0, %v3270
        %v3559 = vsub.f32 1.0, %v3271
        %v3560 = vsub.f32 1.0, %v3272
        %v3561 = vsub.f32 1.0, %v3273
        %v3562 = vsub.f32 1.0, %v3274
        %v3563 = vsub.f32 1.0, %v3275
        %v3564 = vsub.f32 1.0, %v3276
        %v3565 = vsub.f32 1.0, %v3277
        %v3566 = vsub.f32 1.0, %v3278
        %v3567 = vsub.f32 1.0, %v3279
        %v3568 = vsub.f32 1.0, %v3280
        %v3569 = vsub.f32 1.0, %v3281
        %v3570 = vsub.f32 1.0, %v3282
        %v3571 = vsub.f32 1.0, %v3283
        %v3572 = vsub.f32 1.0, %v3284
        %v3573 = vsub.f32 1.0, %v3285
        %v3574 = vsub.f32 1.0, %v3286
        %v3575 = vsub.f32 1.0, %v3287
        %v3576 = vsub.f32 1.0, %v3288
        %v3577 = vsub.f32 1.0, %v3289
        %v3578 = vsub.f32 1.0, %v3290
        %v3579 = vsub.f32 1.0, %v3291
        %v3580 = vsub.f32 1.0, %v3292
        %v3581 = vsub.f32 1.0, %v3293
        %v3582 = vsub.f32 1.0, %v3294
        %v3583 = vsub.f32 1.0, %v3295
        %v3584 = vsub.f32 1.0, %v3296
        %v3585 = vsub.f32 1.0, %v3297
        %v3586 = vsub.f32 1.0, %v3298
        %v3587 = vsub.f32 1.0, %v3299
        %v3588 = vsub.f32 1.0, %v3300
        %v3589 = vsub.f32 1.0, %v3301
        %v3590 = vsub.f32 1.0, %v3302
        %v3591 = vsub.f32 1.0, %v3303
        %v3592 = vsub.f32 1.0, %v3304
        %v3593 = vsub.f32 1.0, %v3305
        %v3594 = vsub.f32 1.0, %v3306
        %v3595 = vmax.f32 %v3307, 0.0
        %v3596 = vmax.f32 %v3308, 0.0
        %v3597 = vmax.f32 %v3309, 0.0
        %v3598 = vmax.f32 %v3310, 0.0
        %v3599 = vmax.f32 %v3311, 0.0
        %v3600 = vmax.f32 %v3312, 0.0
        %v3601 = vmax.f32 %v3313, 0.0
        %v3602 = vmax.f32 %v3314, 0.0
        %v3603 = vmax.f32 %v3315, 0.0
        %v3604 = vmax.f32 %v3316, 0.0
        %v3605 = vmax.f32 %v3317, 0.0
        %v3606 = vmax.f32 %v3318, 0.0
        %v3607 = vmax.f32 %v3319, 0.0
        %v3608 = vmax.f32 %v3320, 0.0
        %v3609 = vmax.f32 %v3321, 0.0
        %v3610 = vmax.f32 %v3322, 0.0
        %v3611 = vmax.f32 %v3323, 0.0
        %v3612 = vmax.f32 %v3324, 0.0
        %v3613 = vmax.f32 %v3325, 0.0
        %v3614 = vmax.f32 %v3326, 0.0
        %v3615 = vmax.f32 %v3327, 0.0
        %v3616 = vmax.f32 %v3328, 0.0
        %v3617 = vmax.f32 %v3329, 0.0
        %v3618 = vmax.f32 %v3330, 0.0
        %v3619 = vmax.f32 %v3331, 0.0
        %v3620 = vmax.f32 %v3332, 0.0
        %v3621 = vmax.f32 %v3333, 0.0
        %v3622 = vmax.f32 %v3334, 0.0
        %v3623 = vmax.f32 %v3335, 0.0
        %v3624 = vmax.f32 %v3336, 0.0
        %v3625 = vmax.f32 %v3337, 0.0
        %v3626 = vmax.f32 %v3338, 0.0
        %v3627 = vmax.f32 %v3339, 0.0
        %v3628 = vmax.f32 %v3340, 0.0
        %v3629 = vmax.f32 %v3341, 0.0
        %v3630 = vmax.f32 %v3342, 0.0
        %v3631 = vmax.f32 %v3343, 0.0
        %v3632 = vmax.f32 %v3344, 0.0
        %v3633 = vmax.f32 %v3345, 0.0
        %v3634 = vmax.f32 %v3346, 0.0
        %v3635 = vmax.f32 %v3347, 0.0
        %v3636 = vmax.f32 %v3348, 0.0
        %v3637 = vmax.f32 %v3349, 0.0
        %v3638 = vmax.f32 %v3350, 0.0
        %v3639 = vmax.f32 %v3351, 0.0
        %v3640 = vmax.f32 %v3352, 0.0
        %v3641 = vmax.f32 %v3353, 0.0
        %v3642 = vmax.f32 %v3354, 0.0
        %v3643 = vmax.f32 %v3355, 0.0
        %v3644 = vmax.f32 %v3356, 0.0
        %v3645 = vmax.f32 %v3357, 0.0
        %v3646 = vmax.f32 %v3358, 0.0
        %v3647 = vmax.f32 %v3359, 0.0
        %v3648 = vmax.f32 %v3360, 0.0
        %v3649 = vmax.f32 %v3361, 0.0
        %v3650 = vmax.f32 %v3362, 0.0
        %v3651 = vmax.f32 %v3363, 0.0
        %v3652 = vmax.f32 %v3364, 0.0
        %v3653 = vmax.f32 %v3365, 0.0
        %v3654 = vmax.f32 %v3366, 0.0
        %v3655 = vmax.f32 %v3367, 0.0
        %v3656 = vmax.f32 %v3368, 0.0
        %v3657 = vmax.f32 %v3369, 0.0
        %v3658 = vmax.f32 %v3370, 0.0
        %v3659 = vmax.f32 %v3371, 0.0
        %v3660 = vmax.f32 %v3372, 0.0
        %v3661 = vmax.f32 %v3373, 0.0
        %v3662 = vmax.f32 %v3374, 0.0
        %v3663 = vmax.f32 %v3375, 0.0
        %v3664 = vmax.f32 %v3376, 0.0
        %v3665 = vmax.f32 %v3377, 0.0
        %v3666 = vmax.f32 %v3378, 0.0
        %v3667 = vmax.f32 %v3379, 0.0
        %v3668 = vmax.f32 %v3380, 0.0
        %v3669 = vmax.f32 %v3381, 0.0
        %v3670 = vmax.f32 %v3382, 0.0
        %v3671 = vmax.f32 %v3383, 0.0
        %v3672 = vmax.f32 %v3384, 0.0
        %v3673 = vmax.f32 %v3385, 0.0
        %v3674 = vmax.f32 %v3386, 0.0
        %v3675 = vmax.f32 %v3387, 0.0
        %v3676 = vmax.f32 %v3388, 0.0
        %v3677 = vmax.f32 %v3389, 0.0
        %v3678 = vmax.f32 %v3390, 0.0
        %v3679 = vmax.f32 %v3391, 0.0
        %v3680 = vmax.f32 %v3392, 0.0
        %v3681 = vmax.f32 %v3393, 0.0
        %v3682 = vmax.f32 %v3394, 0.0
        %v3683 = vmax.f32 %v3395, 0.0
        %v3684 = vmax.f32 %v3396, 0.0
        %v3685 = vmax.f32 %v3397, 0.0
        %v3686 = vmax.f32 %v3398, 0.0
        %v3687 = vmax.f32 %v3399, 0.0
        %v3688 = vmax.f32 %v3400, 0.0
        %v3689 = vmax.f32 %v3401, 0.0
        %v3690 = vmax.f32 %v3402, 0.0
        %v3691 = vmax.f32 %v3403, 0.0
        %v3692 = vmax.f32 %v3404, 0.0
        %v3693 = vmax.f32 %v3405, 0.0
        %v3694 = vmax.f32 %v3406, 0.0
        %v3695 = vmax.f32 %v3407, 0.0
        %v3696 = vmax.f32 %v3408, 0.0
        %v3697 = vmax.f32 %v3409, 0.0
        %v3698 = vmax.f32 %v3410, 0.0
        %v3699 = vmax.f32 %v3411, 0.0
        %v3700 = vmax.f32 %v3412, 0.0
        %v3701 = vmax.f32 %v3413, 0.0
        %v3702 = vmax.f32 %v3414, 0.0
        %v3703 = vmax.f32 %v3415, 0.0
        %v3704 = vmax.f32 %v3416, 0.0
        %v3705 = vmax.f32 %v3417, 0.0
        %v3706 = vmax.f32 %v3418, 0.0
        %v3707 = vmax.f32 %v3419, 0.0
        %v3708 = vmax.f32 %v3420, 0.0
        %v3709 = vmax.f32 %v3421, 0.0
        %v3710 = vmax.f32 %v3422, 0.0
        %v3711 = vmax.f32 %v3423, 0.0
        %v3712 = vmax.f32 %v3424, 0.0
        %v3713 = vmax.f32 %v3425, 0.0
        %v3714 = vmax.f32 %v3426, 0.0
        %v3715 = vmax.f32 %v3427, 0.0
        %v3716 = vmax.f32 %v3428, 0.0
        %v3717 = vmax.f32 %v3429, 0.0
        %v3718 = vmax.f32 %v3430, 0.0
        %v3719 = vmax.f32 %v3431, 0.0
        %v3720 = vmax.f32 %v3432, 0.0
        %v3721 = vmax.f32 %v3433, 0.0
        %v3722 = vmax.f32 %v3434, 0.0
        %v3723 = vmax.f32 %v3435, 0.0
        %v3724 = vmax.f32 %v3436, 0.0
        %v3725 = vmax.f32 %v3437, 0.0
        %v3726 = vmax.f32 %v3438, 0.0
        %v3727 = vmax.f32 %v3439, 0.0
        %v3728 = vmax.f32 %v3440, 0.0
        %v3729 = vmax.f32 %v3441, 0.0
        %v3730 = vmax.f32 %v3442, 0.0
        %v3731 = vmax.f32 %v3443, 0.0
        %v3732 = vmax.f32 %v3444, 0.0
        %v3733 = vmax.f32 %v3445, 0.0
        %v3734 = vmax.f32 %v3446, 0.0
        %v3735 = vmax.f32 %v3447, 0.0
        %v3736 = vmax.f32 %v3448, 0.0
        %v3737 = vmax.f32 %v3449, 0.0
        %v3738 = vmax.f32 %v3450, 0.0
        %v3739 = vmax.f32 %v3451, 0.0
        %v3740 = vmax.f32 %v3452, 0.0
        %v3741 = vmax.f32 %v3453, 0.0
        %v3742 = vmax.f32 %v3454, 0.0
        %v3743 = vmax.f32 %v3455, 0.0
        %v3744 = vmax.f32 %v3456, 0.0
        %v3745 = vmax.f32 %v3457, 0.0
        %v3746 = vmax.f32 %v3458, 0.0
        %v3747 = vmax.f32 %v3459, 0.0
        %v3748 = vmax.f32 %v3460, 0.0
        %v3749 = vmax.f32 %v3461, 0.0
        %v3750 = vmax.f32 %v3462, 0.0
        %v3751 = vmax.f32 %v3463, 0.0
        %v3752 = vmax.f32 %v3464, 0.0
        %v3753 = vmax.f32 %v3465, 0.0
        %v3754 = vmax.f32 %v3466, 0.0
        %v3755 = vmax.f32 %v3467, 0.0
        %v3756 = vmax.f32 %v3468, 0.0
        %v3757 = vmax.f32 %v3469, 0.0
        %v3758 = vmax.f32 %v3470, 0.0
        %v3759 = vmax.f32 %v3471, 0.0
        %v3760 = vmax.f32 %v3472, 0.0
        %v3761 = vmax.f32 %v3473, 0.0
        %v3762 = vmax.f32 %v3474, 0.0
        %v3763 = vmax.f32 %v3475, 0.0
        %v3764 = vmax.f32 %v3476, 0.0
        %v3765 = vmax.f32 %v3477, 0.0
        %v3766 = vmax.f32 %v3478, 0.0
        %v3767 = vmax.f32 %v3479, 0.0
        %v3768 = vmax.f32 %v3480, 0.0
        %v3769 = vmax.f32 %v3481, 0.0
        %v3770 = vmax.f32 %v3482, 0.0
        %v3771 = vmax.f32 %v3483, 0.0
        %v3772 = vmax.f32 %v3484, 0.0
        %v3773 = vmax.f32 %v3485, 0.0
        %v3774 = vmax.f32 %v3486, 0.0
        %v3775 = vmax.f32 %v3487, 0.0
        %v3776 = vmax.f32 %v3488, 0.0
        %v3777 = vmax.f32 %v3489, 0.0
        %v3778 = vmax.f32 %v3490, 0.0
        %v3779 = vmax.f32 %v3491, 0.0
        %v3780 = vmax.f32 %v3492, 0.0
        %v3781 = vmax.f32 %v3493, 0.0
        %v3782 = vmax.f32 %v3494, 0.0
        %v3783 = vmax.f32 %v3495, 0.0
        %v3784 = vmax.f32 %v3496, 0.0
        %v3785 = vmax.f32 %v3497, 0.0
        %v3786 = vmax.f32 %v3498, 0.0
        %v3787 = vmax.f32 %v3499, 0.0
        %v3788 = vmax.f32 %v3500, 0.0
        %v3789 = vmax.f32 %v3501, 0.0
        %v3790 = vmax.f32 %v3502, 0.0
        %v3791 = vmax.f32 %v3503, 0.0
        %v3792 = vmax.f32 %v3504, 0.0
        %v3793 = vmax.f32 %v3505, 0.0
        %v3794 = vmax.f32 %v3506, 0.0
        %v3795 = vmax.f32 %v3507, 0.0
        %v3796 = vmax.f32 %v3508, 0.0
        %v3797 = vmax.f32 %v3509, 0.0
        %v3798 = vmax.f32 %v3510, 0.0
        %v3799 = vmax.f32 %v3511, 0.0
        %v3800 = vmax.f32 %v3512, 0.0
        %v3801 = vmax.f32 %v3513, 0.0
        %v3802 = vmax.f32 %v3514, 0.0
        %v3803 = vmax.f32 %v3515, 0.0
        %v3804 = vmax.f32 %v3516, 0.0
        %v3805 = vmax.f32 %v3517, 0.0
        %v3806 = vmax.f32 %v3518, 0.0
        %v3807 = vmax.f32 %v3519, 0.0
        %v3808 = vmax.f32 %v3520, 0.0
        %v3809 = vmax.f32 %v3521, 0.0
        %v3810 = vmax.f32 %v3522, 0.0
        %v3811 = vmax.f32 %v3523, 0.0
        %v3812 = vmax.f32 %v3524, 0.0
        %v3813 = vmax.f32 %v3525, 0.0
        %v3814 = vmax.f32 %v3526, 0.0
        %v3815 = vmax.f32 %v3527, 0.0
        %v3816 = vmax.f32 %v3528, 0.0
        %v3817 = vmax.f32 %v3529, 0.0
        %v3818 = vmax.f32 %v3530, 0.0
        %v3819 = vmax.f32 %v3531, 0.0
        %v3820 = vmax.f32 %v3532, 0.0
        %v3821 = vmax.f32 %v3533, 0.0
        %v3822 = vmax.f32 %v3534, 0.0
        %v3823 = vmax.f32 %v3535, 0.0
        %v3824 = vmax.f32 %v3536, 0.0
        %v3825 = vmax.f32 %v3537, 0.0
        %v3826 = vmax.f32 %v3538, 0.0
        %v3827 = vmax.f32 %v3539, 0.0
        %v3828 = vmax.f32 %v3540, 0.0
        %v3829 = vmax.f32 %v3541, 0.0
        %v3830 = vmax.f32 %v3542, 0.0
        %v3831 = vmax.f32 %v3543, 0.0
        %v3832 = vmax.f32 %v3544, 0.0
        %v3833 = vmax.f32 %v3545, 0.0
        %v3834 = vmax.f32 %v3546, 0.0
        %v3835 = vmax.f32 %v3547, 0.0
        %v3836 = vmax.f32 %v3548, 0.0
        %v3837 = vmax.f32 %v3549, 0.0
        %v3838 = vmax.f32 %v3550, 0.0
        %v3839 = vmax.f32 %v3551, 0.0
        %v3840 = vmax.f32 %v3552, 0.0
        %v3841 = vmax.f32 %v3553, 0.0
        %v3842 = vmax.f32 %v3554, 0.0
        %v3843 = vmax.f32 %v3555, 0.0
        %v3844 = vmax.f32 %v3556, 0.0
        %v3845 = vmax.f32 %v3557, 0.0
        %v3846 = vmax.f32 %v3558, 0.0
        %v3847 = vmax.f32 %v3559, 0.0
        %v3848 = vmax.f32 %v3560, 0.0
        %v3849 = vmax.f32 %v3561, 0.0
        %v3850 = vmax.f32 %v3562, 0.0
        %v3851 = vmax.f32 %v3563, 0.0
        %v3852 = vmax.f32 %v3564, 0.0
        %v3853 = vmax.f32 %v3565, 0.0
        %v3854 = vmax.f32 %v3566, 0.0
        %v3855 = vmax.f32 %v3567, 0.0
        %v3856 = vmax.f32 %v3568, 0.0
        %v3857 = vmax.f32 %v3569, 0.0
        %v3858 = vmax.f32 %v3570, 0.0
        %v3859 = vmax.f32 %v3571, 0.0
        %v3860 = vmax.f32 %v3572, 0.0
        %v3861 = vmax.f32 %v3573, 0.0
        %v3862 = vmax.f32 %v3574, 0.0
        %v3863 = vmax.f32 %v3575, 0.0
        %v3864 = vmax.f32 %v3576, 0.0
        %v3865 = vmax.f32 %v3577, 0.0
        %v3866 = vmax.f32 %v3578, 0.0
        %v3867 = vmax.f32 %v3579, 0.0
        %v3868 = vmax.f32 %v3580, 0.0
        %v3869 = vmax.f32 %v3581, 0.0
        %v3870 = vmax.f32 %v3582, 0.0
        %v3871 = vmax.f32 %v3583, 0.0
        %v3872 = vmax.f32 %v3584, 0.0
        %v3873 = vmax.f32 %v3585, 0.0
        %v3874 = vmax.f32 %v3586, 0.0
        %v3875 = vmax.f32 %v3587, 0.0
        %v3876 = vmax.f32 %v3588, 0.0
        %v3877 = vmax.f32 %v3589, 0.0
        %v3878 = vmax.f32 %v3590, 0.0
        %v3879 = vmax.f32 %v3591, 0.0
        %v3880 = vmax.f32 %v3592, 0.0
        %v3881 = vmax.f32 %v3593, 0.0
        %v3882 = vmax.f32 %v3594, 0.0
        %v3883 = vmul.f32 %v2437, %v3595
        %v3884 = vmul.f32 %v2438, %v3596
        %v3885 = vmul.f32 %v2439, %v3597
        %v3886 = vmul.f32 %v2440, %v3598
        %v3887 = vmul.f32 %v2441, %v3599
        %v3888 = vmul.f32 %v2442, %v3600
        %v3889 = vmul.f32 %v2443, %v3601
        %v3890 = vmul.f32 %v2444, %v3602
        %v3891 = vmul.f32 %v2445, %v3603
        %v3892 = vmul.f32 %v2446, %v3604
        %v3893 = vmul.f32 %v2447, %v3605
        %v3894 = vmul.f32 %v2448, %v3606
        %v3895 = vmul.f32 %v2449, %v3607
        %v3896 = vmul.f32 %v2450, %v3608
        %v3897 = vmul.f32 %v2451, %v3609
        %v3898 = vmul.f32 %v2452, %v3610
        %v3899 = vmul.f32 %v2453, %v3611
        %v3900 = vmul.f32 %v2454, %v3612
        %v3901 = vmul.f32 %v2455, %v3613
        %v3902 = vmul.f32 %v2456, %v3614
        %v3903 = vmul.f32 %v2457, %v3615
        %v3904 = vmul.f32 %v2458, %v3616
        %v3905 = vmul.f32 %v2459, %v3617
        %v3906 = vmul.f32 %v2460, %v3618
        %v3907 = vmul.f32 %v2461, %v3619
        %v3908 = vmul.f32 %v2462, %v3620
        %v3909 = vmul.f32 %v2463, %v3621
        %v3910 = vmul.f32 %v2464, %v3622
        %v3911 = vmul.f32 %v2465, %v3623
        %v3912 = vmul.f32 %v2466, %v3624
        %v3913 = vmul.f32 %v2467, %v3625
        %v3914 = vmul.f32 %v2468, %v3626
        %v3915 = vmul.f32 %v2469, %v3627
        %v3916 = vmul.f32 %v2470, %v3628
        %v3917 = vmul.f32 %v2471, %v3629
        %v3918 = vmul.f32 %v2472, %v3630
        %v3919 = vmul.f32 %v2473, %v3631
        %v3920 = vmul.f32 %v2474, %v3632
        %v3921 = vmul.f32 %v2475, %v3633
        %v3922 = vmul.f32 %v2476, %v3634
        %v3923 = vmul.f32 %v2477, %v3635
        %v3924 = vmul.f32 %v2478, %v3636
        %v3925 = vmul.f32 %v2479, %v3637
        %v3926 = vmul.f32 %v2480, %v3638
        %v3927 = vmul.f32 %v2481, %v3639
        %v3928 = vmul.f32 %v2482, %v3640
        %v3929 = vmul.f32 %v2483, %v3641
        %v3930 = vmul.f32 %v2484, %v3642
        %v3931 = vmul.f32 %v2485, %v3643
        %v3932 = vmul.f32 %v2486, %v3644
        %v3933 = vmul.f32 %v2487, %v3645
        %v3934 = vmul.f32 %v2488, %v3646
        %v3935 = vmul.f32 %v2489, %v3647
        %v3936 = vmul.f32 %v2490, %v3648
        %v3937 = vmul.f32 %v2491, %v3649
        %v3938 = vmul.f32 %v2492, %v3650
        %v3939 = vmul.f32 %v2493, %v3651
        %v3940 = vmul.f32 %v2494, %v3652
        %v3941 = vmul.f32 %v2495, %v3653
        %v3942 = vmul.f32 %v2496, %v3654
        %v3943 = vmul.f32 %v2497, %v3655
        %v3944 = vmul.f32 %v2498, %v3656
        %v3945 = vmul.f32 %v2499, %v3657
        %v3946 = vmul.f32 %v2500, %v3658
        %v3947 = vmul.f32 %v2501, %v3659
        %v3948 = vmul.f32 %v2502, %v3660
        %v3949 = vmul.f32 %v2503, %v3661
        %v3950 = vmul.f32 %v2504, %v3662
        %v3951 = vmul.f32 %v2505, %v3663
        %v3952 = vmul.f32 %v2506, %v3664
        %v3953 = vmul.f32 %v2507, %v3665
        %v3954 = vmul.f32 %v2508, %v3666
        %v3955 = vmul.f32 %v2509, %v3667
        %v3956 = vmul.f32 %v2510, %v3668
        %v3957 = vmul.f32 %v2511, %v3669
        %v3958 = vmul.f32 %v2512, %v3670
        %v3959 = vmul.f32 %v2513, %v3671
        %v3960 = vmul.f32 %v2514, %v3672
        %v3961 = vmul.f32 %v2515, %v3673
        %v3962 = vmul.f32 %v2516, %v3674
        %v3963 = vmul.f32 %v2517, %v3675
        %v3964 = vmul.f32 %v2518, %v3676
        %v3965 = vmul.f32 %v2519, %v3677
        %v3966 = vmul.f32 %v2520, %v3678
        %v3967 = vmul.f32 %v2521, %v3679
        %v3968 = vmul.f32 %v2522, %v3680
        %v3969 = vmul.f32 %v2523, %v3681
        %v3970 = vmul.f32 %v2524, %v3682
        %v3971 = vmul.f32 %v2525, %v3683
        %v3972 = vmul.f32 %v2526, %v3684
        %v3973 = vmul.f32 %v2527, %v3685
        %v3974 = vmul.f32 %v2528, %v3686
        %v3975 = vmul.f32 %v2529, %v3687
        %v3976 = vmul.f32 %v2530, %v3688
        %v3977 = vmul.f32 %v2531, %v3689
        %v3978 = vmul.f32 %v2532, %v3690
        %v3979 = vmul.f32 %v2533, %v3691
        %v3980 = vmul.f32 %v2534, %v3692
        %v3981 = vmul.f32 %v2535, %v3693
        %v3982 = vmul.f32 %v2536, %v3694
        %v3983 = vmul.f32 %v2537, %v3695
        %v3984 = vmul.f32 %v2538, %v3696
        %v3985 = vmul.f32 %v2539, %v3697
        %v3986 = vmul.f32 %v2540, %v3698
        %v3987 = vmul.f32 %v2541, %v3699
        %v3988 = vmul.f32 %v2542, %v3700
        %v3989 = vmul.f32 %v2543, %v3701
        %v3990 = vmul.f32 %v2544, %v3702
        %v3991 = vmul.f32 %v2545, %v3703
        %v3992 = vmul.f32 %v2546, %v3704
        %v3993 = vmul.f32 %v2547, %v3705
        %v3994 = vmul.f32 %v2548, %v3706
        %v3995 = vmul.f32 %v2549, %v3707
        %v3996 = vmul.f32 %v2550, %v3708
        %v3997 = vmul.f32 %v2551, %v3709
        %v3998 = vmul.f32 %v2552, %v3710
        %v3999 = vmul.f32 %v2553, %v3711
        %v4000 = vmul.f32 %v2554, %v3712
        %v4001 = vmul.f32 %v2555, %v3713
        %v4002 = vmul.f32 %v2556, %v3714
        %v4003 = vmul.f32 %v2557, %v3715
        %v4004 = vmul.f32 %v2558, %v3716
        %v4005 = vmul.f32 %v2559, %v3717
        %v4006 = vmul.f32 %v2560, %v3718
        %v4007 = vmul.f32 %v2561, %v3719
        %v4008 = vmul.f32 %v2562, %v3720
        %v4009 = vmul.f32 %v2563, %v3721
        %v4010 = vmul.f32 %v2564, %v3722
        %v4011 = vmul.f32 %v2565, %v3723
        %v4012 = vmul.f32 %v2566, %v3724
        %v4013 = vmul.f32 %v2567, %v3725
        %v4014 = vmul.f32 %v2568, %v3726
        %v4015 = vmul.f32 %v2569, %v3727
        %v4016 = vmul.f32 %v2570, %v3728
        %v4017 = vmul.f32 %v2571, %v3729
        %v4018 = vmul.f32 %v2572, %v3730
        %v4019 = vmul.f32 %v2573, %v3731
        %v4020 = vmul.f32 %v2574, %v3732
        %v4021 = vmul.f32 %v2575, %v3733
        %v4022 = vmul.f32 %v2576, %v3734
        %v4023 = vmul.f32 %v2577, %v3735
        %v4024 = vmul.f32 %v2578, %v3736
        %v4025 = vmul.f32 %v2579, %v3737
        %v4026 = vmul.f32 %v2580, %v3738
        %v4027 = vmul.f32 %v2581, %v3739
        %v4028 = vmul.f32 %v2582, %v3740
        %v4029 = vmul.f32 %v2583, %v3741
        %v4030 = vmul.f32 %v2584, %v3742
        %v4031 = vmul.f32 %v2585, %v3743
        %v4032 = vmul.f32 %v2586, %v3744
        %v4033 = vmul.f32 %v2587, %v3745
        %v4034 = vmul.f32 %v2588, %v3746
        %v4035 = vmul.f32 %v2589, %v3747
        %v4036 = vmul.f32 %v2590, %v3748
        %v4037 = vmul.f32 %v2591, %v3749
        %v4038 = vmul.f32 %v2592, %v3750
        %v4039 = vmul.f32 %v2593, %v3751
        %v4040 = vmul.f32 %v2594, %v3752
        %v4041 = vmul.f32 %v2595, %v3753
        %v4042 = vmul.f32 %v2596, %v3754
        %v4043 = vmul.f32 %v2597, %v3755
        %v4044 = vmul.f32 %v2598, %v3756
        %v4045 = vmul.f32 %v2599, %v3757
        %v4046 = vmul.f32 %v2600, %v3758
        %v4047 = vmul.f32 %v2601, %v3759
        %v4048 = vmul.f32 %v2602, %v3760
        %v4049 = vmul.f32 %v2603, %v3761
        %v4050 = vmul.f32 %v2604, %v3762
        %v4051 = vmul.f32 %v2605, %v3763
        %v4052 = vmul.f32 %v2606, %v3764
        %v4053 = vmul.f32 %v2607, %v3765
        %v4054 = vmul.f32 %v2608, %v3766
        %v4055 = vmul.f32 %v2609, %v3767
        %v4056 = vmul.f32 %v2610, %v3768
        %v4057 = vmul.f32 %v2611, %v3769
        %v4058 = vmul.f32 %v2612, %v3770
        %v4059 = vmul.f32 %v2613, %v3771
        %v4060 = vmul.f32 %v2614, %v3772
        %v4061 = vmul.f32 %v2615, %v3773
        %v4062 = vmul.f32 %v2616, %v3774
        %v4063 = vmul.f32 %v2617, %v3775
        %v4064 = vmul.f32 %v2618, %v3776
        %v4065 = vmul.f32 %v2619, %v3777
        %v4066 = vmul.f32 %v2620, %v3778
        %v4067 = vmul.f32 %v2621, %v3779
        %v4068 = vmul.f32 %v2622, %v3780
        %v4069 = vmul.f32 %v2623, %v3781
        %v4070 = vmul.f32 %v2624, %v3782
        %v4071 = vmul.f32 %v2625, %v3783
        %v4072 = vmul.f32 %v2626, %v3784
        %v4073 = vmul.f32 %v2627, %v3785
        %v4074 = vmul.f32 %v2628, %v3786
        %v4075 = vmul.f32 %v2629, %v3787
        %v4076 = vmul.f32 %v2630, %v3788
        %v4077 = vmul.f32 %v2631, %v3789
        %v4078 = vmul.f32 %v2632, %v3790
        %v4079 = vmul.f32 %v2633, %v3791
        %v4080 = vmul.f32 %v2634, %v3792
        %v4081 = vmul.f32 %v2635, %v3793
        %v4082 = vmul.f32 %v2636, %v3794
        %v4083 = vmul.f32 %v2637, %v3795
        %v4084 = vmul.f32 %v2638, %v3796
        %v4085 = vmul.f32 %v2639, %v3797
        %v4086 = vmul.f32 %v2640, %v3798
        %v4087 = vmul.f32 %v2641, %v3799
        %v4088 = vmul.f32 %v2642, %v3800
        %v4089 = vmul.f32 %v2643, %v3801
        %v4090 = vmul.f32 %v2644, %v3802
        %v4091 = vmul.f32 %v2645, %v3803
        %v4092 = vmul.f32 %v2646, %v3804
        %v4093 = vmul.f32 %v2647, %v3805
        %v4094 = vmul.f32 %v2648, %v3806
        %v4095 = vmul.f32 %v2649, %v3807
        %v4096 = vmul.f32 %v2650, %v3808
        %v4097 = vmul.f32 %v2651, %v3809
        %v4098 = vmul.f32 %v2652, %v3810
        %v4099 = vmul.f32 %v2653, %v3811
        %v4100 = vmul.f32 %v2654, %v3812
        %v4101 = vmul.f32 %v2655, %v3813
        %v4102 = vmul.f32 %v2656, %v3814
        %v4103 = vmul.f32 %v2657, %v3815
        %v4104 = vmul.f32 %v2658, %v3816
        %v4105 = vmul.f32 %v2659, %v3817
        %v4106 = vmul.f32 %v2660, %v3818
        %v4107 = vmul.f32 %v2661, %v3819
        %v4108 = vmul.f32 %v2662, %v3820
        %v4109 = vmul.f32 %v2663, %v3821
        %v4110 = vmul.f32 %v2664, %v3822
        %v4111 = vmul.f32 %v2665, %v3823
        %v4112 = vmul.f32 %v2666, %v3824
        %v4113 = vmul.f32 %v2667, %v3825
        %v4114 = vmul.f32 %v2668, %v3826
        %v4115 = vmul.f32 %v2669, %v3827
        %v4116 = vmul.f32 %v2670, %v3828
        %v4117 = vmul.f32 %v2671, %v3829
        %v4118 = vmul.f32 %v2672, %v3830
        %v4119 = vmul.f32 %v2673, %v3831
        %v4120 = vmul.f32 %v2674, %v3832
        %v4121 = vmul.f32 %v2675, %v3833
        %v4122 = vmul.f32 %v2676, %v3834
        %v4123 = vmul.f32 %v2677, %v3835
        %v4124 = vmul.f32 %v2678, %v3836
        %v4125 = vmul.f32 %v2679, %v3837
        %v4126 = vmul.f32 %v2680, %v3838
        %v4127 = vmul.f32 %v2681, %v3839
        %v4128 = vmul.f32 %v2682, %v3840
        %v4129 = vmul.f32 %v2683, %v3841
        %v4130 = vmul.f32 %v2684, %v3842
        %v4131 = vmul.f32 %v2685, %v3843
        %v4132 = vmul.f32 %v2686, %v3844
        %v4133 = vmul.f32 %v2687, %v3845
        %v4134 = vmul.f32 %v2688, %v3846
        %v4135 = vmul.f32 %v2689, %v3847
        %v4136 = vmul.f32 %v2690, %v3848
        %v4137 = vmul.f32 %v2691, %v3849
        %v4138 = vmul.f32 %v2692, %v3850
        %v4139 = vmul.f32 %v2693, %v3851
        %v4140 = vmul.f32 %v2694, %v3852
        %v4141 = vmul.f32 %v2695, %v3853
        %v4142 = vmul.f32 %v2696, %v3854
        %v4143 = vmul.f32 %v2697, %v3855
        %v4144 = vmul.f32 %v2698, %v3856
        %v4145 = vmul.f32 %v2699, %v3857
        %v4146 = vmul.f32 %v2700, %v3858
        %v4147 = vmul.f32 %v2701, %v3859
        %v4148 = vmul.f32 %v2702, %v3860
        %v4149 = vmul.f32 %v2703, %v3861
        %v4150 = vmul.f32 %v2704, %v3862
        %v4151 = vmul.f32 %v2705, %v3863
        %v4152 = vmul.f32 %v2706, %v3864
        %v4153 = vmul.f32 %v2707, %v3865
        %v4154 = vmul.f32 %v2708, %v3866
        %v4155 = vmul.f32 %v2709, %v3867
        %v4156 = vmul.f32 %v2710, %v3868
        %v4157 = vmul.f32 %v2711, %v3869
        %v4158 = vmul.f32 %v2712, %v3870
        %v4159 = vmul.f32 %v2713, %v3871
        %v4160 = vmul.f32 %v2714, %v3872
        %v4161 = vmul.f32 %v2715, %v3873
        %v4162 = vmul.f32 %v2716, %v3874
        %v4163 = vmul.f32 %v2717, %v3875
        %v4164 = vmul.f32 %v2718, %v3876
        %v4165 = vmul.f32 %v2719, %v3877
        %v4166 = vmul.f32 %v2720, %v3878
        %v4167 = vmul.f32 %v2721, %v3879
        %v4168 = vmul.f32 %v2722, %v3880
        %v4169 = vmul.f32 %v2723, %v3881
        %v4170 = vmul.f32 %v2724, %v3882
        %4171 = vmatpush.xpose.msra.mxu0 %v3913
        %4172 = vmatpush.xpose.msra.mxu0 %v3911
        %4173 = vmatpush.xpose.msra.mxu0 %v3909
        %4174 = vmatpush.xpose.msra.mxu0 %v3907
        %4175 = vmatpush.xpose.msra.mxu0 %v3905
        %4176 = vmatpush.xpose.msra.mxu0 %v3903
        %4177 = vmatpush.xpose.msra.mxu0 %v3901
        %4178 = vmatpush.xpose.msra.mxu0 %v3899
        %4179 = vmatpush.xpose.msra.mxu0 %v3897
        %4180 = vmatpush.xpose.msra.mxu0 %v3895
        %4181 = vmatpush.xpose.msra.mxu0 %v3893
        %4182 = vmatpush.xpose.msra.mxu0 %v3891
        %4183 = vmatpush.xpose.msra.mxu0 %v3889
        %4184 = vmatpush.xpose.msra.mxu0 %v3887
        %4185 = vmatpush.xpose.msra.mxu0 %v3885
        %4186 = vmatpush.xpose.msra.mxu0 %v3883
        %4187 = vmatmul.f32.gmra.mxu0 %v364
        %v4188 = vpop.f32.mrf.mxu0
        %v4189 = vadd.f32 0.0, %v4188
        %4190 = vmatmul.f32.gmra.mxu0 %v366
        %v4191 = vpop.f32.mrf.mxu0
        %v4192 = vadd.f32 0.0, %v4191
        %4193 = vmatmul.f32.gmra.mxu0 %v368
        %v4194 = vpop.f32.mrf.mxu0
        %v4195 = vadd.f32 0.0, %v4194
        %4196 = vmatmul.f32.gmra.mxu0 %v370
        %v4197 = vpop.f32.mrf.mxu0
        %v4198 = vadd.f32 0.0, %v4197
        %4199 = vmatmul.f32.gmra.mxu0 %v372
        %v4200 = vpop.f32.mrf.mxu0
        %v4201 = vadd.f32 0.0, %v4200
        %4202 = vmatmul.f32.gmra.mxu0 %v380
        %v4203 = vpop.f32.mrf.mxu0
        %v4204 = vadd.f32 0.0, %v4203
        %4205 = vmatmul.f32.gmra.mxu0 %v382
        %v4206 = vpop.f32.mrf.mxu0
        %v4207 = vadd.f32 0.0, %v4206
        %4208 = vmatmul.f32.gmra.mxu0 %v384
        %v4209 = vpop.f32.mrf.mxu0
        %v4210 = vadd.f32 0.0, %v4209
        %4211 = vmatmul.f32.gmra.mxu0 %v386
        %v4212 = vpop.f32.mrf.mxu0
        %v4213 = vadd.f32 0.0, %v4212
        %4214 = vmatmul.f32.gmra.mxu0 %v388
        %v4215 = vpop.f32.mrf.mxu0
        %v4216 = vadd.f32 0.0, %v4215
        %4217 = vmatmul.f32.gmra.mxu0 %v396
        %v4218 = vpop.f32.mrf.mxu0
        %v4219 = vadd.f32 0.0, %v4218
        %4220 = vmatmul.f32.gmra.mxu0 %v398
        %v4221 = vpop.f32.mrf.mxu0
        %v4222 = vadd.f32 0.0, %v4221
        %4223 = vmatmul.f32.gmra.mxu0 %v400
        %v4224 = vpop.f32.mrf.mxu0
        %v4225 = vadd.f32 0.0, %v4224
        %4226 = vmatmul.f32.gmra.mxu0 %v402
        %v4227 = vpop.f32.mrf.mxu0
        %v4228 = vadd.f32 0.0, %v4227
        %4229 = vmatmul.f32.gmra.mxu0 %v404
        %v4230 = vpop.f32.mrf.mxu0
        %v4231 = vadd.f32 0.0, %v4230
        %4232 = vmatmul.f32.gmra.mxu0 %v408
        %v4233 = vpop.f32.mrf.mxu0
        %v4234 = vadd.f32 0.0, %v4233
        %4235 = vmatmul.f32.gmra.mxu0 %v410
        %v4236 = vpop.f32.mrf.mxu0
        %v4237 = vadd.f32 0.0, %v4236
        %4238 = vmatmul.f32.gmra.mxu0 %v412
        %v4239 = vpop.f32.mrf.mxu0
        %v4240 = vadd.f32 0.0, %v4239
        %4241 = vmatmul.f32.gmra.mxu0 %v414
        %v4242 = vpop.f32.mrf.mxu0
        %v4243 = vadd.f32 0.0, %v4242
        %4244 = vmatmul.f32.gmra.mxu0 %v416
        %v4245 = vpop.f32.mrf.mxu0
        %v4246 = vadd.f32 0.0, %v4245
        %4247 = vdwg.mxu0
        %4248 = vmatpush.xpose.msra.mxu0 %v3914
        %4249 = vmatpush.xpose.msra.mxu0 %v3912
        %4250 = vmatpush.xpose.msra.mxu0 %v3910
        %4251 = vmatpush.xpose.msra.mxu0 %v3908
        %4252 = vmatpush.xpose.msra.mxu0 %v3906
        %4253 = vmatpush.xpose.msra.mxu0 %v3904
        %4254 = vmatpush.xpose.msra.mxu0 %v3902
        %4255 = vmatpush.xpose.msra.mxu0 %v3900
        %4256 = vmatpush.xpose.msra.mxu0 %v3898
        %4257 = vmatpush.xpose.msra.mxu0 %v3896
        %4258 = vmatpush.xpose.msra.mxu0 %v3894
        %4259 = vmatpush.xpose.msra.mxu0 %v3892
        %4260 = vmatpush.xpose.msra.mxu0 %v3890
        %4261 = vmatpush.xpose.msra.mxu0 %v3888
        %4262 = vmatpush.xpose.msra.mxu0 %v3886
        %4263 = vmatpush.xpose.msra.mxu0 %v3884
        %4264 = vmatmul.f32.gmra.mxu0 %v365
        %v4265 = vpop.f32.mrf.mxu0
        %v4266 = vadd.f32 %v4189, %v4265
        %4267 = vmatmul.f32.gmra.mxu0 %v367
        %v4268 = vpop.f32.mrf.mxu0
        %v4269 = vadd.f32 %v4192, %v4268
        %4270 = vmatmul.f32.gmra.mxu0 %v369
        %v4271 = vpop.f32.mrf.mxu0
        %v4272 = vadd.f32 %v4195, %v4271
        %4273 = vmatmul.f32.gmra.mxu0 %v371
        %v4274 = vpop.f32.mrf.mxu0
        %v4275 = vadd.f32 %v4198, %v4274
        %4276 = vmatmul.f32.gmra.mxu0 %v373
        %v4277 = vpop.f32.mrf.mxu0
        %v4278 = vadd.f32 %v4201, %v4277
        %4279 = vmatmul.f32.gmra.mxu0 %v381
        %v4280 = vpop.f32.mrf.mxu0
        %v4281 = vadd.f32 %v4204, %v4280
        %4282 = vmatmul.f32.gmra.mxu0 %v383
        %v4283 = vpop.f32.mrf.mxu0
        %v4284 = vadd.f32 %v4207, %v4283
        %4285 = vmatmul.f32.gmra.mxu0 %v385
        %v4286 = vpop.f32.mrf.mxu0
        %v4287 = vadd.f32 %v4210, %v4286
        %4288 = vmatmul.f32.gmra.mxu0 %v387
        %v4289 = vpop.f32.mrf.mxu0
        %v4290 = vadd.f32 %v4213, %v4289
        %4291 = vmatmul.f32.gmra.mxu0 %v389
        %v4292 = vpop.f32.mrf.mxu0
        %v4293 = vadd.f32 %v4216, %v4292
        %4294 = vmatmul.f32.gmra.mxu0 %v397
        %v4295 = vpop.f32.mrf.mxu0
        %v4296 = vadd.f32 %v4219, %v4295
        %4297 = vmatmul.f32.gmra.mxu0 %v399
        %v4298 = vpop.f32.mrf.mxu0
        %v4299 = vadd.f32 %v4222, %v4298
        %4300 = vmatmul.f32.gmra.mxu0 %v401
        %v4301 = vpop.f32.mrf.mxu0
        %v4302 = vadd.f32 %v4225, %v4301
        %4303 = vmatmul.f32.gmra.mxu0 %v403
        %v4304 = vpop.f32.mrf.mxu0
        %v4305 = vadd.f32 %v4228, %v4304
        %4306 = vmatmul.f32.gmra.mxu0 %v405
        %v4307 = vpop.f32.mrf.mxu0
        %v4308 = vadd.f32 %v4231, %v4307
        %4309 = vmatmul.f32.gmra.mxu0 %v409
        %v4310 = vpop.f32.mrf.mxu0
        %v4311 = vadd.f32 %v4234, %v4310
        %4312 = vmatmul.f32.gmra.mxu0 %v411
        %v4313 = vpop.f32.mrf.mxu0
        %v4314 = vadd.f32 %v4237, %v4313
        %4315 = vmatmul.f32.gmra.mxu0 %v413
        %v4316 = vpop.f32.mrf.mxu0
        %v4317 = vadd.f32 %v4240, %v4316
        %4318 = vmatmul.f32.gmra.mxu0 %v415
        %v4319 = vpop.f32.mrf.mxu0
        %v4320 = vadd.f32 %v4243, %v4319
        %4321 = vmatmul.f32.gmra.mxu0 %v417
        %v4322 = vpop.f32.mrf.mxu0
        %v4323 = vadd.f32 %v4246, %v4322
        %4324 = vdwg.mxu0
        %4325 = vmatpush.xpose.msra.mxu0 %v3945
        %4326 = vmatpush.xpose.msra.mxu0 %v3943
        %4327 = vmatpush.xpose.msra.mxu0 %v3941
        %4328 = vmatpush.xpose.msra.mxu0 %v3939
        %4329 = vmatpush.xpose.msra.mxu0 %v3937
        %4330 = vmatpush.xpose.msra.mxu0 %v3935
        %4331 = vmatpush.xpose.msra.mxu0 %v3933
        %4332 = vmatpush.xpose.msra.mxu0 %v3931
        %4333 = vmatpush.xpose.msra.mxu0 %v3929
        %4334 = vmatpush.xpose.msra.mxu0 %v3927
        %4335 = vmatpush.xpose.msra.mxu0 %v3925
        %4336 = vmatpush.xpose.msra.mxu0 %v3923
        %4337 = vmatpush.xpose.msra.mxu0 %v3921
        %4338 = vmatpush.xpose.msra.mxu0 %v3919
        %4339 = vmatpush.xpose.msra.mxu0 %v3917
        %4340 = vmatpush.xpose.msra.mxu0 %v3915
        %4341 = vmatmul.f32.gmra.mxu0 %v364
        %v4342 = vpop.f32.mrf.mxu0
        %v4343 = vadd.f32 0.0, %v4342
        %4344 = vmatmul.f32.gmra.mxu0 %v366
        %v4345 = vpop.f32.mrf.mxu0
        %v4346 = vadd.f32 0.0, %v4345
        %4347 = vmatmul.f32.gmra.mxu0 %v368
        %v4348 = vpop.f32.mrf.mxu0
        %v4349 = vadd.f32 0.0, %v4348
        %4350 = vmatmul.f32.gmra.mxu0 %v370
        %v4351 = vpop.f32.mrf.mxu0
        %v4352 = vadd.f32 0.0, %v4351
        %4353 = vmatmul.f32.gmra.mxu0 %v372
        %v4354 = vpop.f32.mrf.mxu0
        %v4355 = vadd.f32 0.0, %v4354
        %4356 = vmatmul.f32.gmra.mxu0 %v380
        %v4357 = vpop.f32.mrf.mxu0
        %v4358 = vadd.f32 0.0, %v4357
        %4359 = vmatmul.f32.gmra.mxu0 %v382
        %v4360 = vpop.f32.mrf.mxu0
        %v4361 = vadd.f32 0.0, %v4360
        %4362 = vmatmul.f32.gmra.mxu0 %v384
        %v4363 = vpop.f32.mrf.mxu0
        %v4364 = vadd.f32 0.0, %v4363
        %4365 = vmatmul.f32.gmra.mxu0 %v386
        %v4366 = vpop.f32.mrf.mxu0
        %v4367 = vadd.f32 0.0, %v4366
        %4368 = vmatmul.f32.gmra.mxu0 %v388
        %v4369 = vpop.f32.mrf.mxu0
        %v4370 = vadd.f32 0.0, %v4369
        %4371 = vmatmul.f32.gmra.mxu0 %v396
        %v4372 = vpop.f32.mrf.mxu0
        %v4373 = vadd.f32 0.0, %v4372
        %4374 = vmatmul.f32.gmra.mxu0 %v398
        %v4375 = vpop.f32.mrf.mxu0
        %v4376 = vadd.f32 0.0, %v4375
        %4377 = vmatmul.f32.gmra.mxu0 %v400
        %v4378 = vpop.f32.mrf.mxu0
        %v4379 = vadd.f32 0.0, %v4378
        %4380 = vmatmul.f32.gmra.mxu0 %v402
        %v4381 = vpop.f32.mrf.mxu0
        %v4382 = vadd.f32 0.0, %v4381
        %4383 = vmatmul.f32.gmra.mxu0 %v404
        %v4384 = vpop.f32.mrf.mxu0
        %v4385 = vadd.f32 0.0, %v4384
        %4386 = vmatmul.f32.gmra.mxu0 %v408
        %v4387 = vpop.f32.mrf.mxu0
        %v4388 = vadd.f32 0.0, %v4387
        %4389 = vmatmul.f32.gmra.mxu0 %v410
        %v4390 = vpop.f32.mrf.mxu0
        %v4391 = vadd.f32 0.0, %v4390
        %4392 = vmatmul.f32.gmra.mxu0 %v412
        %v4393 = vpop.f32.mrf.mxu0
        %v4394 = vadd.f32 0.0, %v4393
        %4395 = vmatmul.f32.gmra.mxu0 %v414
        %v4396 = vpop.f32.mrf.mxu0
        %v4397 = vadd.f32 0.0, %v4396
        %4398 = vmatmul.f32.gmra.mxu0 %v416
        %v4399 = vpop.f32.mrf.mxu0
        %v4400 = vadd.f32 0.0, %v4399
        %4401 = vdwg.mxu0
        %4402 = vmatpush.xpose.msra.mxu0 %v3946
        %4403 = vmatpush.xpose.msra.mxu0 %v3944
        %4404 = vmatpush.xpose.msra.mxu0 %v3942
        %4405 = vmatpush.xpose.msra.mxu0 %v3940
        %4406 = vmatpush.xpose.msra.mxu0 %v3938
        %4407 = vmatpush.xpose.msra.mxu0 %v3936
        %4408 = vmatpush.xpose.msra.mxu0 %v3934
        %4409 = vmatpush.xpose.msra.mxu0 %v3932
        %4410 = vmatpush.xpose.msra.mxu0 %v3930
        %4411 = vmatpush.xpose.msra.mxu0 %v3928
        %4412 = vmatpush.xpose.msra.mxu0 %v3926
        %4413 = vmatpush.xpose.msra.mxu0 %v3924
        %4414 = vmatpush.xpose.msra.mxu0 %v3922
        %4415 = vmatpush.xpose.msra.mxu0 %v3920
        %4416 = vmatpush.xpose.msra.mxu0 %v3918
        %4417 = vmatpush.xpose.msra.mxu0 %v3916
        %4418 = vmatmul.f32.gmra.mxu0 %v365
        %v4419 = vpop.f32.mrf.mxu0
        %v4420 = vadd.f32 %v4343, %v4419
        %4421 = vmatmul.f32.gmra.mxu0 %v367
        %v4422 = vpop.f32.mrf.mxu0
        %v4423 = vadd.f32 %v4346, %v4422
        %4424 = vmatmul.f32.gmra.mxu0 %v369
        %v4425 = vpop.f32.mrf.mxu0
        %v4426 = vadd.f32 %v4349, %v4425
        %4427 = vmatmul.f32.gmra.mxu0 %v371
        %v4428 = vpop.f32.mrf.mxu0
        %v4429 = vadd.f32 %v4352, %v4428
        %4430 = vmatmul.f32.gmra.mxu0 %v373
        %v4431 = vpop.f32.mrf.mxu0
        %v4432 = vadd.f32 %v4355, %v4431
        %4433 = vmatmul.f32.gmra.mxu0 %v381
        %v4434 = vpop.f32.mrf.mxu0
        %v4435 = vadd.f32 %v4358, %v4434
        %4436 = vmatmul.f32.gmra.mxu0 %v383
        %v4437 = vpop.f32.mrf.mxu0
        %v4438 = vadd.f32 %v4361, %v4437
        %4439 = vmatmul.f32.gmra.mxu0 %v385
        %v4440 = vpop.f32.mrf.mxu0
        %v4441 = vadd.f32 %v4364, %v4440
        %4442 = vmatmul.f32.gmra.mxu0 %v387
        %v4443 = vpop.f32.mrf.mxu0
        %v4444 = vadd.f32 %v4367, %v4443
        %4445 = vmatmul.f32.gmra.mxu0 %v389
        %v4446 = vpop.f32.mrf.mxu0
        %v4447 = vadd.f32 %v4370, %v4446
        %4448 = vmatmul.f32.gmra.mxu0 %v397
        %v4449 = vpop.f32.mrf.mxu0
        %v4450 = vadd.f32 %v4373, %v4449
        %4451 = vmatmul.f32.gmra.mxu0 %v399
        %v4452 = vpop.f32.mrf.mxu0
        %v4453 = vadd.f32 %v4376, %v4452
        %4454 = vmatmul.f32.gmra.mxu0 %v401
        %v4455 = vpop.f32.mrf.mxu0
        %v4456 = vadd.f32 %v4379, %v4455
        %4457 = vmatmul.f32.gmra.mxu0 %v403
        %v4458 = vpop.f32.mrf.mxu0
        %v4459 = vadd.f32 %v4382, %v4458
        %4460 = vmatmul.f32.gmra.mxu0 %v405
        %v4461 = vpop.f32.mrf.mxu0
        %v4462 = vadd.f32 %v4385, %v4461
        %4463 = vmatmul.f32.gmra.mxu0 %v409
        %v4464 = vpop.f32.mrf.mxu0
        %v4465 = vadd.f32 %v4388, %v4464
        %4466 = vmatmul.f32.gmra.mxu0 %v411
        %v4467 = vpop.f32.mrf.mxu0
        %v4468 = vadd.f32 %v4391, %v4467
        %4469 = vmatmul.f32.gmra.mxu0 %v413
        %v4470 = vpop.f32.mrf.mxu0
        %v4471 = vadd.f32 %v4394, %v4470
        %4472 = vmatmul.f32.gmra.mxu0 %v415
        %v4473 = vpop.f32.mrf.mxu0
        %v4474 = vadd.f32 %v4397, %v4473
        %4475 = vmatmul.f32.gmra.mxu0 %v417
        %v4476 = vpop.f32.mrf.mxu0
        %v4477 = vadd.f32 %v4400, %v4476
        %4478 = vdwg.mxu0
        %4479 = vmatpush.xpose.msra.mxu0 %v3977
        %4480 = vmatpush.xpose.msra.mxu0 %v3975
        %4481 = vmatpush.xpose.msra.mxu0 %v3973
        %4482 = vmatpush.xpose.msra.mxu0 %v3971
        %4483 = vmatpush.xpose.msra.mxu0 %v3969
        %4484 = vmatpush.xpose.msra.mxu0 %v3967
        %4485 = vmatpush.xpose.msra.mxu0 %v3965
        %4486 = vmatpush.xpose.msra.mxu0 %v3963
        %4487 = vmatpush.xpose.msra.mxu0 %v3961
        %4488 = vmatpush.xpose.msra.mxu0 %v3959
        %4489 = vmatpush.xpose.msra.mxu0 %v3957
        %4490 = vmatpush.xpose.msra.mxu0 %v3955
        %4491 = vmatpush.xpose.msra.mxu0 %v3953
        %4492 = vmatpush.xpose.msra.mxu0 %v3951
        %4493 = vmatpush.xpose.msra.mxu0 %v3949
        %4494 = vmatpush.xpose.msra.mxu0 %v3947
        %4495 = vmatmul.f32.gmra.mxu0 %v364
        %v4496 = vpop.f32.mrf.mxu0
        %v4497 = vadd.f32 0.0, %v4496
        %4498 = vmatmul.f32.gmra.mxu0 %v366
        %v4499 = vpop.f32.mrf.mxu0
        %v4500 = vadd.f32 0.0, %v4499
        %4501 = vmatmul.f32.gmra.mxu0 %v368
        %v4502 = vpop.f32.mrf.mxu0
        %v4503 = vadd.f32 0.0, %v4502
        %4504 = vmatmul.f32.gmra.mxu0 %v370
        %v4505 = vpop.f32.mrf.mxu0
        %v4506 = vadd.f32 0.0, %v4505
        %4507 = vmatmul.f32.gmra.mxu0 %v372
        %v4508 = vpop.f32.mrf.mxu0
        %v4509 = vadd.f32 0.0, %v4508
        %4510 = vmatmul.f32.gmra.mxu0 %v380
        %v4511 = vpop.f32.mrf.mxu0
        %v4512 = vadd.f32 0.0, %v4511
        %4513 = vmatmul.f32.gmra.mxu0 %v382
        %v4514 = vpop.f32.mrf.mxu0
        %v4515 = vadd.f32 0.0, %v4514
        %4516 = vmatmul.f32.gmra.mxu0 %v384
        %v4517 = vpop.f32.mrf.mxu0
        %v4518 = vadd.f32 0.0, %v4517
        %4519 = vmatmul.f32.gmra.mxu0 %v386
        %v4520 = vpop.f32.mrf.mxu0
        %v4521 = vadd.f32 0.0, %v4520
        %4522 = vmatmul.f32.gmra.mxu0 %v388
        %v4523 = vpop.f32.mrf.mxu0
        %v4524 = vadd.f32 0.0, %v4523
        %4525 = vmatmul.f32.gmra.mxu0 %v396
        %v4526 = vpop.f32.mrf.mxu0
        %v4527 = vadd.f32 0.0, %v4526
        %4528 = vmatmul.f32.gmra.mxu0 %v398
        %v4529 = vpop.f32.mrf.mxu0
        %v4530 = vadd.f32 0.0, %v4529
        %4531 = vmatmul.f32.gmra.mxu0 %v400
        %v4532 = vpop.f32.mrf.mxu0
        %v4533 = vadd.f32 0.0, %v4532
        %4534 = vmatmul.f32.gmra.mxu0 %v402
        %v4535 = vpop.f32.mrf.mxu0
        %v4536 = vadd.f32 0.0, %v4535
        %4537 = vmatmul.f32.gmra.mxu0 %v404
        %v4538 = vpop.f32.mrf.mxu0
        %v4539 = vadd.f32 0.0, %v4538
        %4540 = vmatmul.f32.gmra.mxu0 %v408
        %v4541 = vpop.f32.mrf.mxu0
        %v4542 = vadd.f32 0.0, %v4541
        %4543 = vmatmul.f32.gmra.mxu0 %v410
        %v4544 = vpop.f32.mrf.mxu0
        %v4545 = vadd.f32 0.0, %v4544
        %4546 = vmatmul.f32.gmra.mxu0 %v412
        %v4547 = vpop.f32.mrf.mxu0
        %v4548 = vadd.f32 0.0, %v4547
        %4549 = vmatmul.f32.gmra.mxu0 %v414
        %v4550 = vpop.f32.mrf.mxu0
        %v4551 = vadd.f32 0.0, %v4550
        %4552 = vmatmul.f32.gmra.mxu0 %v416
        %v4553 = vpop.f32.mrf.mxu0
        %v4554 = vadd.f32 0.0, %v4553
        %4555 = vdwg.mxu0
        %4556 = vmatpush.xpose.msra.mxu0 %v3978
        %4557 = vmatpush.xpose.msra.mxu0 %v3976
        %4558 = vmatpush.xpose.msra.mxu0 %v3974
        %4559 = vmatpush.xpose.msra.mxu0 %v3972
        %4560 = vmatpush.xpose.msra.mxu0 %v3970
        %4561 = vmatpush.xpose.msra.mxu0 %v3968
        %4562 = vmatpush.xpose.msra.mxu0 %v3966
        %4563 = vmatpush.xpose.msra.mxu0 %v3964
        %4564 = vmatpush.xpose.msra.mxu0 %v3962
        %4565 = vmatpush.xpose.msra.mxu0 %v3960
        %4566 = vmatpush.xpose.msra.mxu0 %v3958
        %4567 = vmatpush.xpose.msra.mxu0 %v3956
        %4568 = vmatpush.xpose.msra.mxu0 %v3954
        %4569 = vmatpush.xpose.msra.mxu0 %v3952
        %4570 = vmatpush.xpose.msra.mxu0 %v3950
        %4571 = vmatpush.xpose.msra.mxu0 %v3948
        %4572 = vmatmul.f32.gmra.mxu0 %v365
        %v4573 = vpop.f32.mrf.mxu0
        %v4574 = vadd.f32 %v4497, %v4573
        %4575 = vmatmul.f32.gmra.mxu0 %v367
        %v4576 = vpop.f32.mrf.mxu0
        %v4577 = vadd.f32 %v4500, %v4576
        %4578 = vmatmul.f32.gmra.mxu0 %v369
        %v4579 = vpop.f32.mrf.mxu0
        %v4580 = vadd.f32 %v4503, %v4579
        %4581 = vmatmul.f32.gmra.mxu0 %v371
        %v4582 = vpop.f32.mrf.mxu0
        %v4583 = vadd.f32 %v4506, %v4582
        %4584 = vmatmul.f32.gmra.mxu0 %v373
        %v4585 = vpop.f32.mrf.mxu0
        %v4586 = vadd.f32 %v4509, %v4585
        %4587 = vmatmul.f32.gmra.mxu0 %v381
        %v4588 = vpop.f32.mrf.mxu0
        %v4589 = vadd.f32 %v4512, %v4588
        %4590 = vmatmul.f32.gmra.mxu0 %v383
        %v4591 = vpop.f32.mrf.mxu0
        %v4592 = vadd.f32 %v4515, %v4591
        %4593 = vmatmul.f32.gmra.mxu0 %v385
        %v4594 = vpop.f32.mrf.mxu0
        %v4595 = vadd.f32 %v4518, %v4594
        %4596 = vmatmul.f32.gmra.mxu0 %v387
        %v4597 = vpop.f32.mrf.mxu0
        %v4598 = vadd.f32 %v4521, %v4597
        %4599 = vmatmul.f32.gmra.mxu0 %v389
        %v4600 = vpop.f32.mrf.mxu0
        %v4601 = vadd.f32 %v4524, %v4600
        %4602 = vmatmul.f32.gmra.mxu0 %v397
        %v4603 = vpop.f32.mrf.mxu0
        %v4604 = vadd.f32 %v4527, %v4603
        %4605 = vmatmul.f32.gmra.mxu0 %v399
        %v4606 = vpop.f32.mrf.mxu0
        %v4607 = vadd.f32 %v4530, %v4606
        %4608 = vmatmul.f32.gmra.mxu0 %v401
        %v4609 = vpop.f32.mrf.mxu0
        %v4610 = vadd.f32 %v4533, %v4609
        %4611 = vmatmul.f32.gmra.mxu0 %v403
        %v4612 = vpop.f32.mrf.mxu0
        %v4613 = vadd.f32 %v4536, %v4612
        %4614 = vmatmul.f32.gmra.mxu0 %v405
        %v4615 = vpop.f32.mrf.mxu0
        %v4616 = vadd.f32 %v4539, %v4615
        %4617 = vmatmul.f32.gmra.mxu0 %v409
        %v4618 = vpop.f32.mrf.mxu0
        %v4619 = vadd.f32 %v4542, %v4618
        %4620 = vmatmul.f32.gmra.mxu0 %v411
        %v4621 = vpop.f32.mrf.mxu0
        %v4622 = vadd.f32 %v4545, %v4621
        %4623 = vmatmul.f32.gmra.mxu0 %v413
        %v4624 = vpop.f32.mrf.mxu0
        %v4625 = vadd.f32 %v4548, %v4624
        %4626 = vmatmul.f32.gmra.mxu0 %v415
        %v4627 = vpop.f32.mrf.mxu0
        %v4628 = vadd.f32 %v4551, %v4627
        %4629 = vmatmul.f32.gmra.mxu0 %v417
        %v4630 = vpop.f32.mrf.mxu0
        %v4631 = vadd.f32 %v4554, %v4630
        %4632 = vdwg.mxu0
        %4633 = vmatpush.xpose.msra.mxu0 %v4009
        %4634 = vmatpush.xpose.msra.mxu0 %v4007
        %4635 = vmatpush.xpose.msra.mxu0 %v4005
        %4636 = vmatpush.xpose.msra.mxu0 %v4003
        %4637 = vmatpush.xpose.msra.mxu0 %v4001
        %4638 = vmatpush.xpose.msra.mxu0 %v3999
        %4639 = vmatpush.xpose.msra.mxu0 %v3997
        %4640 = vmatpush.xpose.msra.mxu0 %v3995
        %4641 = vmatpush.xpose.msra.mxu0 %v3993
        %4642 = vmatpush.xpose.msra.mxu0 %v3991
        %4643 = vmatpush.xpose.msra.mxu0 %v3989
        %4644 = vmatpush.xpose.msra.mxu0 %v3987
        %4645 = vmatpush.xpose.msra.mxu0 %v3985
        %4646 = vmatpush.xpose.msra.mxu0 %v3983
        %4647 = vmatpush.xpose.msra.mxu0 %v3981
        %4648 = vmatpush.xpose.msra.mxu0 %v3979
        %4649 = vmatmul.f32.gmra.mxu0 %v364
        %v4650 = vpop.f32.mrf.mxu0
        %v4651 = vadd.f32 0.0, %v4650
        %4652 = vmatmul.f32.gmra.mxu0 %v366
        %v4653 = vpop.f32.mrf.mxu0
        %v4654 = vadd.f32 0.0, %v4653
        %4655 = vmatmul.f32.gmra.mxu0 %v368
        %v4656 = vpop.f32.mrf.mxu0
        %v4657 = vadd.f32 0.0, %v4656
        %4658 = vmatmul.f32.gmra.mxu0 %v370
        %v4659 = vpop.f32.mrf.mxu0
        %v4660 = vadd.f32 0.0, %v4659
        %4661 = vmatmul.f32.gmra.mxu0 %v372
        %v4662 = vpop.f32.mrf.mxu0
        %v4663 = vadd.f32 0.0, %v4662
        %4664 = vmatmul.f32.gmra.mxu0 %v380
        %v4665 = vpop.f32.mrf.mxu0
        %v4666 = vadd.f32 0.0, %v4665
        %4667 = vmatmul.f32.gmra.mxu0 %v382
        %v4668 = vpop.f32.mrf.mxu0
        %v4669 = vadd.f32 0.0, %v4668
        %4670 = vmatmul.f32.gmra.mxu0 %v384
        %v4671 = vpop.f32.mrf.mxu0
        %v4672 = vadd.f32 0.0, %v4671
        %4673 = vmatmul.f32.gmra.mxu0 %v386
        %v4674 = vpop.f32.mrf.mxu0
        %v4675 = vadd.f32 0.0, %v4674
        %4676 = vmatmul.f32.gmra.mxu0 %v388
        %v4677 = vpop.f32.mrf.mxu0
        %v4678 = vadd.f32 0.0, %v4677
        %4679 = vmatmul.f32.gmra.mxu0 %v396
        %v4680 = vpop.f32.mrf.mxu0
        %v4681 = vadd.f32 0.0, %v4680
        %4682 = vmatmul.f32.gmra.mxu0 %v398
        %v4683 = vpop.f32.mrf.mxu0
        %v4684 = vadd.f32 0.0, %v4683
        %4685 = vmatmul.f32.gmra.mxu0 %v400
        %v4686 = vpop.f32.mrf.mxu0
        %v4687 = vadd.f32 0.0, %v4686
        %4688 = vmatmul.f32.gmra.mxu0 %v402
        %v4689 = vpop.f32.mrf.mxu0
        %v4690 = vadd.f32 0.0, %v4689
        %4691 = vmatmul.f32.gmra.mxu0 %v404
        %v4692 = vpop.f32.mrf.mxu0
        %v4693 = vadd.f32 0.0, %v4692
        %4694 = vmatmul.f32.gmra.mxu0 %v408
        %v4695 = vpop.f32.mrf.mxu0
        %v4696 = vadd.f32 0.0, %v4695
        %4697 = vmatmul.f32.gmra.mxu0 %v410
        %v4698 = vpop.f32.mrf.mxu0
        %v4699 = vadd.f32 0.0, %v4698
        %4700 = vmatmul.f32.gmra.mxu0 %v412
        %v4701 = vpop.f32.mrf.mxu0
        %v4702 = vadd.f32 0.0, %v4701
        %4703 = vmatmul.f32.gmra.mxu0 %v414
        %v4704 = vpop.f32.mrf.mxu0
        %v4705 = vadd.f32 0.0, %v4704
        %4706 = vmatmul.f32.gmra.mxu0 %v416
        %v4707 = vpop.f32.mrf.mxu0
        %v4708 = vadd.f32 0.0, %v4707
        %4709 = vdwg.mxu0
        %4710 = vmatpush.xpose.msra.mxu0 %v4010
        %4711 = vmatpush.xpose.msra.mxu0 %v4008
        %4712 = vmatpush.xpose.msra.mxu0 %v4006
        %4713 = vmatpush.xpose.msra.mxu0 %v4004
        %4714 = vmatpush.xpose.msra.mxu0 %v4002
        %4715 = vmatpush.xpose.msra.mxu0 %v4000
        %4716 = vmatpush.xpose.msra.mxu0 %v3998
        %4717 = vmatpush.xpose.msra.mxu0 %v3996
        %4718 = vmatpush.xpose.msra.mxu0 %v3994
        %4719 = vmatpush.xpose.msra.mxu0 %v3992
        %4720 = vmatpush.xpose.msra.mxu0 %v3990
        %4721 = vmatpush.xpose.msra.mxu0 %v3988
        %4722 = vmatpush.xpose.msra.mxu0 %v3986
        %4723 = vmatpush.xpose.msra.mxu0 %v3984
        %4724 = vmatpush.xpose.msra.mxu0 %v3982
        %4725 = vmatpush.xpose.msra.mxu0 %v3980
        %4726 = vmatmul.f32.gmra.mxu0 %v365
        %v4727 = vpop.f32.mrf.mxu0
        %v4728 = vadd.f32 %v4651, %v4727
        %4729 = vmatmul.f32.gmra.mxu0 %v367
        %v4730 = vpop.f32.mrf.mxu0
        %v4731 = vadd.f32 %v4654, %v4730
        %4732 = vmatmul.f32.gmra.mxu0 %v369
        %v4733 = vpop.f32.mrf.mxu0
        %v4734 = vadd.f32 %v4657, %v4733
        %4735 = vmatmul.f32.gmra.mxu0 %v371
        %v4736 = vpop.f32.mrf.mxu0
        %v4737 = vadd.f32 %v4660, %v4736
        %4738 = vmatmul.f32.gmra.mxu0 %v373
        %v4739 = vpop.f32.mrf.mxu0
        %v4740 = vadd.f32 %v4663, %v4739
        %4741 = vmatmul.f32.gmra.mxu0 %v381
        %v4742 = vpop.f32.mrf.mxu0
        %v4743 = vadd.f32 %v4666, %v4742
        %4744 = vmatmul.f32.gmra.mxu0 %v383
        %v4745 = vpop.f32.mrf.mxu0
        %v4746 = vadd.f32 %v4669, %v4745
        %4747 = vmatmul.f32.gmra.mxu0 %v385
        %v4748 = vpop.f32.mrf.mxu0
        %v4749 = vadd.f32 %v4672, %v4748
        %4750 = vmatmul.f32.gmra.mxu0 %v387
        %v4751 = vpop.f32.mrf.mxu0
        %v4752 = vadd.f32 %v4675, %v4751
        %4753 = vmatmul.f32.gmra.mxu0 %v389
        %v4754 = vpop.f32.mrf.mxu0
        %v4755 = vadd.f32 %v4678, %v4754
        %4756 = vmatmul.f32.gmra.mxu0 %v397
        %v4757 = vpop.f32.mrf.mxu0
        %v4758 = vadd.f32 %v4681, %v4757
        %4759 = vmatmul.f32.gmra.mxu0 %v399
        %v4760 = vpop.f32.mrf.mxu0
        %v4761 = vadd.f32 %v4684, %v4760
        %4762 = vmatmul.f32.gmra.mxu0 %v401
        %v4763 = vpop.f32.mrf.mxu0
        %v4764 = vadd.f32 %v4687, %v4763
        %4765 = vmatmul.f32.gmra.mxu0 %v403
        %v4766 = vpop.f32.mrf.mxu0
        %v4767 = vadd.f32 %v4690, %v4766
        %4768 = vmatmul.f32.gmra.mxu0 %v405
        %v4769 = vpop.f32.mrf.mxu0
        %v4770 = vadd.f32 %v4693, %v4769
        %4771 = vmatmul.f32.gmra.mxu0 %v409
        %v4772 = vpop.f32.mrf.mxu0
        %v4773 = vadd.f32 %v4696, %v4772
        %4774 = vmatmul.f32.gmra.mxu0 %v411
        %v4775 = vpop.f32.mrf.mxu0
        %v4776 = vadd.f32 %v4699, %v4775
        %4777 = vmatmul.f32.gmra.mxu0 %v413
        %v4778 = vpop.f32.mrf.mxu0
        %v4779 = vadd.f32 %v4702, %v4778
        %4780 = vmatmul.f32.gmra.mxu0 %v415
        %v4781 = vpop.f32.mrf.mxu0
        %v4782 = vadd.f32 %v4705, %v4781
        %4783 = vmatmul.f32.gmra.mxu0 %v417
        %v4784 = vpop.f32.mrf.mxu0
        %v4785 = vadd.f32 %v4708, %v4784
        %4786 = vdwg.mxu0
        %4787 = vmatpush.xpose.msra.mxu0 %v4041
        %4788 = vmatpush.xpose.msra.mxu0 %v4039
        %4789 = vmatpush.xpose.msra.mxu0 %v4037
        %4790 = vmatpush.xpose.msra.mxu0 %v4035
        %4791 = vmatpush.xpose.msra.mxu0 %v4033
        %4792 = vmatpush.xpose.msra.mxu0 %v4031
        %4793 = vmatpush.xpose.msra.mxu0 %v4029
        %4794 = vmatpush.xpose.msra.mxu0 %v4027
        %4795 = vmatpush.xpose.msra.mxu0 %v4025
        %4796 = vmatpush.xpose.msra.mxu0 %v4023
        %4797 = vmatpush.xpose.msra.mxu0 %v4021
        %4798 = vmatpush.xpose.msra.mxu0 %v4019
        %4799 = vmatpush.xpose.msra.mxu0 %v4017
        %4800 = vmatpush.xpose.msra.mxu0 %v4015
        %4801 = vmatpush.xpose.msra.mxu0 %v4013
        %4802 = vmatpush.xpose.msra.mxu0 %v4011
        %4803 = vmatmul.f32.gmra.mxu0 %v364
        %v4804 = vpop.f32.mrf.mxu0
        %v4805 = vadd.f32 0.0, %v4804
        %4806 = vmatmul.f32.gmra.mxu0 %v366
        %v4807 = vpop.f32.mrf.mxu0
        %v4808 = vadd.f32 0.0, %v4807
        %4809 = vmatmul.f32.gmra.mxu0 %v368
        %v4810 = vpop.f32.mrf.mxu0
        %v4811 = vadd.f32 0.0, %v4810
        %4812 = vmatmul.f32.gmra.mxu0 %v370
        %v4813 = vpop.f32.mrf.mxu0
        %v4814 = vadd.f32 0.0, %v4813
        %4815 = vmatmul.f32.gmra.mxu0 %v372
        %v4816 = vpop.f32.mrf.mxu0
        %v4817 = vadd.f32 0.0, %v4816
        %4818 = vmatmul.f32.gmra.mxu0 %v380
        %v4819 = vpop.f32.mrf.mxu0
        %v4820 = vadd.f32 0.0, %v4819
        %4821 = vmatmul.f32.gmra.mxu0 %v382
        %v4822 = vpop.f32.mrf.mxu0
        %v4823 = vadd.f32 0.0, %v4822
        %4824 = vmatmul.f32.gmra.mxu0 %v384
        %v4825 = vpop.f32.mrf.mxu0
        %v4826 = vadd.f32 0.0, %v4825
        %4827 = vmatmul.f32.gmra.mxu0 %v386
        %v4828 = vpop.f32.mrf.mxu0
        %v4829 = vadd.f32 0.0, %v4828
        %4830 = vmatmul.f32.gmra.mxu0 %v388
        %v4831 = vpop.f32.mrf.mxu0
        %v4832 = vadd.f32 0.0, %v4831
        %4833 = vmatmul.f32.gmra.mxu0 %v396
        %v4834 = vpop.f32.mrf.mxu0
        %v4835 = vadd.f32 0.0, %v4834
        %4836 = vmatmul.f32.gmra.mxu0 %v398
        %v4837 = vpop.f32.mrf.mxu0
        %v4838 = vadd.f32 0.0, %v4837
        %4839 = vmatmul.f32.gmra.mxu0 %v400
        %v4840 = vpop.f32.mrf.mxu0
        %v4841 = vadd.f32 0.0, %v4840
        %4842 = vmatmul.f32.gmra.mxu0 %v402
        %v4843 = vpop.f32.mrf.mxu0
        %v4844 = vadd.f32 0.0, %v4843
        %4845 = vmatmul.f32.gmra.mxu0 %v404
        %v4846 = vpop.f32.mrf.mxu0
        %v4847 = vadd.f32 0.0, %v4846
        %4848 = vmatmul.f32.gmra.mxu0 %v408
        %v4849 = vpop.f32.mrf.mxu0
        %v4850 = vadd.f32 0.0, %v4849
        %4851 = vmatmul.f32.gmra.mxu0 %v410
        %v4852 = vpop.f32.mrf.mxu0
        %v4853 = vadd.f32 0.0, %v4852
        %4854 = vmatmul.f32.gmra.mxu0 %v412
        %v4855 = vpop.f32.mrf.mxu0
        %v4856 = vadd.f32 0.0, %v4855
        %4857 = vmatmul.f32.gmra.mxu0 %v414
        %v4858 = vpop.f32.mrf.mxu0
        %v4859 = vadd.f32 0.0, %v4858
        %4860 = vmatmul.f32.gmra.mxu0 %v416
        %v4861 = vpop.f32.mrf.mxu0
        %v4862 = vadd.f32 0.0, %v4861
        %4863 = vdwg.mxu0
        %4864 = vmatpush.xpose.msra.mxu0 %v4042
        %4865 = vmatpush.xpose.msra.mxu0 %v4040
        %4866 = vmatpush.xpose.msra.mxu0 %v4038
        %4867 = vmatpush.xpose.msra.mxu0 %v4036
        %4868 = vmatpush.xpose.msra.mxu0 %v4034
        %4869 = vmatpush.xpose.msra.mxu0 %v4032
        %4870 = vmatpush.xpose.msra.mxu0 %v4030
        %4871 = vmatpush.xpose.msra.mxu0 %v4028
        %4872 = vmatpush.xpose.msra.mxu0 %v4026
        %4873 = vmatpush.xpose.msra.mxu0 %v4024
        %4874 = vmatpush.xpose.msra.mxu0 %v4022
        %4875 = vmatpush.xpose.msra.mxu0 %v4020
        %4876 = vmatpush.xpose.msra.mxu0 %v4018
        %4877 = vmatpush.xpose.msra.mxu0 %v4016
        %4878 = vmatpush.xpose.msra.mxu0 %v4014
        %4879 = vmatpush.xpose.msra.mxu0 %v4012
        %4880 = vmatmul.f32.gmra.mxu0 %v365
        %v4881 = vpop.f32.mrf.mxu0
        %v4882 = vadd.f32 %v4805, %v4881
        %4883 = vmatmul.f32.gmra.mxu0 %v367
        %v4884 = vpop.f32.mrf.mxu0
        %v4885 = vadd.f32 %v4808, %v4884
        %4886 = vmatmul.f32.gmra.mxu0 %v369
        %v4887 = vpop.f32.mrf.mxu0
        %v4888 = vadd.f32 %v4811, %v4887
        %4889 = vmatmul.f32.gmra.mxu0 %v371
        %v4890 = vpop.f32.mrf.mxu0
        %v4891 = vadd.f32 %v4814, %v4890
        %4892 = vmatmul.f32.gmra.mxu0 %v373
        %v4893 = vpop.f32.mrf.mxu0
        %v4894 = vadd.f32 %v4817, %v4893
        %4895 = vmatmul.f32.gmra.mxu0 %v381
        %v4896 = vpop.f32.mrf.mxu0
        %v4897 = vadd.f32 %v4820, %v4896
        %4898 = vmatmul.f32.gmra.mxu0 %v383
        %v4899 = vpop.f32.mrf.mxu0
        %v4900 = vadd.f32 %v4823, %v4899
        %4901 = vmatmul.f32.gmra.mxu0 %v385
        %v4902 = vpop.f32.mrf.mxu0
        %v4903 = vadd.f32 %v4826, %v4902
        %4904 = vmatmul.f32.gmra.mxu0 %v387
        %v4905 = vpop.f32.mrf.mxu0
        %v4906 = vadd.f32 %v4829, %v4905
        %4907 = vmatmul.f32.gmra.mxu0 %v389
        %v4908 = vpop.f32.mrf.mxu0
        %v4909 = vadd.f32 %v4832, %v4908
        %4910 = vmatmul.f32.gmra.mxu0 %v397
        %v4911 = vpop.f32.mrf.mxu0
        %v4912 = vadd.f32 %v4835, %v4911
        %4913 = vmatmul.f32.gmra.mxu0 %v399
        %v4914 = vpop.f32.mrf.mxu0
        %v4915 = vadd.f32 %v4838, %v4914
        %4916 = vmatmul.f32.gmra.mxu0 %v401
        %v4917 = vpop.f32.mrf.mxu0
        %v4918 = vadd.f32 %v4841, %v4917
        %4919 = vmatmul.f32.gmra.mxu0 %v403
        %v4920 = vpop.f32.mrf.mxu0
        %v4921 = vadd.f32 %v4844, %v4920
        %4922 = vmatmul.f32.gmra.mxu0 %v405
        %v4923 = vpop.f32.mrf.mxu0
        %v4924 = vadd.f32 %v4847, %v4923
        %4925 = vmatmul.f32.gmra.mxu0 %v409
        %v4926 = vpop.f32.mrf.mxu0
        %v4927 = vadd.f32 %v4850, %v4926
        %4928 = vmatmul.f32.gmra.mxu0 %v411
        %v4929 = vpop.f32.mrf.mxu0
        %v4930 = vadd.f32 %v4853, %v4929
        %4931 = vmatmul.f32.gmra.mxu0 %v413
        %v4932 = vpop.f32.mrf.mxu0
        %v4933 = vadd.f32 %v4856, %v4932
        %4934 = vmatmul.f32.gmra.mxu0 %v415
        %v4935 = vpop.f32.mrf.mxu0
        %v4936 = vadd.f32 %v4859, %v4935
        %4937 = vmatmul.f32.gmra.mxu0 %v417
        %v4938 = vpop.f32.mrf.mxu0
        %v4939 = vadd.f32 %v4862, %v4938
        %4940 = vdwg.mxu0
        %4941 = vmatpush.xpose.msra.mxu0 %v4073
        %4942 = vmatpush.xpose.msra.mxu0 %v4071
        %4943 = vmatpush.xpose.msra.mxu0 %v4069
        %4944 = vmatpush.xpose.msra.mxu0 %v4067
        %4945 = vmatpush.xpose.msra.mxu0 %v4065
        %4946 = vmatpush.xpose.msra.mxu0 %v4063
        %4947 = vmatpush.xpose.msra.mxu0 %v4061
        %4948 = vmatpush.xpose.msra.mxu0 %v4059
        %4949 = vmatpush.xpose.msra.mxu0 %v4057
        %4950 = vmatpush.xpose.msra.mxu0 %v4055
        %4951 = vmatpush.xpose.msra.mxu0 %v4053
        %4952 = vmatpush.xpose.msra.mxu0 %v4051
        %4953 = vmatpush.xpose.msra.mxu0 %v4049
        %4954 = vmatpush.xpose.msra.mxu0 %v4047
        %4955 = vmatpush.xpose.msra.mxu0 %v4045
        %4956 = vmatpush.xpose.msra.mxu0 %v4043
        %4957 = vmatmul.f32.gmra.mxu0 %v364
        %v4958 = vpop.f32.mrf.mxu0
        %v4959 = vadd.f32 0.0, %v4958
        %4960 = vmatmul.f32.gmra.mxu0 %v366
        %v4961 = vpop.f32.mrf.mxu0
        %v4962 = vadd.f32 0.0, %v4961
        %4963 = vmatmul.f32.gmra.mxu0 %v368
        %v4964 = vpop.f32.mrf.mxu0
        %v4965 = vadd.f32 0.0, %v4964
        %4966 = vmatmul.f32.gmra.mxu0 %v370
        %v4967 = vpop.f32.mrf.mxu0
        %v4968 = vadd.f32 0.0, %v4967
        %4969 = vmatmul.f32.gmra.mxu0 %v372
        %v4970 = vpop.f32.mrf.mxu0
        %v4971 = vadd.f32 0.0, %v4970
        %4972 = vmatmul.f32.gmra.mxu0 %v380
        %v4973 = vpop.f32.mrf.mxu0
        %v4974 = vadd.f32 0.0, %v4973
        %4975 = vmatmul.f32.gmra.mxu0 %v382
        %v4976 = vpop.f32.mrf.mxu0
        %v4977 = vadd.f32 0.0, %v4976
        %4978 = vmatmul.f32.gmra.mxu0 %v384
        %v4979 = vpop.f32.mrf.mxu0
        %v4980 = vadd.f32 0.0, %v4979
        %4981 = vmatmul.f32.gmra.mxu0 %v386
        %v4982 = vpop.f32.mrf.mxu0
        %v4983 = vadd.f32 0.0, %v4982
        %4984 = vmatmul.f32.gmra.mxu0 %v388
        %v4985 = vpop.f32.mrf.mxu0
        %v4986 = vadd.f32 0.0, %v4985
        %4987 = vmatmul.f32.gmra.mxu0 %v396
        %v4988 = vpop.f32.mrf.mxu0
        %v4989 = vadd.f32 0.0, %v4988
        %4990 = vmatmul.f32.gmra.mxu0 %v398
        %v4991 = vpop.f32.mrf.mxu0
        %v4992 = vadd.f32 0.0, %v4991
        %4993 = vmatmul.f32.gmra.mxu0 %v400
        %v4994 = vpop.f32.mrf.mxu0
        %v4995 = vadd.f32 0.0, %v4994
        %4996 = vmatmul.f32.gmra.mxu0 %v402
        %v4997 = vpop.f32.mrf.mxu0
        %v4998 = vadd.f32 0.0, %v4997
        %4999 = vmatmul.f32.gmra.mxu0 %v404
        %v5000 = vpop.f32.mrf.mxu0
        %v5001 = vadd.f32 0.0, %v5000
        %5002 = vmatmul.f32.gmra.mxu0 %v408
        %v5003 = vpop.f32.mrf.mxu0
        %v5004 = vadd.f32 0.0, %v5003
        %5005 = vmatmul.f32.gmra.mxu0 %v410
        %v5006 = vpop.f32.mrf.mxu0
        %v5007 = vadd.f32 0.0, %v5006
        %5008 = vmatmul.f32.gmra.mxu0 %v412
        %v5009 = vpop.f32.mrf.mxu0
        %v5010 = vadd.f32 0.0, %v5009
        %5011 = vmatmul.f32.gmra.mxu0 %v414
        %v5012 = vpop.f32.mrf.mxu0
        %v5013 = vadd.f32 0.0, %v5012
        %5014 = vmatmul.f32.gmra.mxu0 %v416
        %v5015 = vpop.f32.mrf.mxu0
        %v5016 = vadd.f32 0.0, %v5015
        %5017 = vdwg.mxu0
        %5018 = vmatpush.xpose.msra.mxu0 %v4074
        %5019 = vmatpush.xpose.msra.mxu0 %v4072
        %5020 = vmatpush.xpose.msra.mxu0 %v4070
        %5021 = vmatpush.xpose.msra.mxu0 %v4068
        %5022 = vmatpush.xpose.msra.mxu0 %v4066
        %5023 = vmatpush.xpose.msra.mxu0 %v4064
        %5024 = vmatpush.xpose.msra.mxu0 %v4062
        %5025 = vmatpush.xpose.msra.mxu0 %v4060
        %5026 = vmatpush.xpose.msra.mxu0 %v4058
        %5027 = vmatpush.xpose.msra.mxu0 %v4056
        %5028 = vmatpush.xpose.msra.mxu0 %v4054
        %5029 = vmatpush.xpose.msra.mxu0 %v4052
        %5030 = vmatpush.xpose.msra.mxu0 %v4050
        %5031 = vmatpush.xpose.msra.mxu0 %v4048
        %5032 = vmatpush.xpose.msra.mxu0 %v4046
        %5033 = vmatpush.xpose.msra.mxu0 %v4044
        %5034 = vmatmul.f32.gmra.mxu0 %v365
        %v5035 = vpop.f32.mrf.mxu0
        %v5036 = vadd.f32 %v4959, %v5035
        %5037 = vmatmul.f32.gmra.mxu0 %v367
        %v5038 = vpop.f32.mrf.mxu0
        %v5039 = vadd.f32 %v4962, %v5038
        %5040 = vmatmul.f32.gmra.mxu0 %v369
        %v5041 = vpop.f32.mrf.mxu0
        %v5042 = vadd.f32 %v4965, %v5041
        %5043 = vmatmul.f32.gmra.mxu0 %v371
        %v5044 = vpop.f32.mrf.mxu0
        %v5045 = vadd.f32 %v4968, %v5044
        %5046 = vmatmul.f32.gmra.mxu0 %v373
        %v5047 = vpop.f32.mrf.mxu0
        %v5048 = vadd.f32 %v4971, %v5047
        %5049 = vmatmul.f32.gmra.mxu0 %v381
        %v5050 = vpop.f32.mrf.mxu0
        %v5051 = vadd.f32 %v4974, %v5050
        %5052 = vmatmul.f32.gmra.mxu0 %v383
        %v5053 = vpop.f32.mrf.mxu0
        %v5054 = vadd.f32 %v4977, %v5053
        %5055 = vmatmul.f32.gmra.mxu0 %v385
        %v5056 = vpop.f32.mrf.mxu0
        %v5057 = vadd.f32 %v4980, %v5056
        %5058 = vmatmul.f32.gmra.mxu0 %v387
        %v5059 = vpop.f32.mrf.mxu0
        %v5060 = vadd.f32 %v4983, %v5059
        %5061 = vmatmul.f32.gmra.mxu0 %v389
        %v5062 = vpop.f32.mrf.mxu0
        %v5063 = vadd.f32 %v4986, %v5062
        %5064 = vmatmul.f32.gmra.mxu0 %v397
        %v5065 = vpop.f32.mrf.mxu0
        %v5066 = vadd.f32 %v4989, %v5065
        %5067 = vmatmul.f32.gmra.mxu0 %v399
        %v5068 = vpop.f32.mrf.mxu0
        %v5069 = vadd.f32 %v4992, %v5068
        %5070 = vmatmul.f32.gmra.mxu0 %v401
        %v5071 = vpop.f32.mrf.mxu0
        %v5072 = vadd.f32 %v4995, %v5071
        %5073 = vmatmul.f32.gmra.mxu0 %v403
        %v5074 = vpop.f32.mrf.mxu0
        %v5075 = vadd.f32 %v4998, %v5074
        %5076 = vmatmul.f32.gmra.mxu0 %v405
        %v5077 = vpop.f32.mrf.mxu0
        %v5078 = vadd.f32 %v5001, %v5077
        %5079 = vmatmul.f32.gmra.mxu0 %v409
        %v5080 = vpop.f32.mrf.mxu0
        %v5081 = vadd.f32 %v5004, %v5080
        %5082 = vmatmul.f32.gmra.mxu0 %v411
        %v5083 = vpop.f32.mrf.mxu0
        %v5084 = vadd.f32 %v5007, %v5083
        %5085 = vmatmul.f32.gmra.mxu0 %v413
        %v5086 = vpop.f32.mrf.mxu0
        %v5087 = vadd.f32 %v5010, %v5086
        %5088 = vmatmul.f32.gmra.mxu0 %v415
        %v5089 = vpop.f32.mrf.mxu0
        %v5090 = vadd.f32 %v5013, %v5089
        %5091 = vmatmul.f32.gmra.mxu0 %v417
        %v5092 = vpop.f32.mrf.mxu0
        %v5093 = vadd.f32 %v5016, %v5092
        %5094 = vdwg.mxu0
        %5095 = vmatpush.xpose.msra.mxu0 %v4105
        %5096 = vmatpush.xpose.msra.mxu0 %v4103
        %5097 = vmatpush.xpose.msra.mxu0 %v4101
        %5098 = vmatpush.xpose.msra.mxu0 %v4099
        %5099 = vmatpush.xpose.msra.mxu0 %v4097
        %5100 = vmatpush.xpose.msra.mxu0 %v4095
        %5101 = vmatpush.xpose.msra.mxu0 %v4093
        %5102 = vmatpush.xpose.msra.mxu0 %v4091
        %5103 = vmatpush.xpose.msra.mxu0 %v4089
        %5104 = vmatpush.xpose.msra.mxu0 %v4087
        %5105 = vmatpush.xpose.msra.mxu0 %v4085
        %5106 = vmatpush.xpose.msra.mxu0 %v4083
        %5107 = vmatpush.xpose.msra.mxu0 %v4081
        %5108 = vmatpush.xpose.msra.mxu0 %v4079
        %5109 = vmatpush.xpose.msra.mxu0 %v4077
        %5110 = vmatpush.xpose.msra.mxu0 %v4075
        %5111 = vmatmul.f32.gmra.mxu0 %v364
        %v5112 = vpop.f32.mrf.mxu0
        %v5113 = vadd.f32 0.0, %v5112
        %5114 = vmatmul.f32.gmra.mxu0 %v366
        %v5115 = vpop.f32.mrf.mxu0
        %v5116 = vadd.f32 0.0, %v5115
        %5117 = vmatmul.f32.gmra.mxu0 %v368
        %v5118 = vpop.f32.mrf.mxu0
        %v5119 = vadd.f32 0.0, %v5118
        %5120 = vmatmul.f32.gmra.mxu0 %v370
        %v5121 = vpop.f32.mrf.mxu0
        %v5122 = vadd.f32 0.0, %v5121
        %5123 = vmatmul.f32.gmra.mxu0 %v372
        %v5124 = vpop.f32.mrf.mxu0
        %v5125 = vadd.f32 0.0, %v5124
        %5126 = vmatmul.f32.gmra.mxu0 %v380
        %v5127 = vpop.f32.mrf.mxu0
        %v5128 = vadd.f32 0.0, %v5127
        %5129 = vmatmul.f32.gmra.mxu0 %v382
        %v5130 = vpop.f32.mrf.mxu0
        %v5131 = vadd.f32 0.0, %v5130
        %5132 = vmatmul.f32.gmra.mxu0 %v384
        %v5133 = vpop.f32.mrf.mxu0
        %v5134 = vadd.f32 0.0, %v5133
        %5135 = vmatmul.f32.gmra.mxu0 %v386
        %v5136 = vpop.f32.mrf.mxu0
        %v5137 = vadd.f32 0.0, %v5136
        %5138 = vmatmul.f32.gmra.mxu0 %v388
        %v5139 = vpop.f32.mrf.mxu0
        %v5140 = vadd.f32 0.0, %v5139
        %5141 = vmatmul.f32.gmra.mxu0 %v396
        %v5142 = vpop.f32.mrf.mxu0
        %v5143 = vadd.f32 0.0, %v5142
        %5144 = vmatmul.f32.gmra.mxu0 %v398
        %v5145 = vpop.f32.mrf.mxu0
        %v5146 = vadd.f32 0.0, %v5145
        %5147 = vmatmul.f32.gmra.mxu0 %v400
        %v5148 = vpop.f32.mrf.mxu0
        %v5149 = vadd.f32 0.0, %v5148
        %5150 = vmatmul.f32.gmra.mxu0 %v402
        %v5151 = vpop.f32.mrf.mxu0
        %v5152 = vadd.f32 0.0, %v5151
        %5153 = vmatmul.f32.gmra.mxu0 %v404
        %v5154 = vpop.f32.mrf.mxu0
        %v5155 = vadd.f32 0.0, %v5154
        %5156 = vmatmul.f32.gmra.mxu0 %v408
        %v5157 = vpop.f32.mrf.mxu0
        %v5158 = vadd.f32 0.0, %v5157
        %5159 = vmatmul.f32.gmra.mxu0 %v410
        %v5160 = vpop.f32.mrf.mxu0
        %v5161 = vadd.f32 0.0, %v5160
        %5162 = vmatmul.f32.gmra.mxu0 %v412
        %v5163 = vpop.f32.mrf.mxu0
        %v5164 = vadd.f32 0.0, %v5163
        %5165 = vmatmul.f32.gmra.mxu0 %v414
        %v5166 = vpop.f32.mrf.mxu0
        %v5167 = vadd.f32 0.0, %v5166
        %5168 = vmatmul.f32.gmra.mxu0 %v416
        %v5169 = vpop.f32.mrf.mxu0
        %v5170 = vadd.f32 0.0, %v5169
        %5171 = vdwg.mxu0
        %5172 = vmatpush.xpose.msra.mxu0 %v4106
        %5173 = vmatpush.xpose.msra.mxu0 %v4104
        %5174 = vmatpush.xpose.msra.mxu0 %v4102
        %5175 = vmatpush.xpose.msra.mxu0 %v4100
        %5176 = vmatpush.xpose.msra.mxu0 %v4098
        %5177 = vmatpush.xpose.msra.mxu0 %v4096
        %5178 = vmatpush.xpose.msra.mxu0 %v4094
        %5179 = vmatpush.xpose.msra.mxu0 %v4092
        %5180 = vmatpush.xpose.msra.mxu0 %v4090
        %5181 = vmatpush.xpose.msra.mxu0 %v4088
        %5182 = vmatpush.xpose.msra.mxu0 %v4086
        %5183 = vmatpush.xpose.msra.mxu0 %v4084
        %5184 = vmatpush.xpose.msra.mxu0 %v4082
        %5185 = vmatpush.xpose.msra.mxu0 %v4080
        %5186 = vmatpush.xpose.msra.mxu0 %v4078
        %5187 = vmatpush.xpose.msra.mxu0 %v4076
        %5188 = vmatmul.f32.gmra.mxu0 %v365
        %v5189 = vpop.f32.mrf.mxu0
        %v5190 = vadd.f32 %v5113, %v5189
        %5191 = vmatmul.f32.gmra.mxu0 %v367
        %v5192 = vpop.f32.mrf.mxu0
        %v5193 = vadd.f32 %v5116, %v5192
        %5194 = vmatmul.f32.gmra.mxu0 %v369
        %v5195 = vpop.f32.mrf.mxu0
        %v5196 = vadd.f32 %v5119, %v5195
        %5197 = vmatmul.f32.gmra.mxu0 %v371
        %v5198 = vpop.f32.mrf.mxu0
        %v5199 = vadd.f32 %v5122, %v5198
        %5200 = vmatmul.f32.gmra.mxu0 %v373
        %v5201 = vpop.f32.mrf.mxu0
        %v5202 = vadd.f32 %v5125, %v5201
        %5203 = vmatmul.f32.gmra.mxu0 %v381
        %v5204 = vpop.f32.mrf.mxu0
        %v5205 = vadd.f32 %v5128, %v5204
        %5206 = vmatmul.f32.gmra.mxu0 %v383
        %v5207 = vpop.f32.mrf.mxu0
        %v5208 = vadd.f32 %v5131, %v5207
        %5209 = vmatmul.f32.gmra.mxu0 %v385
        %v5210 = vpop.f32.mrf.mxu0
        %v5211 = vadd.f32 %v5134, %v5210
        %5212 = vmatmul.f32.gmra.mxu0 %v387
        %v5213 = vpop.f32.mrf.mxu0
        %v5214 = vadd.f32 %v5137, %v5213
        %5215 = vmatmul.f32.gmra.mxu0 %v389
        %v5216 = vpop.f32.mrf.mxu0
        %v5217 = vadd.f32 %v5140, %v5216
        %5218 = vmatmul.f32.gmra.mxu0 %v397
        %v5219 = vpop.f32.mrf.mxu0
        %v5220 = vadd.f32 %v5143, %v5219
        %5221 = vmatmul.f32.gmra.mxu0 %v399
        %v5222 = vpop.f32.mrf.mxu0
        %v5223 = vadd.f32 %v5146, %v5222
        %5224 = vmatmul.f32.gmra.mxu0 %v401
        %v5225 = vpop.f32.mrf.mxu0
        %v5226 = vadd.f32 %v5149, %v5225
        %5227 = vmatmul.f32.gmra.mxu0 %v403
        %v5228 = vpop.f32.mrf.mxu0
        %v5229 = vadd.f32 %v5152, %v5228
        %5230 = vmatmul.f32.gmra.mxu0 %v405
        %v5231 = vpop.f32.mrf.mxu0
        %v5232 = vadd.f32 %v5155, %v5231
        %5233 = vmatmul.f32.gmra.mxu0 %v409
        %v5234 = vpop.f32.mrf.mxu0
        %v5235 = vadd.f32 %v5158, %v5234
        %5236 = vmatmul.f32.gmra.mxu0 %v411
        %v5237 = vpop.f32.mrf.mxu0
        %v5238 = vadd.f32 %v5161, %v5237
        %5239 = vmatmul.f32.gmra.mxu0 %v413
        %v5240 = vpop.f32.mrf.mxu0
        %v5241 = vadd.f32 %v5164, %v5240
        %5242 = vmatmul.f32.gmra.mxu0 %v415
        %v5243 = vpop.f32.mrf.mxu0
        %v5244 = vadd.f32 %v5167, %v5243
        %5245 = vmatmul.f32.gmra.mxu0 %v417
        %v5246 = vpop.f32.mrf.mxu0
        %v5247 = vadd.f32 %v5170, %v5246
        %5248 = vdwg.mxu0
        %5249 = vmatpush.xpose.msra.mxu0 %v4137
        %5250 = vmatpush.xpose.msra.mxu0 %v4135
        %5251 = vmatpush.xpose.msra.mxu0 %v4133
        %5252 = vmatpush.xpose.msra.mxu0 %v4131
        %5253 = vmatpush.xpose.msra.mxu0 %v4129
        %5254 = vmatpush.xpose.msra.mxu0 %v4127
        %5255 = vmatpush.xpose.msra.mxu0 %v4125
        %5256 = vmatpush.xpose.msra.mxu0 %v4123
        %5257 = vmatpush.xpose.msra.mxu0 %v4121
        %5258 = vmatpush.xpose.msra.mxu0 %v4119
        %5259 = vmatpush.xpose.msra.mxu0 %v4117
        %5260 = vmatpush.xpose.msra.mxu0 %v4115
        %5261 = vmatpush.xpose.msra.mxu0 %v4113
        %5262 = vmatpush.xpose.msra.mxu0 %v4111
        %5263 = vmatpush.xpose.msra.mxu0 %v4109
        %5264 = vmatpush.xpose.msra.mxu0 %v4107
        %5265 = vmatmul.f32.gmra.mxu0 %v364
        %v5266 = vpop.f32.mrf.mxu0
        %v5267 = vadd.f32 0.0, %v5266
        %5268 = vmatmul.f32.gmra.mxu0 %v366
        %v5269 = vpop.f32.mrf.mxu0
        %v5270 = vadd.f32 0.0, %v5269
        %5271 = vmatmul.f32.gmra.mxu0 %v368
        %v5272 = vpop.f32.mrf.mxu0
        %v5273 = vadd.f32 0.0, %v5272
        %5274 = vmatmul.f32.gmra.mxu0 %v370
        %v5275 = vpop.f32.mrf.mxu0
        %v5276 = vadd.f32 0.0, %v5275
        %5277 = vmatmul.f32.gmra.mxu0 %v372
        %v5278 = vpop.f32.mrf.mxu0
        %v5279 = vadd.f32 0.0, %v5278
        %5280 = vmatmul.f32.gmra.mxu0 %v380
        %v5281 = vpop.f32.mrf.mxu0
        %v5282 = vadd.f32 0.0, %v5281
        %5283 = vmatmul.f32.gmra.mxu0 %v382
        %v5284 = vpop.f32.mrf.mxu0
        %v5285 = vadd.f32 0.0, %v5284
        %5286 = vmatmul.f32.gmra.mxu0 %v384
        %v5287 = vpop.f32.mrf.mxu0
        %v5288 = vadd.f32 0.0, %v5287
        %5289 = vmatmul.f32.gmra.mxu0 %v386
        %v5290 = vpop.f32.mrf.mxu0
        %v5291 = vadd.f32 0.0, %v5290
        %5292 = vmatmul.f32.gmra.mxu0 %v388
        %v5293 = vpop.f32.mrf.mxu0
        %v5294 = vadd.f32 0.0, %v5293
        %5295 = vmatmul.f32.gmra.mxu0 %v396
        %v5296 = vpop.f32.mrf.mxu0
        %v5297 = vadd.f32 0.0, %v5296
        %5298 = vmatmul.f32.gmra.mxu0 %v398
        %v5299 = vpop.f32.mrf.mxu0
        %v5300 = vadd.f32 0.0, %v5299
        %5301 = vmatmul.f32.gmra.mxu0 %v400
        %v5302 = vpop.f32.mrf.mxu0
        %v5303 = vadd.f32 0.0, %v5302
        %5304 = vmatmul.f32.gmra.mxu0 %v402
        %v5305 = vpop.f32.mrf.mxu0
        %v5306 = vadd.f32 0.0, %v5305
        %5307 = vmatmul.f32.gmra.mxu0 %v404
        %v5308 = vpop.f32.mrf.mxu0
        %v5309 = vadd.f32 0.0, %v5308
        %5310 = vmatmul.f32.gmra.mxu0 %v408
        %v5311 = vpop.f32.mrf.mxu0
        %v5312 = vadd.f32 0.0, %v5311
        %5313 = vmatmul.f32.gmra.mxu0 %v410
        %v5314 = vpop.f32.mrf.mxu0
        %v5315 = vadd.f32 0.0, %v5314
        %5316 = vmatmul.f32.gmra.mxu0 %v412
        %v5317 = vpop.f32.mrf.mxu0
        %v5318 = vadd.f32 0.0, %v5317
        %5319 = vmatmul.f32.gmra.mxu0 %v414
        %v5320 = vpop.f32.mrf.mxu0
        %v5321 = vadd.f32 0.0, %v5320
        %5322 = vmatmul.f32.gmra.mxu0 %v416
        %v5323 = vpop.f32.mrf.mxu0
        %v5324 = vadd.f32 0.0, %v5323
        %5325 = vdwg.mxu0
        %5326 = vmatpush.xpose.msra.mxu0 %v4138
        %5327 = vmatpush.xpose.msra.mxu0 %v4136
        %5328 = vmatpush.xpose.msra.mxu0 %v4134
        %5329 = vmatpush.xpose.msra.mxu0 %v4132
        %5330 = vmatpush.xpose.msra.mxu0 %v4130
        %5331 = vmatpush.xpose.msra.mxu0 %v4128
        %5332 = vmatpush.xpose.msra.mxu0 %v4126
        %5333 = vmatpush.xpose.msra.mxu0 %v4124
        %5334 = vmatpush.xpose.msra.mxu0 %v4122
        %5335 = vmatpush.xpose.msra.mxu0 %v4120
        %5336 = vmatpush.xpose.msra.mxu0 %v4118
        %5337 = vmatpush.xpose.msra.mxu0 %v4116
        %5338 = vmatpush.xpose.msra.mxu0 %v4114
        %5339 = vmatpush.xpose.msra.mxu0 %v4112
        %5340 = vmatpush.xpose.msra.mxu0 %v4110
        %5341 = vmatpush.xpose.msra.mxu0 %v4108
        %5342 = vmatmul.f32.gmra.mxu0 %v365
        %v5343 = vpop.f32.mrf.mxu0
        %v5344 = vadd.f32 %v5267, %v5343
        %5345 = vmatmul.f32.gmra.mxu0 %v367
        %v5346 = vpop.f32.mrf.mxu0
        %v5347 = vadd.f32 %v5270, %v5346
        %5348 = vmatmul.f32.gmra.mxu0 %v369
        %v5349 = vpop.f32.mrf.mxu0
        %v5350 = vadd.f32 %v5273, %v5349
        %5351 = vmatmul.f32.gmra.mxu0 %v371
        %v5352 = vpop.f32.mrf.mxu0
        %v5353 = vadd.f32 %v5276, %v5352
        %5354 = vmatmul.f32.gmra.mxu0 %v373
        %v5355 = vpop.f32.mrf.mxu0
        %v5356 = vadd.f32 %v5279, %v5355
        %5357 = vmatmul.f32.gmra.mxu0 %v381
        %v5358 = vpop.f32.mrf.mxu0
        %v5359 = vadd.f32 %v5282, %v5358
        %5360 = vmatmul.f32.gmra.mxu0 %v383
        %v5361 = vpop.f32.mrf.mxu0
        %v5362 = vadd.f32 %v5285, %v5361
        %5363 = vmatmul.f32.gmra.mxu0 %v385
        %v5364 = vpop.f32.mrf.mxu0
        %v5365 = vadd.f32 %v5288, %v5364
        %5366 = vmatmul.f32.gmra.mxu0 %v387
        %v5367 = vpop.f32.mrf.mxu0
        %v5368 = vadd.f32 %v5291, %v5367
        %5369 = vmatmul.f32.gmra.mxu0 %v389
        %v5370 = vpop.f32.mrf.mxu0
        %v5371 = vadd.f32 %v5294, %v5370
        %5372 = vmatmul.f32.gmra.mxu0 %v397
        %v5373 = vpop.f32.mrf.mxu0
        %v5374 = vadd.f32 %v5297, %v5373
        %5375 = vmatmul.f32.gmra.mxu0 %v399
        %v5376 = vpop.f32.mrf.mxu0
        %v5377 = vadd.f32 %v5300, %v5376
        %5378 = vmatmul.f32.gmra.mxu0 %v401
        %v5379 = vpop.f32.mrf.mxu0
        %v5380 = vadd.f32 %v5303, %v5379
        %5381 = vmatmul.f32.gmra.mxu0 %v403
        %v5382 = vpop.f32.mrf.mxu0
        %v5383 = vadd.f32 %v5306, %v5382
        %5384 = vmatmul.f32.gmra.mxu0 %v405
        %v5385 = vpop.f32.mrf.mxu0
        %v5386 = vadd.f32 %v5309, %v5385
        %5387 = vmatmul.f32.gmra.mxu0 %v409
        %v5388 = vpop.f32.mrf.mxu0
        %v5389 = vadd.f32 %v5312, %v5388
        %5390 = vmatmul.f32.gmra.mxu0 %v411
        %v5391 = vpop.f32.mrf.mxu0
        %v5392 = vadd.f32 %v5315, %v5391
        %5393 = vmatmul.f32.gmra.mxu0 %v413
        %v5394 = vpop.f32.mrf.mxu0
        %v5395 = vadd.f32 %v5318, %v5394
        %5396 = vmatmul.f32.gmra.mxu0 %v415
        %v5397 = vpop.f32.mrf.mxu0
        %v5398 = vadd.f32 %v5321, %v5397
        %5399 = vmatmul.f32.gmra.mxu0 %v417
        %v5400 = vpop.f32.mrf.mxu0
        %v5401 = vadd.f32 %v5324, %v5400
        %5402 = vdwg.mxu0
        %5403 = vmatpush.xpose.msra.mxu0 %v4169
        %5404 = vmatpush.xpose.msra.mxu0 %v4167
        %5405 = vmatpush.xpose.msra.mxu0 %v4165
        %5406 = vmatpush.xpose.msra.mxu0 %v4163
        %5407 = vmatpush.xpose.msra.mxu0 %v4161
        %5408 = vmatpush.xpose.msra.mxu0 %v4159
        %5409 = vmatpush.xpose.msra.mxu0 %v4157
        %5410 = vmatpush.xpose.msra.mxu0 %v4155
        %5411 = vmatpush.xpose.msra.mxu0 %v4153
        %5412 = vmatpush.xpose.msra.mxu0 %v4151
        %5413 = vmatpush.xpose.msra.mxu0 %v4149
        %5414 = vmatpush.xpose.msra.mxu0 %v4147
        %5415 = vmatpush.xpose.msra.mxu0 %v4145
        %5416 = vmatpush.xpose.msra.mxu0 %v4143
        %5417 = vmatpush.xpose.msra.mxu0 %v4141
        %5418 = vmatpush.xpose.msra.mxu0 %v4139
        %5419 = vmatmul.f32.gmra.mxu0 %v364
        %v5420 = vpop.f32.mrf.mxu0
        %v5421 = vadd.f32 0.0, %v5420
        %5422 = vmatmul.f32.gmra.mxu0 %v366
        %v5423 = vpop.f32.mrf.mxu0
        %v5424 = vadd.f32 0.0, %v5423
        %5425 = vmatmul.f32.gmra.mxu0 %v368
        %v5426 = vpop.f32.mrf.mxu0
        %v5427 = vadd.f32 0.0, %v5426
        %5428 = vmatmul.f32.gmra.mxu0 %v370
        %v5429 = vpop.f32.mrf.mxu0
        %v5430 = vadd.f32 0.0, %v5429
        %5431 = vmatmul.f32.gmra.mxu0 %v372
        %v5432 = vpop.f32.mrf.mxu0
        %v5433 = vadd.f32 0.0, %v5432
        %5434 = vmatmul.f32.gmra.mxu0 %v380
        %v5435 = vpop.f32.mrf.mxu0
        %v5436 = vadd.f32 0.0, %v5435
        %5437 = vmatmul.f32.gmra.mxu0 %v382
        %v5438 = vpop.f32.mrf.mxu0
        %v5439 = vadd.f32 0.0, %v5438
        %5440 = vmatmul.f32.gmra.mxu0 %v384
        %v5441 = vpop.f32.mrf.mxu0
        %v5442 = vadd.f32 0.0, %v5441
        %5443 = vmatmul.f32.gmra.mxu0 %v386
        %v5444 = vpop.f32.mrf.mxu0
        %v5445 = vadd.f32 0.0, %v5444
        %5446 = vmatmul.f32.gmra.mxu0 %v388
        %v5447 = vpop.f32.mrf.mxu0
        %v5448 = vadd.f32 0.0, %v5447
        %5449 = vmatmul.f32.gmra.mxu0 %v396
        %v5450 = vpop.f32.mrf.mxu0
        %v5451 = vadd.f32 0.0, %v5450
        %5452 = vmatmul.f32.gmra.mxu0 %v398
        %v5453 = vpop.f32.mrf.mxu0
        %v5454 = vadd.f32 0.0, %v5453
        %5455 = vmatmul.f32.gmra.mxu0 %v400
        %v5456 = vpop.f32.mrf.mxu0
        %v5457 = vadd.f32 0.0, %v5456
        %5458 = vmatmul.f32.gmra.mxu0 %v402
        %v5459 = vpop.f32.mrf.mxu0
        %v5460 = vadd.f32 0.0, %v5459
        %5461 = vmatmul.f32.gmra.mxu0 %v404
        %v5462 = vpop.f32.mrf.mxu0
        %v5463 = vadd.f32 0.0, %v5462
        %5464 = vmatmul.f32.gmra.mxu0 %v408
        %v5465 = vpop.f32.mrf.mxu0
        %v5466 = vadd.f32 0.0, %v5465
        %5467 = vmatmul.f32.gmra.mxu0 %v410
        %v5468 = vpop.f32.mrf.mxu0
        %v5469 = vadd.f32 0.0, %v5468
        %5470 = vmatmul.f32.gmra.mxu0 %v412
        %v5471 = vpop.f32.mrf.mxu0
        %v5472 = vadd.f32 0.0, %v5471
        %5473 = vmatmul.f32.gmra.mxu0 %v414
        %v5474 = vpop.f32.mrf.mxu0
        %v5475 = vadd.f32 0.0, %v5474
        %5476 = vmatmul.f32.gmra.mxu0 %v416
        %v5477 = vpop.f32.mrf.mxu0
        %v5478 = vadd.f32 0.0, %v5477
        %5479 = vdwg.mxu0
        %5480 = vmatpush.xpose.msra.mxu0 %v4170
        %5481 = vmatpush.xpose.msra.mxu0 %v4168
        %5482 = vmatpush.xpose.msra.mxu0 %v4166
        %5483 = vmatpush.xpose.msra.mxu0 %v4164
        %5484 = vmatpush.xpose.msra.mxu0 %v4162
        %5485 = vmatpush.xpose.msra.mxu0 %v4160
        %5486 = vmatpush.xpose.msra.mxu0 %v4158
        %5487 = vmatpush.xpose.msra.mxu0 %v4156
        %5488 = vmatpush.xpose.msra.mxu0 %v4154
        %5489 = vmatpush.xpose.msra.mxu0 %v4152
        %5490 = vmatpush.xpose.msra.mxu0 %v4150
        %5491 = vmatpush.xpose.msra.mxu0 %v4148
        %5492 = vmatpush.xpose.msra.mxu0 %v4146
        %5493 = vmatpush.xpose.msra.mxu0 %v4144
        %5494 = vmatpush.xpose.msra.mxu0 %v4142
        %5495 = vmatpush.xpose.msra.mxu0 %v4140
        %5496 = vmatmul.f32.gmra.mxu0 %v365
        %v5497 = vpop.f32.mrf.mxu0
        %v5498 = vadd.f32 %v5421, %v5497
        %5499 = vmatmul.f32.gmra.mxu0 %v367
        %v5500 = vpop.f32.mrf.mxu0
        %v5501 = vadd.f32 %v5424, %v5500
        %5502 = vmatmul.f32.gmra.mxu0 %v369
        %v5503 = vpop.f32.mrf.mxu0
        %v5504 = vadd.f32 %v5427, %v5503
        %5505 = vmatmul.f32.gmra.mxu0 %v371
        %v5506 = vpop.f32.mrf.mxu0
        %v5507 = vadd.f32 %v5430, %v5506
        %5508 = vmatmul.f32.gmra.mxu0 %v373
        %v5509 = vpop.f32.mrf.mxu0
        %v5510 = vadd.f32 %v5433, %v5509
        %5511 = vmatmul.f32.gmra.mxu0 %v381
        %v5512 = vpop.f32.mrf.mxu0
        %v5513 = vadd.f32 %v5436, %v5512
        %5514 = vmatmul.f32.gmra.mxu0 %v383
        %v5515 = vpop.f32.mrf.mxu0
        %v5516 = vadd.f32 %v5439, %v5515
        %5517 = vmatmul.f32.gmra.mxu0 %v385
        %v5518 = vpop.f32.mrf.mxu0
        %v5519 = vadd.f32 %v5442, %v5518
        %5520 = vmatmul.f32.gmra.mxu0 %v387
        %v5521 = vpop.f32.mrf.mxu0
        %v5522 = vadd.f32 %v5445, %v5521
        %5523 = vmatmul.f32.gmra.mxu0 %v389
        %v5524 = vpop.f32.mrf.mxu0
        %v5525 = vadd.f32 %v5448, %v5524
        %5526 = vmatmul.f32.gmra.mxu0 %v397
        %v5527 = vpop.f32.mrf.mxu0
        %v5528 = vadd.f32 %v5451, %v5527
        %5529 = vmatmul.f32.gmra.mxu0 %v399
        %v5530 = vpop.f32.mrf.mxu0
        %v5531 = vadd.f32 %v5454, %v5530
        %5532 = vmatmul.f32.gmra.mxu0 %v401
        %v5533 = vpop.f32.mrf.mxu0
        %v5534 = vadd.f32 %v5457, %v5533
        %5535 = vmatmul.f32.gmra.mxu0 %v403
        %v5536 = vpop.f32.mrf.mxu0
        %v5537 = vadd.f32 %v5460, %v5536
        %5538 = vmatmul.f32.gmra.mxu0 %v405
        %v5539 = vpop.f32.mrf.mxu0
        %v5540 = vadd.f32 %v5463, %v5539
        %5541 = vmatmul.f32.gmra.mxu0 %v409
        %v5542 = vpop.f32.mrf.mxu0
        %v5543 = vadd.f32 %v5466, %v5542
        %5544 = vmatmul.f32.gmra.mxu0 %v411
        %v5545 = vpop.f32.mrf.mxu0
        %v5546 = vadd.f32 %v5469, %v5545
        %5547 = vmatmul.f32.gmra.mxu0 %v413
        %v5548 = vpop.f32.mrf.mxu0
        %v5549 = vadd.f32 %v5472, %v5548
        %5550 = vmatmul.f32.gmra.mxu0 %v415
        %v5551 = vpop.f32.mrf.mxu0
        %v5552 = vadd.f32 %v5475, %v5551
        %5553 = vmatmul.f32.gmra.mxu0 %v417
        %v5554 = vpop.f32.mrf.mxu0
        %v5555 = vadd.f32 %v5478, %v5554
        %5556 = vdwg.mxu0
        %p5557 = scmp.eq.s32.totalorder %s27, 0
        // Predicated region
        $region37: #{tpu_custom_call.1} parent=31 // pred_check
          %p5558 = pneg %p5557
        $region38: #{tpu_custom_call.1} parent=31 // pred_check_branch
          %5560 = sbr.rel (%p5558) target = $region40
        $region39: #{tpu_custom_call.1} parent=31 // pred_region
          %5561 = vst [vmem:[%s264] sm:$0xff] %v4266
          %5562 = vst [vmem:[%s264 + $0x8] sm:$0xff] %v4420
          %5563 = vst [vmem:[%s264 + $0x10] sm:$0xff] %v4574
          %5564 = vst [vmem:[%s264 + $0x18] sm:$0xff] %v4728
          %5565 = vst [vmem:[%s264 + $0x20] sm:$0xff] %v4882
          %5566 = vst [vmem:[%s264 + $0x28] sm:$0xff] %v5036
          %5567 = vst [vmem:[%s264 + $0x30] sm:$0xff] %v5190
          %5568 = vst [vmem:[%s264 + $0x38] sm:$0xff] %v5344
          %5569 = vst [vmem:[%s264 + $0x40] sm:$0xff] %v5498
          %5570 = vst [vmem:[%s264 + $0x48] sm:$0xff] %v4269
          %5571 = vst [vmem:[%s264 + $0x50] sm:$0xff] %v4423
          %5572 = vst [vmem:[%s264 + $0x58] sm:$0xff] %v4577
          %5573 = vst [vmem:[%s264 + $0x60] sm:$0xff] %v4731
          %5574 = vst [vmem:[%s264 + $0x68] sm:$0xff] %v4885
          %5575 = vst [vmem:[%s264 + $0x70] sm:$0xff] %v5039
          %5576 = vst [vmem:[%s264 + $0x78] sm:$0xff] %v5193
          %5577 = vst [vmem:[%s264 + $0x80] sm:$0xff] %v5347
          %5578 = vst [vmem:[%s264 + $0x88] sm:$0xff] %v5501
          %5579 = vst [vmem:[%s264 + $0x90] sm:$0xff] %v4272
          %5580 = vst [vmem:[%s264 + $0x98] sm:$0xff] %v4426
          %5581 = vst [vmem:[%s264 + $0xa0] sm:$0xff] %v4580
          %5582 = vst [vmem:[%s264 + $0xa8] sm:$0xff] %v4734
          %5583 = vst [vmem:[%s264 + $0xb0] sm:$0xff] %v4888
          %5584 = vst [vmem:[%s264 + $0xb8] sm:$0xff] %v5042
          %5585 = vst [vmem:[%s264 + $0xc0] sm:$0xff] %v5196
          %5586 = vst [vmem:[%s264 + $0xc8] sm:$0xff] %v5350
          %5587 = vst [vmem:[%s264 + $0xd0] sm:$0xff] %v5504
          %5588 = vst [vmem:[%s264 + $0xd8] sm:$0xff] %v4275
          %5589 = vst [vmem:[%s264 + $0xe0] sm:$0xff] %v4429
          %5590 = vst [vmem:[%s264 + $0xe8] sm:$0xff] %v4583
          %5591 = vst [vmem:[%s264 + $0xf0] sm:$0xff] %v4737
          %5592 = vst [vmem:[%s264 + $0xf8] sm:$0xff] %v4891
          %5593 = vst [vmem:[%s264 + $0x100] sm:$0xff] %v5045
          %5594 = vst [vmem:[%s264 + $0x108] sm:$0xff] %v5199
          %5595 = vst [vmem:[%s264 + $0x110] sm:$0xff] %v5353
          %5596 = vst [vmem:[%s264 + $0x118] sm:$0xff] %v5507
          %5597 = vst [vmem:[%s264 + $0x120] sm:$0xff] %v4278
          %5598 = vst [vmem:[%s264 + $0x128] sm:$0xff] %v4432
          %5599 = vst [vmem:[%s264 + $0x130] sm:$0xff] %v4586
          %5600 = vst [vmem:[%s264 + $0x138] sm:$0xff] %v4740
          %5601 = vst [vmem:[%s264 + $0x140] sm:$0xff] %v4894
          %5602 = vst [vmem:[%s264 + $0x148] sm:$0xff] %v5048
          %5603 = vst [vmem:[%s264 + $0x150] sm:$0xff] %v5202
          %5604 = vst [vmem:[%s264 + $0x158] sm:$0xff] %v5356
          %5605 = vst [vmem:[%s264 + $0x160] sm:$0xff] %v5510
          %5606 = vst [vmem:[%s264 + $0x168] sm:$0xff] %v4281
          %5607 = vst [vmem:[%s264 + $0x170] sm:$0xff] %v4435
          %5608 = vst [vmem:[%s264 + $0x178] sm:$0xff] %v4589
          %5609 = vst [vmem:[%s264 + $0x180] sm:$0xff] %v4743
          %5610 = vst [vmem:[%s264 + $0x188] sm:$0xff] %v4897
          %5611 = vst [vmem:[%s264 + $0x190] sm:$0xff] %v5051
          %5612 = vst [vmem:[%s264 + $0x198] sm:$0xff] %v5205
          %5613 = vst [vmem:[%s264 + $0x1a0] sm:$0xff] %v5359
          %5614 = vst [vmem:[%s264 + $0x1a8] sm:$0xff] %v5513
          %5615 = vst [vmem:[%s264 + $0x1b0] sm:$0xff] %v4284
          %5616 = vst [vmem:[%s264 + $0x1b8] sm:$0xff] %v4438
          %5617 = vst [vmem:[%s264 + $0x1c0] sm:$0xff] %v4592
          %5618 = vst [vmem:[%s264 + $0x1c8] sm:$0xff] %v4746
          %5619 = vst [vmem:[%s264 + $0x1d0] sm:$0xff] %v4900
          %5620 = vst [vmem:[%s264 + $0x1d8] sm:$0xff] %v5054
          %5621 = vst [vmem:[%s264 + $0x1e0] sm:$0xff] %v5208
          %5622 = vst [vmem:[%s264 + $0x1e8] sm:$0xff] %v5362
          %5623 = vst [vmem:[%s264 + $0x1f0] sm:$0xff] %v5516
          %5624 = vst [vmem:[%s264 + $0x1f8] sm:$0xff] %v4287
          %5625 = vst [vmem:[%s264 + $0x200] sm:$0xff] %v4441
          %5626 = vst [vmem:[%s264 + $0x208] sm:$0xff] %v4595
          %5627 = vst [vmem:[%s264 + $0x210] sm:$0xff] %v4749
          %5628 = vst [vmem:[%s264 + $0x218] sm:$0xff] %v4903
          %5629 = vst [vmem:[%s264 + $0x220] sm:$0xff] %v5057
          %5630 = vst [vmem:[%s264 + $0x228] sm:$0xff] %v5211
          %5631 = vst [vmem:[%s264 + $0x230] sm:$0xff] %v5365
          %5632 = vst [vmem:[%s264 + $0x238] sm:$0xff] %v5519
          %5633 = vst [vmem:[%s264 + $0x240] sm:$0xff] %v4290
          %5634 = vst [vmem:[%s264 + $0x248] sm:$0xff] %v4444
          %5635 = vst [vmem:[%s264 + $0x250] sm:$0xff] %v4598
          %5636 = vst [vmem:[%s264 + $0x258] sm:$0xff] %v4752
          %5637 = vst [vmem:[%s264 + $0x260] sm:$0xff] %v4906
          %5638 = vst [vmem:[%s264 + $0x268] sm:$0xff] %v5060
          %5639 = vst [vmem:[%s264 + $0x270] sm:$0xff] %v5214
          %5640 = vst [vmem:[%s264 + $0x278] sm:$0xff] %v5368
          %5641 = vst [vmem:[%s264 + $0x280] sm:$0xff] %v5522
          %5642 = vst [vmem:[%s264 + $0x288] sm:$0xff] %v4293
          %5643 = vst [vmem:[%s264 + $0x290] sm:$0xff] %v4447
          %5644 = vst [vmem:[%s264 + $0x298] sm:$0xff] %v4601
          %5645 = vst [vmem:[%s264 + $0x2a0] sm:$0xff] %v4755
          %5646 = vst [vmem:[%s264 + $0x2a8] sm:$0xff] %v4909
          %5647 = vst [vmem:[%s264 + $0x2b0] sm:$0xff] %v5063
          %5648 = vst [vmem:[%s264 + $0x2b8] sm:$0xff] %v5217
          %5649 = vst [vmem:[%s264 + $0x2c0] sm:$0xff] %v5371
          %5650 = vst [vmem:[%s264 + $0x2c8] sm:$0xff] %v5525
          %5651 = vst [vmem:[%s264 + $0x2d0] sm:$0xff] %v4296
          %5652 = vst [vmem:[%s264 + $0x2d8] sm:$0xff] %v4450
          %5653 = vst [vmem:[%s264 + $0x2e0] sm:$0xff] %v4604
          %5654 = vst [vmem:[%s264 + $0x2e8] sm:$0xff] %v4758
          %5655 = vst [vmem:[%s264 + $0x2f0] sm:$0xff] %v4912
          %5656 = vst [vmem:[%s264 + $0x2f8] sm:$0xff] %v5066
          %5657 = vst [vmem:[%s264 + $0x300] sm:$0xff] %v5220
          %5658 = vst [vmem:[%s264 + $0x308] sm:$0xff] %v5374
          %5659 = vst [vmem:[%s264 + $0x310] sm:$0xff] %v5528
          %5660 = vst [vmem:[%s264 + $0x318] sm:$0xff] %v4299
          %5661 = vst [vmem:[%s264 + $0x320] sm:$0xff] %v4453
          %5662 = vst [vmem:[%s264 + $0x328] sm:$0xff] %v4607
          %5663 = vst [vmem:[%s264 + $0x330] sm:$0xff] %v4761
          %5664 = vst [vmem:[%s264 + $0x338] sm:$0xff] %v4915
          %5665 = vst [vmem:[%s264 + $0x340] sm:$0xff] %v5069
          %5666 = vst [vmem:[%s264 + $0x348] sm:$0xff] %v5223
          %5667 = vst [vmem:[%s264 + $0x350] sm:$0xff] %v5377
          %5668 = vst [vmem:[%s264 + $0x358] sm:$0xff] %v5531
          %5669 = vst [vmem:[%s264 + $0x360] sm:$0xff] %v4302
          %5670 = vst [vmem:[%s264 + $0x368] sm:$0xff] %v4456
          %5671 = vst [vmem:[%s264 + $0x370] sm:$0xff] %v4610
          %5672 = vst [vmem:[%s264 + $0x378] sm:$0xff] %v4764
          %5673 = vst [vmem:[%s264 + $0x380] sm:$0xff] %v4918
          %5674 = vst [vmem:[%s264 + $0x388] sm:$0xff] %v5072
          %5675 = vst [vmem:[%s264 + $0x390] sm:$0xff] %v5226
          %5676 = vst [vmem:[%s264 + $0x398] sm:$0xff] %v5380
          %5677 = vst [vmem:[%s264 + $0x3a0] sm:$0xff] %v5534
          %5678 = vst [vmem:[%s264 + $0x3a8] sm:$0xff] %v4305
          %5679 = vst [vmem:[%s264 + $0x3b0] sm:$0xff] %v4459
          %5680 = vst [vmem:[%s264 + $0x3b8] sm:$0xff] %v4613
          %5681 = vst [vmem:[%s264 + $0x3c0] sm:$0xff] %v4767
          %5682 = vst [vmem:[%s264 + $0x3c8] sm:$0xff] %v4921
          %5683 = vst [vmem:[%s264 + $0x3d0] sm:$0xff] %v5075
          %5684 = vst [vmem:[%s264 + $0x3d8] sm:$0xff] %v5229
          %5685 = vst [vmem:[%s264 + $0x3e0] sm:$0xff] %v5383
          %5686 = vst [vmem:[%s264 + $0x3e8] sm:$0xff] %v5537
          %5687 = vst [vmem:[%s264 + $0x3f0] sm:$0xff] %v4308
          %5688 = vst [vmem:[%s264 + $0x3f8] sm:$0xff] %v4462
          %5689 = vst [vmem:[%s264 + $0x400] sm:$0xff] %v4616
          %5690 = vst [vmem:[%s264 + $0x408] sm:$0xff] %v4770
          %5691 = vst [vmem:[%s264 + $0x410] sm:$0xff] %v4924
          %5692 = vst [vmem:[%s264 + $0x418] sm:$0xff] %v5078
          %5693 = vst [vmem:[%s264 + $0x420] sm:$0xff] %v5232
          %5694 = vst [vmem:[%s264 + $0x428] sm:$0xff] %v5386
          %5695 = vst [vmem:[%s264 + $0x430] sm:$0xff] %v5540
          %5696 = vst [vmem:[%s264 + $0x438] sm:$0xff] %v4311
          %5697 = vst [vmem:[%s264 + $0x440] sm:$0xff] %v4465
          %5698 = vst [vmem:[%s264 + $0x448] sm:$0xff] %v4619
          %5699 = vst [vmem:[%s264 + $0x450] sm:$0xff] %v4773
          %5700 = vst [vmem:[%s264 + $0x458] sm:$0xff] %v4927
          %5701 = vst [vmem:[%s264 + $0x460] sm:$0xff] %v5081
          %5702 = vst [vmem:[%s264 + $0x468] sm:$0xff] %v5235
          %5703 = vst [vmem:[%s264 + $0x470] sm:$0xff] %v5389
          %5704 = vst [vmem:[%s264 + $0x478] sm:$0xff] %v5543
          %5705 = vst [vmem:[%s264 + $0x480] sm:$0xff] %v4314
          %5706 = vst [vmem:[%s264 + $0x488] sm:$0xff] %v4468
          %5707 = vst [vmem:[%s264 + $0x490] sm:$0xff] %v4622
          %5708 = vst [vmem:[%s264 + $0x498] sm:$0xff] %v4776
          %5709 = vst [vmem:[%s264 + $0x4a0] sm:$0xff] %v4930
          %5710 = vst [vmem:[%s264 + $0x4a8] sm:$0xff] %v5084
          %5711 = vst [vmem:[%s264 + $0x4b0] sm:$0xff] %v5238
          %5712 = vst [vmem:[%s264 + $0x4b8] sm:$0xff] %v5392
          %5713 = vst [vmem:[%s264 + $0x4c0] sm:$0xff] %v5546
          %5714 = vst [vmem:[%s264 + $0x4c8] sm:$0xff] %v4317
          %5715 = vst [vmem:[%s264 + $0x4d0] sm:$0xff] %v4471
          %5716 = vst [vmem:[%s264 + $0x4d8] sm:$0xff] %v4625
          %5717 = vst [vmem:[%s264 + $0x4e0] sm:$0xff] %v4779
          %5718 = vst [vmem:[%s264 + $0x4e8] sm:$0xff] %v4933
          %5719 = vst [vmem:[%s264 + $0x4f0] sm:$0xff] %v5087
          %5720 = vst [vmem:[%s264 + $0x4f8] sm:$0xff] %v5241
          %5721 = vst [vmem:[%s264 + $0x500] sm:$0xff] %v5395
          %5722 = vst [vmem:[%s264 + $0x508] sm:$0xff] %v5549
          %5723 = vst [vmem:[%s264 + $0x510] sm:$0xff] %v4320
          %5724 = vst [vmem:[%s264 + $0x518] sm:$0xff] %v4474
          %5725 = vst [vmem:[%s264 + $0x520] sm:$0xff] %v4628
          %5726 = vst [vmem:[%s264 + $0x528] sm:$0xff] %v4782
          %5727 = vst [vmem:[%s264 + $0x530] sm:$0xff] %v4936
          %5728 = vst [vmem:[%s264 + $0x538] sm:$0xff] %v5090
          %5729 = vst [vmem:[%s264 + $0x540] sm:$0xff] %v5244
          %5730 = vst [vmem:[%s264 + $0x548] sm:$0xff] %v5398
          %5731 = vst [vmem:[%s264 + $0x550] sm:$0xff] %v5552
          %5732 = vst [vmem:[%s264 + $0x558] sm:$0xff] %v4323
          %5733 = vst [vmem:[%s264 + $0x560] sm:$0xff] %v4477
          %5734 = vst [vmem:[%s264 + $0x568] sm:$0xff] %v4631
          %5735 = vst [vmem:[%s264 + $0x570] sm:$0xff] %v4785
          %5736 = vst [vmem:[%s264 + $0x578] sm:$0xff] %v4939
          %5737 = vst [vmem:[%s264 + $0x580] sm:$0xff] %v5093
          %5738 = vst [vmem:[%s264 + $0x588] sm:$0xff] %v5247
          %5739 = vst [vmem:[%s264 + $0x590] sm:$0xff] %v5401
          %5740 = vst [vmem:[%s264 + $0x598] sm:$0xff] %v5555
        $region40: #{tpu_custom_call.1} parent=31 // pred_fallthru
          _
        %p5741 = scmp.gt.s32.totalorder %s27, 0
        // Predicated region
        $region41: #{tpu_custom_call.1} parent=31 // pred_check
          %p5742 = pneg %p5741
        $region42: #{tpu_custom_call.1} parent=31 // pred_check_branch
          %5744 = sbr.rel (%p5742) target = $region44
        $region43: #{tpu_custom_call.1} parent=31 // pred_region
          %v5745 = vld [vmem:[%s264] sm:$0xff]
          %v5746 = vld [vmem:[%s264 + $0x8] sm:$0xff]
          %v5747 = vld [vmem:[%s264 + $0x10] sm:$0xff]
          %v5748 = vld [vmem:[%s264 + $0x18] sm:$0xff]
          %v5749 = vld [vmem:[%s264 + $0x20] sm:$0xff]
          %v5750 = vld [vmem:[%s264 + $0x28] sm:$0xff]
          %v5751 = vld [vmem:[%s264 + $0x30] sm:$0xff]
          %v5752 = vld [vmem:[%s264 + $0x38] sm:$0xff]
          %v5753 = vld [vmem:[%s264 + $0x40] sm:$0xff]
          %v5754 = vld [vmem:[%s264 + $0x48] sm:$0xff]
          %v5755 = vld [vmem:[%s264 + $0x50] sm:$0xff]
          %v5756 = vld [vmem:[%s264 + $0x58] sm:$0xff]
          %v5757 = vld [vmem:[%s264 + $0x60] sm:$0xff]
          %v5758 = vld [vmem:[%s264 + $0x68] sm:$0xff]
          %v5759 = vld [vmem:[%s264 + $0x70] sm:$0xff]
          %v5760 = vld [vmem:[%s264 + $0x78] sm:$0xff]
          %v5761 = vld [vmem:[%s264 + $0x80] sm:$0xff]
          %v5762 = vld [vmem:[%s264 + $0x88] sm:$0xff]
          %v5763 = vld [vmem:[%s264 + $0x90] sm:$0xff]
          %v5764 = vld [vmem:[%s264 + $0x98] sm:$0xff]
          %v5765 = vld [vmem:[%s264 + $0xa0] sm:$0xff]
          %v5766 = vld [vmem:[%s264 + $0xa8] sm:$0xff]
          %v5767 = vld [vmem:[%s264 + $0xb0] sm:$0xff]
          %v5768 = vld [vmem:[%s264 + $0xb8] sm:$0xff]
          %v5769 = vld [vmem:[%s264 + $0xc0] sm:$0xff]
          %v5770 = vld [vmem:[%s264 + $0xc8] sm:$0xff]
          %v5771 = vld [vmem:[%s264 + $0xd0] sm:$0xff]
          %v5772 = vld [vmem:[%s264 + $0xd8] sm:$0xff]
          %v5773 = vld [vmem:[%s264 + $0xe0] sm:$0xff]
          %v5774 = vld [vmem:[%s264 + $0xe8] sm:$0xff]
          %v5775 = vld [vmem:[%s264 + $0xf0] sm:$0xff]
          %v5776 = vld [vmem:[%s264 + $0xf8] sm:$0xff]
          %v5777 = vld [vmem:[%s264 + $0x100] sm:$0xff]
          %v5778 = vld [vmem:[%s264 + $0x108] sm:$0xff]
          %v5779 = vld [vmem:[%s264 + $0x110] sm:$0xff]
          %v5780 = vld [vmem:[%s264 + $0x118] sm:$0xff]
          %v5781 = vld [vmem:[%s264 + $0x120] sm:$0xff]
          %v5782 = vld [vmem:[%s264 + $0x128] sm:$0xff]
          %v5783 = vld [vmem:[%s264 + $0x130] sm:$0xff]
          %v5784 = vld [vmem:[%s264 + $0x138] sm:$0xff]
          %v5785 = vld [vmem:[%s264 + $0x140] sm:$0xff]
          %v5786 = vld [vmem:[%s264 + $0x148] sm:$0xff]
          %v5787 = vld [vmem:[%s264 + $0x150] sm:$0xff]
          %v5788 = vld [vmem:[%s264 + $0x158] sm:$0xff]
          %v5789 = vld [vmem:[%s264 + $0x160] sm:$0xff]
          %v5790 = vld [vmem:[%s264 + $0x168] sm:$0xff]
          %v5791 = vld [vmem:[%s264 + $0x170] sm:$0xff]
          %v5792 = vld [vmem:[%s264 + $0x178] sm:$0xff]
          %v5793 = vld [vmem:[%s264 + $0x180] sm:$0xff]
          %v5794 = vld [vmem:[%s264 + $0x188] sm:$0xff]
          %v5795 = vld [vmem:[%s264 + $0x190] sm:$0xff]
          %v5796 = vld [vmem:[%s264 + $0x198] sm:$0xff]
          %v5797 = vld [vmem:[%s264 + $0x1a0] sm:$0xff]
          %v5798 = vld [vmem:[%s264 + $0x1a8] sm:$0xff]
          %v5799 = vld [vmem:[%s264 + $0x1b0] sm:$0xff]
          %v5800 = vld [vmem:[%s264 + $0x1b8] sm:$0xff]
          %v5801 = vld [vmem:[%s264 + $0x1c0] sm:$0xff]
          %v5802 = vld [vmem:[%s264 + $0x1c8] sm:$0xff]
          %v5803 = vld [vmem:[%s264 + $0x1d0] sm:$0xff]
          %v5804 = vld [vmem:[%s264 + $0x1d8] sm:$0xff]
          %v5805 = vld [vmem:[%s264 + $0x1e0] sm:$0xff]
          %v5806 = vld [vmem:[%s264 + $0x1e8] sm:$0xff]
          %v5807 = vld [vmem:[%s264 + $0x1f0] sm:$0xff]
          %v5808 = vld [vmem:[%s264 + $0x1f8] sm:$0xff]
          %v5809 = vld [vmem:[%s264 + $0x200] sm:$0xff]
          %v5810 = vld [vmem:[%s264 + $0x208] sm:$0xff]
          %v5811 = vld [vmem:[%s264 + $0x210] sm:$0xff]
          %v5812 = vld [vmem:[%s264 + $0x218] sm:$0xff]
          %v5813 = vld [vmem:[%s264 + $0x220] sm:$0xff]
          %v5814 = vld [vmem:[%s264 + $0x228] sm:$0xff]
          %v5815 = vld [vmem:[%s264 + $0x230] sm:$0xff]
          %v5816 = vld [vmem:[%s264 + $0x238] sm:$0xff]
          %v5817 = vld [vmem:[%s264 + $0x240] sm:$0xff]
          %v5818 = vld [vmem:[%s264 + $0x248] sm:$0xff]
          %v5819 = vld [vmem:[%s264 + $0x250] sm:$0xff]
          %v5820 = vld [vmem:[%s264 + $0x258] sm:$0xff]
          %v5821 = vld [vmem:[%s264 + $0x260] sm:$0xff]
          %v5822 = vld [vmem:[%s264 + $0x268] sm:$0xff]
          %v5823 = vld [vmem:[%s264 + $0x270] sm:$0xff]
          %v5824 = vld [vmem:[%s264 + $0x278] sm:$0xff]
          %v5825 = vld [vmem:[%s264 + $0x280] sm:$0xff]
          %v5826 = vld [vmem:[%s264 + $0x288] sm:$0xff]
          %v5827 = vld [vmem:[%s264 + $0x290] sm:$0xff]
          %v5828 = vld [vmem:[%s264 + $0x298] sm:$0xff]
          %v5829 = vld [vmem:[%s264 + $0x2a0] sm:$0xff]
          %v5830 = vld [vmem:[%s264 + $0x2a8] sm:$0xff]
          %v5831 = vld [vmem:[%s264 + $0x2b0] sm:$0xff]
          %v5832 = vld [vmem:[%s264 + $0x2b8] sm:$0xff]
          %v5833 = vld [vmem:[%s264 + $0x2c0] sm:$0xff]
          %v5834 = vld [vmem:[%s264 + $0x2c8] sm:$0xff]
          %v5835 = vld [vmem:[%s264 + $0x2d0] sm:$0xff]
          %v5836 = vld [vmem:[%s264 + $0x2d8] sm:$0xff]
          %v5837 = vld [vmem:[%s264 + $0x2e0] sm:$0xff]
          %v5838 = vld [vmem:[%s264 + $0x2e8] sm:$0xff]
          %v5839 = vld [vmem:[%s264 + $0x2f0] sm:$0xff]
          %v5840 = vld [vmem:[%s264 + $0x2f8] sm:$0xff]
          %v5841 = vld [vmem:[%s264 + $0x300] sm:$0xff]
          %v5842 = vld [vmem:[%s264 + $0x308] sm:$0xff]
          %v5843 = vld [vmem:[%s264 + $0x310] sm:$0xff]
          %v5844 = vld [vmem:[%s264 + $0x318] sm:$0xff]
          %v5845 = vld [vmem:[%s264 + $0x320] sm:$0xff]
          %v5846 = vld [vmem:[%s264 + $0x328] sm:$0xff]
          %v5847 = vld [vmem:[%s264 + $0x330] sm:$0xff]
          %v5848 = vld [vmem:[%s264 + $0x338] sm:$0xff]
          %v5849 = vld [vmem:[%s264 + $0x340] sm:$0xff]
          %v5850 = vld [vmem:[%s264 + $0x348] sm:$0xff]
          %v5851 = vld [vmem:[%s264 + $0x350] sm:$0xff]
          %v5852 = vld [vmem:[%s264 + $0x358] sm:$0xff]
          %v5853 = vld [vmem:[%s264 + $0x360] sm:$0xff]
          %v5854 = vld [vmem:[%s264 + $0x368] sm:$0xff]
          %v5855 = vld [vmem:[%s264 + $0x370] sm:$0xff]
          %v5856 = vld [vmem:[%s264 + $0x378] sm:$0xff]
          %v5857 = vld [vmem:[%s264 + $0x380] sm:$0xff]
          %v5858 = vld [vmem:[%s264 + $0x388] sm:$0xff]
          %v5859 = vld [vmem:[%s264 + $0x390] sm:$0xff]
          %v5860 = vld [vmem:[%s264 + $0x398] sm:$0xff]
          %v5861 = vld [vmem:[%s264 + $0x3a0] sm:$0xff]
          %v5862 = vld [vmem:[%s264 + $0x3a8] sm:$0xff]
          %v5863 = vld [vmem:[%s264 + $0x3b0] sm:$0xff]
          %v5864 = vld [vmem:[%s264 + $0x3b8] sm:$0xff]
          %v5865 = vld [vmem:[%s264 + $0x3c0] sm:$0xff]
          %v5866 = vld [vmem:[%s264 + $0x3c8] sm:$0xff]
          %v5867 = vld [vmem:[%s264 + $0x3d0] sm:$0xff]
          %v5868 = vld [vmem:[%s264 + $0x3d8] sm:$0xff]
          %v5869 = vld [vmem:[%s264 + $0x3e0] sm:$0xff]
          %v5870 = vld [vmem:[%s264 + $0x3e8] sm:$0xff]
          %v5871 = vld [vmem:[%s264 + $0x3f0] sm:$0xff]
          %v5872 = vld [vmem:[%s264 + $0x3f8] sm:$0xff]
          %v5873 = vld [vmem:[%s264 + $0x400] sm:$0xff]
          %v5874 = vld [vmem:[%s264 + $0x408] sm:$0xff]
          %v5875 = vld [vmem:[%s264 + $0x410] sm:$0xff]
          %v5876 = vld [vmem:[%s264 + $0x418] sm:$0xff]
          %v5877 = vld [vmem:[%s264 + $0x420] sm:$0xff]
          %v5878 = vld [vmem:[%s264 + $0x428] sm:$0xff]
          %v5879 = vld [vmem:[%s264 + $0x430] sm:$0xff]
          %v5880 = vld [vmem:[%s264 + $0x438] sm:$0xff]
          %v5881 = vld [vmem:[%s264 + $0x440] sm:$0xff]
          %v5882 = vld [vmem:[%s264 + $0x448] sm:$0xff]
          %v5883 = vld [vmem:[%s264 + $0x450] sm:$0xff]
          %v5884 = vld [vmem:[%s264 + $0x458] sm:$0xff]
          %v5885 = vld [vmem:[%s264 + $0x460] sm:$0xff]
          %v5886 = vld [vmem:[%s264 + $0x468] sm:$0xff]
          %v5887 = vld [vmem:[%s264 + $0x470] sm:$0xff]
          %v5888 = vld [vmem:[%s264 + $0x478] sm:$0xff]
          %v5889 = vld [vmem:[%s264 + $0x480] sm:$0xff]
          %v5890 = vld [vmem:[%s264 + $0x488] sm:$0xff]
          %v5891 = vld [vmem:[%s264 + $0x490] sm:$0xff]
          %v5892 = vld [vmem:[%s264 + $0x498] sm:$0xff]
          %v5893 = vld [vmem:[%s264 + $0x4a0] sm:$0xff]
          %v5894 = vld [vmem:[%s264 + $0x4a8] sm:$0xff]
          %v5895 = vld [vmem:[%s264 + $0x4b0] sm:$0xff]
          %v5896 = vld [vmem:[%s264 + $0x4b8] sm:$0xff]
          %v5897 = vld [vmem:[%s264 + $0x4c0] sm:$0xff]
          %v5898 = vld [vmem:[%s264 + $0x4c8] sm:$0xff]
          %v5899 = vld [vmem:[%s264 + $0x4d0] sm:$0xff]
          %v5900 = vld [vmem:[%s264 + $0x4d8] sm:$0xff]
          %v5901 = vld [vmem:[%s264 + $0x4e0] sm:$0xff]
          %v5902 = vld [vmem:[%s264 + $0x4e8] sm:$0xff]
          %v5903 = vld [vmem:[%s264 + $0x4f0] sm:$0xff]
          %v5904 = vld [vmem:[%s264 + $0x4f8] sm:$0xff]
          %v5905 = vld [vmem:[%s264 + $0x500] sm:$0xff]
          %v5906 = vld [vmem:[%s264 + $0x508] sm:$0xff]
          %v5907 = vld [vmem:[%s264 + $0x510] sm:$0xff]
          %v5908 = vld [vmem:[%s264 + $0x518] sm:$0xff]
          %v5909 = vld [vmem:[%s264 + $0x520] sm:$0xff]
          %v5910 = vld [vmem:[%s264 + $0x528] sm:$0xff]
          %v5911 = vld [vmem:[%s264 + $0x530] sm:$0xff]
          %v5912 = vld [vmem:[%s264 + $0x538] sm:$0xff]
          %v5913 = vld [vmem:[%s264 + $0x540] sm:$0xff]
          %v5914 = vld [vmem:[%s264 + $0x548] sm:$0xff]
          %v5915 = vld [vmem:[%s264 + $0x550] sm:$0xff]
          %v5916 = vld [vmem:[%s264 + $0x558] sm:$0xff]
          %v5917 = vld [vmem:[%s264 + $0x560] sm:$0xff]
          %v5918 = vld [vmem:[%s264 + $0x568] sm:$0xff]
          %v5919 = vld [vmem:[%s264 + $0x570] sm:$0xff]
          %v5920 = vld [vmem:[%s264 + $0x578] sm:$0xff]
          %v5921 = vld [vmem:[%s264 + $0x580] sm:$0xff]
          %v5922 = vld [vmem:[%s264 + $0x588] sm:$0xff]
          %v5923 = vld [vmem:[%s264 + $0x590] sm:$0xff]
          %v5924 = vld [vmem:[%s264 + $0x598] sm:$0xff]
          %v5925 = vadd.f32 %v5745, %v4266
          %v5926 = vadd.f32 %v5746, %v4420
          %v5927 = vadd.f32 %v5747, %v4574
          %v5928 = vadd.f32 %v5748, %v4728
          %v5929 = vadd.f32 %v5749, %v4882
          %v5930 = vadd.f32 %v5750, %v5036
          %v5931 = vadd.f32 %v5751, %v5190
          %v5932 = vadd.f32 %v5752, %v5344
          %v5933 = vadd.f32 %v5753, %v5498
          %v5934 = vadd.f32 %v5754, %v4269
          %v5935 = vadd.f32 %v5755, %v4423
          %v5936 = vadd.f32 %v5756, %v4577
          %v5937 = vadd.f32 %v5757, %v4731
          %v5938 = vadd.f32 %v5758, %v4885
          %v5939 = vadd.f32 %v5759, %v5039
          %v5940 = vadd.f32 %v5760, %v5193
          %v5941 = vadd.f32 %v5761, %v5347
          %v5942 = vadd.f32 %v5762, %v5501
          %v5943 = vadd.f32 %v5763, %v4272
          %v5944 = vadd.f32 %v5764, %v4426
          %v5945 = vadd.f32 %v5765, %v4580
          %v5946 = vadd.f32 %v5766, %v4734
          %v5947 = vadd.f32 %v5767, %v4888
          %v5948 = vadd.f32 %v5768, %v5042
          %v5949 = vadd.f32 %v5769, %v5196
          %v5950 = vadd.f32 %v5770, %v5350
          %v5951 = vadd.f32 %v5771, %v5504
          %v5952 = vadd.f32 %v5772, %v4275
          %v5953 = vadd.f32 %v5773, %v4429
          %v5954 = vadd.f32 %v5774, %v4583
          %v5955 = vadd.f32 %v5775, %v4737
          %v5956 = vadd.f32 %v5776, %v4891
          %v5957 = vadd.f32 %v5777, %v5045
          %v5958 = vadd.f32 %v5778, %v5199
          %v5959 = vadd.f32 %v5779, %v5353
          %v5960 = vadd.f32 %v5780, %v5507
          %v5961 = vadd.f32 %v5781, %v4278
          %v5962 = vadd.f32 %v5782, %v4432
          %v5963 = vadd.f32 %v5783, %v4586
          %v5964 = vadd.f32 %v5784, %v4740
          %v5965 = vadd.f32 %v5785, %v4894
          %v5966 = vadd.f32 %v5786, %v5048
          %v5967 = vadd.f32 %v5787, %v5202
          %v5968 = vadd.f32 %v5788, %v5356
          %v5969 = vadd.f32 %v5789, %v5510
          %v5970 = vadd.f32 %v5790, %v4281
          %v5971 = vadd.f32 %v5791, %v4435
          %v5972 = vadd.f32 %v5792, %v4589
          %v5973 = vadd.f32 %v5793, %v4743
          %v5974 = vadd.f32 %v5794, %v4897
          %v5975 = vadd.f32 %v5795, %v5051
          %v5976 = vadd.f32 %v5796, %v5205
          %v5977 = vadd.f32 %v5797, %v5359
          %v5978 = vadd.f32 %v5798, %v5513
          %v5979 = vadd.f32 %v5799, %v4284
          %v5980 = vadd.f32 %v5800, %v4438
          %v5981 = vadd.f32 %v5801, %v4592
          %v5982 = vadd.f32 %v5802, %v4746
          %v5983 = vadd.f32 %v5803, %v4900
          %v5984 = vadd.f32 %v5804, %v5054
          %v5985 = vadd.f32 %v5805, %v5208
          %v5986 = vadd.f32 %v5806, %v5362
          %v5987 = vadd.f32 %v5807, %v5516
          %v5988 = vadd.f32 %v5808, %v4287
          %v5989 = vadd.f32 %v5809, %v4441
          %v5990 = vadd.f32 %v5810, %v4595
          %v5991 = vadd.f32 %v5811, %v4749
          %v5992 = vadd.f32 %v5812, %v4903
          %v5993 = vadd.f32 %v5813, %v5057
          %v5994 = vadd.f32 %v5814, %v5211
          %v5995 = vadd.f32 %v5815, %v5365
          %v5996 = vadd.f32 %v5816, %v5519
          %v5997 = vadd.f32 %v5817, %v4290
          %v5998 = vadd.f32 %v5818, %v4444
          %v5999 = vadd.f32 %v5819, %v4598
          %v6000 = vadd.f32 %v5820, %v4752
          %v6001 = vadd.f32 %v5821, %v4906
          %v6002 = vadd.f32 %v5822, %v5060
          %v6003 = vadd.f32 %v5823, %v5214
          %v6004 = vadd.f32 %v5824, %v5368
          %v6005 = vadd.f32 %v5825, %v5522
          %v6006 = vadd.f32 %v5826, %v4293
          %v6007 = vadd.f32 %v5827, %v4447
          %v6008 = vadd.f32 %v5828, %v4601
          %v6009 = vadd.f32 %v5829, %v4755
          %v6010 = vadd.f32 %v5830, %v4909
          %v6011 = vadd.f32 %v5831, %v5063
          %v6012 = vadd.f32 %v5832, %v5217
          %v6013 = vadd.f32 %v5833, %v5371
          %v6014 = vadd.f32 %v5834, %v5525
          %v6015 = vadd.f32 %v5835, %v4296
          %v6016 = vadd.f32 %v5836, %v4450
          %v6017 = vadd.f32 %v5837, %v4604
          %v6018 = vadd.f32 %v5838, %v4758
          %v6019 = vadd.f32 %v5839, %v4912
          %v6020 = vadd.f32 %v5840, %v5066
          %v6021 = vadd.f32 %v5841, %v5220
          %v6022 = vadd.f32 %v5842, %v5374
          %v6023 = vadd.f32 %v5843, %v5528
          %v6024 = vadd.f32 %v5844, %v4299
          %v6025 = vadd.f32 %v5845, %v4453
          %v6026 = vadd.f32 %v5846, %v4607
          %v6027 = vadd.f32 %v5847, %v4761
          %v6028 = vadd.f32 %v5848, %v4915
          %v6029 = vadd.f32 %v5849, %v5069
          %v6030 = vadd.f32 %v5850, %v5223
          %v6031 = vadd.f32 %v5851, %v5377
          %v6032 = vadd.f32 %v5852, %v5531
          %v6033 = vadd.f32 %v5853, %v4302
          %v6034 = vadd.f32 %v5854, %v4456
          %v6035 = vadd.f32 %v5855, %v4610
          %v6036 = vadd.f32 %v5856, %v4764
          %v6037 = vadd.f32 %v5857, %v4918
          %v6038 = vadd.f32 %v5858, %v5072
          %v6039 = vadd.f32 %v5859, %v5226
          %v6040 = vadd.f32 %v5860, %v5380
          %v6041 = vadd.f32 %v5861, %v5534
          %v6042 = vadd.f32 %v5862, %v4305
          %v6043 = vadd.f32 %v5863, %v4459
          %v6044 = vadd.f32 %v5864, %v4613
          %v6045 = vadd.f32 %v5865, %v4767
          %v6046 = vadd.f32 %v5866, %v4921
          %v6047 = vadd.f32 %v5867, %v5075
          %v6048 = vadd.f32 %v5868, %v5229
          %v6049 = vadd.f32 %v5869, %v5383
          %v6050 = vadd.f32 %v5870, %v5537
          %v6051 = vadd.f32 %v5871, %v4308
          %v6052 = vadd.f32 %v5872, %v4462
          %v6053 = vadd.f32 %v5873, %v4616
          %v6054 = vadd.f32 %v5874, %v4770
          %v6055 = vadd.f32 %v5875, %v4924
          %v6056 = vadd.f32 %v5876, %v5078
          %v6057 = vadd.f32 %v5877, %v5232
          %v6058 = vadd.f32 %v5878, %v5386
          %v6059 = vadd.f32 %v5879, %v5540
          %v6060 = vadd.f32 %v5880, %v4311
          %v6061 = vadd.f32 %v5881, %v4465
          %v6062 = vadd.f32 %v5882, %v4619
          %v6063 = vadd.f32 %v5883, %v4773
          %v6064 = vadd.f32 %v5884, %v4927
          %v6065 = vadd.f32 %v5885, %v5081
          %v6066 = vadd.f32 %v5886, %v5235
          %v6067 = vadd.f32 %v5887, %v5389
          %v6068 = vadd.f32 %v5888, %v5543
          %v6069 = vadd.f32 %v5889, %v4314
          %v6070 = vadd.f32 %v5890, %v4468
          %v6071 = vadd.f32 %v5891, %v4622
          %v6072 = vadd.f32 %v5892, %v4776
          %v6073 = vadd.f32 %v5893, %v4930
          %v6074 = vadd.f32 %v5894, %v5084
          %v6075 = vadd.f32 %v5895, %v5238
          %v6076 = vadd.f32 %v5896, %v5392
          %v6077 = vadd.f32 %v5897, %v5546
          %v6078 = vadd.f32 %v5898, %v4317
          %v6079 = vadd.f32 %v5899, %v4471
          %v6080 = vadd.f32 %v5900, %v4625
          %v6081 = vadd.f32 %v5901, %v4779
          %v6082 = vadd.f32 %v5902, %v4933
          %v6083 = vadd.f32 %v5903, %v5087
          %v6084 = vadd.f32 %v5904, %v5241
          %v6085 = vadd.f32 %v5905, %v5395
          %v6086 = vadd.f32 %v5906, %v5549
          %v6087 = vadd.f32 %v5907, %v4320
          %v6088 = vadd.f32 %v5908, %v4474
          %v6089 = vadd.f32 %v5909, %v4628
          %v6090 = vadd.f32 %v5910, %v4782
          %v6091 = vadd.f32 %v5911, %v4936
          %v6092 = vadd.f32 %v5912, %v5090
          %v6093 = vadd.f32 %v5913, %v5244
          %v6094 = vadd.f32 %v5914, %v5398
          %v6095 = vadd.f32 %v5915, %v5552
          %v6096 = vadd.f32 %v5916, %v4323
          %v6097 = vadd.f32 %v5917, %v4477
          %v6098 = vadd.f32 %v5918, %v4631
          %v6099 = vadd.f32 %v5919, %v4785
          %v6100 = vadd.f32 %v5920, %v4939
          %v6101 = vadd.f32 %v5921, %v5093
          %v6102 = vadd.f32 %v5922, %v5247
          %v6103 = vadd.f32 %v5923, %v5401
          %v6104 = vadd.f32 %v5924, %v5555
          %6105 = vst [vmem:[%s264] sm:$0xff] %v5925
          %6106 = vst [vmem:[%s264 + $0x8] sm:$0xff] %v5926
          %6107 = vst [vmem:[%s264 + $0x10] sm:$0xff] %v5927
          %6108 = vst [vmem:[%s264 + $0x18] sm:$0xff] %v5928
          %6109 = vst [vmem:[%s264 + $0x20] sm:$0xff] %v5929
          %6110 = vst [vmem:[%s264 + $0x28] sm:$0xff] %v5930
          %6111 = vst [vmem:[%s264 + $0x30] sm:$0xff] %v5931
          %6112 = vst [vmem:[%s264 + $0x38] sm:$0xff] %v5932
          %6113 = vst [vmem:[%s264 + $0x40] sm:$0xff] %v5933
          %6114 = vst [vmem:[%s264 + $0x48] sm:$0xff] %v5934
          %6115 = vst [vmem:[%s264 + $0x50] sm:$0xff] %v5935
          %6116 = vst [vmem:[%s264 + $0x58] sm:$0xff] %v5936
          %6117 = vst [vmem:[%s264 + $0x60] sm:$0xff] %v5937
          %6118 = vst [vmem:[%s264 + $0x68] sm:$0xff] %v5938
          %6119 = vst [vmem:[%s264 + $0x70] sm:$0xff] %v5939
          %6120 = vst [vmem:[%s264 + $0x78] sm:$0xff] %v5940
          %6121 = vst [vmem:[%s264 + $0x80] sm:$0xff] %v5941
          %6122 = vst [vmem:[%s264 + $0x88] sm:$0xff] %v5942
          %6123 = vst [vmem:[%s264 + $0x90] sm:$0xff] %v5943
          %6124 = vst [vmem:[%s264 + $0x98] sm:$0xff] %v5944
          %6125 = vst [vmem:[%s264 + $0xa0] sm:$0xff] %v5945
          %6126 = vst [vmem:[%s264 + $0xa8] sm:$0xff] %v5946
          %6127 = vst [vmem:[%s264 + $0xb0] sm:$0xff] %v5947
          %6128 = vst [vmem:[%s264 + $0xb8] sm:$0xff] %v5948
          %6129 = vst [vmem:[%s264 + $0xc0] sm:$0xff] %v5949
          %6130 = vst [vmem:[%s264 + $0xc8] sm:$0xff] %v5950
          %6131 = vst [vmem:[%s264 + $0xd0] sm:$0xff] %v5951
          %6132 = vst [vmem:[%s264 + $0xd8] sm:$0xff] %v5952
          %6133 = vst [vmem:[%s264 + $0xe0] sm:$0xff] %v5953
          %6134 = vst [vmem:[%s264 + $0xe8] sm:$0xff] %v5954
          %6135 = vst [vmem:[%s264 + $0xf0] sm:$0xff] %v5955
          %6136 = vst [vmem:[%s264 + $0xf8] sm:$0xff] %v5956
          %6137 = vst [vmem:[%s264 + $0x100] sm:$0xff] %v5957
          %6138 = vst [vmem:[%s264 + $0x108] sm:$0xff] %v5958
          %6139 = vst [vmem:[%s264 + $0x110] sm:$0xff] %v5959
          %6140 = vst [vmem:[%s264 + $0x118] sm:$0xff] %v5960
          %6141 = vst [vmem:[%s264 + $0x120] sm:$0xff] %v5961
          %6142 = vst [vmem:[%s264 + $0x128] sm:$0xff] %v5962
          %6143 = vst [vmem:[%s264 + $0x130] sm:$0xff] %v5963
          %6144 = vst [vmem:[%s264 + $0x138] sm:$0xff] %v5964
          %6145 = vst [vmem:[%s264 + $0x140] sm:$0xff] %v5965
          %6146 = vst [vmem:[%s264 + $0x148] sm:$0xff] %v5966
          %6147 = vst [vmem:[%s264 + $0x150] sm:$0xff] %v5967
          %6148 = vst [vmem:[%s264 + $0x158] sm:$0xff] %v5968
          %6149 = vst [vmem:[%s264 + $0x160] sm:$0xff] %v5969
          %6150 = vst [vmem:[%s264 + $0x168] sm:$0xff] %v5970
          %6151 = vst [vmem:[%s264 + $0x170] sm:$0xff] %v5971
          %6152 = vst [vmem:[%s264 + $0x178] sm:$0xff] %v5972
          %6153 = vst [vmem:[%s264 + $0x180] sm:$0xff] %v5973
          %6154 = vst [vmem:[%s264 + $0x188] sm:$0xff] %v5974
          %6155 = vst [vmem:[%s264 + $0x190] sm:$0xff] %v5975
          %6156 = vst [vmem:[%s264 + $0x198] sm:$0xff] %v5976
          %6157 = vst [vmem:[%s264 + $0x1a0] sm:$0xff] %v5977
          %6158 = vst [vmem:[%s264 + $0x1a8] sm:$0xff] %v5978
          %6159 = vst [vmem:[%s264 + $0x1b0] sm:$0xff] %v5979
          %6160 = vst [vmem:[%s264 + $0x1b8] sm:$0xff] %v5980
          %6161 = vst [vmem:[%s264 + $0x1c0] sm:$0xff] %v5981
          %6162 = vst [vmem:[%s264 + $0x1c8] sm:$0xff] %v5982
          %6163 = vst [vmem:[%s264 + $0x1d0] sm:$0xff] %v5983
          %6164 = vst [vmem:[%s264 + $0x1d8] sm:$0xff] %v5984
          %6165 = vst [vmem:[%s264 + $0x1e0] sm:$0xff] %v5985
          %6166 = vst [vmem:[%s264 + $0x1e8] sm:$0xff] %v5986
          %6167 = vst [vmem:[%s264 + $0x1f0] sm:$0xff] %v5987
          %6168 = vst [vmem:[%s264 + $0x1f8] sm:$0xff] %v5988
          %6169 = vst [vmem:[%s264 + $0x200] sm:$0xff] %v5989
          %6170 = vst [vmem:[%s264 + $0x208] sm:$0xff] %v5990
          %6171 = vst [vmem:[%s264 + $0x210] sm:$0xff] %v5991
          %6172 = vst [vmem:[%s264 + $0x218] sm:$0xff] %v5992
          %6173 = vst [vmem:[%s264 + $0x220] sm:$0xff] %v5993
          %6174 = vst [vmem:[%s264 + $0x228] sm:$0xff] %v5994
          %6175 = vst [vmem:[%s264 + $0x230] sm:$0xff] %v5995
          %6176 = vst [vmem:[%s264 + $0x238] sm:$0xff] %v5996
          %6177 = vst [vmem:[%s264 + $0x240] sm:$0xff] %v5997
          %6178 = vst [vmem:[%s264 + $0x248] sm:$0xff] %v5998
          %6179 = vst [vmem:[%s264 + $0x250] sm:$0xff] %v5999
          %6180 = vst [vmem:[%s264 + $0x258] sm:$0xff] %v6000
          %6181 = vst [vmem:[%s264 + $0x260] sm:$0xff] %v6001
          %6182 = vst [vmem:[%s264 + $0x268] sm:$0xff] %v6002
          %6183 = vst [vmem:[%s264 + $0x270] sm:$0xff] %v6003
          %6184 = vst [vmem:[%s264 + $0x278] sm:$0xff] %v6004
          %6185 = vst [vmem:[%s264 + $0x280] sm:$0xff] %v6005
          %6186 = vst [vmem:[%s264 + $0x288] sm:$0xff] %v6006
          %6187 = vst [vmem:[%s264 + $0x290] sm:$0xff] %v6007
          %6188 = vst [vmem:[%s264 + $0x298] sm:$0xff] %v6008
          %6189 = vst [vmem:[%s264 + $0x2a0] sm:$0xff] %v6009
          %6190 = vst [vmem:[%s264 + $0x2a8] sm:$0xff] %v6010
          %6191 = vst [vmem:[%s264 + $0x2b0] sm:$0xff] %v6011
          %6192 = vst [vmem:[%s264 + $0x2b8] sm:$0xff] %v6012
          %6193 = vst [vmem:[%s264 + $0x2c0] sm:$0xff] %v6013
          %6194 = vst [vmem:[%s264 + $0x2c8] sm:$0xff] %v6014
          %6195 = vst [vmem:[%s264 + $0x2d0] sm:$0xff] %v6015
          %6196 = vst [vmem:[%s264 + $0x2d8] sm:$0xff] %v6016
          %6197 = vst [vmem:[%s264 + $0x2e0] sm:$0xff] %v6017
          %6198 = vst [vmem:[%s264 + $0x2e8] sm:$0xff] %v6018
          %6199 = vst [vmem:[%s264 + $0x2f0] sm:$0xff] %v6019
          %6200 = vst [vmem:[%s264 + $0x2f8] sm:$0xff] %v6020
          %6201 = vst [vmem:[%s264 + $0x300] sm:$0xff] %v6021
          %6202 = vst [vmem:[%s264 + $0x308] sm:$0xff] %v6022
          %6203 = vst [vmem:[%s264 + $0x310] sm:$0xff] %v6023
          %6204 = vst [vmem:[%s264 + $0x318] sm:$0xff] %v6024
          %6205 = vst [vmem:[%s264 + $0x320] sm:$0xff] %v6025
          %6206 = vst [vmem:[%s264 + $0x328] sm:$0xff] %v6026
          %6207 = vst [vmem:[%s264 + $0x330] sm:$0xff] %v6027
          %6208 = vst [vmem:[%s264 + $0x338] sm:$0xff] %v6028
          %6209 = vst [vmem:[%s264 + $0x340] sm:$0xff] %v6029
          %6210 = vst [vmem:[%s264 + $0x348] sm:$0xff] %v6030
          %6211 = vst [vmem:[%s264 + $0x350] sm:$0xff] %v6031
          %6212 = vst [vmem:[%s264 + $0x358] sm:$0xff] %v6032
          %6213 = vst [vmem:[%s264 + $0x360] sm:$0xff] %v6033
          %6214 = vst [vmem:[%s264 + $0x368] sm:$0xff] %v6034
          %6215 = vst [vmem:[%s264 + $0x370] sm:$0xff] %v6035
          %6216 = vst [vmem:[%s264 + $0x378] sm:$0xff] %v6036
          %6217 = vst [vmem:[%s264 + $0x380] sm:$0xff] %v6037
          %6218 = vst [vmem:[%s264 + $0x388] sm:$0xff] %v6038
          %6219 = vst [vmem:[%s264 + $0x390] sm:$0xff] %v6039
          %6220 = vst [vmem:[%s264 + $0x398] sm:$0xff] %v6040
          %6221 = vst [vmem:[%s264 + $0x3a0] sm:$0xff] %v6041
          %6222 = vst [vmem:[%s264 + $0x3a8] sm:$0xff] %v6042
          %6223 = vst [vmem:[%s264 + $0x3b0] sm:$0xff] %v6043
          %6224 = vst [vmem:[%s264 + $0x3b8] sm:$0xff] %v6044
          %6225 = vst [vmem:[%s264 + $0x3c0] sm:$0xff] %v6045
          %6226 = vst [vmem:[%s264 + $0x3c8] sm:$0xff] %v6046
          %6227 = vst [vmem:[%s264 + $0x3d0] sm:$0xff] %v6047
          %6228 = vst [vmem:[%s264 + $0x3d8] sm:$0xff] %v6048
          %6229 = vst [vmem:[%s264 + $0x3e0] sm:$0xff] %v6049
          %6230 = vst [vmem:[%s264 + $0x3e8] sm:$0xff] %v6050
          %6231 = vst [vmem:[%s264 + $0x3f0] sm:$0xff] %v6051
          %6232 = vst [vmem:[%s264 + $0x3f8] sm:$0xff] %v6052
          %6233 = vst [vmem:[%s264 + $0x400] sm:$0xff] %v6053
          %6234 = vst [vmem:[%s264 + $0x408] sm:$0xff] %v6054
          %6235 = vst [vmem:[%s264 + $0x410] sm:$0xff] %v6055
          %6236 = vst [vmem:[%s264 + $0x418] sm:$0xff] %v6056
          %6237 = vst [vmem:[%s264 + $0x420] sm:$0xff] %v6057
          %6238 = vst [vmem:[%s264 + $0x428] sm:$0xff] %v6058
          %6239 = vst [vmem:[%s264 + $0x430] sm:$0xff] %v6059
          %6240 = vst [vmem:[%s264 + $0x438] sm:$0xff] %v6060
          %6241 = vst [vmem:[%s264 + $0x440] sm:$0xff] %v6061
          %6242 = vst [vmem:[%s264 + $0x448] sm:$0xff] %v6062
          %6243 = vst [vmem:[%s264 + $0x450] sm:$0xff] %v6063
          %6244 = vst [vmem:[%s264 + $0x458] sm:$0xff] %v6064
          %6245 = vst [vmem:[%s264 + $0x460] sm:$0xff] %v6065
          %6246 = vst [vmem:[%s264 + $0x468] sm:$0xff] %v6066
          %6247 = vst [vmem:[%s264 + $0x470] sm:$0xff] %v6067
          %6248 = vst [vmem:[%s264 + $0x478] sm:$0xff] %v6068
          %6249 = vst [vmem:[%s264 + $0x480] sm:$0xff] %v6069
          %6250 = vst [vmem:[%s264 + $0x488] sm:$0xff] %v6070
          %6251 = vst [vmem:[%s264 + $0x490] sm:$0xff] %v6071
          %6252 = vst [vmem:[%s264 + $0x498] sm:$0xff] %v6072
          %6253 = vst [vmem:[%s264 + $0x4a0] sm:$0xff] %v6073
          %6254 = vst [vmem:[%s264 + $0x4a8] sm:$0xff] %v6074
          %6255 = vst [vmem:[%s264 + $0x4b0] sm:$0xff] %v6075
          %6256 = vst [vmem:[%s264 + $0x4b8] sm:$0xff] %v6076
          %6257 = vst [vmem:[%s264 + $0x4c0] sm:$0xff] %v6077
          %6258 = vst [vmem:[%s264 + $0x4c8] sm:$0xff] %v6078
          %6259 = vst [vmem:[%s264 + $0x4d0] sm:$0xff] %v6079
          %6260 = vst [vmem:[%s264 + $0x4d8] sm:$0xff] %v6080
          %6261 = vst [vmem:[%s264 + $0x4e0] sm:$0xff] %v6081
          %6262 = vst [vmem:[%s264 + $0x4e8] sm:$0xff] %v6082
          %6263 = vst [vmem:[%s264 + $0x4f0] sm:$0xff] %v6083
          %6264 = vst [vmem:[%s264 + $0x4f8] sm:$0xff] %v6084
          %6265 = vst [vmem:[%s264 + $0x500] sm:$0xff] %v6085
          %6266 = vst [vmem:[%s264 + $0x508] sm:$0xff] %v6086
          %6267 = vst [vmem:[%s264 + $0x510] sm:$0xff] %v6087
          %6268 = vst [vmem:[%s264 + $0x518] sm:$0xff] %v6088
          %6269 = vst [vmem:[%s264 + $0x520] sm:$0xff] %v6089
          %6270 = vst [vmem:[%s264 + $0x528] sm:$0xff] %v6090
          %6271 = vst [vmem:[%s264 + $0x530] sm:$0xff] %v6091
          %6272 = vst [vmem:[%s264 + $0x538] sm:$0xff] %v6092
          %6273 = vst [vmem:[%s264 + $0x540] sm:$0xff] %v6093
          %6274 = vst [vmem:[%s264 + $0x548] sm:$0xff] %v6094
          %6275 = vst [vmem:[%s264 + $0x550] sm:$0xff] %v6095
          %6276 = vst [vmem:[%s264 + $0x558] sm:$0xff] %v6096
          %6277 = vst [vmem:[%s264 + $0x560] sm:$0xff] %v6097
          %6278 = vst [vmem:[%s264 + $0x568] sm:$0xff] %v6098
          %6279 = vst [vmem:[%s264 + $0x570] sm:$0xff] %v6099
          %6280 = vst [vmem:[%s264 + $0x578] sm:$0xff] %v6100
          %6281 = vst [vmem:[%s264 + $0x580] sm:$0xff] %v6101
          %6282 = vst [vmem:[%s264 + $0x588] sm:$0xff] %v6102
          %6283 = vst [vmem:[%s264 + $0x590] sm:$0xff] %v6103
          %6284 = vst [vmem:[%s264 + $0x598] sm:$0xff] %v6104
        $region44: #{tpu_custom_call.1} parent=31 // pred_fallthru
          _
        // Predicated region
        $region45: #{tpu_custom_call.1} parent=31 // pred_check
          %p6285 = pneg %p5557
        $region46: #{tpu_custom_call.1} parent=31 // pred_check_branch
          %6287 = sbr.rel (%p6285) target = $region48
        $region47: #{tpu_custom_call.1} parent=31 // pred_region
          %v6288 = vld [vmem:[%s264] sm:$0xff]
          %v6289 = vld [vmem:[%s264 + $0x8] sm:$0xff]
          %v6290 = vld [vmem:[%s264 + $0x10] sm:$0xff]
          %v6291 = vld [vmem:[%s264 + $0x18] sm:$0xff]
          %v6292 = vld [vmem:[%s264 + $0x20] sm:$0xff]
          %v6293 = vld [vmem:[%s264 + $0x28] sm:$0xff]
          %v6294 = vld [vmem:[%s264 + $0x30] sm:$0xff]
          %v6295 = vld [vmem:[%s264 + $0x38] sm:$0xff]
          %v6296 = vld [vmem:[%s264 + $0x40] sm:$0xff]
          %v6297 = vld [vmem:[%s264 + $0x48] sm:$0xff]
          %v6298 = vld [vmem:[%s264 + $0x50] sm:$0xff]
          %v6299 = vld [vmem:[%s264 + $0x58] sm:$0xff]
          %v6300 = vld [vmem:[%s264 + $0x60] sm:$0xff]
          %v6301 = vld [vmem:[%s264 + $0x68] sm:$0xff]
          %v6302 = vld [vmem:[%s264 + $0x70] sm:$0xff]
          %v6303 = vld [vmem:[%s264 + $0x78] sm:$0xff]
          %v6304 = vld [vmem:[%s264 + $0x80] sm:$0xff]
          %v6305 = vld [vmem:[%s264 + $0x88] sm:$0xff]
          %v6306 = vld [vmem:[%s264 + $0x90] sm:$0xff]
          %v6307 = vld [vmem:[%s264 + $0x98] sm:$0xff]
          %v6308 = vld [vmem:[%s264 + $0xa0] sm:$0xff]
          %v6309 = vld [vmem:[%s264 + $0xa8] sm:$0xff]
          %v6310 = vld [vmem:[%s264 + $0xb0] sm:$0xff]
          %v6311 = vld [vmem:[%s264 + $0xb8] sm:$0xff]
          %v6312 = vld [vmem:[%s264 + $0xc0] sm:$0xff]
          %v6313 = vld [vmem:[%s264 + $0xc8] sm:$0xff]
          %v6314 = vld [vmem:[%s264 + $0xd0] sm:$0xff]
          %v6315 = vld [vmem:[%s264 + $0xd8] sm:$0xff]
          %v6316 = vld [vmem:[%s264 + $0xe0] sm:$0xff]
          %v6317 = vld [vmem:[%s264 + $0xe8] sm:$0xff]
          %v6318 = vld [vmem:[%s264 + $0xf0] sm:$0xff]
          %v6319 = vld [vmem:[%s264 + $0xf8] sm:$0xff]
          %v6320 = vld [vmem:[%s264 + $0x100] sm:$0xff]
          %v6321 = vld [vmem:[%s264 + $0x108] sm:$0xff]
          %v6322 = vld [vmem:[%s264 + $0x110] sm:$0xff]
          %v6323 = vld [vmem:[%s264 + $0x118] sm:$0xff]
          %v6324 = vld [vmem:[%s264 + $0x120] sm:$0xff]
          %v6325 = vld [vmem:[%s264 + $0x128] sm:$0xff]
          %v6326 = vld [vmem:[%s264 + $0x130] sm:$0xff]
          %v6327 = vld [vmem:[%s264 + $0x138] sm:$0xff]
          %v6328 = vld [vmem:[%s264 + $0x140] sm:$0xff]
          %v6329 = vld [vmem:[%s264 + $0x148] sm:$0xff]
          %v6330 = vld [vmem:[%s264 + $0x150] sm:$0xff]
          %v6331 = vld [vmem:[%s264 + $0x158] sm:$0xff]
          %v6332 = vld [vmem:[%s264 + $0x160] sm:$0xff]
          %v6333 = vld [vmem:[%s264 + $0x168] sm:$0xff]
          %v6334 = vld [vmem:[%s264 + $0x170] sm:$0xff]
          %v6335 = vld [vmem:[%s264 + $0x178] sm:$0xff]
          %v6336 = vld [vmem:[%s264 + $0x180] sm:$0xff]
          %v6337 = vld [vmem:[%s264 + $0x188] sm:$0xff]
          %v6338 = vld [vmem:[%s264 + $0x190] sm:$0xff]
          %v6339 = vld [vmem:[%s264 + $0x198] sm:$0xff]
          %v6340 = vld [vmem:[%s264 + $0x1a0] sm:$0xff]
          %v6341 = vld [vmem:[%s264 + $0x1a8] sm:$0xff]
          %v6342 = vld [vmem:[%s264 + $0x1b0] sm:$0xff]
          %v6343 = vld [vmem:[%s264 + $0x1b8] sm:$0xff]
          %v6344 = vld [vmem:[%s264 + $0x1c0] sm:$0xff]
          %v6345 = vld [vmem:[%s264 + $0x1c8] sm:$0xff]
          %v6346 = vld [vmem:[%s264 + $0x1d0] sm:$0xff]
          %v6347 = vld [vmem:[%s264 + $0x1d8] sm:$0xff]
          %v6348 = vld [vmem:[%s264 + $0x1e0] sm:$0xff]
          %v6349 = vld [vmem:[%s264 + $0x1e8] sm:$0xff]
          %v6350 = vld [vmem:[%s264 + $0x1f0] sm:$0xff]
          %v6351 = vld [vmem:[%s264 + $0x1f8] sm:$0xff]
          %v6352 = vld [vmem:[%s264 + $0x200] sm:$0xff]
          %v6353 = vld [vmem:[%s264 + $0x208] sm:$0xff]
          %v6354 = vld [vmem:[%s264 + $0x210] sm:$0xff]
          %v6355 = vld [vmem:[%s264 + $0x218] sm:$0xff]
          %v6356 = vld [vmem:[%s264 + $0x220] sm:$0xff]
          %v6357 = vld [vmem:[%s264 + $0x228] sm:$0xff]
          %v6358 = vld [vmem:[%s264 + $0x230] sm:$0xff]
          %v6359 = vld [vmem:[%s264 + $0x238] sm:$0xff]
          %v6360 = vld [vmem:[%s264 + $0x240] sm:$0xff]
          %v6361 = vld [vmem:[%s264 + $0x248] sm:$0xff]
          %v6362 = vld [vmem:[%s264 + $0x250] sm:$0xff]
          %v6363 = vld [vmem:[%s264 + $0x258] sm:$0xff]
          %v6364 = vld [vmem:[%s264 + $0x260] sm:$0xff]
          %v6365 = vld [vmem:[%s264 + $0x268] sm:$0xff]
          %v6366 = vld [vmem:[%s264 + $0x270] sm:$0xff]
          %v6367 = vld [vmem:[%s264 + $0x278] sm:$0xff]
          %v6368 = vld [vmem:[%s264 + $0x280] sm:$0xff]
          %v6369 = vld [vmem:[%s264 + $0x288] sm:$0xff]
          %v6370 = vld [vmem:[%s264 + $0x290] sm:$0xff]
          %v6371 = vld [vmem:[%s264 + $0x298] sm:$0xff]
          %v6372 = vld [vmem:[%s264 + $0x2a0] sm:$0xff]
          %v6373 = vld [vmem:[%s264 + $0x2a8] sm:$0xff]
          %v6374 = vld [vmem:[%s264 + $0x2b0] sm:$0xff]
          %v6375 = vld [vmem:[%s264 + $0x2b8] sm:$0xff]
          %v6376 = vld [vmem:[%s264 + $0x2c0] sm:$0xff]
          %v6377 = vld [vmem:[%s264 + $0x2c8] sm:$0xff]
          %v6378 = vld [vmem:[%s264 + $0x2d0] sm:$0xff]
          %v6379 = vld [vmem:[%s264 + $0x2d8] sm:$0xff]
          %v6380 = vld [vmem:[%s264 + $0x2e0] sm:$0xff]
          %v6381 = vld [vmem:[%s264 + $0x2e8] sm:$0xff]
          %v6382 = vld [vmem:[%s264 + $0x2f0] sm:$0xff]
          %v6383 = vld [vmem:[%s264 + $0x2f8] sm:$0xff]
          %v6384 = vld [vmem:[%s264 + $0x300] sm:$0xff]
          %v6385 = vld [vmem:[%s264 + $0x308] sm:$0xff]
          %v6386 = vld [vmem:[%s264 + $0x310] sm:$0xff]
          %v6387 = vld [vmem:[%s264 + $0x318] sm:$0xff]
          %v6388 = vld [vmem:[%s264 + $0x320] sm:$0xff]
          %v6389 = vld [vmem:[%s264 + $0x328] sm:$0xff]
          %v6390 = vld [vmem:[%s264 + $0x330] sm:$0xff]
          %v6391 = vld [vmem:[%s264 + $0x338] sm:$0xff]
          %v6392 = vld [vmem:[%s264 + $0x340] sm:$0xff]
          %v6393 = vld [vmem:[%s264 + $0x348] sm:$0xff]
          %v6394 = vld [vmem:[%s264 + $0x350] sm:$0xff]
          %v6395 = vld [vmem:[%s264 + $0x358] sm:$0xff]
          %v6396 = vld [vmem:[%s264 + $0x360] sm:$0xff]
          %v6397 = vld [vmem:[%s264 + $0x368] sm:$0xff]
          %v6398 = vld [vmem:[%s264 + $0x370] sm:$0xff]
          %v6399 = vld [vmem:[%s264 + $0x378] sm:$0xff]
          %v6400 = vld [vmem:[%s264 + $0x380] sm:$0xff]
          %v6401 = vld [vmem:[%s264 + $0x388] sm:$0xff]
          %v6402 = vld [vmem:[%s264 + $0x390] sm:$0xff]
          %v6403 = vld [vmem:[%s264 + $0x398] sm:$0xff]
          %v6404 = vld [vmem:[%s264 + $0x3a0] sm:$0xff]
          %v6405 = vld [vmem:[%s264 + $0x3a8] sm:$0xff]
          %v6406 = vld [vmem:[%s264 + $0x3b0] sm:$0xff]
          %v6407 = vld [vmem:[%s264 + $0x3b8] sm:$0xff]
          %v6408 = vld [vmem:[%s264 + $0x3c0] sm:$0xff]
          %v6409 = vld [vmem:[%s264 + $0x3c8] sm:$0xff]
          %v6410 = vld [vmem:[%s264 + $0x3d0] sm:$0xff]
          %v6411 = vld [vmem:[%s264 + $0x3d8] sm:$0xff]
          %v6412 = vld [vmem:[%s264 + $0x3e0] sm:$0xff]
          %v6413 = vld [vmem:[%s264 + $0x3e8] sm:$0xff]
          %v6414 = vld [vmem:[%s264 + $0x3f0] sm:$0xff]
          %v6415 = vld [vmem:[%s264 + $0x3f8] sm:$0xff]
          %v6416 = vld [vmem:[%s264 + $0x400] sm:$0xff]
          %v6417 = vld [vmem:[%s264 + $0x408] sm:$0xff]
          %v6418 = vld [vmem:[%s264 + $0x410] sm:$0xff]
          %v6419 = vld [vmem:[%s264 + $0x418] sm:$0xff]
          %v6420 = vld [vmem:[%s264 + $0x420] sm:$0xff]
          %v6421 = vld [vmem:[%s264 + $0x428] sm:$0xff]
          %v6422 = vld [vmem:[%s264 + $0x430] sm:$0xff]
          %v6423 = vld [vmem:[%s264 + $0x438] sm:$0xff]
          %v6424 = vld [vmem:[%s264 + $0x440] sm:$0xff]
          %v6425 = vld [vmem:[%s264 + $0x448] sm:$0xff]
          %v6426 = vld [vmem:[%s264 + $0x450] sm:$0xff]
          %v6427 = vld [vmem:[%s264 + $0x458] sm:$0xff]
          %v6428 = vld [vmem:[%s264 + $0x460] sm:$0xff]
          %v6429 = vld [vmem:[%s264 + $0x468] sm:$0xff]
          %v6430 = vld [vmem:[%s264 + $0x470] sm:$0xff]
          %v6431 = vld [vmem:[%s264 + $0x478] sm:$0xff]
          %v6432 = vld [vmem:[%s264 + $0x480] sm:$0xff]
          %v6433 = vld [vmem:[%s264 + $0x488] sm:$0xff]
          %v6434 = vld [vmem:[%s264 + $0x490] sm:$0xff]
          %v6435 = vld [vmem:[%s264 + $0x498] sm:$0xff]
          %v6436 = vld [vmem:[%s264 + $0x4a0] sm:$0xff]
          %v6437 = vld [vmem:[%s264 + $0x4a8] sm:$0xff]
          %v6438 = vld [vmem:[%s264 + $0x4b0] sm:$0xff]
          %v6439 = vld [vmem:[%s264 + $0x4b8] sm:$0xff]
          %v6440 = vld [vmem:[%s264 + $0x4c0] sm:$0xff]
          %v6441 = vld [vmem:[%s264 + $0x4c8] sm:$0xff]
          %v6442 = vld [vmem:[%s264 + $0x4d0] sm:$0xff]
          %v6443 = vld [vmem:[%s264 + $0x4d8] sm:$0xff]
          %v6444 = vld [vmem:[%s264 + $0x4e0] sm:$0xff]
          %v6445 = vld [vmem:[%s264 + $0x4e8] sm:$0xff]
          %v6446 = vld [vmem:[%s264 + $0x4f0] sm:$0xff]
          %v6447 = vld [vmem:[%s264 + $0x4f8] sm:$0xff]
          %v6448 = vld [vmem:[%s264 + $0x500] sm:$0xff]
          %v6449 = vld [vmem:[%s264 + $0x508] sm:$0xff]
          %v6450 = vld [vmem:[%s264 + $0x510] sm:$0xff]
          %v6451 = vld [vmem:[%s264 + $0x518] sm:$0xff]
          %v6452 = vld [vmem:[%s264 + $0x520] sm:$0xff]
          %v6453 = vld [vmem:[%s264 + $0x528] sm:$0xff]
          %v6454 = vld [vmem:[%s264 + $0x530] sm:$0xff]
          %v6455 = vld [vmem:[%s264 + $0x538] sm:$0xff]
          %v6456 = vld [vmem:[%s264 + $0x540] sm:$0xff]
          %v6457 = vld [vmem:[%s264 + $0x548] sm:$0xff]
          %v6458 = vld [vmem:[%s264 + $0x550] sm:$0xff]
          %v6459 = vld [vmem:[%s264 + $0x558] sm:$0xff]
          %v6460 = vld [vmem:[%s264 + $0x560] sm:$0xff]
          %v6461 = vld [vmem:[%s264 + $0x568] sm:$0xff]
          %v6462 = vld [vmem:[%s264 + $0x570] sm:$0xff]
          %v6463 = vld [vmem:[%s264 + $0x578] sm:$0xff]
          %v6464 = vld [vmem:[%s264 + $0x580] sm:$0xff]
          %v6465 = vld [vmem:[%s264 + $0x588] sm:$0xff]
          %v6466 = vld [vmem:[%s264 + $0x590] sm:$0xff]
          %v6467 = vld [vmem:[%s264 + $0x598] sm:$0xff]
          %vm6468 = vcmp.gt.f32.partialorder %v6423, 0.0
          %vm6469 = vcmp.gt.f32.partialorder %v6424, 0.0
          %vm6470 = vcmp.gt.f32.partialorder %v6425, 0.0
          %vm6471 = vcmp.gt.f32.partialorder %v6426, 0.0
          %vm6472 = vcmp.gt.f32.partialorder %v6427, 0.0
          %vm6473 = vcmp.gt.f32.partialorder %v6428, 0.0
          %vm6474 = vcmp.gt.f32.partialorder %v6429, 0.0
          %vm6475 = vcmp.gt.f32.partialorder %v6430, 0.0
          %vm6476 = vcmp.gt.f32.partialorder %v6431, 0.0
          %vm6477 = vcmp.gt.f32.partialorder %v6432, 0.0
          %vm6478 = vcmp.gt.f32.partialorder %v6433, 0.0
          %vm6479 = vcmp.gt.f32.partialorder %v6434, 0.0
          %vm6480 = vcmp.gt.f32.partialorder %v6435, 0.0
          %vm6481 = vcmp.gt.f32.partialorder %v6436, 0.0
          %vm6482 = vcmp.gt.f32.partialorder %v6437, 0.0
          %vm6483 = vcmp.gt.f32.partialorder %v6438, 0.0
          %vm6484 = vcmp.gt.f32.partialorder %v6439, 0.0
          %vm6485 = vcmp.gt.f32.partialorder %v6440, 0.0
          %vm6486 = vcmp.gt.f32.partialorder %v6441, 0.0
          %vm6487 = vcmp.gt.f32.partialorder %v6442, 0.0
          %vm6488 = vcmp.gt.f32.partialorder %v6443, 0.0
          %vm6489 = vcmp.gt.f32.partialorder %v6444, 0.0
          %vm6490 = vcmp.gt.f32.partialorder %v6445, 0.0
          %vm6491 = vcmp.gt.f32.partialorder %v6446, 0.0
          %vm6492 = vcmp.gt.f32.partialorder %v6447, 0.0
          %vm6493 = vcmp.gt.f32.partialorder %v6448, 0.0
          %vm6494 = vcmp.gt.f32.partialorder %v6449, 0.0
          %vm6495 = vcmp.gt.f32.partialorder %v6450, 0.0
          %vm6496 = vcmp.gt.f32.partialorder %v6451, 0.0
          %vm6497 = vcmp.gt.f32.partialorder %v6452, 0.0
          %vm6498 = vcmp.gt.f32.partialorder %v6453, 0.0
          %vm6499 = vcmp.gt.f32.partialorder %v6454, 0.0
          %vm6500 = vcmp.gt.f32.partialorder %v6455, 0.0
          %vm6501 = vcmp.gt.f32.partialorder %v6456, 0.0
          %vm6502 = vcmp.gt.f32.partialorder %v6457, 0.0
          %vm6503 = vcmp.gt.f32.partialorder %v6458, 0.0
          %vm6504 = vcmp.gt.f32.partialorder %v6459, 0.0
          %vm6505 = vcmp.gt.f32.partialorder %v6460, 0.0
          %vm6506 = vcmp.gt.f32.partialorder %v6461, 0.0
          %vm6507 = vcmp.gt.f32.partialorder %v6462, 0.0
          %vm6508 = vcmp.gt.f32.partialorder %v6463, 0.0
          %vm6509 = vcmp.gt.f32.partialorder %v6464, 0.0
          %vm6510 = vcmp.gt.f32.partialorder %v6465, 0.0
          %vm6511 = vcmp.gt.f32.partialorder %v6466, 0.0
          %vm6512 = vcmp.gt.f32.partialorder %v6467, 0.0
          %v6513 = vsel %vm6468, %v6423, 1.0
          %v6514 = vsel %vm6469, %v6424, 1.0
          %v6515 = vsel %vm6470, %v6425, 1.0
          %v6516 = vsel %vm6471, %v6426, 1.0
          %v6517 = vsel %vm6472, %v6427, 1.0
          %v6518 = vsel %vm6473, %v6428, 1.0
          %v6519 = vsel %vm6474, %v6429, 1.0
          %v6520 = vsel %vm6475, %v6430, 1.0
          %v6521 = vsel %vm6476, %v6431, 1.0
          %v6522 = vsel %vm6477, %v6432, 1.0
          %v6523 = vsel %vm6478, %v6433, 1.0
          %v6524 = vsel %vm6479, %v6434, 1.0
          %v6525 = vsel %vm6480, %v6435, 1.0
          %v6526 = vsel %vm6481, %v6436, 1.0
          %v6527 = vsel %vm6482, %v6437, 1.0
          %v6528 = vsel %vm6483, %v6438, 1.0
          %v6529 = vsel %vm6484, %v6439, 1.0
          %v6530 = vsel %vm6485, %v6440, 1.0
          %v6531 = vsel %vm6486, %v6441, 1.0
          %v6532 = vsel %vm6487, %v6442, 1.0
          %v6533 = vsel %vm6488, %v6443, 1.0
          %v6534 = vsel %vm6489, %v6444, 1.0
          %v6535 = vsel %vm6490, %v6445, 1.0
          %v6536 = vsel %vm6491, %v6446, 1.0
          %v6537 = vsel %vm6492, %v6447, 1.0
          %v6538 = vsel %vm6493, %v6448, 1.0
          %v6539 = vsel %vm6494, %v6449, 1.0
          %v6540 = vsel %vm6495, %v6450, 1.0
          %v6541 = vsel %vm6496, %v6451, 1.0
          %v6542 = vsel %vm6497, %v6452, 1.0
          %v6543 = vsel %vm6498, %v6453, 1.0
          %v6544 = vsel %vm6499, %v6454, 1.0
          %v6545 = vsel %vm6500, %v6455, 1.0
          %v6546 = vsel %vm6501, %v6456, 1.0
          %v6547 = vsel %vm6502, %v6457, 1.0
          %v6548 = vsel %vm6503, %v6458, 1.0
          %v6549 = vsel %vm6504, %v6459, 1.0
          %v6550 = vsel %vm6505, %v6460, 1.0
          %v6551 = vsel %vm6506, %v6461, 1.0
          %v6552 = vsel %vm6507, %v6462, 1.0
          %v6553 = vsel %vm6508, %v6463, 1.0
          %v6554 = vsel %vm6509, %v6464, 1.0
          %v6555 = vsel %vm6510, %v6465, 1.0
          %v6556 = vsel %vm6511, %v6466, 1.0
          %v6557 = vsel %vm6512, %v6467, 1.0
          %v6558 = vrcp.pop %v6513
          %v6559 = vmul.f32 %v6513, %v6558
          %v6560 = vsub.f32 1.0, %v6559
          %v6561 = vmul.f32 %v6558, %v6560
          %v6562 = vadd.f32 %v6558, %v6561
          %vm6563 = vweird.f32 %v6513
          %vm6564 = vweird.f32 %v6558
          %vm6565 = vmor %vm6563, %vm6564
          %v6566 = vsel %vm6565, %v6558, %v6562
          %v6567 = vand.u32 2147483647, %v6513
          %vm6568 = vcmp.eq.f32.partialorder %v6567, 8.507059e+37
          %v6569 = vand.u32 %v6513, 2147483648
          %v6570 = vor.u32 1.1754944e-38, %v6569
          %v6571 = vsel %vm6568, %v6570, %v6566
          %v6572 = vmul.f32 1.0, %v6571
          %v6573 = vrcp.pop %v6514
          %v6574 = vmul.f32 %v6514, %v6573
          %v6575 = vsub.f32 1.0, %v6574
          %v6576 = vmul.f32 %v6573, %v6575
          %v6577 = vadd.f32 %v6573, %v6576
          %vm6578 = vweird.f32 %v6514
          %vm6579 = vweird.f32 %v6573
          %vm6580 = vmor %vm6578, %vm6579
          %v6581 = vsel %vm6580, %v6573, %v6577
          %v6582 = vand.u32 2147483647, %v6514
          %vm6583 = vcmp.eq.f32.partialorder %v6582, 8.507059e+37
          %v6584 = vand.u32 %v6514, 2147483648
          %v6585 = vor.u32 1.1754944e-38, %v6584
          %v6586 = vsel %vm6583, %v6585, %v6581
          %v6587 = vmul.f32 1.0, %v6586
          %v6588 = vrcp.pop %v6515
          %v6589 = vmul.f32 %v6515, %v6588
          %v6590 = vsub.f32 1.0, %v6589
          %v6591 = vmul.f32 %v6588, %v6590
          %v6592 = vadd.f32 %v6588, %v6591
          %vm6593 = vweird.f32 %v6515
          %vm6594 = vweird.f32 %v6588
          %vm6595 = vmor %vm6593, %vm6594
          %v6596 = vsel %vm6595, %v6588, %v6592
          %v6597 = vand.u32 2147483647, %v6515
          %vm6598 = vcmp.eq.f32.partialorder %v6597, 8.507059e+37
          %v6599 = vand.u32 %v6515, 2147483648
          %v6600 = vor.u32 1.1754944e-38, %v6599
          %v6601 = vsel %vm6598, %v6600, %v6596
          %v6602 = vmul.f32 1.0, %v6601
          %v6603 = vrcp.pop %v6516
          %v6604 = vmul.f32 %v6516, %v6603
          %v6605 = vsub.f32 1.0, %v6604
          %v6606 = vmul.f32 %v6603, %v6605
          %v6607 = vadd.f32 %v6603, %v6606
          %vm6608 = vweird.f32 %v6516
          %vm6609 = vweird.f32 %v6603
          %vm6610 = vmor %vm6608, %vm6609
          %v6611 = vsel %vm6610, %v6603, %v6607
          %v6612 = vand.u32 2147483647, %v6516
          %vm6613 = vcmp.eq.f32.partialorder %v6612, 8.507059e+37
          %v6614 = vand.u32 %v6516, 2147483648
          %v6615 = vor.u32 1.1754944e-38, %v6614
          %v6616 = vsel %vm6613, %v6615, %v6611
          %v6617 = vmul.f32 1.0, %v6616
          %v6618 = vrcp.pop %v6517
          %v6619 = vmul.f32 %v6517, %v6618
          %v6620 = vsub.f32 1.0, %v6619
          %v6621 = vmul.f32 %v6618, %v6620
          %v6622 = vadd.f32 %v6618, %v6621
          %vm6623 = vweird.f32 %v6517
          %vm6624 = vweird.f32 %v6618
          %vm6625 = vmor %vm6623, %vm6624
          %v6626 = vsel %vm6625, %v6618, %v6622
          %v6627 = vand.u32 2147483647, %v6517
          %vm6628 = vcmp.eq.f32.partialorder %v6627, 8.507059e+37
          %v6629 = vand.u32 %v6517, 2147483648
          %v6630 = vor.u32 1.1754944e-38, %v6629
          %v6631 = vsel %vm6628, %v6630, %v6626
          %v6632 = vmul.f32 1.0, %v6631
          %v6633 = vrcp.pop %v6518
          %v6634 = vmul.f32 %v6518, %v6633
          %v6635 = vsub.f32 1.0, %v6634
          %v6636 = vmul.f32 %v6633, %v6635
          %v6637 = vadd.f32 %v6633, %v6636
          %vm6638 = vweird.f32 %v6518
          %vm6639 = vweird.f32 %v6633
          %vm6640 = vmor %vm6638, %vm6639
          %v6641 = vsel %vm6640, %v6633, %v6637
          %v6642 = vand.u32 2147483647, %v6518
          %vm6643 = vcmp.eq.f32.partialorder %v6642, 8.507059e+37
          %v6644 = vand.u32 %v6518, 2147483648
          %v6645 = vor.u32 1.1754944e-38, %v6644
          %v6646 = vsel %vm6643, %v6645, %v6641
          %v6647 = vmul.f32 1.0, %v6646
          %v6648 = vrcp.pop %v6519
          %v6649 = vmul.f32 %v6519, %v6648
          %v6650 = vsub.f32 1.0, %v6649
          %v6651 = vmul.f32 %v6648, %v6650
          %v6652 = vadd.f32 %v6648, %v6651
          %vm6653 = vweird.f32 %v6519
          %vm6654 = vweird.f32 %v6648
          %vm6655 = vmor %vm6653, %vm6654
          %v6656 = vsel %vm6655, %v6648, %v6652
          %v6657 = vand.u32 2147483647, %v6519
          %vm6658 = vcmp.eq.f32.partialorder %v6657, 8.507059e+37
          %v6659 = vand.u32 %v6519, 2147483648
          %v6660 = vor.u32 1.1754944e-38, %v6659
          %v6661 = vsel %vm6658, %v6660, %v6656
          %v6662 = vmul.f32 1.0, %v6661
          %v6663 = vrcp.pop %v6520
          %v6664 = vmul.f32 %v6520, %v6663
          %v6665 = vsub.f32 1.0, %v6664
          %v6666 = vmul.f32 %v6663, %v6665
          %v6667 = vadd.f32 %v6663, %v6666
          %vm6668 = vweird.f32 %v6520
          %vm6669 = vweird.f32 %v6663
          %vm6670 = vmor %vm6668, %vm6669
          %v6671 = vsel %vm6670, %v6663, %v6667
          %v6672 = vand.u32 2147483647, %v6520
          %vm6673 = vcmp.eq.f32.partialorder %v6672, 8.507059e+37
          %v6674 = vand.u32 %v6520, 2147483648
          %v6675 = vor.u32 1.1754944e-38, %v6674
          %v6676 = vsel %vm6673, %v6675, %v6671
          %v6677 = vmul.f32 1.0, %v6676
          %v6678 = vrcp.pop %v6521
          %v6679 = vmul.f32 %v6521, %v6678
          %v6680 = vsub.f32 1.0, %v6679
          %v6681 = vmul.f32 %v6678, %v6680
          %v6682 = vadd.f32 %v6678, %v6681
          %vm6683 = vweird.f32 %v6521
          %vm6684 = vweird.f32 %v6678
          %vm6685 = vmor %vm6683, %vm6684
          %v6686 = vsel %vm6685, %v6678, %v6682
          %v6687 = vand.u32 2147483647, %v6521
          %vm6688 = vcmp.eq.f32.partialorder %v6687, 8.507059e+37
          %v6689 = vand.u32 %v6521, 2147483648
          %v6690 = vor.u32 1.1754944e-38, %v6689
          %v6691 = vsel %vm6688, %v6690, %v6686
          %v6692 = vmul.f32 1.0, %v6691
          %v6693 = vrcp.pop %v6522
          %v6694 = vmul.f32 %v6522, %v6693
          %v6695 = vsub.f32 1.0, %v6694
          %v6696 = vmul.f32 %v6693, %v6695
          %v6697 = vadd.f32 %v6693, %v6696
          %vm6698 = vweird.f32 %v6522
          %vm6699 = vweird.f32 %v6693
          %vm6700 = vmor %vm6698, %vm6699
          %v6701 = vsel %vm6700, %v6693, %v6697
          %v6702 = vand.u32 2147483647, %v6522
          %vm6703 = vcmp.eq.f32.partialorder %v6702, 8.507059e+37
          %v6704 = vand.u32 %v6522, 2147483648
          %v6705 = vor.u32 1.1754944e-38, %v6704
          %v6706 = vsel %vm6703, %v6705, %v6701
          %v6707 = vmul.f32 1.0, %v6706
          %v6708 = vrcp.pop %v6523
          %v6709 = vmul.f32 %v6523, %v6708
          %v6710 = vsub.f32 1.0, %v6709
          %v6711 = vmul.f32 %v6708, %v6710
          %v6712 = vadd.f32 %v6708, %v6711
          %vm6713 = vweird.f32 %v6523
          %vm6714 = vweird.f32 %v6708
          %vm6715 = vmor %vm6713, %vm6714
          %v6716 = vsel %vm6715, %v6708, %v6712
          %v6717 = vand.u32 2147483647, %v6523
          %vm6718 = vcmp.eq.f32.partialorder %v6717, 8.507059e+37
          %v6719 = vand.u32 %v6523, 2147483648
          %v6720 = vor.u32 1.1754944e-38, %v6719
          %v6721 = vsel %vm6718, %v6720, %v6716
          %v6722 = vmul.f32 1.0, %v6721
          %v6723 = vrcp.pop %v6524
          %v6724 = vmul.f32 %v6524, %v6723
          %v6725 = vsub.f32 1.0, %v6724
          %v6726 = vmul.f32 %v6723, %v6725
          %v6727 = vadd.f32 %v6723, %v6726
          %vm6728 = vweird.f32 %v6524
          %vm6729 = vweird.f32 %v6723
          %vm6730 = vmor %vm6728, %vm6729
          %v6731 = vsel %vm6730, %v6723, %v6727
          %v6732 = vand.u32 2147483647, %v6524
          %vm6733 = vcmp.eq.f32.partialorder %v6732, 8.507059e+37
          %v6734 = vand.u32 %v6524, 2147483648
          %v6735 = vor.u32 1.1754944e-38, %v6734
          %v6736 = vsel %vm6733, %v6735, %v6731
          %v6737 = vmul.f32 1.0, %v6736
          %v6738 = vrcp.pop %v6525
          %v6739 = vmul.f32 %v6525, %v6738
          %v6740 = vsub.f32 1.0, %v6739
          %v6741 = vmul.f32 %v6738, %v6740
          %v6742 = vadd.f32 %v6738, %v6741
          %vm6743 = vweird.f32 %v6525
          %vm6744 = vweird.f32 %v6738
          %vm6745 = vmor %vm6743, %vm6744
          %v6746 = vsel %vm6745, %v6738, %v6742
          %v6747 = vand.u32 2147483647, %v6525
          %vm6748 = vcmp.eq.f32.partialorder %v6747, 8.507059e+37
          %v6749 = vand.u32 %v6525, 2147483648
          %v6750 = vor.u32 1.1754944e-38, %v6749
          %v6751 = vsel %vm6748, %v6750, %v6746
          %v6752 = vmul.f32 1.0, %v6751
          %v6753 = vrcp.pop %v6526
          %v6754 = vmul.f32 %v6526, %v6753
          %v6755 = vsub.f32 1.0, %v6754
          %v6756 = vmul.f32 %v6753, %v6755
          %v6757 = vadd.f32 %v6753, %v6756
          %vm6758 = vweird.f32 %v6526
          %vm6759 = vweird.f32 %v6753
          %vm6760 = vmor %vm6758, %vm6759
          %v6761 = vsel %vm6760, %v6753, %v6757
          %v6762 = vand.u32 2147483647, %v6526
          %vm6763 = vcmp.eq.f32.partialorder %v6762, 8.507059e+37
          %v6764 = vand.u32 %v6526, 2147483648
          %v6765 = vor.u32 1.1754944e-38, %v6764
          %v6766 = vsel %vm6763, %v6765, %v6761
          %v6767 = vmul.f32 1.0, %v6766
          %v6768 = vrcp.pop %v6527
          %v6769 = vmul.f32 %v6527, %v6768
          %v6770 = vsub.f32 1.0, %v6769
          %v6771 = vmul.f32 %v6768, %v6770
          %v6772 = vadd.f32 %v6768, %v6771
          %vm6773 = vweird.f32 %v6527
          %vm6774 = vweird.f32 %v6768
          %vm6775 = vmor %vm6773, %vm6774
          %v6776 = vsel %vm6775, %v6768, %v6772
          %v6777 = vand.u32 2147483647, %v6527
          %vm6778 = vcmp.eq.f32.partialorder %v6777, 8.507059e+37
          %v6779 = vand.u32 %v6527, 2147483648
          %v6780 = vor.u32 1.1754944e-38, %v6779
          %v6781 = vsel %vm6778, %v6780, %v6776
          %v6782 = vmul.f32 1.0, %v6781
          %v6783 = vrcp.pop %v6528
          %v6784 = vmul.f32 %v6528, %v6783
          %v6785 = vsub.f32 1.0, %v6784
          %v6786 = vmul.f32 %v6783, %v6785
          %v6787 = vadd.f32 %v6783, %v6786
          %vm6788 = vweird.f32 %v6528
          %vm6789 = vweird.f32 %v6783
          %vm6790 = vmor %vm6788, %vm6789
          %v6791 = vsel %vm6790, %v6783, %v6787
          %v6792 = vand.u32 2147483647, %v6528
          %vm6793 = vcmp.eq.f32.partialorder %v6792, 8.507059e+37
          %v6794 = vand.u32 %v6528, 2147483648
          %v6795 = vor.u32 1.1754944e-38, %v6794
          %v6796 = vsel %vm6793, %v6795, %v6791
          %v6797 = vmul.f32 1.0, %v6796
          %v6798 = vrcp.pop %v6529
          %v6799 = vmul.f32 %v6529, %v6798
          %v6800 = vsub.f32 1.0, %v6799
          %v6801 = vmul.f32 %v6798, %v6800
          %v6802 = vadd.f32 %v6798, %v6801
          %vm6803 = vweird.f32 %v6529
          %vm6804 = vweird.f32 %v6798
          %vm6805 = vmor %vm6803, %vm6804
          %v6806 = vsel %vm6805, %v6798, %v6802
          %v6807 = vand.u32 2147483647, %v6529
          %vm6808 = vcmp.eq.f32.partialorder %v6807, 8.507059e+37
          %v6809 = vand.u32 %v6529, 2147483648
          %v6810 = vor.u32 1.1754944e-38, %v6809
          %v6811 = vsel %vm6808, %v6810, %v6806
          %v6812 = vmul.f32 1.0, %v6811
          %v6813 = vrcp.pop %v6530
          %v6814 = vmul.f32 %v6530, %v6813
          %v6815 = vsub.f32 1.0, %v6814
          %v6816 = vmul.f32 %v6813, %v6815
          %v6817 = vadd.f32 %v6813, %v6816
          %vm6818 = vweird.f32 %v6530
          %vm6819 = vweird.f32 %v6813
          %vm6820 = vmor %vm6818, %vm6819
          %v6821 = vsel %vm6820, %v6813, %v6817
          %v6822 = vand.u32 2147483647, %v6530
          %vm6823 = vcmp.eq.f32.partialorder %v6822, 8.507059e+37
          %v6824 = vand.u32 %v6530, 2147483648
          %v6825 = vor.u32 1.1754944e-38, %v6824
          %v6826 = vsel %vm6823, %v6825, %v6821
          %v6827 = vmul.f32 1.0, %v6826
          %v6828 = vrcp.pop %v6531
          %v6829 = vmul.f32 %v6531, %v6828
          %v6830 = vsub.f32 1.0, %v6829
          %v6831 = vmul.f32 %v6828, %v6830
          %v6832 = vadd.f32 %v6828, %v6831
          %vm6833 = vweird.f32 %v6531
          %vm6834 = vweird.f32 %v6828
          %vm6835 = vmor %vm6833, %vm6834
          %v6836 = vsel %vm6835, %v6828, %v6832
          %v6837 = vand.u32 2147483647, %v6531
          %vm6838 = vcmp.eq.f32.partialorder %v6837, 8.507059e+37
          %v6839 = vand.u32 %v6531, 2147483648
          %v6840 = vor.u32 1.1754944e-38, %v6839
          %v6841 = vsel %vm6838, %v6840, %v6836
          %v6842 = vmul.f32 1.0, %v6841
          %v6843 = vrcp.pop %v6532
          %v6844 = vmul.f32 %v6532, %v6843
          %v6845 = vsub.f32 1.0, %v6844
          %v6846 = vmul.f32 %v6843, %v6845
          %v6847 = vadd.f32 %v6843, %v6846
          %vm6848 = vweird.f32 %v6532
          %vm6849 = vweird.f32 %v6843
          %vm6850 = vmor %vm6848, %vm6849
          %v6851 = vsel %vm6850, %v6843, %v6847
          %v6852 = vand.u32 2147483647, %v6532
          %vm6853 = vcmp.eq.f32.partialorder %v6852, 8.507059e+37
          %v6854 = vand.u32 %v6532, 2147483648
          %v6855 = vor.u32 1.1754944e-38, %v6854
          %v6856 = vsel %vm6853, %v6855, %v6851
          %v6857 = vmul.f32 1.0, %v6856
          %v6858 = vrcp.pop %v6533
          %v6859 = vmul.f32 %v6533, %v6858
          %v6860 = vsub.f32 1.0, %v6859
          %v6861 = vmul.f32 %v6858, %v6860
          %v6862 = vadd.f32 %v6858, %v6861
          %vm6863 = vweird.f32 %v6533
          %vm6864 = vweird.f32 %v6858
          %vm6865 = vmor %vm6863, %vm6864
          %v6866 = vsel %vm6865, %v6858, %v6862
          %v6867 = vand.u32 2147483647, %v6533
          %vm6868 = vcmp.eq.f32.partialorder %v6867, 8.507059e+37
          %v6869 = vand.u32 %v6533, 2147483648
          %v6870 = vor.u32 1.1754944e-38, %v6869
          %v6871 = vsel %vm6868, %v6870, %v6866
          %v6872 = vmul.f32 1.0, %v6871
          %v6873 = vrcp.pop %v6534
          %v6874 = vmul.f32 %v6534, %v6873
          %v6875 = vsub.f32 1.0, %v6874
          %v6876 = vmul.f32 %v6873, %v6875
          %v6877 = vadd.f32 %v6873, %v6876
          %vm6878 = vweird.f32 %v6534
          %vm6879 = vweird.f32 %v6873
          %vm6880 = vmor %vm6878, %vm6879
          %v6881 = vsel %vm6880, %v6873, %v6877
          %v6882 = vand.u32 2147483647, %v6534
          %vm6883 = vcmp.eq.f32.partialorder %v6882, 8.507059e+37
          %v6884 = vand.u32 %v6534, 2147483648
          %v6885 = vor.u32 1.1754944e-38, %v6884
          %v6886 = vsel %vm6883, %v6885, %v6881
          %v6887 = vmul.f32 1.0, %v6886
          %v6888 = vrcp.pop %v6535
          %v6889 = vmul.f32 %v6535, %v6888
          %v6890 = vsub.f32 1.0, %v6889
          %v6891 = vmul.f32 %v6888, %v6890
          %v6892 = vadd.f32 %v6888, %v6891
          %vm6893 = vweird.f32 %v6535
          %vm6894 = vweird.f32 %v6888
          %vm6895 = vmor %vm6893, %vm6894
          %v6896 = vsel %vm6895, %v6888, %v6892
          %v6897 = vand.u32 2147483647, %v6535
          %vm6898 = vcmp.eq.f32.partialorder %v6897, 8.507059e+37
          %v6899 = vand.u32 %v6535, 2147483648
          %v6900 = vor.u32 1.1754944e-38, %v6899
          %v6901 = vsel %vm6898, %v6900, %v6896
          %v6902 = vmul.f32 1.0, %v6901
          %v6903 = vrcp.pop %v6536
          %v6904 = vmul.f32 %v6536, %v6903
          %v6905 = vsub.f32 1.0, %v6904
          %v6906 = vmul.f32 %v6903, %v6905
          %v6907 = vadd.f32 %v6903, %v6906
          %vm6908 = vweird.f32 %v6536
          %vm6909 = vweird.f32 %v6903
          %vm6910 = vmor %vm6908, %vm6909
          %v6911 = vsel %vm6910, %v6903, %v6907
          %v6912 = vand.u32 2147483647, %v6536
          %vm6913 = vcmp.eq.f32.partialorder %v6912, 8.507059e+37
          %v6914 = vand.u32 %v6536, 2147483648
          %v6915 = vor.u32 1.1754944e-38, %v6914
          %v6916 = vsel %vm6913, %v6915, %v6911
          %v6917 = vmul.f32 1.0, %v6916
          %v6918 = vrcp.pop %v6537
          %v6919 = vmul.f32 %v6537, %v6918
          %v6920 = vsub.f32 1.0, %v6919
          %v6921 = vmul.f32 %v6918, %v6920
          %v6922 = vadd.f32 %v6918, %v6921
          %vm6923 = vweird.f32 %v6537
          %vm6924 = vweird.f32 %v6918
          %vm6925 = vmor %vm6923, %vm6924
          %v6926 = vsel %vm6925, %v6918, %v6922
          %v6927 = vand.u32 2147483647, %v6537
          %vm6928 = vcmp.eq.f32.partialorder %v6927, 8.507059e+37
          %v6929 = vand.u32 %v6537, 2147483648
          %v6930 = vor.u32 1.1754944e-38, %v6929
          %v6931 = vsel %vm6928, %v6930, %v6926
          %v6932 = vmul.f32 1.0, %v6931
          %v6933 = vrcp.pop %v6538
          %v6934 = vmul.f32 %v6538, %v6933
          %v6935 = vsub.f32 1.0, %v6934
          %v6936 = vmul.f32 %v6933, %v6935
          %v6937 = vadd.f32 %v6933, %v6936
          %vm6938 = vweird.f32 %v6538
          %vm6939 = vweird.f32 %v6933
          %vm6940 = vmor %vm6938, %vm6939
          %v6941 = vsel %vm6940, %v6933, %v6937
          %v6942 = vand.u32 2147483647, %v6538
          %vm6943 = vcmp.eq.f32.partialorder %v6942, 8.507059e+37
          %v6944 = vand.u32 %v6538, 2147483648
          %v6945 = vor.u32 1.1754944e-38, %v6944
          %v6946 = vsel %vm6943, %v6945, %v6941
          %v6947 = vmul.f32 1.0, %v6946
          %v6948 = vrcp.pop %v6539
          %v6949 = vmul.f32 %v6539, %v6948
          %v6950 = vsub.f32 1.0, %v6949
          %v6951 = vmul.f32 %v6948, %v6950
          %v6952 = vadd.f32 %v6948, %v6951
          %vm6953 = vweird.f32 %v6539
          %vm6954 = vweird.f32 %v6948
          %vm6955 = vmor %vm6953, %vm6954
          %v6956 = vsel %vm6955, %v6948, %v6952
          %v6957 = vand.u32 2147483647, %v6539
          %vm6958 = vcmp.eq.f32.partialorder %v6957, 8.507059e+37
          %v6959 = vand.u32 %v6539, 2147483648
          %v6960 = vor.u32 1.1754944e-38, %v6959
          %v6961 = vsel %vm6958, %v6960, %v6956
          %v6962 = vmul.f32 1.0, %v6961
          %v6963 = vrcp.pop %v6540
          %v6964 = vmul.f32 %v6540, %v6963
          %v6965 = vsub.f32 1.0, %v6964
          %v6966 = vmul.f32 %v6963, %v6965
          %v6967 = vadd.f32 %v6963, %v6966
          %vm6968 = vweird.f32 %v6540
          %vm6969 = vweird.f32 %v6963
          %vm6970 = vmor %vm6968, %vm6969
          %v6971 = vsel %vm6970, %v6963, %v6967
          %v6972 = vand.u32 2147483647, %v6540
          %vm6973 = vcmp.eq.f32.partialorder %v6972, 8.507059e+37
          %v6974 = vand.u32 %v6540, 2147483648
          %v6975 = vor.u32 1.1754944e-38, %v6974
          %v6976 = vsel %vm6973, %v6975, %v6971
          %v6977 = vmul.f32 1.0, %v6976
          %v6978 = vrcp.pop %v6541
          %v6979 = vmul.f32 %v6541, %v6978
          %v6980 = vsub.f32 1.0, %v6979
          %v6981 = vmul.f32 %v6978, %v6980
          %v6982 = vadd.f32 %v6978, %v6981
          %vm6983 = vweird.f32 %v6541
          %vm6984 = vweird.f32 %v6978
          %vm6985 = vmor %vm6983, %vm6984
          %v6986 = vsel %vm6985, %v6978, %v6982
          %v6987 = vand.u32 2147483647, %v6541
          %vm6988 = vcmp.eq.f32.partialorder %v6987, 8.507059e+37
          %v6989 = vand.u32 %v6541, 2147483648
          %v6990 = vor.u32 1.1754944e-38, %v6989
          %v6991 = vsel %vm6988, %v6990, %v6986
          %v6992 = vmul.f32 1.0, %v6991
          %v6993 = vrcp.pop %v6542
          %v6994 = vmul.f32 %v6542, %v6993
          %v6995 = vsub.f32 1.0, %v6994
          %v6996 = vmul.f32 %v6993, %v6995
          %v6997 = vadd.f32 %v6993, %v6996
          %vm6998 = vweird.f32 %v6542
          %vm6999 = vweird.f32 %v6993
          %vm7000 = vmor %vm6998, %vm6999
          %v7001 = vsel %vm7000, %v6993, %v6997
          %v7002 = vand.u32 2147483647, %v6542
          %vm7003 = vcmp.eq.f32.partialorder %v7002, 8.507059e+37
          %v7004 = vand.u32 %v6542, 2147483648
          %v7005 = vor.u32 1.1754944e-38, %v7004
          %v7006 = vsel %vm7003, %v7005, %v7001
          %v7007 = vmul.f32 1.0, %v7006
          %v7008 = vrcp.pop %v6543
          %v7009 = vmul.f32 %v6543, %v7008
          %v7010 = vsub.f32 1.0, %v7009
          %v7011 = vmul.f32 %v7008, %v7010
          %v7012 = vadd.f32 %v7008, %v7011
          %vm7013 = vweird.f32 %v6543
          %vm7014 = vweird.f32 %v7008
          %vm7015 = vmor %vm7013, %vm7014
          %v7016 = vsel %vm7015, %v7008, %v7012
          %v7017 = vand.u32 2147483647, %v6543
          %vm7018 = vcmp.eq.f32.partialorder %v7017, 8.507059e+37
          %v7019 = vand.u32 %v6543, 2147483648
          %v7020 = vor.u32 1.1754944e-38, %v7019
          %v7021 = vsel %vm7018, %v7020, %v7016
          %v7022 = vmul.f32 1.0, %v7021
          %v7023 = vrcp.pop %v6544
          %v7024 = vmul.f32 %v6544, %v7023
          %v7025 = vsub.f32 1.0, %v7024
          %v7026 = vmul.f32 %v7023, %v7025
          %v7027 = vadd.f32 %v7023, %v7026
          %vm7028 = vweird.f32 %v6544
          %vm7029 = vweird.f32 %v7023
          %vm7030 = vmor %vm7028, %vm7029
          %v7031 = vsel %vm7030, %v7023, %v7027
          %v7032 = vand.u32 2147483647, %v6544
          %vm7033 = vcmp.eq.f32.partialorder %v7032, 8.507059e+37
          %v7034 = vand.u32 %v6544, 2147483648
          %v7035 = vor.u32 1.1754944e-38, %v7034
          %v7036 = vsel %vm7033, %v7035, %v7031
          %v7037 = vmul.f32 1.0, %v7036
          %v7038 = vrcp.pop %v6545
          %v7039 = vmul.f32 %v6545, %v7038
          %v7040 = vsub.f32 1.0, %v7039
          %v7041 = vmul.f32 %v7038, %v7040
          %v7042 = vadd.f32 %v7038, %v7041
          %vm7043 = vweird.f32 %v6545
          %vm7044 = vweird.f32 %v7038
          %vm7045 = vmor %vm7043, %vm7044
          %v7046 = vsel %vm7045, %v7038, %v7042
          %v7047 = vand.u32 2147483647, %v6545
          %vm7048 = vcmp.eq.f32.partialorder %v7047, 8.507059e+37
          %v7049 = vand.u32 %v6545, 2147483648
          %v7050 = vor.u32 1.1754944e-38, %v7049
          %v7051 = vsel %vm7048, %v7050, %v7046
          %v7052 = vmul.f32 1.0, %v7051
          %v7053 = vrcp.pop %v6546
          %v7054 = vmul.f32 %v6546, %v7053
          %v7055 = vsub.f32 1.0, %v7054
          %v7056 = vmul.f32 %v7053, %v7055
          %v7057 = vadd.f32 %v7053, %v7056
          %vm7058 = vweird.f32 %v6546
          %vm7059 = vweird.f32 %v7053
          %vm7060 = vmor %vm7058, %vm7059
          %v7061 = vsel %vm7060, %v7053, %v7057
          %v7062 = vand.u32 2147483647, %v6546
          %vm7063 = vcmp.eq.f32.partialorder %v7062, 8.507059e+37
          %v7064 = vand.u32 %v6546, 2147483648
          %v7065 = vor.u32 1.1754944e-38, %v7064
          %v7066 = vsel %vm7063, %v7065, %v7061
          %v7067 = vmul.f32 1.0, %v7066
          %v7068 = vrcp.pop %v6547
          %v7069 = vmul.f32 %v6547, %v7068
          %v7070 = vsub.f32 1.0, %v7069
          %v7071 = vmul.f32 %v7068, %v7070
          %v7072 = vadd.f32 %v7068, %v7071
          %vm7073 = vweird.f32 %v6547
          %vm7074 = vweird.f32 %v7068
          %vm7075 = vmor %vm7073, %vm7074
          %v7076 = vsel %vm7075, %v7068, %v7072
          %v7077 = vand.u32 2147483647, %v6547
          %vm7078 = vcmp.eq.f32.partialorder %v7077, 8.507059e+37
          %v7079 = vand.u32 %v6547, 2147483648
          %v7080 = vor.u32 1.1754944e-38, %v7079
          %v7081 = vsel %vm7078, %v7080, %v7076
          %v7082 = vmul.f32 1.0, %v7081
          %v7083 = vrcp.pop %v6548
          %v7084 = vmul.f32 %v6548, %v7083
          %v7085 = vsub.f32 1.0, %v7084
          %v7086 = vmul.f32 %v7083, %v7085
          %v7087 = vadd.f32 %v7083, %v7086
          %vm7088 = vweird.f32 %v6548
          %vm7089 = vweird.f32 %v7083
          %vm7090 = vmor %vm7088, %vm7089
          %v7091 = vsel %vm7090, %v7083, %v7087
          %v7092 = vand.u32 2147483647, %v6548
          %vm7093 = vcmp.eq.f32.partialorder %v7092, 8.507059e+37
          %v7094 = vand.u32 %v6548, 2147483648
          %v7095 = vor.u32 1.1754944e-38, %v7094
          %v7096 = vsel %vm7093, %v7095, %v7091
          %v7097 = vmul.f32 1.0, %v7096
          %v7098 = vrcp.pop %v6549
          %v7099 = vmul.f32 %v6549, %v7098
          %v7100 = vsub.f32 1.0, %v7099
          %v7101 = vmul.f32 %v7098, %v7100
          %v7102 = vadd.f32 %v7098, %v7101
          %vm7103 = vweird.f32 %v6549
          %vm7104 = vweird.f32 %v7098
          %vm7105 = vmor %vm7103, %vm7104
          %v7106 = vsel %vm7105, %v7098, %v7102
          %v7107 = vand.u32 2147483647, %v6549
          %vm7108 = vcmp.eq.f32.partialorder %v7107, 8.507059e+37
          %v7109 = vand.u32 %v6549, 2147483648
          %v7110 = vor.u32 1.1754944e-38, %v7109
          %v7111 = vsel %vm7108, %v7110, %v7106
          %v7112 = vmul.f32 1.0, %v7111
          %v7113 = vrcp.pop %v6550
          %v7114 = vmul.f32 %v6550, %v7113
          %v7115 = vsub.f32 1.0, %v7114
          %v7116 = vmul.f32 %v7113, %v7115
          %v7117 = vadd.f32 %v7113, %v7116
          %vm7118 = vweird.f32 %v6550
          %vm7119 = vweird.f32 %v7113
          %vm7120 = vmor %vm7118, %vm7119
          %v7121 = vsel %vm7120, %v7113, %v7117
          %v7122 = vand.u32 2147483647, %v6550
          %vm7123 = vcmp.eq.f32.partialorder %v7122, 8.507059e+37
          %v7124 = vand.u32 %v6550, 2147483648
          %v7125 = vor.u32 1.1754944e-38, %v7124
          %v7126 = vsel %vm7123, %v7125, %v7121
          %v7127 = vmul.f32 1.0, %v7126
          %v7128 = vrcp.pop %v6551
          %v7129 = vmul.f32 %v6551, %v7128
          %v7130 = vsub.f32 1.0, %v7129
          %v7131 = vmul.f32 %v7128, %v7130
          %v7132 = vadd.f32 %v7128, %v7131
          %vm7133 = vweird.f32 %v6551
          %vm7134 = vweird.f32 %v7128
          %vm7135 = vmor %vm7133, %vm7134
          %v7136 = vsel %vm7135, %v7128, %v7132
          %v7137 = vand.u32 2147483647, %v6551
          %vm7138 = vcmp.eq.f32.partialorder %v7137, 8.507059e+37
          %v7139 = vand.u32 %v6551, 2147483648
          %v7140 = vor.u32 1.1754944e-38, %v7139
          %v7141 = vsel %vm7138, %v7140, %v7136
          %v7142 = vmul.f32 1.0, %v7141
          %v7143 = vrcp.pop %v6552
          %v7144 = vmul.f32 %v6552, %v7143
          %v7145 = vsub.f32 1.0, %v7144
          %v7146 = vmul.f32 %v7143, %v7145
          %v7147 = vadd.f32 %v7143, %v7146
          %vm7148 = vweird.f32 %v6552
          %vm7149 = vweird.f32 %v7143
          %vm7150 = vmor %vm7148, %vm7149
          %v7151 = vsel %vm7150, %v7143, %v7147
          %v7152 = vand.u32 2147483647, %v6552
          %vm7153 = vcmp.eq.f32.partialorder %v7152, 8.507059e+37
          %v7154 = vand.u32 %v6552, 2147483648
          %v7155 = vor.u32 1.1754944e-38, %v7154
          %v7156 = vsel %vm7153, %v7155, %v7151
          %v7157 = vmul.f32 1.0, %v7156
          %v7158 = vrcp.pop %v6553
          %v7159 = vmul.f32 %v6553, %v7158
          %v7160 = vsub.f32 1.0, %v7159
          %v7161 = vmul.f32 %v7158, %v7160
          %v7162 = vadd.f32 %v7158, %v7161
          %vm7163 = vweird.f32 %v6553
          %vm7164 = vweird.f32 %v7158
          %vm7165 = vmor %vm7163, %vm7164
          %v7166 = vsel %vm7165, %v7158, %v7162
          %v7167 = vand.u32 2147483647, %v6553
          %vm7168 = vcmp.eq.f32.partialorder %v7167, 8.507059e+37
          %v7169 = vand.u32 %v6553, 2147483648
          %v7170 = vor.u32 1.1754944e-38, %v7169
          %v7171 = vsel %vm7168, %v7170, %v7166
          %v7172 = vmul.f32 1.0, %v7171
          %v7173 = vrcp.pop %v6554
          %v7174 = vmul.f32 %v6554, %v7173
          %v7175 = vsub.f32 1.0, %v7174
          %v7176 = vmul.f32 %v7173, %v7175
          %v7177 = vadd.f32 %v7173, %v7176
          %vm7178 = vweird.f32 %v6554
          %vm7179 = vweird.f32 %v7173
          %vm7180 = vmor %vm7178, %vm7179
          %v7181 = vsel %vm7180, %v7173, %v7177
          %v7182 = vand.u32 2147483647, %v6554
          %vm7183 = vcmp.eq.f32.partialorder %v7182, 8.507059e+37
          %v7184 = vand.u32 %v6554, 2147483648
          %v7185 = vor.u32 1.1754944e-38, %v7184
          %v7186 = vsel %vm7183, %v7185, %v7181
          %v7187 = vmul.f32 1.0, %v7186
          %v7188 = vrcp.pop %v6555
          %v7189 = vmul.f32 %v6555, %v7188
          %v7190 = vsub.f32 1.0, %v7189
          %v7191 = vmul.f32 %v7188, %v7190
          %v7192 = vadd.f32 %v7188, %v7191
          %vm7193 = vweird.f32 %v6555
          %vm7194 = vweird.f32 %v7188
          %vm7195 = vmor %vm7193, %vm7194
          %v7196 = vsel %vm7195, %v7188, %v7192
          %v7197 = vand.u32 2147483647, %v6555
          %vm7198 = vcmp.eq.f32.partialorder %v7197, 8.507059e+37
          %v7199 = vand.u32 %v6555, 2147483648
          %v7200 = vor.u32 1.1754944e-38, %v7199
          %v7201 = vsel %vm7198, %v7200, %v7196
          %v7202 = vmul.f32 1.0, %v7201
          %v7203 = vrcp.pop %v6556
          %v7204 = vmul.f32 %v6556, %v7203
          %v7205 = vsub.f32 1.0, %v7204
          %v7206 = vmul.f32 %v7203, %v7205
          %v7207 = vadd.f32 %v7203, %v7206
          %vm7208 = vweird.f32 %v6556
          %vm7209 = vweird.f32 %v7203
          %vm7210 = vmor %vm7208, %vm7209
          %v7211 = vsel %vm7210, %v7203, %v7207
          %v7212 = vand.u32 2147483647, %v6556
          %vm7213 = vcmp.eq.f32.partialorder %v7212, 8.507059e+37
          %v7214 = vand.u32 %v6556, 2147483648
          %v7215 = vor.u32 1.1754944e-38, %v7214
          %v7216 = vsel %vm7213, %v7215, %v7211
          %v7217 = vmul.f32 1.0, %v7216
          %v7218 = vrcp.pop %v6557
          %v7219 = vmul.f32 %v6557, %v7218
          %v7220 = vsub.f32 1.0, %v7219
          %v7221 = vmul.f32 %v7218, %v7220
          %v7222 = vadd.f32 %v7218, %v7221
          %vm7223 = vweird.f32 %v6557
          %vm7224 = vweird.f32 %v7218
          %vm7225 = vmor %vm7223, %vm7224
          %v7226 = vsel %vm7225, %v7218, %v7222
          %v7227 = vand.u32 2147483647, %v6557
          %vm7228 = vcmp.eq.f32.partialorder %v7227, 8.507059e+37
          %v7229 = vand.u32 %v6557, 2147483648
          %v7230 = vor.u32 1.1754944e-38, %v7229
          %v7231 = vsel %vm7228, %v7230, %v7226
          %v7232 = vmul.f32 1.0, %v7231
          %v7233 = vsel %vm6468, %v6572, 0.0
          %v7234 = vsel %vm6469, %v6587, 0.0
          %v7235 = vsel %vm6470, %v6602, 0.0
          %v7236 = vsel %vm6471, %v6617, 0.0
          %v7237 = vsel %vm6472, %v6632, 0.0
          %v7238 = vsel %vm6473, %v6647, 0.0
          %v7239 = vsel %vm6474, %v6662, 0.0
          %v7240 = vsel %vm6475, %v6677, 0.0
          %v7241 = vsel %vm6476, %v6692, 0.0
          %v7242 = vsel %vm6477, %v6707, 0.0
          %v7243 = vsel %vm6478, %v6722, 0.0
          %v7244 = vsel %vm6479, %v6737, 0.0
          %v7245 = vsel %vm6480, %v6752, 0.0
          %v7246 = vsel %vm6481, %v6767, 0.0
          %v7247 = vsel %vm6482, %v6782, 0.0
          %v7248 = vsel %vm6483, %v6797, 0.0
          %v7249 = vsel %vm6484, %v6812, 0.0
          %v7250 = vsel %vm6485, %v6827, 0.0
          %v7251 = vsel %vm6486, %v6842, 0.0
          %v7252 = vsel %vm6487, %v6857, 0.0
          %v7253 = vsel %vm6488, %v6872, 0.0
          %v7254 = vsel %vm6489, %v6887, 0.0
          %v7255 = vsel %vm6490, %v6902, 0.0
          %v7256 = vsel %vm6491, %v6917, 0.0
          %v7257 = vsel %vm6492, %v6932, 0.0
          %v7258 = vsel %vm6493, %v6947, 0.0
          %v7259 = vsel %vm6494, %v6962, 0.0
          %v7260 = vsel %vm6495, %v6977, 0.0
          %v7261 = vsel %vm6496, %v6992, 0.0
          %v7262 = vsel %vm6497, %v7007, 0.0
          %v7263 = vsel %vm6498, %v7022, 0.0
          %v7264 = vsel %vm6499, %v7037, 0.0
          %v7265 = vsel %vm6500, %v7052, 0.0
          %v7266 = vsel %vm6501, %v7067, 0.0
          %v7267 = vsel %vm6502, %v7082, 0.0
          %v7268 = vsel %vm6503, %v7097, 0.0
          %v7269 = vsel %vm6504, %v7112, 0.0
          %v7270 = vsel %vm6505, %v7127, 0.0
          %v7271 = vsel %vm6506, %v7142, 0.0
          %v7272 = vsel %vm6507, %v7157, 0.0
          %v7273 = vsel %vm6508, %v7172, 0.0
          %v7274 = vsel %vm6509, %v7187, 0.0
          %v7275 = vsel %vm6510, %v7202, 0.0
          %v7276 = vsel %vm6511, %v7217, 0.0
          %v7277 = vsel %vm6512, %v7232, 0.0
          %v7278 = vmul.f32 %v6288, %v7233
          %v7279 = vmul.f32 %v6289, %v7234
          %v7280 = vmul.f32 %v6290, %v7235
          %v7281 = vmul.f32 %v6291, %v7236
          %v7282 = vmul.f32 %v6292, %v7237
          %v7283 = vmul.f32 %v6293, %v7238
          %v7284 = vmul.f32 %v6294, %v7239
          %v7285 = vmul.f32 %v6295, %v7240
          %v7286 = vmul.f32 %v6296, %v7241
          %v7287 = vmul.f32 %v6297, %v7242
          %v7288 = vmul.f32 %v6298, %v7243
          %v7289 = vmul.f32 %v6299, %v7244
          %v7290 = vmul.f32 %v6300, %v7245
          %v7291 = vmul.f32 %v6301, %v7246
          %v7292 = vmul.f32 %v6302, %v7247
          %v7293 = vmul.f32 %v6303, %v7248
          %v7294 = vmul.f32 %v6304, %v7249
          %v7295 = vmul.f32 %v6305, %v7250
          %v7296 = vmul.f32 %v6306, %v7251
          %v7297 = vmul.f32 %v6307, %v7252
          %v7298 = vmul.f32 %v6308, %v7253
          %v7299 = vmul.f32 %v6309, %v7254
          %v7300 = vmul.f32 %v6310, %v7255
          %v7301 = vmul.f32 %v6311, %v7256
          %v7302 = vmul.f32 %v6312, %v7257
          %v7303 = vmul.f32 %v6313, %v7258
          %v7304 = vmul.f32 %v6314, %v7259
          %v7305 = vmul.f32 %v6315, %v7260
          %v7306 = vmul.f32 %v6316, %v7261
          %v7307 = vmul.f32 %v6317, %v7262
          %v7308 = vmul.f32 %v6318, %v7263
          %v7309 = vmul.f32 %v6319, %v7264
          %v7310 = vmul.f32 %v6320, %v7265
          %v7311 = vmul.f32 %v6321, %v7266
          %v7312 = vmul.f32 %v6322, %v7267
          %v7313 = vmul.f32 %v6323, %v7268
          %v7314 = vmul.f32 %v6324, %v7269
          %v7315 = vmul.f32 %v6325, %v7270
          %v7316 = vmul.f32 %v6326, %v7271
          %v7317 = vmul.f32 %v6327, %v7272
          %v7318 = vmul.f32 %v6328, %v7273
          %v7319 = vmul.f32 %v6329, %v7274
          %v7320 = vmul.f32 %v6330, %v7275
          %v7321 = vmul.f32 %v6331, %v7276
          %v7322 = vmul.f32 %v6332, %v7277
          %7323 = vst [vmem:[%s264] sm:$0xff] %v7278
          %7324 = vst [vmem:[%s264 + $0x8] sm:$0xff] %v7279
          %7325 = vst [vmem:[%s264 + $0x10] sm:$0xff] %v7280
          %7326 = vst [vmem:[%s264 + $0x18] sm:$0xff] %v7281
          %7327 = vst [vmem:[%s264 + $0x20] sm:$0xff] %v7282
          %7328 = vst [vmem:[%s264 + $0x28] sm:$0xff] %v7283
          %7329 = vst [vmem:[%s264 + $0x30] sm:$0xff] %v7284
          %7330 = vst [vmem:[%s264 + $0x38] sm:$0xff] %v7285
          %7331 = vst [vmem:[%s264 + $0x40] sm:$0xff] %v7286
          %7332 = vst [vmem:[%s264 + $0x48] sm:$0xff] %v7287
          %7333 = vst [vmem:[%s264 + $0x50] sm:$0xff] %v7288
          %7334 = vst [vmem:[%s264 + $0x58] sm:$0xff] %v7289
          %7335 = vst [vmem:[%s264 + $0x60] sm:$0xff] %v7290
          %7336 = vst [vmem:[%s264 + $0x68] sm:$0xff] %v7291
          %7337 = vst [vmem:[%s264 + $0x70] sm:$0xff] %v7292
          %7338 = vst [vmem:[%s264 + $0x78] sm:$0xff] %v7293
          %7339 = vst [vmem:[%s264 + $0x80] sm:$0xff] %v7294
          %7340 = vst [vmem:[%s264 + $0x88] sm:$0xff] %v7295
          %7341 = vst [vmem:[%s264 + $0x90] sm:$0xff] %v7296
          %7342 = vst [vmem:[%s264 + $0x98] sm:$0xff] %v7297
          %7343 = vst [vmem:[%s264 + $0xa0] sm:$0xff] %v7298
          %7344 = vst [vmem:[%s264 + $0xa8] sm:$0xff] %v7299
          %7345 = vst [vmem:[%s264 + $0xb0] sm:$0xff] %v7300
          %7346 = vst [vmem:[%s264 + $0xb8] sm:$0xff] %v7301
          %7347 = vst [vmem:[%s264 + $0xc0] sm:$0xff] %v7302
          %7348 = vst [vmem:[%s264 + $0xc8] sm:$0xff] %v7303
          %7349 = vst [vmem:[%s264 + $0xd0] sm:$0xff] %v7304
          %7350 = vst [vmem:[%s264 + $0xd8] sm:$0xff] %v7305
          %7351 = vst [vmem:[%s264 + $0xe0] sm:$0xff] %v7306
          %7352 = vst [vmem:[%s264 + $0xe8] sm:$0xff] %v7307
          %7353 = vst [vmem:[%s264 + $0xf0] sm:$0xff] %v7308
          %7354 = vst [vmem:[%s264 + $0xf8] sm:$0xff] %v7309
          %7355 = vst [vmem:[%s264 + $0x100] sm:$0xff] %v7310
          %7356 = vst [vmem:[%s264 + $0x108] sm:$0xff] %v7311
          %7357 = vst [vmem:[%s264 + $0x110] sm:$0xff] %v7312
          %7358 = vst [vmem:[%s264 + $0x118] sm:$0xff] %v7313
          %7359 = vst [vmem:[%s264 + $0x120] sm:$0xff] %v7314
          %7360 = vst [vmem:[%s264 + $0x128] sm:$0xff] %v7315
          %7361 = vst [vmem:[%s264 + $0x130] sm:$0xff] %v7316
          %7362 = vst [vmem:[%s264 + $0x138] sm:$0xff] %v7317
          %7363 = vst [vmem:[%s264 + $0x140] sm:$0xff] %v7318
          %7364 = vst [vmem:[%s264 + $0x148] sm:$0xff] %v7319
          %7365 = vst [vmem:[%s264 + $0x150] sm:$0xff] %v7320
          %7366 = vst [vmem:[%s264 + $0x158] sm:$0xff] %v7321
          %7367 = vst [vmem:[%s264 + $0x160] sm:$0xff] %v7322
          %v7368 = vmul.f32 %v6333, %v7233
          %v7369 = vmul.f32 %v6334, %v7234
          %v7370 = vmul.f32 %v6335, %v7235
          %v7371 = vmul.f32 %v6336, %v7236
          %v7372 = vmul.f32 %v6337, %v7237
          %v7373 = vmul.f32 %v6338, %v7238
          %v7374 = vmul.f32 %v6339, %v7239
          %v7375 = vmul.f32 %v6340, %v7240
          %v7376 = vmul.f32 %v6341, %v7241
          %v7377 = vmul.f32 %v6342, %v7242
          %v7378 = vmul.f32 %v6343, %v7243
          %v7379 = vmul.f32 %v6344, %v7244
          %v7380 = vmul.f32 %v6345, %v7245
          %v7381 = vmul.f32 %v6346, %v7246
          %v7382 = vmul.f32 %v6347, %v7247
          %v7383 = vmul.f32 %v6348, %v7248
          %v7384 = vmul.f32 %v6349, %v7249
          %v7385 = vmul.f32 %v6350, %v7250
          %v7386 = vmul.f32 %v6351, %v7251
          %v7387 = vmul.f32 %v6352, %v7252
          %v7388 = vmul.f32 %v6353, %v7253
          %v7389 = vmul.f32 %v6354, %v7254
          %v7390 = vmul.f32 %v6355, %v7255
          %v7391 = vmul.f32 %v6356, %v7256
          %v7392 = vmul.f32 %v6357, %v7257
          %v7393 = vmul.f32 %v6358, %v7258
          %v7394 = vmul.f32 %v6359, %v7259
          %v7395 = vmul.f32 %v6360, %v7260
          %v7396 = vmul.f32 %v6361, %v7261
          %v7397 = vmul.f32 %v6362, %v7262
          %v7398 = vmul.f32 %v6363, %v7263
          %v7399 = vmul.f32 %v6364, %v7264
          %v7400 = vmul.f32 %v6365, %v7265
          %v7401 = vmul.f32 %v6366, %v7266
          %v7402 = vmul.f32 %v6367, %v7267
          %v7403 = vmul.f32 %v6368, %v7268
          %v7404 = vmul.f32 %v6369, %v7269
          %v7405 = vmul.f32 %v6370, %v7270
          %v7406 = vmul.f32 %v6371, %v7271
          %v7407 = vmul.f32 %v6372, %v7272
          %v7408 = vmul.f32 %v6373, %v7273
          %v7409 = vmul.f32 %v6374, %v7274
          %v7410 = vmul.f32 %v6375, %v7275
          %v7411 = vmul.f32 %v6376, %v7276
          %v7412 = vmul.f32 %v6377, %v7277
          %7413 = vst [vmem:[%s264 + $0x168] sm:$0xff] %v7368
          %7414 = vst [vmem:[%s264 + $0x170] sm:$0xff] %v7369
          %7415 = vst [vmem:[%s264 + $0x178] sm:$0xff] %v7370
          %7416 = vst [vmem:[%s264 + $0x180] sm:$0xff] %v7371
          %7417 = vst [vmem:[%s264 + $0x188] sm:$0xff] %v7372
          %7418 = vst [vmem:[%s264 + $0x190] sm:$0xff] %v7373
          %7419 = vst [vmem:[%s264 + $0x198] sm:$0xff] %v7374
          %7420 = vst [vmem:[%s264 + $0x1a0] sm:$0xff] %v7375
          %7421 = vst [vmem:[%s264 + $0x1a8] sm:$0xff] %v7376
          %7422 = vst [vmem:[%s264 + $0x1b0] sm:$0xff] %v7377
          %7423 = vst [vmem:[%s264 + $0x1b8] sm:$0xff] %v7378
          %7424 = vst [vmem:[%s264 + $0x1c0] sm:$0xff] %v7379
          %7425 = vst [vmem:[%s264 + $0x1c8] sm:$0xff] %v7380
          %7426 = vst [vmem:[%s264 + $0x1d0] sm:$0xff] %v7381
          %7427 = vst [vmem:[%s264 + $0x1d8] sm:$0xff] %v7382
          %7428 = vst [vmem:[%s264 + $0x1e0] sm:$0xff] %v7383
          %7429 = vst [vmem:[%s264 + $0x1e8] sm:$0xff] %v7384
          %7430 = vst [vmem:[%s264 + $0x1f0] sm:$0xff] %v7385
          %7431 = vst [vmem:[%s264 + $0x1f8] sm:$0xff] %v7386
          %7432 = vst [vmem:[%s264 + $0x200] sm:$0xff] %v7387
          %7433 = vst [vmem:[%s264 + $0x208] sm:$0xff] %v7388
          %7434 = vst [vmem:[%s264 + $0x210] sm:$0xff] %v7389
          %7435 = vst [vmem:[%s264 + $0x218] sm:$0xff] %v7390
          %7436 = vst [vmem:[%s264 + $0x220] sm:$0xff] %v7391
          %7437 = vst [vmem:[%s264 + $0x228] sm:$0xff] %v7392
          %7438 = vst [vmem:[%s264 + $0x230] sm:$0xff] %v7393
          %7439 = vst [vmem:[%s264 + $0x238] sm:$0xff] %v7394
          %7440 = vst [vmem:[%s264 + $0x240] sm:$0xff] %v7395
          %7441 = vst [vmem:[%s264 + $0x248] sm:$0xff] %v7396
          %7442 = vst [vmem:[%s264 + $0x250] sm:$0xff] %v7397
          %7443 = vst [vmem:[%s264 + $0x258] sm:$0xff] %v7398
          %7444 = vst [vmem:[%s264 + $0x260] sm:$0xff] %v7399
          %7445 = vst [vmem:[%s264 + $0x268] sm:$0xff] %v7400
          %7446 = vst [vmem:[%s264 + $0x270] sm:$0xff] %v7401
          %7447 = vst [vmem:[%s264 + $0x278] sm:$0xff] %v7402
          %7448 = vst [vmem:[%s264 + $0x280] sm:$0xff] %v7403
          %7449 = vst [vmem:[%s264 + $0x288] sm:$0xff] %v7404
          %7450 = vst [vmem:[%s264 + $0x290] sm:$0xff] %v7405
          %7451 = vst [vmem:[%s264 + $0x298] sm:$0xff] %v7406
          %7452 = vst [vmem:[%s264 + $0x2a0] sm:$0xff] %v7407
          %7453 = vst [vmem:[%s264 + $0x2a8] sm:$0xff] %v7408
          %7454 = vst [vmem:[%s264 + $0x2b0] sm:$0xff] %v7409
          %7455 = vst [vmem:[%s264 + $0x2b8] sm:$0xff] %v7410
          %7456 = vst [vmem:[%s264 + $0x2c0] sm:$0xff] %v7411
          %7457 = vst [vmem:[%s264 + $0x2c8] sm:$0xff] %v7412
          %v7458 = vmul.f32 %v6378, %v7233
          %v7459 = vmul.f32 %v6379, %v7234
          %v7460 = vmul.f32 %v6380, %v7235
          %v7461 = vmul.f32 %v6381, %v7236
          %v7462 = vmul.f32 %v6382, %v7237
          %v7463 = vmul.f32 %v6383, %v7238
          %v7464 = vmul.f32 %v6384, %v7239
          %v7465 = vmul.f32 %v6385, %v7240
          %v7466 = vmul.f32 %v6386, %v7241
          %v7467 = vmul.f32 %v6387, %v7242
          %v7468 = vmul.f32 %v6388, %v7243
          %v7469 = vmul.f32 %v6389, %v7244
          %v7470 = vmul.f32 %v6390, %v7245
          %v7471 = vmul.f32 %v6391, %v7246
          %v7472 = vmul.f32 %v6392, %v7247
          %v7473 = vmul.f32 %v6393, %v7248
          %v7474 = vmul.f32 %v6394, %v7249
          %v7475 = vmul.f32 %v6395, %v7250
          %v7476 = vmul.f32 %v6396, %v7251
          %v7477 = vmul.f32 %v6397, %v7252
          %v7478 = vmul.f32 %v6398, %v7253
          %v7479 = vmul.f32 %v6399, %v7254
          %v7480 = vmul.f32 %v6400, %v7255
          %v7481 = vmul.f32 %v6401, %v7256
          %v7482 = vmul.f32 %v6402, %v7257
          %v7483 = vmul.f32 %v6403, %v7258
          %v7484 = vmul.f32 %v6404, %v7259
          %v7485 = vmul.f32 %v6405, %v7260
          %v7486 = vmul.f32 %v6406, %v7261
          %v7487 = vmul.f32 %v6407, %v7262
          %v7488 = vmul.f32 %v6408, %v7263
          %v7489 = vmul.f32 %v6409, %v7264
          %v7490 = vmul.f32 %v6410, %v7265
          %v7491 = vmul.f32 %v6411, %v7266
          %v7492 = vmul.f32 %v6412, %v7267
          %v7493 = vmul.f32 %v6413, %v7268
          %v7494 = vmul.f32 %v6414, %v7269
          %v7495 = vmul.f32 %v6415, %v7270
          %v7496 = vmul.f32 %v6416, %v7271
          %v7497 = vmul.f32 %v6417, %v7272
          %v7498 = vmul.f32 %v6418, %v7273
          %v7499 = vmul.f32 %v6419, %v7274
          %v7500 = vmul.f32 %v6420, %v7275
          %v7501 = vmul.f32 %v6421, %v7276
          %v7502 = vmul.f32 %v6422, %v7277
          %7503 = vst [vmem:[%s264 + $0x2d0] sm:$0xff] %v7458
          %7504 = vst [vmem:[%s264 + $0x2d8] sm:$0xff] %v7459
          %7505 = vst [vmem:[%s264 + $0x2e0] sm:$0xff] %v7460
          %7506 = vst [vmem:[%s264 + $0x2e8] sm:$0xff] %v7461
          %7507 = vst [vmem:[%s264 + $0x2f0] sm:$0xff] %v7462
          %7508 = vst [vmem:[%s264 + $0x2f8] sm:$0xff] %v7463
          %7509 = vst [vmem:[%s264 + $0x300] sm:$0xff] %v7464
          %7510 = vst [vmem:[%s264 + $0x308] sm:$0xff] %v7465
          %7511 = vst [vmem:[%s264 + $0x310] sm:$0xff] %v7466
          %7512 = vst [vmem:[%s264 + $0x318] sm:$0xff] %v7467
          %7513 = vst [vmem:[%s264 + $0x320] sm:$0xff] %v7468
          %7514 = vst [vmem:[%s264 + $0x328] sm:$0xff] %v7469
          %7515 = vst [vmem:[%s264 + $0x330] sm:$0xff] %v7470
          %7516 = vst [vmem:[%s264 + $0x338] sm:$0xff] %v7471
          %7517 = vst [vmem:[%s264 + $0x340] sm:$0xff] %v7472
          %7518 = vst [vmem:[%s264 + $0x348] sm:$0xff] %v7473
          %7519 = vst [vmem:[%s264 + $0x350] sm:$0xff] %v7474
          %7520 = vst [vmem:[%s264 + $0x358] sm:$0xff] %v7475
          %7521 = vst [vmem:[%s264 + $0x360] sm:$0xff] %v7476
          %7522 = vst [vmem:[%s264 + $0x368] sm:$0xff] %v7477
          %7523 = vst [vmem:[%s264 + $0x370] sm:$0xff] %v7478
          %7524 = vst [vmem:[%s264 + $0x378] sm:$0xff] %v7479
          %7525 = vst [vmem:[%s264 + $0x380] sm:$0xff] %v7480
          %7526 = vst [vmem:[%s264 + $0x388] sm:$0xff] %v7481
          %7527 = vst [vmem:[%s264 + $0x390] sm:$0xff] %v7482
          %7528 = vst [vmem:[%s264 + $0x398] sm:$0xff] %v7483
          %7529 = vst [vmem:[%s264 + $0x3a0] sm:$0xff] %v7484
          %7530 = vst [vmem:[%s264 + $0x3a8] sm:$0xff] %v7485
          %7531 = vst [vmem:[%s264 + $0x3b0] sm:$0xff] %v7486
          %7532 = vst [vmem:[%s264 + $0x3b8] sm:$0xff] %v7487
          %7533 = vst [vmem:[%s264 + $0x3c0] sm:$0xff] %v7488
          %7534 = vst [vmem:[%s264 + $0x3c8] sm:$0xff] %v7489
          %7535 = vst [vmem:[%s264 + $0x3d0] sm:$0xff] %v7490
          %7536 = vst [vmem:[%s264 + $0x3d8] sm:$0xff] %v7491
          %7537 = vst [vmem:[%s264 + $0x3e0] sm:$0xff] %v7492
          %7538 = vst [vmem:[%s264 + $0x3e8] sm:$0xff] %v7493
          %7539 = vst [vmem:[%s264 + $0x3f0] sm:$0xff] %v7494
          %7540 = vst [vmem:[%s264 + $0x3f8] sm:$0xff] %v7495
          %7541 = vst [vmem:[%s264 + $0x400] sm:$0xff] %v7496
          %7542 = vst [vmem:[%s264 + $0x408] sm:$0xff] %v7497
          %7543 = vst [vmem:[%s264 + $0x410] sm:$0xff] %v7498
          %7544 = vst [vmem:[%s264 + $0x418] sm:$0xff] %v7499
          %7545 = vst [vmem:[%s264 + $0x420] sm:$0xff] %v7500
          %7546 = vst [vmem:[%s264 + $0x428] sm:$0xff] %v7501
          %7547 = vst [vmem:[%s264 + $0x430] sm:$0xff] %v7502
        $region48: #{tpu_custom_call.1} parent=31 // pred_fallthru
          _
        %s7548 = sand.u32 %s133, 1
        %s7549 = scalar_lea.sflag [#allocation4], %s7548
        %s7550 = sand.u32 %s133, 1
        %s7551 = smul.addr %s7550, 1440
        %s7552 = scalar_lea.vmem [#allocation5], %s7551
        // Predicated region
        $region49: #{tpu_custom_call.1} parent=31 // pred_check
          %p7553 = pneg %p143
        $region50: #{tpu_custom_call.1} parent=31 // pred_check_branch
          %7555 = sbr.rel (%p7553) target = $region52
        $region51: #{tpu_custom_call.1} parent=31 // pred_region
          %s7556 = smul.u32 9, %s26
          %7558 = vsyncadd %s7549, 0
          %s7559 = smul.addr %s25, 180
          %s7560 = sadd.s32 %s7556, %s7559
          %s7561 = smul.addr %s7560, 8
          %s7562 = scalar_lea.hbm %s3, %s7561
          %s7563 = sshll.u32 %s7552, 4
          %s7564 = int_to_ptr.vmem [resolvable:$true] %s7563
          %s7565 = sshll.u32 %s7562, 4
          %s7566 = int_to_ptr.hbm [resolvable:$true] %s7565
          %7571 = dma.vmem_to_hbm [thread:$0]  %s7564, 23040, %s7566, %s7549, 1152, 1152, 72
        $region52: #{tpu_custom_call.1} parent=31 // pred_fallthru
          _
      $region32: #{tpu_custom_call.1} parent=5 // pred_fallthru
        _
      %p7572 = scmp.le.s32.totalorder 2, %s15
      // Predicated region
      $region53: #{tpu_custom_call.1} parent=5 // pred_check
        %p7573 = pneg %p7572
      $region54: #{tpu_custom_call.1} parent=5 // pred_check_branch
        %7575 = sbr.rel (%p7573) target = $region56
      $region55: #{tpu_custom_call.1} parent=5 // pred_region
        %s7576 = ssub.s32 %s15, 2
        // Predicated region
        $region57: #{tpu_custom_call.1} parent=55 // pred_check
          %p7577 = pneg %p149
        $region58: #{tpu_custom_call.1} parent=55 // pred_check_branch
          %7579 = sbr.rel (%p7577) target = $region60
        $region59: #{tpu_custom_call.1} parent=55 // pred_region
          %s7580 = sand.u32 %s134, 1
          %s7581 = scalar_lea.sflag [#allocation4], %s7580
          %s7582 = sand.u32 %s134, 1
          %s7583 = smul.addr %s7582, 1440
          %s7584 = scalar_lea.vmem [#allocation5], %s7583
          %7586 = dma.done %s7581, 23040
        $region60: #{tpu_custom_call.1} parent=55 // pred_fallthru
          _
      $region56: #{tpu_custom_call.1} parent=5 // pred_fallthru
        _
    $region6: #{tpu_custom_call.1} parent=1 // loop_footer
      %s19 = sadd.s32 1, %s15
    $region7: #{tpu_custom_call.1} parent=1 // loop_footer_branch
      %14 = sbr.rel target = $region3
    $region8: #{tpu_custom_call.1} parent=1 // loop_exit
      _
    %7587 = vsyncpa [#allocation3], 1
    %s7588 = scalar_lea.sflag [#allocation3], 1
    %7589 = vsyncpa %s7588, 1
    %7590 = vsyncpa [#allocation4], 1
    %s7591 = scalar_lea.sflag [#allocation4], 1
    %7592 = vsyncpa %s7591, 1

</llo_original>
